<compile_context>
chip_gen: v7x
topology: tpu7x:2x2x1
jax: 0.10.0
libtpu: 0.0.40
codegen_flags: <defaults>
</compile_context>

<pallas_src>
import functools

import jax
import jax.numpy as jnp
from jax.experimental import pallas as pl
from jax.experimental.pallas import tpu as pltpu


def _round_up(x, m):
    return ((x + m - 1) // m) * m


def _vmem_limit_bytes():
    """Per-generation VMEM budget: ~3/4 of physical, clamped to [32, 96] MiB."""
    limit = 48 * 1024 * 1024           # safe default (v7x has 64 MiB physical)
    try:
        info = pltpu.get_tpu_info()
        cap = getattr(info, "vmem_capacity_bytes", None)
        if cap:
            limit = int(cap) * 3 // 4  # 128 MiB parts -> 96 MiB, v7x -> 48 MiB
    except Exception:
        pass
    return max(32 * 1024 * 1024, min(limit, 96 * 1024 * 1024))


_VMEM_LIMIT = _vmem_limit_bytes()
_HEAD_TK = 2688        # head K tile: Kp = round_up(5184, 2688) = 5376 -> 2 steps
_CONV_TM_MAX = 512     # max M tile for the conv matmuls
_CONV_TK_MAX = 1024    # all conv K (256 / 512 / 288 / 576) fit in one K step


def _pick_m_tile(mp, max_tile):
    """mp is a multiple of 8. Prefer a tile that divides mp (no zero-row pad)."""
    if mp <= max_tile:
        return mp
    t = (max_tile // 8) * 8
    while t >= 8:
        if mp % t == 0:
            return t
        t -= 8
    return (max_tile // 8) * 8


# ---------------------------------------------------------------------------
# Tiled matmul + bias + optional ReLU:  Y = relu?(X @ W + b)
# ---------------------------------------------------------------------------
def _matmul_bias_1k_kernel(x_ref, w_ref, b_ref, o_ref, *, apply_relu):
    # Single-K-step path (all conv layers): no accumulator scratch, no pl.when.
    y = jnp.dot(x_ref[...], w_ref[...], preferred_element_type=jnp.float32)
    y = y + b_ref[...]                       # (1, TN) broadcasts over rows
    if apply_relu:
        y = jnp.maximum(y, 0.0)
    o_ref[...] = y.astype(o_ref.dtype)


def _matmul_bias_kernel(x_ref, w_ref, b_ref, o_ref, acc_ref, *, apply_relu):
    # General K-tiled path with an f32 VMEM accumulator (not hit for this net's
    # conv shapes; kept for generality).
    k = pl.program_id(2)

    @pl.when(k == 0)
    def _():
        acc_ref[...] = jnp.zeros_like(acc_ref)

    acc_ref[...] += jnp.dot(x_ref[...], w_ref[...],
                            preferred_element_type=jnp.float32)

    @pl.when(k == pl.num_programs(2) - 1)
    def _():
        y = acc_ref[...] + b_ref[...]
        if apply_relu:
            y = jnp.maximum(y, 0.0)
        o_ref[...] = y.astype(o_ref.dtype)


def matmul_bias(x, w, b, *, relu, out_dtype=jnp.bfloat16,
                tm_max=_CONV_TM_MAX, tk_max=_CONV_TK_MAX):
    """Y = relu?(X @ W + b).
    x: (M, K) (bf16 or f32); w: (K, Np) bf16 with Np % 128 == 0 (pre-padded at
    init); b: (1, Np) f32.  Returns (Mp, Np) in out_dtype; caller slices."""
    M, K = x.shape
    Kw, Np = w.shape
    assert Kw == K and Np % 128 == 0 and b.shape == (1, Np)

    Mp = _round_up(M, 8)
    tm = _pick_m_tile(Mp, tm_max)
    Mp = _round_up(Mp, tm)
    tn = 256 if Np % 256 == 0 else 128

    if K <= tk_max:
        tk, Kp = K, K                      # single K step, no K padding needed
    else:
        tk = tk_max
        Kp = _round_up(K, tk)

    if (Mp, Kp) != (M, K):
        x = jnp.pad(x, ((0, Mp - M), (0, Kp - K)))
    x = x.astype(jnp.bfloat16)             # no-op when activations are bf16
    if Kp != K:
        w = jnp.pad(w, ((0, Kp - K), (0, 0)))

    cost = pl.CostEstimate(
        flops=2 * Mp * Kp * Np,
        transcendentals=0,
        bytes_accessed=(Mp * Kp + Kp * Np) * 2 + Np * 4
                       + Mp * Np * jnp.dtype(out_dtype).itemsize,
    )

    if Kp == tk:   # ---- single-K-step specialization (all conv layers) ----
        grid = (Mp // tm, Np // tn)
        return pl.pallas_call(
            functools.partial(_matmul_bias_1k_kernel, apply_relu=relu),
            out_shape=jax.ShapeDtypeStruct((Mp, Np), out_dtype),
            grid_spec=pltpu.PrefetchScalarGridSpec(
                num_scalar_prefetch=0,
                grid=grid,
                in_specs=[
                    pl.BlockSpec((tm, Kp), lambda i, j: (i, 0)),
                    pl.BlockSpec((Kp, tn), lambda i, j: (0, j)),
                    pl.BlockSpec((1, tn), lambda i, j: (0, j)),
                ],
                out_specs=pl.BlockSpec((tm, tn), lambda i, j: (i, j)),
            ),
            compiler_params=pltpu.CompilerParams(
                dimension_semantics=("parallel", "parallel"),
                vmem_limit_bytes=_VMEM_LIMIT,
            ),
            cost_estimate=cost,
        )(x, w, b)

    grid = (Mp // tm, Np // tn, Kp // tk)
    return pl.pallas_call(
        functools.partial(_matmul_bias_kernel, apply_relu=relu),
        out_shape=jax.ShapeDtypeStruct((Mp, Np), out_dtype),
        grid_spec=pltpu.PrefetchScalarGridSpec(
            num_scalar_prefetch=0,
            grid=grid,
            in_specs=[
                pl.BlockSpec((tm, tk), lambda i, j, k: (i, k)),
                pl.BlockSpec((tk, tn), lambda i, j, k: (k, j)),
                pl.BlockSpec((1, tn), lambda i, j, k: (0, j)),
            ],
            out_specs=pl.BlockSpec((tm, tn), lambda i, j, k: (i, j)),
            scratch_shapes=[pltpu.VMEM((tm, tn), jnp.float32)],
        ),
        compiler_params=pltpu.CompilerParams(
            dimension_semantics=("parallel", "parallel", "arbitrary"),
            vmem_limit_bytes=_VMEM_LIMIT,
        ),
        cost_estimate=cost,
    )(x, w, b)


# ---------------------------------------------------------------------------
# Convolution: NHWC im2col (cheap XLA strided slices + concat, no transposes,
# built directly in bf16) followed by the single-step Pallas matmul. Weights
# were pre-reshaped at init to (KH*KW*IC, OCp) matching the (kh, kw, c) order.
# ---------------------------------------------------------------------------
def conv2d_nhwc(x, wmat, b, oc, *, kh, kw, stride, padding, relu):
    n, h, w, c = x.shape
    if padding > 0:
        x = jnp.pad(x, ((0, 0), (padding, padding), (padding, padding), (0, 0)))
    hp, wp = h + 2 * padding, w + 2 * padding
    oh = (hp - kh) // stride + 1
    ow = (wp - kw) // stride + 1
    # TODO(synk): fuse patch extraction into the conv kernel (in-kernel strided
    # reads of a VMEM-resident padded activation) to remove the 9x read blowup.
    cols = [x[:, i:i + stride * oh:stride, j:j + stride * ow:stride, :]
            for i in range(kh) for j in range(kw)]
    cols = jnp.concatenate(cols, axis=-1).reshape(n * oh * ow, kh * kw * c)
    out = matmul_bias(cols, wmat, b, relu=relu, out_dtype=jnp.bfloat16)
    return out[:n * oh * ow, :oc].reshape(n, oh, ow, oc)


# ---------------------------------------------------------------------------
# Fused MLP head: out = relu(x @ W1 + b1) @ W2 + b2 in one pallas_call.
# W1 is streamed over a (short) K grid; the (B,512) hidden lives in VMEM.
# ---------------------------------------------------------------------------
def _mlp_head_kernel(x_ref, w1_ref, b1_ref, w2_ref, b2_ref, o_ref, h_ref):
    k = pl.program_id(0)

    @pl.when(k == 0)
    def _():
        h_ref[...] = jnp.zeros_like(h_ref)

    h_ref[...] += jnp.dot(x_ref[...], w1_ref[...],
                          preferred_element_type=jnp.float32)

    @pl.when(k == pl.num_programs(0) - 1)
    def _():
        h = jnp.maximum(h_ref[...] + b1_ref[...], 0.0)
        o = jnp.dot(h.astype(w2_ref.dtype), w2_ref[...],
                    preferred_element_type=jnp.float32) + b2_ref[...]
        o_ref[...] = o.astype(o_ref.dtype)


def mlp_head(x, w1, b1, w2, b2, n_actions, *, tk=_HEAD_TK):
    """x: (B,K) bf16; w1: (Kp,512) bf16 (K pre-padded to a multiple of tk);
    w2: (512,N2p) bf16; biases (1,·) f32.  Returns (B, n_actions) f32."""
    M, K = x.shape
    Kp, H = w1.shape
    N2p = w2.shape[1]
    assert Kp % tk == 0
    Mp = _round_up(M, 8)
    xp = jnp.pad(x, ((0, Mp - M), (0, Kp - K))).astype(jnp.bfloat16)

    cost = pl.CostEstimate(
        flops=2 * Mp * Kp * H + 2 * Mp * H * N2p,
        transcendentals=0,
        bytes_accessed=(Mp * Kp + Kp * H + H * N2p) * 2
                       + (H + N2p) * 4 + Mp * N2p * 4,
    )

    out = pl.pallas_call(
        _mlp_head_kernel,
        out_shape=jax.ShapeDtypeStruct((Mp, N2p), jnp.float32),
        grid_spec=pltpu.PrefetchScalarGridSpec(
            num_scalar_prefetch=0,
            grid=(Kp // tk,),
            in_specs=[
                pl.BlockSpec((Mp, tk), lambda k: (0, k)),
                pl.BlockSpec((tk, H), lambda k: (k, 0)),
                pl.BlockSpec((1, H), lambda k: (0, 0)),
                pl.BlockSpec((H, N2p), lambda k: (0, 0)),
                pl.BlockSpec((1, N2p), lambda k: (0, 0)),
            ],
            out_specs=pl.BlockSpec((Mp, N2p), lambda k: (0, 0)),
            scratch_shapes=[pltpu.VMEM((Mp, H), jnp.float32)],
        ),
        compiler_params=pltpu.CompilerParams(
            dimension_semantics=("arbitrary",),
            vmem_limit_bytes=_VMEM_LIMIT,
        ),
        cost_estimate=cost,
    )(xp, w1, b1, w2, b2)
    return out[:M, :n_actions]


# ---------------------------------------------------------------------------
# Parameters: init in PyTorch layout (uniform(-1/sqrt(fan_in), +...)), then
# convert ONCE at init to the kernel-friendly layout (pre-transposed weights,
# NHWC lin1 column permutation, lane padding + bf16).
# ---------------------------------------------------------------------------
def _uniform(key, shape, fan_in):
    bound = 1.0 / jnp.sqrt(jnp.float32(fan_in))
    return jax.random.uniform(key, shape, jnp.float32, -bound, bound)


def init_convnet_params_torch_layout(state_shape, n_actions, key):
    c, h, w = state_shape
    in_dim = 9 * 9 * 64
    keys = jax.random.split(key, 12)
    p = {}
    p["conv1_w"] = _uniform(keys[0], (32, c, 8, 8), c * 8 * 8)
    p["conv1_b"] = _uniform(keys[1], (32,), c * 8 * 8)
    p["conv2_w"] = _uniform(keys[2], (32, 32, 4, 4), 32 * 4 * 4)
    p["conv2_b"] = _uniform(keys[3], (32,), 32 * 4 * 4)
    p["conv3_w"] = _uniform(keys[4], (64, 32, 3, 3), 32 * 3 * 3)
    p["conv3_b"] = _uniform(keys[5], (64,), 32 * 3 * 3)
    p["conv4_w"] = _uniform(keys[6], (64, 64, 3, 3), 64 * 3 * 3)
    p["conv4_b"] = _uniform(keys[7], (64,), 64 * 3 * 3)
    p["lin1_w"] = _uniform(keys[8], (512, in_dim), in_dim)   # PyTorch (out, in)
    p["lin1_b"] = _uniform(keys[9], (512,), in_dim)
    p["lin2_w"] = _uniform(keys[10], (n_actions, 512), 512)
    p["lin2_b"] = _uniform(keys[11], (n_actions,), 512)
    return p


def prepare_params(p, n_actions):
    q = {}
    for name in ("conv1", "conv2", "conv3", "conv4"):
        w = p[f"{name}_w"]                                   # (OC, IC, KH, KW)
        oc = w.shape[0]
        ocp = _round_up(oc, 128)
        # (KH, KW, IC, OC) flattened -> rows ordered (kh, kw, ic): matches im2col
        wmat = w.transpose(2, 3, 1, 0).reshape(-1, oc)
        q[f"{name}_w"] = jnp.pad(wmat, ((0, 0), (0, ocp - oc))).astype(jnp.bfloat16)
        q[f"{name}_b"] = jnp.pad(p[f"{name}_b"],
                                 (0, ocp - oc)).reshape(1, ocp).astype(jnp.float32)
    # lin1: permute columns from PyTorch's (C,H,W) flatten to our NHWC (H,W,C)
    # flatten, transpose to (in, out), pad K to the head K-tile, cast to bf16.
    w1 = p["lin1_w"].reshape(512, 64, 9, 9).transpose(0, 2, 3, 1).reshape(512, -1).T
    k1 = w1.shape[0]
    k1p = _round_up(k1, _HEAD_TK)
    q["lin1_w"] = jnp.pad(w1, ((0, k1p - k1), (0, 0))).astype(jnp.bfloat16)
    q["lin1_b"] = p["lin1_b"].reshape(1, -1).astype(jnp.float32)
    # lin2: (out, in) -> (in, out), pad out to 128 lanes (lane-dense stores).
    w2 = p["lin2_w"].T
    n2p = _round_up(n_actions, 128)
    q["lin2_w"] = jnp.pad(w2, ((0, 0), (0, n2p - n_actions))).astype(jnp.bfloat16)
    q["lin2_b"] = jnp.pad(p["lin2_b"],
                          (0, n2p - n_actions)).reshape(1, -1).astype(jnp.float32)
    return q


def convnet_forward(params, x, n_actions):
    x = jnp.transpose(x, (0, 2, 3, 1)).astype(jnp.bfloat16)   # NCHW -> NHWC bf16
    x = conv2d_nhwc(x, params["conv1_w"], params["conv1_b"], 32,
                    kh=8, kw=8, stride=4, padding=0, relu=True)
    x = conv2d_nhwc(x, params["conv2_w"], params["conv2_b"], 32,
                    kh=4, kw=4, stride=2, padding=0, relu=True)
    x = conv2d_nhwc(x, params["conv3_w"], params["conv3_b"], 64,
                    kh=3, kw=3, stride=1, padding=1, relu=True)
    x = conv2d_nhwc(x, params["conv4_w"], params["conv4_b"], 64,
                    kh=3, kw=3, stride=1, padding=1, relu=True)
    x = x.reshape(x.shape[0], -1)        # NHWC flatten; lin1_w permuted to match
    return mlp_head(x, params["lin1_w"], params["lin1_b"],
                    params["lin2_w"], params["lin2_b"], n_actions)


class ConvModelNew:
    """JAX/Pallas equivalent of the PyTorch ConvModelNew (online + frozen target)."""

    def __init__(self, state_shape, n_actions, key):
        raw = init_convnet_params_torch_layout(state_shape, n_actions, key)
        self.online = prepare_params(raw, n_actions)
        # deepcopy-equivalent: identical values, separate buffers
        self.target = jax.tree_util.tree_map(jnp.array, self.online)
        self._forward = jax.jit(lambda p, x: convnet_forward(p, x, n_actions))

    def __call__(self, x, model="online"):
        if model == "online":
            return self._forward(self.online, x)
        elif model == "target":
            return self._forward(self.target, x)
        else:
            raise Exception(f"model must be in [target, online], got {model}")

    def __str__(self):
        return "ConvModel"


if __name__ == "__main__":
    key = jax.random.PRNGKey(0)
    k_params, k_x = jax.random.split(key)

    # in_dim = 9*9*64 in the module implies 84x84 spatial input; batch=2, c=4.
    state_shape = (4, 84, 84)
    n_actions = 6
    batch = 2

    model = ConvModelNew(state_shape, n_actions, k_params)
    x = jax.random.normal(k_x, (batch,) + state_shape, dtype=jnp.float32)

    out_online = jax.block_until_ready(model(x, model="online"))
    out_target = jax.block_until_ready(model(x, model="target"))

    assert out_online.shape == (batch, n_actions)
    assert out_target.shape == (batch, n_actions)
    assert bool(jnp.all(jnp.isfinite(out_online)))
    # online and target start as identical copies -> identical outputs
    assert bool(jnp.allclose(out_online, out_target))

    print("KERNEL_OK")
</pallas_src>

<mosaic_0001>
module attributes {stable_mosaic.version = 11 : i64} {
  func.func @_matmul_bias_1k_kernel(%arg0: i32, %arg1: i32, %arg2: memref<400x256xbf16, #tpu.memory_space<vmem>>, %arg3: memref<256x128xbf16, #tpu.memory_space<vmem>>, %arg4: memref<1x128xf32, #tpu.memory_space<vmem>>, %arg5: memref<400x128xbf16, #tpu.memory_space<vmem>>) attributes {dimension_semantics = [#tpu.dimension_semantics<parallel>, #tpu.dimension_semantics<parallel>], iteration_bounds = array<i64: 2, 1>, scalar_prefetch = 0 : i64, scratch_operands = 0 : i64, tpu.core_type = #tpu.core_type<tc>, window_params = [{transform_indices = @transform_0, window_bounds = array<i64: 400, 256>}, {transform_indices = @transform_1, window_bounds = array<i64: 256, 128>}, {transform_indices = @transform_2, window_bounds = array<i64: 1, 128>}, {transform_indices = @transform_3, window_bounds = array<i64: 400, 128>}]} {
    %c0 = arith.constant 0 : index
    %c0_0 = arith.constant 0 : index
    %0 = vector.load %arg2[%c0, %c0_0] : memref<400x256xbf16, #tpu.memory_space<vmem>>, vector<400x256xbf16>
    %c0_1 = arith.constant 0 : index
    %c0_2 = arith.constant 0 : index
    %1 = vector.load %arg3[%c0_1, %c0_2] : memref<256x128xbf16, #tpu.memory_space<vmem>>, vector<256x128xbf16>
    %cst = arith.constant dense<0.000000e+00> : vector<400x128xf32>
    %2 = tpu.matmul %0, %1, %cst {dimension_numbers = #tpu.dot_dimension_numbers<[1], [0], [0], [1], [0, 0, 1, 1], [], []>} : vector<400x256xbf16>, vector<256x128xbf16>, vector<400x128xf32> -> vector<400x128xf32>
    %c0_3 = arith.constant 0 : index
    %c0_4 = arith.constant 0 : index
    %3 = vector.load %arg4[%c0_3, %c0_4] : memref<1x128xf32, #tpu.memory_space<vmem>>, vector<1x128xf32>
    %4 = vector.broadcast %3 : vector<1x128xf32> to vector<400x128xf32>
    %5 = arith.addf %2, %4 : vector<400x128xf32>
    %cst_5 = arith.constant 0.000000e+00 : f32
    %6 = vector.broadcast %cst_5 : f32 to vector<400x128xf32>
    %7 = arith.maximumf %5, %6 : vector<400x128xf32>
    %8 = arith.truncf %7 : vector<400x128xf32> to vector<400x128xbf16>
    %c0_6 = arith.constant 0 : index
    %c0_7 = arith.constant 0 : index
    %9 = vector.load %arg5[%c0_6, %c0_7] : memref<400x128xbf16, #tpu.memory_space<vmem>>, vector<400x128xbf16>
    tpu.vector_store %arg5[%c0_6, %c0_7], %8 {strides = array<i32>} : memref<400x128xbf16, #tpu.memory_space<vmem>>, vector<400x128xbf16>,
    return
  }
  func.func @transform_0(%arg0: i32, %arg1: i32) -> (i32, i32) {
    %c0_i32 = arith.constant 0 : i32
    %c0_i32_0 = arith.constant 0 : i32
    return %arg0, %c0_i32 : i32, i32
  }
  func.func @transform_1(%arg0: i32, %arg1: i32) -> (i32, i32) {
    %c0_i32 = arith.constant 0 : i32
    %c0_i32_0 = arith.constant 0 : i32
    return %c0_i32, %arg1 : i32, i32
  }
  func.func @transform_2(%arg0: i32, %arg1: i32) -> (i32, i32) {
    %c0_i32 = arith.constant 0 : i32
    %c0_i32_0 = arith.constant 0 : i32
    return %c0_i32, %arg1 : i32, i32
  }
  func.func @transform_3(%arg0: i32, %arg1: i32) -> (i32, i32) {
    %c0_i32 = arith.constant 0 : i32
    return %arg0, %arg1 : i32, i32
  }
}

module attributes {stable_mosaic.version = 11 : i64} {
  func.func @_matmul_bias_1k_kernel(%arg0: i32, %arg1: i32, %arg2: memref<168x512xbf16, #tpu.memory_space<vmem>>, %arg3: memref<512x128xbf16, #tpu.memory_space<vmem>>, %arg4: memref<1x128xf32, #tpu.memory_space<vmem>>, %arg5: memref<168x128xbf16, #tpu.memory_space<vmem>>) attributes {dimension_semantics = [#tpu.dimension_semantics<parallel>, #tpu.dimension_semantics<parallel>], iteration_bounds = array<i64: 1, 1>, scalar_prefetch = 0 : i64, scratch_operands = 0 : i64, tpu.core_type = #tpu.core_type<tc>, window_params = [{transform_indices = @transform_0, window_bounds = array<i64: 168, 512>}, {transform_indices = @transform_1, window_bounds = array<i64: 512, 128>}, {transform_indices = @transform_2, window_bounds = array<i64: 1, 128>}, {transform_indices = @transform_3, window_bounds = array<i64: 168, 128>}]} {
    %c0 = arith.constant 0 : index
    %c0_0 = arith.constant 0 : index
    %0 = vector.load %arg2[%c0, %c0_0] : memref<168x512xbf16, #tpu.memory_space<vmem>>, vector<168x512xbf16>
    %c0_1 = arith.constant 0 : index
    %c0_2 = arith.constant 0 : index
    %1 = vector.load %arg3[%c0_1, %c0_2] : memref<512x128xbf16, #tpu.memory_space<vmem>>, vector<512x128xbf16>
    %cst = arith.constant dense<0.000000e+00> : vector<168x128xf32>
    %2 = tpu.matmul %0, %1, %cst {dimension_numbers = #tpu.dot_dimension_numbers<[1], [0], [0], [1], [0, 0, 1, 1], [], []>} : vector<168x512xbf16>, vector<512x128xbf16>, vector<168x128xf32> -> vector<168x128xf32>
    %c0_3 = arith.constant 0 : index
    %c0_4 = arith.constant 0 : index
    %3 = vector.load %arg4[%c0_3, %c0_4] : memref<1x128xf32, #tpu.memory_space<vmem>>, vector<1x128xf32>
    %4 = vector.broadcast %3 : vector<1x128xf32> to vector<168x128xf32>
    %5 = arith.addf %2, %4 : vector<168x128xf32>
    %cst_5 = arith.constant 0.000000e+00 : f32
    %6 = vector.broadcast %cst_5 : f32 to vector<168x128xf32>
    %7 = arith.maximumf %5, %6 : vector<168x128xf32>
    %8 = arith.truncf %7 : vector<168x128xf32> to vector<168x128xbf16>
    %c0_6 = arith.constant 0 : index
    %c0_7 = arith.constant 0 : index
    %9 = vector.load %arg5[%c0_6, %c0_7] : memref<168x128xbf16, #tpu.memory_space<vmem>>, vector<168x128xbf16>
    tpu.vector_store %arg5[%c0_6, %c0_7], %8 {strides = array<i32>} : memref<168x128xbf16, #tpu.memory_space<vmem>>, vector<168x128xbf16>,
    return
  }
  func.func @transform_0(%arg0: i32, %arg1: i32) -> (i32, i32) {
    %c0_i32 = arith.constant 0 : i32
    %c0_i32_0 = arith.constant 0 : i32
    return %arg0, %c0_i32 : i32, i32
  }
  func.func @transform_1(%arg0: i32, %arg1: i32) -> (i32, i32) {
    %c0_i32 = arith.constant 0 : i32
    %c0_i32_0 = arith.constant 0 : i32
    return %c0_i32, %arg1 : i32, i32
  }
  func.func @transform_2(%arg0: i32, %arg1: i32) -> (i32, i32) {
    %c0_i32 = arith.constant 0 : i32
    %c0_i32_0 = arith.constant 0 : i32
    return %c0_i32, %arg1 : i32, i32
  }
  func.func @transform_3(%arg0: i32, %arg1: i32) -> (i32, i32) {
    %c0_i32 = arith.constant 0 : i32
    return %arg0, %arg1 : i32, i32
  }
}

module attributes {stable_mosaic.version = 11 : i64} {
  func.func @_matmul_bias_1k_kernel(%arg0: i32, %arg1: i32, %arg2: memref<168x288xbf16, #tpu.memory_space<vmem>>, %arg3: memref<288x128xbf16, #tpu.memory_space<vmem>>, %arg4: memref<1x128xf32, #tpu.memory_space<vmem>>, %arg5: memref<168x128xbf16, #tpu.memory_space<vmem>>) attributes {dimension_semantics = [#tpu.dimension_semantics<parallel>, #tpu.dimension_semantics<parallel>], iteration_bounds = array<i64: 1, 1>, scalar_prefetch = 0 : i64, scratch_operands = 0 : i64, tpu.core_type = #tpu.core_type<tc>, window_params = [{transform_indices = @transform_0, window_bounds = array<i64: 168, 288>}, {transform_indices = @transform_1, window_bounds = array<i64: 288, 128>}, {transform_indices = @transform_2, window_bounds = array<i64: 1, 128>}, {transform_indices = @transform_3, window_bounds = array<i64: 168, 128>}]} {
    %c0 = arith.constant 0 : index
    %c0_0 = arith.constant 0 : index
    %0 = vector.load %arg2[%c0, %c0_0] : memref<168x288xbf16, #tpu.memory_space<vmem>>, vector<168x288xbf16>
    %c0_1 = arith.constant 0 : index
    %c0_2 = arith.constant 0 : index
    %1 = vector.load %arg3[%c0_1, %c0_2] : memref<288x128xbf16, #tpu.memory_space<vmem>>, vector<288x128xbf16>
    %cst = arith.constant dense<0.000000e+00> : vector<168x128xf32>
    %2 = tpu.matmul %0, %1, %cst {dimension_numbers = #tpu.dot_dimension_numbers<[1], [0], [0], [1], [0, 0, 1, 1], [], []>} : vector<168x288xbf16>, vector<288x128xbf16>, vector<168x128xf32> -> vector<168x128xf32>
    %c0_3 = arith.constant 0 : index
    %c0_4 = arith.constant 0 : index
    %3 = vector.load %arg4[%c0_3, %c0_4] : memref<1x128xf32, #tpu.memory_space<vmem>>, vector<1x128xf32>
    %4 = vector.broadcast %3 : vector<1x128xf32> to vector<168x128xf32>
    %5 = arith.addf %2, %4 : vector<168x128xf32>
    %cst_5 = arith.constant 0.000000e+00 : f32
    %6 = vector.broadcast %cst_5 : f32 to vector<168x128xf32>
    %7 = arith.maximumf %5, %6 : vector<168x128xf32>
    %8 = arith.truncf %7 : vector<168x128xf32> to vector<168x128xbf16>
    %c0_6 = arith.constant 0 : index
    %c0_7 = arith.constant 0 : index
    %9 = vector.load %arg5[%c0_6, %c0_7] : memref<168x128xbf16, #tpu.memory_space<vmem>>, vector<168x128xbf16>
    tpu.vector_store %arg5[%c0_6, %c0_7], %8 {strides = array<i32>} : memref<168x128xbf16, #tpu.memory_space<vmem>>, vector<168x128xbf16>,
    return
  }
  func.func @transform_0(%arg0: i32, %arg1: i32) -> (i32, i32) {
    %c0_i32 = arith.constant 0 : i32
    %c0_i32_0 = arith.constant 0 : i32
    return %arg0, %c0_i32 : i32, i32
  }
  func.func @transform_1(%arg0: i32, %arg1: i32) -> (i32, i32) {
    %c0_i32 = arith.constant 0 : i32
    %c0_i32_0 = arith.constant 0 : i32
    return %c0_i32, %arg1 : i32, i32
  }
  func.func @transform_2(%arg0: i32, %arg1: i32) -> (i32, i32) {
    %c0_i32 = arith.constant 0 : i32
    %c0_i32_0 = arith.constant 0 : i32
    return %c0_i32, %arg1 : i32, i32
  }
  func.func @transform_3(%arg0: i32, %arg1: i32) -> (i32, i32) {
    %c0_i32 = arith.constant 0 : i32
    return %arg0, %arg1 : i32, i32
  }
}

module attributes {stable_mosaic.version = 11 : i64} {
  func.func @_matmul_bias_1k_kernel(%arg0: i32, %arg1: i32, %arg2: memref<168x576xbf16, #tpu.memory_space<vmem>>, %arg3: memref<576x128xbf16, #tpu.memory_space<vmem>>, %arg4: memref<1x128xf32, #tpu.memory_space<vmem>>, %arg5: memref<168x128xbf16, #tpu.memory_space<vmem>>) attributes {dimension_semantics = [#tpu.dimension_semantics<parallel>, #tpu.dimension_semantics<parallel>], iteration_bounds = array<i64: 1, 1>, scalar_prefetch = 0 : i64, scratch_operands = 0 : i64, tpu.core_type = #tpu.core_type<tc>, window_params = [{transform_indices = @transform_0, window_bounds = array<i64: 168, 576>}, {transform_indices = @transform_1, window_bounds = array<i64: 576, 128>}, {transform_indices = @transform_2, window_bounds = array<i64: 1, 128>}, {transform_indices = @transform_3, window_bounds = array<i64: 168, 128>}]} {
    %c0 = arith.constant 0 : index
    %c0_0 = arith.constant 0 : index
    %0 = vector.load %arg2[%c0, %c0_0] : memref<168x576xbf16, #tpu.memory_space<vmem>>, vector<168x576xbf16>
    %c0_1 = arith.constant 0 : index
    %c0_2 = arith.constant 0 : index
    %1 = vector.load %arg3[%c0_1, %c0_2] : memref<576x128xbf16, #tpu.memory_space<vmem>>, vector<576x128xbf16>
    %cst = arith.constant dense<0.000000e+00> : vector<168x128xf32>
    %2 = tpu.matmul %0, %1, %cst {dimension_numbers = #tpu.dot_dimension_numbers<[1], [0], [0], [1], [0, 0, 1, 1], [], []>} : vector<168x576xbf16>, vector<576x128xbf16>, vector<168x128xf32> -> vector<168x128xf32>
    %c0_3 = arith.constant 0 : index
    %c0_4 = arith.constant 0 : index
    %3 = vector.load %arg4[%c0_3, %c0_4] : memref<1x128xf32, #tpu.memory_space<vmem>>, vector<1x128xf32>
    %4 = vector.broadcast %3 : vector<1x128xf32> to vector<168x128xf32>
    %5 = arith.addf %2, %4 : vector<168x128xf32>
    %cst_5 = arith.constant 0.000000e+00 : f32
    %6 = vector.broadcast %cst_5 : f32 to vector<168x128xf32>
    %7 = arith.maximumf %5, %6 : vector<168x128xf32>
    %8 = arith.truncf %7 : vector<168x128xf32> to vector<168x128xbf16>
    %c0_6 = arith.constant 0 : index
    %c0_7 = arith.constant 0 : index
    %9 = vector.load %arg5[%c0_6, %c0_7] : memref<168x128xbf16, #tpu.memory_space<vmem>>, vector<168x128xbf16>
    tpu.vector_store %arg5[%c0_6, %c0_7], %8 {strides = array<i32>} : memref<168x128xbf16, #tpu.memory_space<vmem>>, vector<168x128xbf16>,
    return
  }
  func.func @transform_0(%arg0: i32, %arg1: i32) -> (i32, i32) {
    %c0_i32 = arith.constant 0 : i32
    %c0_i32_0 = arith.constant 0 : i32
    return %arg0, %c0_i32 : i32, i32
  }
  func.func @transform_1(%arg0: i32, %arg1: i32) -> (i32, i32) {
    %c0_i32 = arith.constant 0 : i32
    %c0_i32_0 = arith.constant 0 : i32
    return %c0_i32, %arg1 : i32, i32
  }
  func.func @transform_2(%arg0: i32, %arg1: i32) -> (i32, i32) {
    %c0_i32 = arith.constant 0 : i32
    %c0_i32_0 = arith.constant 0 : i32
    return %c0_i32, %arg1 : i32, i32
  }
  func.func @transform_3(%arg0: i32, %arg1: i32) -> (i32, i32) {
    %c0_i32 = arith.constant 0 : i32
    return %arg0, %arg1 : i32, i32
  }
}

module attributes {stable_mosaic.version = 11 : i64} {
  func.func @_mlp_head_kernel(%arg0: i32, %arg1: memref<8x2688xbf16, #tpu.memory_space<vmem>>, %arg2: memref<2688x512xbf16, #tpu.memory_space<vmem>>, %arg3: memref<1x512xf32, #tpu.memory_space<vmem>>, %arg4: memref<512x128xbf16, #tpu.memory_space<vmem>>, %arg5: memref<1x128xf32, #tpu.memory_space<vmem>>, %arg6: memref<8x128xf32, #tpu.memory_space<vmem>>, %arg7: memref<8x512xf32, #tpu.memory_space<vmem>>) attributes {dimension_semantics = [#tpu.dimension_semantics<arbitrary>], iteration_bounds = array<i64: 2>, scalar_prefetch = 0 : i64, scratch_operands = 1 : i64, tpu.core_type = #tpu.core_type<tc>, window_params = [{transform_indices = @transform_0, window_bounds = array<i64: 8, 2688>}, {transform_indices = @transform_1, window_bounds = array<i64: 2688, 512>}, {pipeline_mode = #tpu.pipeline_mode<synchronous>, transform_indices = @transform_2, window_bounds = array<i64: 1, 512>}, {pipeline_mode = #tpu.pipeline_mode<synchronous>, transform_indices = @transform_3, window_bounds = array<i64: 512, 128>}, {pipeline_mode = #tpu.pipeline_mode<synchronous>, transform_indices = @transform_4, window_bounds = array<i64: 1, 128>}, {pipeline_mode = #tpu.pipeline_mode<synchronous>, transform_indices = @transform_5, window_bounds = array<i64: 8, 128>}]} {
    %c0_i32 = arith.constant 0 : i32
    %0 = arith.cmpi eq, %arg0, %c0_i32 : i32
    %1 = arith.extui %0 : i1 to i32
    %c0_i32_0 = arith.constant 0 : i32
    %2 = arith.cmpi ne, %1, %c0_i32_0 : i32
    scf.if %2 {
      %cst_9 = arith.constant 0.000000e+00 : f32
      %12 = vector.broadcast %cst_9 : f32 to vector<8x512xf32>
      %c0_10 = arith.constant 0 : index
      %c0_11 = arith.constant 0 : index
      %13 = vector.load %arg7[%c0_10, %c0_11] : memref<8x512xf32, #tpu.memory_space<vmem>>, vector<8x512xf32>
      tpu.vector_store %arg7[%c0_10, %c0_11], %12 {strides = array<i32>} : memref<8x512xf32, #tpu.memory_space<vmem>>, vector<8x512xf32>,
    } else {
    }
    %c0 = arith.constant 0 : index
    %c0_1 = arith.constant 0 : index
    %3 = vector.load %arg7[%c0, %c0_1] : memref<8x512xf32, #tpu.memory_space<vmem>>, vector<8x512xf32>
    %c0_2 = arith.constant 0 : index
    %c0_3 = arith.constant 0 : index
    %4 = vector.load %arg1[%c0_2, %c0_3] : memref<8x2688xbf16, #tpu.memory_space<vmem>>, vector<8x2688xbf16>
    %c0_4 = arith.constant 0 : index
    %c0_5 = arith.constant 0 : index
    %5 = vector.load %arg2[%c0_4, %c0_5] : memref<2688x512xbf16, #tpu.memory_space<vmem>>, vector<2688x512xbf16>
    %cst = arith.constant dense<0.000000e+00> : vector<8x512xf32>
    %6 = tpu.matmul %4, %5, %cst {dimension_numbers = #tpu.dot_dimension_numbers<[1], [0], [0], [1], [0, 0, 1, 1], [], []>} : vector<8x2688xbf16>, vector<2688x512xbf16>, vector<8x512xf32> -> vector<8x512xf32>
    %7 = arith.addf %3, %6 : vector<8x512xf32>
    %c0_6 = arith.constant 0 : index
    %c0_7 = arith.constant 0 : index
    %8 = vector.load %arg7[%c0_6, %c0_7] : memref<8x512xf32, #tpu.memory_space<vmem>>, vector<8x512xf32>
    tpu.vector_store %arg7[%c0_6, %c0_7], %7 {strides = array<i32>} : memref<8x512xf32, #tpu.memory_space<vmem>>, vector<8x512xf32>,
    %c1_i32 = arith.constant 1 : i32
    %9 = arith.cmpi eq, %arg0, %c1_i32 : i32
    %10 = arith.extui %9 : i1 to i32
    %c0_i32_8 = arith.constant 0 : i32
    %11 = arith.cmpi ne, %10, %c0_i32_8 : i32
    scf.if %11 {
      %c0_9 = arith.constant 0 : index
      %c0_10 = arith.constant 0 : index
      %12 = vector.load %arg7[%c0_9, %c0_10] : memref<8x512xf32, #tpu.memory_space<vmem>>, vector<8x512xf32>
      %c0_11 = arith.constant 0 : index
      %c0_12 = arith.constant 0 : index
      %13 = vector.load %arg3[%c0_11, %c0_12] : memref<1x512xf32, #tpu.memory_space<vmem>>, vector<1x512xf32>
      %14 = vector.broadcast %13 : vector<1x512xf32> to vector<8x512xf32>
      %15 = arith.addf %12, %14 : vector<8x512xf32>
      %cst_13 = arith.constant 0.000000e+00 : f32
      %16 = vector.broadcast %cst_13 : f32 to vector<8x512xf32>
      %17 = arith.maximumf %15, %16 : vector<8x512xf32>
      %18 = arith.truncf %17 : vector<8x512xf32> to vector<8x512xbf16>
      %c0_14 = arith.constant 0 : index
      %c0_15 = arith.constant 0 : index
      %19 = vector.load %arg4[%c0_14, %c0_15] : memref<512x128xbf16, #tpu.memory_space<vmem>>, vector<512x128xbf16>
      %cst_16 = arith.constant dense<0.000000e+00> : vector<8x128xf32>
      %20 = tpu.matmul %18, %19, %cst_16 {dimension_numbers = #tpu.dot_dimension_numbers<[1], [0], [0], [1], [0, 0, 1, 1], [], []>} : vector<8x512xbf16>, vector<512x128xbf16>, vector<8x128xf32> -> vector<8x128xf32>
      %c0_17 = arith.constant 0 : index
      %c0_18 = arith.constant 0 : index
      %21 = vector.load %arg5[%c0_17, %c0_18] : memref<1x128xf32, #tpu.memory_space<vmem>>, vector<1x128xf32>
      %22 = vector.broadcast %21 : vector<1x128xf32> to vector<8x128xf32>
      %23 = arith.addf %20, %22 : vector<8x128xf32>
      %c0_19 = arith.constant 0 : index
      %c0_20 = arith.constant 0 : index
      %24 = vector.load %arg6[%c0_19, %c0_20] : memref<8x128xf32, #tpu.memory_space<vmem>>, vector<8x128xf32>
      tpu.vector_store %arg6[%c0_19, %c0_20], %23 {strides = array<i32>} : memref<8x128xf32, #tpu.memory_space<vmem>>, vector<8x128xf32>,
    } else {
    }
    return
  }
  func.func @transform_0(%arg0: i32) -> (i32, i32) {
    %c0_i32 = arith.constant 0 : i32
    %c0_i32_0 = arith.constant 0 : i32
    return %c0_i32, %arg0 : i32, i32
  }
  func.func @transform_1(%arg0: i32) -> (i32, i32) {
    %c0_i32 = arith.constant 0 : i32
    %c0_i32_0 = arith.constant 0 : i32
    return %arg0, %c0_i32 : i32, i32
  }
  func.func @transform_2(%arg0: i32) -> (i32, i32) {
    %c0_i32 = arith.constant 0 : i32
    %c0_i32_0 = arith.constant 0 : i32
    %c0_i32_1 = arith.constant 0 : i32
    return %c0_i32, %c0_i32_0 : i32, i32
  }
  func.func @transform_3(%arg0: i32) -> (i32, i32) {
    %c0_i32 = arith.constant 0 : i32
    %c0_i32_0 = arith.constant 0 : i32
    %c0_i32_1 = arith.constant 0 : i32
    return %c0_i32, %c0_i32_0 : i32, i32
  }
  func.func @transform_4(%arg0: i32) -> (i32, i32) {
    %c0_i32 = arith.constant 0 : i32
    %c0_i32_0 = arith.constant 0 : i32
    %c0_i32_1 = arith.constant 0 : i32
    return %c0_i32, %c0_i32_0 : i32, i32
  }
  func.func @transform_5(%arg0: i32) -> (i32, i32) {
    %c0_i32 = arith.constant 0 : i32
    %c0_i32_0 = arith.constant 0 : i32
    %c0_i32_1 = arith.constant 0 : i32
    return %c0_i32, %c0_i32_0 : i32, i32
  }
}

</mosaic_0001>

<llo_original>
// kernel: _lambda_.5
$region0: #{_lambda_.5}
  #allocation0 [shape = 'u32[]', space=smem, size = 0x4, offset = 0x4, fixed_abs, tag = 'smem constant byte address 0x4 - core index']
  #allocation1 [shape = 'u32[144,128]{1,0:T(1,128)}', space=vmem, size = 0x12000, scoped, tag = 'internal scratch']
  %s0 = inlined_call_operand.vmem [shape: bf16[800,256], index: 0, kind: input, shape index: {}]
  %s1 = inlined_call_operand.vmem [shape: bf16[256,128], index: 1, kind: input, shape index: {}]
  %s2 = inlined_call_operand.vmem [shape: f32[1,128], index: 2, kind: input, shape index: {}]
  %s3 = inlined_call_operand.vmem [shape: bf16[800,128], index: 3, kind: output, shape index: {}]
  %s4 = sld [smem:[#allocation0]]
  $region45: #{_lambda_.5} parent=0
    _
  %s6 = ssub.s32 1, %s4
  %s7 = scalar_select 0, %s6, %s4
  loop: start=0, step=1, limit=4
  $region2: #{_lambda_.5} parent=0 // loop_pre_header
    _
  $region3: #{_lambda_.5} parent=0 // loop_header
    %s9 = sphi 0, %s13
    %p10 = scmp.ge.s32.totalorder %s9, 4
    %s16 = sphi 0, %s28
    %s17 = sphi 0, %s24
    %s18 = sphi 0, %s16
    %s19 = sphi 0, %s17
    %s20 = sphi 0, %s18
    %s21 = sphi 0, %s19
    %s31 = sphi 0, %s33
    %s34 = sphi 0, %s31
    %s35 = sphi 0, %s34
    %s51 = sphi 0, %s35
    %s57 = sphi 0, %s59
    %s60 = sphi 0, %s57
    %s61 = sphi 0, %s60
    %s77 = sphi 0, %s61
    %s83 = sphi 0, %s85
    %s86 = sphi 0, %s83
    %s87 = sphi 0, %s86
    %s103 = sphi 0, %s87
    %s111 = sphi 0, %s113
    %s114 = sphi 0, %s111
    %s115 = sphi 0, %s114
    %s131 = sphi 0, %s115
  $region4: #{_lambda_.5} parent=0 // loop_header_branch
    %12 = sbr.rel (%p10) target = $region8
  $region5: #{_lambda_.5} parent=0 // loop_body
    %s14 = ssub.s32 %s9, 1
    %s15 = ssub.s32 %s9, 2
    %s22 = sadd.s32 1, %s17
    %p23 = scmp.ge.s32.totalorder %s22, 1
    %s24 = scalar_select %p23, 0, %s22
    %s25 = sadd.s32 1, %s16
    %s26 = scalar_select %p23, %s25, %s16
    %p27 = scmp.ge.s32.totalorder %s26, 2
    %s28 = scalar_select %p27, 0, %s26
    %s29 = ssub.s32 %s16, %s28
    %p30 = scmp.eq.s32.totalorder %s29, 0
    %s32 = sadd.s32 %s31, 1
    %s33 = scalar_select %p30, %s31, %s32
    %p36 = pneg %p30
    %p37 = scmp.eq.s32.totalorder %s9, 1
    %p38 = por %p36, %p37
    %p39 = scmp.ne.s32.totalorder %s31, %s34
    %p40 = scmp.eq.s32.totalorder %s9, 0
    %p41 = por %p39, %p40
    %p42 = scmp.ne.s32.totalorder %s31, %s34
    %p43 = scmp.eq.s32.totalorder %s14, 1
    %p44 = por %p42, %p43
    %p45 = scmp.ne.s32.totalorder %s34, %s35
    %p46 = scmp.eq.s32.totalorder %s14, 0
    %p47 = por %p45, %p46
    %p48 = scmp.ne.s32.totalorder %s34, %s35
    %p49 = scmp.eq.s32.totalorder %s15, 1
    %p50 = por %p48, %p49
    %p52 = scmp.ne.s32.totalorder %s35, %s51
    %p53 = scmp.eq.s32.totalorder %s15, 0
    %p54 = por %p52, %p53
    %s55 = ssub.s32 %s17, %s24
    %p56 = scmp.eq.s32.totalorder %s55, 0
    %s58 = sadd.s32 %s57, 1
    %s59 = scalar_select %p56, %s57, %s58
    %p62 = pneg %p56
    %p63 = scmp.eq.s32.totalorder %s9, 1
    %p64 = por %p62, %p63
    %p65 = scmp.ne.s32.totalorder %s57, %s60
    %p66 = scmp.eq.s32.totalorder %s9, 0
    %p67 = por %p65, %p66
    %p68 = scmp.ne.s32.totalorder %s57, %s60
    %p69 = scmp.eq.s32.totalorder %s14, 1
    %p70 = por %p68, %p69
    %p71 = scmp.ne.s32.totalorder %s60, %s61
    %p72 = scmp.eq.s32.totalorder %s14, 0
    %p73 = por %p71, %p72
    %p74 = scmp.ne.s32.totalorder %s60, %s61
    %p75 = scmp.eq.s32.totalorder %s15, 1
    %p76 = por %p74, %p75
    %p78 = scmp.ne.s32.totalorder %s61, %s77
    %p79 = scmp.eq.s32.totalorder %s15, 0
    %p80 = por %p78, %p79
    %s81 = ssub.s32 %s17, %s24
    %p82 = scmp.eq.s32.totalorder %s81, 0
    %s84 = sadd.s32 %s83, 1
    %s85 = scalar_select %p82, %s83, %s84
    %p88 = pneg %p82
    %p89 = scmp.eq.s32.totalorder %s9, 1
    %p90 = por %p88, %p89
    %p91 = scmp.ne.s32.totalorder %s83, %s86
    %p92 = scmp.eq.s32.totalorder %s9, 0
    %p93 = por %p91, %p92
    %p94 = scmp.ne.s32.totalorder %s83, %s86
    %p95 = scmp.eq.s32.totalorder %s14, 1
    %p96 = por %p94, %p95
    %p97 = scmp.ne.s32.totalorder %s86, %s87
    %p98 = scmp.eq.s32.totalorder %s14, 0
    %p99 = por %p97, %p98
    %p100 = scmp.ne.s32.totalorder %s86, %s87
    %p101 = scmp.eq.s32.totalorder %s15, 1
    %p102 = por %p100, %p101
    %p104 = scmp.ne.s32.totalorder %s87, %s103
    %p105 = scmp.eq.s32.totalorder %s15, 0
    %p106 = por %p104, %p105
    %s107 = ssub.s32 %s16, %s28
    %s108 = ssub.s32 %s17, %s24
    %s109 = sor.u32 %s107, %s108
    %p110 = scmp.eq.s32.totalorder %s109, 0
    %s112 = sadd.s32 %s111, 1
    %s113 = scalar_select %p110, %s111, %s112
    %p116 = pneg %p110
    %p117 = scmp.eq.s32.totalorder %s9, 1
    %p118 = por %p116, %p117
    %p119 = scmp.ne.s32.totalorder %s111, %s114
    %p120 = scmp.eq.s32.totalorder %s9, 0
    %p121 = por %p119, %p120
    %p122 = scmp.ne.s32.totalorder %s111, %s114
    %p123 = scmp.eq.s32.totalorder %s14, 1
    %p124 = por %p122, %p123
    %p125 = scmp.ne.s32.totalorder %s114, %s115
    %p126 = scmp.eq.s32.totalorder %s14, 0
    %p127 = por %p125, %p126
    %p128 = scmp.ne.s32.totalorder %s114, %s115
    %p129 = scmp.eq.s32.totalorder %s15, 1
    %p130 = por %p128, %p129
    %p132 = scmp.ne.s32.totalorder %s115, %s131
    %p133 = scmp.eq.s32.totalorder %s15, 0
    %p134 = por %p132, %p133
    %p135 = scmp.le.s32.totalorder 1, %s9
    %p136 = scmp.lt.s32.totalorder %s9, 3
    %p137 = pnand %p135, %p136
    %p138 = pneg %p137
    // Predicated region
    $region9: #{_lambda_.5} parent=5 // pred_check
      _
    $region10: #{_lambda_.5} parent=5 // pred_check_branch
      %140 = sbr.rel (%p137) target = $region12
    $region11: #{_lambda_.5} parent=5 // pred_region
      %s141 = ssub.s32 %s9, 1
      // Predicated region
      $region13: #{_lambda_.5} parent=11 // pred_check
        %p142 = pneg %p73
      $region14: #{_lambda_.5} parent=11 // pred_check_branch
        %144 = sbr.rel (%p142) target = $region16
      $region15: #{_lambda_.5} parent=11 // pred_region
        %p145 = scmp.lt.s32.totalorder %s19, 0
        %s146 = scalar_select %p145, %s19, 0
        %s147 = smul.addr %s146, 4
        %s148 = scalar_lea.vmem %s1, %s147
      $region16: #{_lambda_.5} parent=11 // pred_fallthru
        _
      // Predicated region
      $region17: #{_lambda_.5} parent=11 // pred_check
        %p149 = pneg %p99
      $region18: #{_lambda_.5} parent=11 // pred_check_branch
        %151 = sbr.rel (%p149) target = $region20
      $region19: #{_lambda_.5} parent=11 // pred_region
        %p152 = scmp.lt.s32.totalorder %s19, 0
        %s153 = scalar_select %p152, %s19, 0
        %s154 = scalar_lea.vmem %s2, %s153
      $region20: #{_lambda_.5} parent=11 // pred_fallthru
        _
    $region12: #{_lambda_.5} parent=5 // pred_fallthru
      _
    %p155 = scmp.lt.s32.totalorder %s9, 2
    // Predicated region
    $region21: #{_lambda_.5} parent=5 // pred_check
      %p156 = pneg %p155
    $region22: #{_lambda_.5} parent=5 // pred_check_branch
      %158 = sbr.rel (%p156) target = $region24
    $region23: #{_lambda_.5} parent=5 // pred_region
      // Predicated region
      $region25: #{_lambda_.5} parent=23 // pred_check
        %p159 = pneg %p41
      $region26: #{_lambda_.5} parent=23 // pred_check_branch
        %161 = sbr.rel (%p159) target = $region28
      $region27: #{_lambda_.5} parent=23 // pred_region
        %s162 = smul.u32 50, %s16
        %p163 = scmp.lt.s32.totalorder %s162, 99
        %s164 = scalar_select %p163, %s162, 99
        %s165 = smul.addr %s164, 2
        %s166 = smul.addr %s165, 4
        %s167 = scalar_lea.vmem %s0, %s166
        %s168 = smul.u32 50, %s16
      $region28: #{_lambda_.5} parent=23 // pred_fallthru
        _
    $region24: #{_lambda_.5} parent=5 // pred_fallthru
      _
    %p169 = scmp.le.s32.totalorder 1, %s9
    %p170 = scmp.lt.s32.totalorder %s9, 3
    %p171 = pnand %p169, %p170
    %p172 = pneg %p171
    // Predicated region
    $region29: #{_lambda_.5} parent=5 // pred_check
      _
    $region30: #{_lambda_.5} parent=5 // pred_check_branch
      %174 = sbr.rel (%p171) target = $region32
    $region31: #{_lambda_.5} parent=5 // pred_region
      %s175 = ssub.s32 %s9, 1
      %s176 = smul.u32 50, %s18
      %p177 = scmp.lt.s32.totalorder %s176, 99
      %s178 = scalar_select %p177, %s176, 99
      %s179 = smul.addr %s178, 2
      %s180 = smul.addr %s179, 4
      %s181 = scalar_lea.vmem %s0, %s180
      %p182 = pneg %p47
      %p183 = pneg %p44
      %p184 = scmp.lt.s32.totalorder %s19, 0
      %s185 = scalar_select %p184, %s19, 0
      %s186 = smul.addr %s185, 4
      %s187 = scalar_lea.vmem %s1, %s186
      %p188 = pneg %p73
      %p189 = pneg %p70
      %p190 = scmp.lt.s32.totalorder %s19, 0
      %s191 = scalar_select %p190, %s19, 0
      %s192 = scalar_lea.vmem %s2, %s191
      %p193 = pneg %p99
      %p194 = pneg %p96
      %p195 = pneg %p127
      %p196 = pneg %p124
      %s197 = smul.u32 50, %s18
      %p198 = scmp.lt.s32.totalorder %s197, 99
      %s199 = scalar_select %p198, %s197, 99
      %p200 = scmp.lt.s32.totalorder %s19, 0
      %s201 = scalar_select %p200, %s19, 0
      %s202 = sadd.s32 %s201, %s199
      %s203 = smul.addr %s202, 4
      %s204 = scalar_lea.vmem %s3, %s203
      %s205 = smul.u32 50, %s18
      %p206 = scmp.lt.s32.totalorder %s205, 99
      %s207 = scalar_select %p206, %s205, 99
      %s208 = smul.addr %s207, 2
      %s209 = smul.addr %s208, 4
      %s210 = scalar_lea.vmem %s0, %s209
      %s211 = smul.u32 50, %s18
      %p212 = scmp.lt.s32.totalorder %s19, 0
      %s213 = scalar_select %p212, %s19, 0
      %s214 = smul.addr %s213, 4
      %s215 = scalar_lea.vmem %s1, %s214
      %p216 = scmp.lt.s32.totalorder %s19, 0
      %s217 = scalar_select %p216, %s19, 0
      %s218 = scalar_lea.vmem %s2, %s217
      %s219 = smul.u32 50, %s18
      %p220 = scmp.lt.s32.totalorder %s219, 99
      %s221 = scalar_select %p220, %s219, 99
      %p222 = scmp.lt.s32.totalorder %s19, 0
      %s223 = scalar_select %p222, %s19, 0
      %s224 = sadd.s32 %s223, %s221
      %s225 = smul.addr %s224, 4
      %s226 = scalar_lea.vmem %s3, %s225
      %s227 = smul.u32 50, %s18
      %v229 = vld [vmem:[%s210] sm:$0xff]
      %v230 = vld [vmem:[%s210 + $0x8] sm:$0xff]
      %v231 = vld [vmem:[%s210 + $0x10] sm:$0xff]
      %v232 = vld [vmem:[%s210 + $0x18] sm:$0xff]
      %v233 = vld [vmem:[%s210 + $0x20] sm:$0xff]
      %v234 = vld [vmem:[%s210 + $0x28] sm:$0xff]
      %v235 = vld [vmem:[%s210 + $0x30] sm:$0xff]
      %v236 = vld [vmem:[%s210 + $0x38] sm:$0xff]
      %v237 = vld [vmem:[%s210 + $0x40] sm:$0xff]
      %v238 = vld [vmem:[%s210 + $0x48] sm:$0xff]
      %v239 = vld [vmem:[%s210 + $0x50] sm:$0xff]
      %v240 = vld [vmem:[%s210 + $0x58] sm:$0xff]
      %v241 = vld [vmem:[%s210 + $0x60] sm:$0xff]
      %v242 = vld [vmem:[%s210 + $0x68] sm:$0xff]
      %v243 = vld [vmem:[%s210 + $0x70] sm:$0xff]
      %v244 = vld [vmem:[%s210 + $0x78] sm:$0xff]
      %v245 = vld [vmem:[%s210 + $0x80] sm:$0xff]
      %v246 = vld [vmem:[%s210 + $0x88] sm:$0xff]
      %v247 = vld [vmem:[%s210 + $0x90] sm:$0xff]
      %v248 = vld [vmem:[%s210 + $0x98] sm:$0xff]
      %v249 = vld [vmem:[%s210 + $0xa0] sm:$0xff]
      %v250 = vld [vmem:[%s210 + $0xa8] sm:$0xff]
      %v251 = vld [vmem:[%s210 + $0xb0] sm:$0xff]
      %v252 = vld [vmem:[%s210 + $0xb8] sm:$0xff]
      %v253 = vld [vmem:[%s210 + $0xc0] sm:$0xff]
      %v254 = vld [vmem:[%s210 + $0xc8] sm:$0xff]
      %v255 = vld [vmem:[%s210 + $0xd0] sm:$0xff]
      %v256 = vld [vmem:[%s210 + $0xd8] sm:$0xff]
      %v257 = vld [vmem:[%s210 + $0xe0] sm:$0xff]
      %v258 = vld [vmem:[%s210 + $0xe8] sm:$0xff]
      %v259 = vld [vmem:[%s210 + $0xf0] sm:$0xff]
      %v260 = vld [vmem:[%s210 + $0xf8] sm:$0xff]
      %v261 = vld [vmem:[%s210 + $0x100] sm:$0xff]
      %v262 = vld [vmem:[%s210 + $0x108] sm:$0xff]
      %v263 = vld [vmem:[%s210 + $0x110] sm:$0xff]
      %v264 = vld [vmem:[%s210 + $0x118] sm:$0xff]
      %v265 = vld [vmem:[%s210 + $0x120] sm:$0xff]
      %v266 = vld [vmem:[%s210 + $0x128] sm:$0xff]
      %v267 = vld [vmem:[%s210 + $0x130] sm:$0xff]
      %v268 = vld [vmem:[%s210 + $0x138] sm:$0xff]
      %v269 = vld [vmem:[%s210 + $0x140] sm:$0xff]
      %v270 = vld [vmem:[%s210 + $0x148] sm:$0xff]
      %v271 = vld [vmem:[%s210 + $0x150] sm:$0xff]
      %v272 = vld [vmem:[%s210 + $0x158] sm:$0xff]
      %v273 = vld [vmem:[%s210 + $0x160] sm:$0xff]
      %v274 = vld [vmem:[%s210 + $0x168] sm:$0xff]
      %v275 = vld [vmem:[%s210 + $0x170] sm:$0xff]
      %v276 = vld [vmem:[%s210 + $0x178] sm:$0xff]
      %v277 = vld [vmem:[%s210 + $0x180] sm:$0xff]
      %v278 = vld [vmem:[%s210 + $0x188] sm:$0xff]
      %v279 = vld [vmem:[%s215] sm:$0xf]
      %v280 = vld [vmem:[%s215 + $0x4] sm:$0xf]
      %v281 = vld [vmem:[%s215 + $0x8] sm:$0xf]
      %v282 = vld [vmem:[%s215 + $0xc] sm:$0xf]
      %v283 = vld [vmem:[%s215 + $0x10] sm:$0xf]
      %v284 = vld [vmem:[%s215 + $0x14] sm:$0xf]
      %v285 = vld [vmem:[%s215 + $0x18] sm:$0xf]
      %v286 = vld [vmem:[%s215 + $0x1c] sm:$0xf]
      %v287 = vld [vmem:[%s215 + $0x20] sm:$0xf]
      %v288 = vld [vmem:[%s215 + $0x24] sm:$0xf]
      %v289 = vld [vmem:[%s215 + $0x28] sm:$0xf]
      %v290 = vld [vmem:[%s215 + $0x2c] sm:$0xf]
      %v291 = vld [vmem:[%s215 + $0x30] sm:$0xf]
      %v292 = vld [vmem:[%s215 + $0x34] sm:$0xf]
      %v293 = vld [vmem:[%s215 + $0x38] sm:$0xf]
      %v294 = vld [vmem:[%s215 + $0x3c] sm:$0xf]
      %v295 = vld [vmem:[%s215 + $0x40] sm:$0xf]
      %v296 = vld [vmem:[%s215 + $0x44] sm:$0xf]
      %v297 = vld [vmem:[%s215 + $0x48] sm:$0xf]
      %v298 = vld [vmem:[%s215 + $0x4c] sm:$0xf]
      %v299 = vld [vmem:[%s215 + $0x50] sm:$0xf]
      %v300 = vld [vmem:[%s215 + $0x54] sm:$0xf]
      %v301 = vld [vmem:[%s215 + $0x58] sm:$0xf]
      %v302 = vld [vmem:[%s215 + $0x5c] sm:$0xf]
      %v303 = vld [vmem:[%s215 + $0x60] sm:$0xf]
      %v304 = vld [vmem:[%s215 + $0x64] sm:$0xf]
      %v305 = vld [vmem:[%s215 + $0x68] sm:$0xf]
      %v306 = vld [vmem:[%s215 + $0x6c] sm:$0xf]
      %v307 = vld [vmem:[%s215 + $0x70] sm:$0xf]
      %v308 = vld [vmem:[%s215 + $0x74] sm:$0xf]
      %v309 = vld [vmem:[%s215 + $0x78] sm:$0xf]
      %v310 = vld [vmem:[%s215 + $0x7c] sm:$0xf]
      %v311 = vld [vmem:[%s218] sm:$0x1]
      %v313 = vlaneseq
      %v314 = vshrl.u32 %v313, 7
      %v315 = vsub.s32 0, %v314
      %v316 = vrot.slane %v311, %v315
      %v368 = vunpack.c.l.b16 %v229
      %v369 = vunpack.c.h.b16 %v229
      %v370 = vunpack.c.l.b16 %v230
      %v371 = vunpack.c.h.b16 %v230
      %v372 = vunpack.c.l.b16 %v231
      %v373 = vunpack.c.h.b16 %v231
      %v374 = vunpack.c.l.b16 %v232
      %v375 = vunpack.c.h.b16 %v232
      %v376 = vunpack.c.l.b16 %v233
      %v377 = vunpack.c.h.b16 %v233
      %v378 = vunpack.c.l.b16 %v234
      %v379 = vunpack.c.h.b16 %v234
      %v380 = vunpack.c.l.b16 %v235
      %v381 = vunpack.c.h.b16 %v235
      %v382 = vunpack.c.l.b16 %v236
      %v383 = vunpack.c.h.b16 %v236
      %v384 = vunpack.c.l.b16 %v237
      %v385 = vunpack.c.h.b16 %v237
      %v386 = vunpack.c.l.b16 %v238
      %v387 = vunpack.c.h.b16 %v238
      %v388 = vunpack.c.l.b16 %v239
      %v389 = vunpack.c.h.b16 %v239
      %v390 = vunpack.c.l.b16 %v240
      %v391 = vunpack.c.h.b16 %v240
      %v392 = vunpack.c.l.b16 %v241
      %v393 = vunpack.c.h.b16 %v241
      %v394 = vunpack.c.l.b16 %v242
      %v395 = vunpack.c.h.b16 %v242
      %v396 = vunpack.c.l.b16 %v243
      %v397 = vunpack.c.h.b16 %v243
      %v398 = vunpack.c.l.b16 %v244
      %v399 = vunpack.c.h.b16 %v244
      %v400 = vunpack.c.l.b16 %v245
      %v401 = vunpack.c.h.b16 %v245
      %v402 = vunpack.c.l.b16 %v246
      %v403 = vunpack.c.h.b16 %v246
      %v404 = vunpack.c.l.b16 %v247
      %v405 = vunpack.c.h.b16 %v247
      %v406 = vunpack.c.l.b16 %v248
      %v407 = vunpack.c.h.b16 %v248
      %v408 = vunpack.c.l.b16 %v249
      %v409 = vunpack.c.h.b16 %v249
      %v410 = vunpack.c.l.b16 %v250
      %v411 = vunpack.c.h.b16 %v250
      %v412 = vunpack.c.l.b16 %v251
      %v413 = vunpack.c.h.b16 %v251
      %v414 = vunpack.c.l.b16 %v252
      %v415 = vunpack.c.h.b16 %v252
      %v416 = vunpack.c.l.b16 %v253
      %v417 = vunpack.c.h.b16 %v253
      %v418 = vunpack.c.l.b16 %v254
      %v419 = vunpack.c.h.b16 %v254
      %v420 = vunpack.c.l.b16 %v255
      %v421 = vunpack.c.h.b16 %v255
      %v422 = vunpack.c.l.b16 %v256
      %v423 = vunpack.c.h.b16 %v256
      %v424 = vunpack.c.l.b16 %v257
      %v425 = vunpack.c.h.b16 %v257
      %v426 = vunpack.c.l.b16 %v258
      %v427 = vunpack.c.h.b16 %v258
      %v428 = vunpack.c.l.b16 %v259
      %v429 = vunpack.c.h.b16 %v259
      %v430 = vunpack.c.l.b16 %v260
      %v431 = vunpack.c.h.b16 %v260
      %v432 = vunpack.c.l.b16 %v261
      %v433 = vunpack.c.h.b16 %v261
      %v434 = vunpack.c.l.b16 %v262
      %v435 = vunpack.c.h.b16 %v262
      %v436 = vunpack.c.l.b16 %v263
      %v437 = vunpack.c.h.b16 %v263
      %v438 = vunpack.c.l.b16 %v264
      %v439 = vunpack.c.h.b16 %v264
      %v440 = vunpack.c.l.b16 %v265
      %v441 = vunpack.c.h.b16 %v265
      %v442 = vunpack.c.l.b16 %v266
      %v443 = vunpack.c.h.b16 %v266
      %v444 = vunpack.c.l.b16 %v267
      %v445 = vunpack.c.h.b16 %v267
      %v446 = vunpack.c.l.b16 %v268
      %v447 = vunpack.c.h.b16 %v268
      %v448 = vunpack.c.l.b16 %v269
      %v449 = vunpack.c.h.b16 %v269
      %v450 = vunpack.c.l.b16 %v270
      %v451 = vunpack.c.h.b16 %v270
      %v452 = vunpack.c.l.b16 %v271
      %v453 = vunpack.c.h.b16 %v271
      %v454 = vunpack.c.l.b16 %v272
      %v455 = vunpack.c.h.b16 %v272
      %v456 = vunpack.c.l.b16 %v273
      %v457 = vunpack.c.h.b16 %v273
      %v458 = vunpack.c.l.b16 %v274
      %v459 = vunpack.c.h.b16 %v274
      %v460 = vunpack.c.l.b16 %v275
      %v461 = vunpack.c.h.b16 %v275
      %v462 = vunpack.c.l.b16 %v276
      %v463 = vunpack.c.h.b16 %v276
      %v464 = vunpack.c.l.b16 %v277
      %v465 = vunpack.c.h.b16 %v277
      %v466 = vunpack.c.l.b16 %v278
      %v467 = vunpack.c.h.b16 %v278
      %v468 = vpack.c.b16 %v370, %v368
      %v469 = vpack.c.b16 %v371, %v369
      %v470 = vpack.c.b16 %v374, %v372
      %v471 = vpack.c.b16 %v375, %v373
      %v472 = vpack.c.b16 %v378, %v376
      %v473 = vpack.c.b16 %v379, %v377
      %v474 = vpack.c.b16 %v382, %v380
      %v475 = vpack.c.b16 %v383, %v381
      %v476 = vpack.c.b16 %v386, %v384
      %v477 = vpack.c.b16 %v387, %v385
      %v478 = vpack.c.b16 %v390, %v388
      %v479 = vpack.c.b16 %v391, %v389
      %v480 = vpack.c.b16 %v394, %v392
      %v481 = vpack.c.b16 %v395, %v393
      %v482 = vpack.c.b16 %v398, %v396
      %v483 = vpack.c.b16 %v399, %v397
      %v484 = vpack.c.b16 %v402, %v400
      %v485 = vpack.c.b16 %v403, %v401
      %v486 = vpack.c.b16 %v406, %v404
      %v487 = vpack.c.b16 %v407, %v405
      %v488 = vpack.c.b16 %v410, %v408
      %v489 = vpack.c.b16 %v411, %v409
      %v490 = vpack.c.b16 %v414, %v412
      %v491 = vpack.c.b16 %v415, %v413
      %v492 = vpack.c.b16 %v418, %v416
      %v493 = vpack.c.b16 %v419, %v417
      %v494 = vpack.c.b16 %v422, %v420
      %v495 = vpack.c.b16 %v423, %v421
      %v496 = vpack.c.b16 %v426, %v424
      %v497 = vpack.c.b16 %v427, %v425
      %v498 = vpack.c.b16 %v430, %v428
      %v499 = vpack.c.b16 %v431, %v429
      %v500 = vpack.c.b16 %v434, %v432
      %v501 = vpack.c.b16 %v435, %v433
      %v502 = vpack.c.b16 %v438, %v436
      %v503 = vpack.c.b16 %v439, %v437
      %v504 = vpack.c.b16 %v442, %v440
      %v505 = vpack.c.b16 %v443, %v441
      %v506 = vpack.c.b16 %v446, %v444
      %v507 = vpack.c.b16 %v447, %v445
      %v508 = vpack.c.b16 %v450, %v448
      %v509 = vpack.c.b16 %v451, %v449
      %v510 = vpack.c.b16 %v454, %v452
      %v511 = vpack.c.b16 %v455, %v453
      %v512 = vpack.c.b16 %v458, %v456
      %v513 = vpack.c.b16 %v459, %v457
      %v514 = vpack.c.b16 %v462, %v460
      %v515 = vpack.c.b16 %v463, %v461
      %v516 = vpack.c.b16 %v466, %v464
      %v517 = vpack.c.b16 %v467, %v465
      %v600 = vunpack.c.l.b16 %v279
      %v601 = vunpack.c.l.b16 %v280
      %v602 = vunpack.c.l.b16 %v281
      %v603 = vunpack.c.l.b16 %v282
      %v604 = vunpack.c.l.b16 %v283
      %v605 = vunpack.c.l.b16 %v284
      %v606 = vunpack.c.l.b16 %v285
      %v607 = vunpack.c.l.b16 %v286
      %v608 = vunpack.c.l.b16 %v287
      %v609 = vunpack.c.l.b16 %v288
      %v610 = vunpack.c.l.b16 %v289
      %v611 = vunpack.c.l.b16 %v290
      %v612 = vunpack.c.l.b16 %v291
      %v613 = vunpack.c.l.b16 %v292
      %v614 = vunpack.c.l.b16 %v293
      %v615 = vunpack.c.l.b16 %v294
      %v616 = vunpack.c.l.b16 %v295
      %v617 = vunpack.c.l.b16 %v296
      %v618 = vunpack.c.l.b16 %v297
      %v619 = vunpack.c.l.b16 %v298
      %v620 = vunpack.c.l.b16 %v299
      %v621 = vunpack.c.l.b16 %v300
      %v622 = vunpack.c.l.b16 %v301
      %v623 = vunpack.c.l.b16 %v302
      %v624 = vunpack.c.l.b16 %v303
      %v625 = vunpack.c.l.b16 %v304
      %v626 = vunpack.c.l.b16 %v305
      %v627 = vunpack.c.l.b16 %v306
      %v628 = vunpack.c.l.b16 %v307
      %v629 = vunpack.c.l.b16 %v308
      %v630 = vunpack.c.l.b16 %v309
      %v631 = vunpack.c.l.b16 %v310
      %v632 = vpack.c.b16 %v601, %v600
      %v633 = vpack.c.b16 %v603, %v602
      %v634 = vpack.c.b16 %v605, %v604
      %v635 = vpack.c.b16 %v607, %v606
      %v636 = vpack.c.b16 %v609, %v608
      %v637 = vpack.c.b16 %v611, %v610
      %v638 = vpack.c.b16 %v613, %v612
      %v639 = vpack.c.b16 %v615, %v614
      %v640 = vpack.c.b16 %v617, %v616
      %v641 = vpack.c.b16 %v619, %v618
      %v642 = vpack.c.b16 %v621, %v620
      %v643 = vpack.c.b16 %v623, %v622
      %v644 = vpack.c.b16 %v625, %v624
      %v645 = vpack.c.b16 %v627, %v626
      %v646 = vpack.c.b16 %v629, %v628
      %v647 = vpack.c.b16 %v631, %v630
      %664 = vmatprep.subr.bf16.mxu0 0
      %665 = vmatpush1.bf16.msra.mxu0 %v632
      %666 = vmatprep.subr.bf16.mxu0 0
      %667 = vmatpush1.bf16.msra.mxu0 %v633
      %668 = vmatprep.subr.bf16.mxu0 0
      %669 = vmatpush1.bf16.msra.mxu0 %v634
      %670 = vmatprep.subr.bf16.mxu0 0
      %671 = vmatpush1.bf16.msra.mxu0 %v635
      %672 = vmatprep.subr.bf16.mxu0 0
      %673 = vmatpush1.bf16.msra.mxu0 %v636
      %674 = vmatprep.subr.bf16.mxu0 0
      %675 = vmatpush1.bf16.msra.mxu0 %v637
      %676 = vmatprep.subr.bf16.mxu0 0
      %677 = vmatpush1.bf16.msra.mxu0 %v638
      %678 = vmatprep.subr.bf16.mxu0 0
      %679 = vmatpush1.bf16.msra.mxu0 %v639
      %680 = vmatprep.subr.bf16.mxu0 0
      %681 = vmatpush1.bf16.msra.mxu0 %v640
      %682 = vmatprep.subr.bf16.mxu0 0
      %683 = vmatpush1.bf16.msra.mxu0 %v641
      %684 = vmatprep.subr.bf16.mxu0 0
      %685 = vmatpush1.bf16.msra.mxu0 %v642
      %686 = vmatprep.subr.bf16.mxu0 0
      %687 = vmatpush1.bf16.msra.mxu0 %v643
      %688 = vmatprep.subr.bf16.mxu0 0
      %689 = vmatpush1.bf16.msra.mxu0 %v644
      %690 = vmatprep.subr.bf16.mxu0 0
      %691 = vmatpush1.bf16.msra.mxu0 %v645
      %692 = vmatprep.subr.bf16.mxu0 0
      %693 = vmatpush1.bf16.msra.mxu0 %v646
      %694 = vmatprep.subr.bf16.mxu0 0
      %695 = vmatpush1.bf16.msra.mxu0 %v647
      %696 = vmatprep.mubr.bf16.mxu0 %v469
      %697 = vmatmul.mubr.bf16.gmra.mrb[0].mxu0 %v468
      %v698 = vpop.f32.mrb[0].mxu0
      %v699 = vadd.f32 %v316, %v698
      %v700 = vpop.f32.mrb[0].mxu0
      %v701 = vpop.f32.mrb[0].mxu0
      %v702 = vadd.f32 %v316, %v701
      %v703 = vpop.f32.mrb[0].mxu0
      %704 = vmatprep.mubr.bf16.mxu0 %v471
      %705 = vmatmul.mubr.bf16.gmra.mrb[0].mxu0 %v470
      %v706 = vpop.f32.mrb[0].mxu0
      %v707 = vadd.f32 %v316, %v706
      %v708 = vpop.f32.mrb[0].mxu0
      %v709 = vpop.f32.mrb[0].mxu0
      %v710 = vadd.f32 %v316, %v709
      %v711 = vpop.f32.mrb[0].mxu0
      %712 = vmatprep.mubr.bf16.mxu0 %v473
      %713 = vmatmul.mubr.bf16.gmra.mrb[0].mxu0 %v472
      %v714 = vpop.f32.mrb[0].mxu0
      %v715 = vadd.f32 %v316, %v714
      %v716 = vpop.f32.mrb[0].mxu0
      %v717 = vpop.f32.mrb[0].mxu0
      %v718 = vadd.f32 %v316, %v717
      %v719 = vpop.f32.mrb[0].mxu0
      %720 = vmatprep.mubr.bf16.mxu0 %v475
      %721 = vmatmul.mubr.bf16.gmra.mrb[0].mxu0 %v474
      %v722 = vpop.f32.mrb[0].mxu0
      %v723 = vadd.f32 %v316, %v722
      %v724 = vpop.f32.mrb[0].mxu0
      %v725 = vpop.f32.mrb[0].mxu0
      %v726 = vadd.f32 %v316, %v725
      %v727 = vpop.f32.mrb[0].mxu0
      %728 = vmatprep.mubr.bf16.mxu0 %v477
      %729 = vmatmul.mubr.bf16.gmra.mrb[0].mxu0 %v476
      %v730 = vpop.f32.mrb[0].mxu0
      %v731 = vadd.f32 %v316, %v730
      %v732 = vpop.f32.mrb[0].mxu0
      %v733 = vpop.f32.mrb[0].mxu0
      %v734 = vadd.f32 %v316, %v733
      %v735 = vpop.f32.mrb[0].mxu0
      %736 = vmatprep.mubr.bf16.mxu0 %v479
      %737 = vmatmul.mubr.bf16.gmra.mrb[0].mxu0 %v478
      %v738 = vpop.f32.mrb[0].mxu0
      %v739 = vadd.f32 %v316, %v738
      %v740 = vpop.f32.mrb[0].mxu0
      %v741 = vpop.f32.mrb[0].mxu0
      %v742 = vadd.f32 %v316, %v741
      %v743 = vpop.f32.mrb[0].mxu0
      %744 = vmatprep.mubr.bf16.mxu0 %v481
      %745 = vmatmul.mubr.bf16.gmra.mrb[0].mxu0 %v480
      %v746 = vpop.f32.mrb[0].mxu0
      %v747 = vadd.f32 %v316, %v746
      %v748 = vpop.f32.mrb[0].mxu0
      %v749 = vpop.f32.mrb[0].mxu0
      %v750 = vadd.f32 %v316, %v749
      %v751 = vpop.f32.mrb[0].mxu0
      %752 = vmatprep.mubr.bf16.mxu0 %v483
      %753 = vmatmul.mubr.bf16.gmra.mrb[0].mxu0 %v482
      %v754 = vpop.f32.mrb[0].mxu0
      %v755 = vadd.f32 %v316, %v754
      %v756 = vpop.f32.mrb[0].mxu0
      %v757 = vpop.f32.mrb[0].mxu0
      %v758 = vadd.f32 %v316, %v757
      %v759 = vpop.f32.mrb[0].mxu0
      %760 = vmatprep.mubr.bf16.mxu0 %v485
      %761 = vmatmul.mubr.bf16.gmra.mrb[0].mxu0 %v484
      %v762 = vpop.f32.mrb[0].mxu0
      %v763 = vadd.f32 %v316, %v762
      %v764 = vpop.f32.mrb[0].mxu0
      %v765 = vpop.f32.mrb[0].mxu0
      %v766 = vadd.f32 %v316, %v765
      %v767 = vpop.f32.mrb[0].mxu0
      %768 = vmatprep.mubr.bf16.mxu0 %v487
      %769 = vmatmul.mubr.bf16.gmra.mrb[0].mxu0 %v486
      %v770 = vpop.f32.mrb[0].mxu0
      %v771 = vadd.f32 %v316, %v770
      %v772 = vpop.f32.mrb[0].mxu0
      %v773 = vpop.f32.mrb[0].mxu0
      %v774 = vadd.f32 %v316, %v773
      %v775 = vpop.f32.mrb[0].mxu0
      %776 = vmatprep.mubr.bf16.mxu0 %v489
      %777 = vmatmul.mubr.bf16.gmra.mrb[0].mxu0 %v488
      %v778 = vpop.f32.mrb[0].mxu0
      %v779 = vadd.f32 %v316, %v778
      %v780 = vpop.f32.mrb[0].mxu0
      %v781 = vpop.f32.mrb[0].mxu0
      %v782 = vadd.f32 %v316, %v781
      %v783 = vpop.f32.mrb[0].mxu0
      %784 = vmatprep.mubr.bf16.mxu0 %v491
      %785 = vmatmul.mubr.bf16.gmra.mrb[0].mxu0 %v490
      %v786 = vpop.f32.mrb[0].mxu0
      %v787 = vadd.f32 %v316, %v786
      %v788 = vpop.f32.mrb[0].mxu0
      %v789 = vpop.f32.mrb[0].mxu0
      %v790 = vadd.f32 %v316, %v789
      %v791 = vpop.f32.mrb[0].mxu0
      %792 = vmatprep.mubr.bf16.mxu0 %v493
      %793 = vmatmul.mubr.bf16.gmra.mrb[0].mxu0 %v492
      %v794 = vpop.f32.mrb[0].mxu0
      %v795 = vadd.f32 %v316, %v794
      %v796 = vpop.f32.mrb[0].mxu0
      %v797 = vpop.f32.mrb[0].mxu0
      %v798 = vadd.f32 %v316, %v797
      %v799 = vpop.f32.mrb[0].mxu0
      %800 = vmatprep.mubr.bf16.mxu0 %v495
      %801 = vmatmul.mubr.bf16.gmra.mrb[0].mxu0 %v494
      %v802 = vpop.f32.mrb[0].mxu0
      %v803 = vadd.f32 %v316, %v802
      %v804 = vpop.f32.mrb[0].mxu0
      %v805 = vpop.f32.mrb[0].mxu0
      %v806 = vadd.f32 %v316, %v805
      %v807 = vpop.f32.mrb[0].mxu0
      %808 = vmatprep.mubr.bf16.mxu0 %v497
      %809 = vmatmul.mubr.bf16.gmra.mrb[0].mxu0 %v496
      %v810 = vpop.f32.mrb[0].mxu0
      %v811 = vadd.f32 %v316, %v810
      %v812 = vpop.f32.mrb[0].mxu0
      %v813 = vpop.f32.mrb[0].mxu0
      %v814 = vadd.f32 %v316, %v813
      %v815 = vpop.f32.mrb[0].mxu0
      %816 = vmatprep.mubr.bf16.mxu0 %v499
      %817 = vmatmul.mubr.bf16.gmra.mrb[0].mxu0 %v498
      %v818 = vpop.f32.mrb[0].mxu0
      %v819 = vadd.f32 %v316, %v818
      %v820 = vpop.f32.mrb[0].mxu0
      %v821 = vpop.f32.mrb[0].mxu0
      %v822 = vadd.f32 %v316, %v821
      %v823 = vpop.f32.mrb[0].mxu0
      %824 = vmatprep.mubr.bf16.mxu0 %v501
      %825 = vmatmul.mubr.bf16.gmra.mrb[0].mxu0 %v500
      %v826 = vpop.f32.mrb[0].mxu0
      %v827 = vadd.f32 %v316, %v826
      %v828 = vpop.f32.mrb[0].mxu0
      %v829 = vpop.f32.mrb[0].mxu0
      %v830 = vadd.f32 %v316, %v829
      %v831 = vpop.f32.mrb[0].mxu0
      %832 = vmatprep.mubr.bf16.mxu0 %v503
      %833 = vmatmul.mubr.bf16.gmra.mrb[0].mxu0 %v502
      %v834 = vpop.f32.mrb[0].mxu0
      %v835 = vadd.f32 %v316, %v834
      %v836 = vpop.f32.mrb[0].mxu0
      %v837 = vpop.f32.mrb[0].mxu0
      %v838 = vadd.f32 %v316, %v837
      %v839 = vpop.f32.mrb[0].mxu0
      %840 = vmatprep.mubr.bf16.mxu0 %v505
      %841 = vmatmul.mubr.bf16.gmra.mrb[0].mxu0 %v504
      %v842 = vpop.f32.mrb[0].mxu0
      %v843 = vadd.f32 %v316, %v842
      %v844 = vpop.f32.mrb[0].mxu0
      %v845 = vpop.f32.mrb[0].mxu0
      %v846 = vadd.f32 %v316, %v845
      %v847 = vpop.f32.mrb[0].mxu0
      %848 = vmatprep.mubr.bf16.mxu0 %v507
      %849 = vmatmul.mubr.bf16.gmra.mrb[0].mxu0 %v506
      %v850 = vpop.f32.mrb[0].mxu0
      %v851 = vadd.f32 %v316, %v850
      %v852 = vpop.f32.mrb[0].mxu0
      %v853 = vpop.f32.mrb[0].mxu0
      %v854 = vadd.f32 %v316, %v853
      %v855 = vpop.f32.mrb[0].mxu0
      %856 = vmatprep.mubr.bf16.mxu0 %v509
      %857 = vmatmul.mubr.bf16.gmra.mrb[0].mxu0 %v508
      %v858 = vpop.f32.mrb[0].mxu0
      %v859 = vadd.f32 %v316, %v858
      %v860 = vpop.f32.mrb[0].mxu0
      %v861 = vpop.f32.mrb[0].mxu0
      %v862 = vadd.f32 %v316, %v861
      %v863 = vpop.f32.mrb[0].mxu0
      %864 = vmatprep.mubr.bf16.mxu0 %v511
      %865 = vmatmul.mubr.bf16.gmra.mrb[0].mxu0 %v510
      %v866 = vpop.f32.mrb[0].mxu0
      %v867 = vadd.f32 %v316, %v866
      %v868 = vpop.f32.mrb[0].mxu0
      %v869 = vpop.f32.mrb[0].mxu0
      %v870 = vadd.f32 %v316, %v869
      %v871 = vpop.f32.mrb[0].mxu0
      %872 = vmatprep.mubr.bf16.mxu0 %v513
      %873 = vmatmul.mubr.bf16.gmra.mrb[0].mxu0 %v512
      %v874 = vpop.f32.mrb[0].mxu0
      %v875 = vadd.f32 %v316, %v874
      %v876 = vpop.f32.mrb[0].mxu0
      %v877 = vpop.f32.mrb[0].mxu0
      %v878 = vadd.f32 %v316, %v877
      %v879 = vpop.f32.mrb[0].mxu0
      %880 = vmatprep.mubr.bf16.mxu0 %v515
      %881 = vmatmul.mubr.bf16.gmra.mrb[0].mxu0 %v514
      %v882 = vpop.f32.mrb[0].mxu0
      %v883 = vadd.f32 %v316, %v882
      %v884 = vpop.f32.mrb[0].mxu0
      %v885 = vpop.f32.mrb[0].mxu0
      %v886 = vadd.f32 %v316, %v885
      %v887 = vpop.f32.mrb[0].mxu0
      %888 = vmatprep.mubr.bf16.mxu0 %v517
      %889 = vmatmul.mubr.bf16.gmra.mrb[0].mxu0 %v516
      %v890 = vpop.f32.mrb[0].mxu0
      %v891 = vadd.f32 %v316, %v890
      %v892 = vpop.f32.mrb[0].mxu0
      %v893 = vpop.f32.mrb[0].mxu0
      %v894 = vadd.f32 %v316, %v893
      %v895 = vpop.f32.mrb[0].mxu0
      %896 = vdwg.mxu0
      %v897 = vmax.f32 %v699, 0.0
      %v898 = vmax.f32 %v702, 0.0
      %v899 = vmax.f32 %v707, 0.0
      %v900 = vmax.f32 %v710, 0.0
      %v901 = vmax.f32 %v715, 0.0
      %v902 = vmax.f32 %v718, 0.0
      %v903 = vmax.f32 %v723, 0.0
      %v904 = vmax.f32 %v726, 0.0
      %v905 = vmax.f32 %v731, 0.0
      %v906 = vmax.f32 %v734, 0.0
      %v907 = vmax.f32 %v739, 0.0
      %v908 = vmax.f32 %v742, 0.0
      %v909 = vmax.f32 %v747, 0.0
      %v910 = vmax.f32 %v750, 0.0
      %v911 = vmax.f32 %v755, 0.0
      %v912 = vmax.f32 %v758, 0.0
      %v913 = vmax.f32 %v763, 0.0
      %v914 = vmax.f32 %v766, 0.0
      %v915 = vmax.f32 %v771, 0.0
      %v916 = vmax.f32 %v774, 0.0
      %v917 = vmax.f32 %v779, 0.0
      %v918 = vmax.f32 %v782, 0.0
      %v919 = vmax.f32 %v787, 0.0
      %v920 = vmax.f32 %v790, 0.0
      %v921 = vmax.f32 %v795, 0.0
      %v922 = vmax.f32 %v798, 0.0
      %v923 = vmax.f32 %v803, 0.0
      %v924 = vmax.f32 %v806, 0.0
      %v925 = vmax.f32 %v811, 0.0
      %v926 = vmax.f32 %v814, 0.0
      %v927 = vmax.f32 %v819, 0.0
      %v928 = vmax.f32 %v822, 0.0
      %v929 = vmax.f32 %v827, 0.0
      %v930 = vmax.f32 %v830, 0.0
      %v931 = vmax.f32 %v835, 0.0
      %v932 = vmax.f32 %v838, 0.0
      %v933 = vmax.f32 %v843, 0.0
      %v934 = vmax.f32 %v846, 0.0
      %v935 = vmax.f32 %v851, 0.0
      %v936 = vmax.f32 %v854, 0.0
      %v937 = vmax.f32 %v859, 0.0
      %v938 = vmax.f32 %v862, 0.0
      %v939 = vmax.f32 %v867, 0.0
      %v940 = vmax.f32 %v870, 0.0
      %v941 = vmax.f32 %v875, 0.0
      %v942 = vmax.f32 %v878, 0.0
      %v943 = vmax.f32 %v883, 0.0
      %v944 = vmax.f32 %v886, 0.0
      %v945 = vmax.f32 %v891, 0.0
      %v946 = vmax.f32 %v894, 0.0
      %v947 = vpack.c.bf16 %v898, %v897
      %v948 = vpack.c.bf16 %v900, %v899
      %v949 = vpack.c.bf16 %v902, %v901
      %v950 = vpack.c.bf16 %v904, %v903
      %v951 = vpack.c.bf16 %v906, %v905
      %v952 = vpack.c.bf16 %v908, %v907
      %v953 = vpack.c.bf16 %v910, %v909
      %v954 = vpack.c.bf16 %v912, %v911
      %v955 = vpack.c.bf16 %v914, %v913
      %v956 = vpack.c.bf16 %v916, %v915
      %v957 = vpack.c.bf16 %v918, %v917
      %v958 = vpack.c.bf16 %v920, %v919
      %v959 = vpack.c.bf16 %v922, %v921
      %v960 = vpack.c.bf16 %v924, %v923
      %v961 = vpack.c.bf16 %v926, %v925
      %v962 = vpack.c.bf16 %v928, %v927
      %v963 = vpack.c.bf16 %v930, %v929
      %v964 = vpack.c.bf16 %v932, %v931
      %v965 = vpack.c.bf16 %v934, %v933
      %v966 = vpack.c.bf16 %v936, %v935
      %v967 = vpack.c.bf16 %v938, %v937
      %v968 = vpack.c.bf16 %v940, %v939
      %v969 = vpack.c.bf16 %v942, %v941
      %v970 = vpack.c.bf16 %v944, %v943
      %v971 = vpack.c.bf16 %v946, %v945
      %v997 = vunpack.c.l.b16 %v947
      %v998 = vunpack.c.h.b16 %v947
      %v999 = vunpack.c.l.b16 %v948
      %v1000 = vunpack.c.h.b16 %v948
      %v1001 = vunpack.c.l.b16 %v949
      %v1002 = vunpack.c.h.b16 %v949
      %v1003 = vunpack.c.l.b16 %v950
      %v1004 = vunpack.c.h.b16 %v950
      %v1005 = vunpack.c.l.b16 %v951
      %v1006 = vunpack.c.h.b16 %v951
      %v1007 = vunpack.c.l.b16 %v952
      %v1008 = vunpack.c.h.b16 %v952
      %v1009 = vunpack.c.l.b16 %v953
      %v1010 = vunpack.c.h.b16 %v953
      %v1011 = vunpack.c.l.b16 %v954
      %v1012 = vunpack.c.h.b16 %v954
      %v1013 = vunpack.c.l.b16 %v955
      %v1014 = vunpack.c.h.b16 %v955
      %v1015 = vunpack.c.l.b16 %v956
      %v1016 = vunpack.c.h.b16 %v956
      %v1017 = vunpack.c.l.b16 %v957
      %v1018 = vunpack.c.h.b16 %v957
      %v1019 = vunpack.c.l.b16 %v958
      %v1020 = vunpack.c.h.b16 %v958
      %v1021 = vunpack.c.l.b16 %v959
      %v1022 = vunpack.c.h.b16 %v959
      %v1023 = vunpack.c.l.b16 %v960
      %v1024 = vunpack.c.h.b16 %v960
      %v1025 = vunpack.c.l.b16 %v961
      %v1026 = vunpack.c.h.b16 %v961
      %v1027 = vunpack.c.l.b16 %v962
      %v1028 = vunpack.c.h.b16 %v962
      %v1029 = vunpack.c.l.b16 %v963
      %v1030 = vunpack.c.h.b16 %v963
      %v1031 = vunpack.c.l.b16 %v964
      %v1032 = vunpack.c.h.b16 %v964
      %v1033 = vunpack.c.l.b16 %v965
      %v1034 = vunpack.c.h.b16 %v965
      %v1035 = vunpack.c.l.b16 %v966
      %v1036 = vunpack.c.h.b16 %v966
      %v1037 = vunpack.c.l.b16 %v967
      %v1038 = vunpack.c.h.b16 %v967
      %v1039 = vunpack.c.l.b16 %v968
      %v1040 = vunpack.c.h.b16 %v968
      %v1041 = vunpack.c.l.b16 %v969
      %v1042 = vunpack.c.h.b16 %v969
      %v1043 = vunpack.c.l.b16 %v970
      %v1044 = vunpack.c.h.b16 %v970
      %v1045 = vunpack.c.l.b16 %v971
      %v1046 = vunpack.c.h.b16 %v971
      %v1047 = vpack.c.b16 %v997, %v997
      %v1048 = vpack.c.b16 %v998, %v998
      %v1049 = vpack.c.b16 %v999, %v999
      %v1050 = vpack.c.b16 %v1000, %v1000
      %v1051 = vpack.c.b16 %v1001, %v1001
      %v1052 = vpack.c.b16 %v1002, %v1002
      %v1053 = vpack.c.b16 %v1003, %v1003
      %v1054 = vpack.c.b16 %v1004, %v1004
      %v1055 = vpack.c.b16 %v1005, %v1005
      %v1056 = vpack.c.b16 %v1006, %v1006
      %v1057 = vpack.c.b16 %v1007, %v1007
      %v1058 = vpack.c.b16 %v1008, %v1008
      %v1059 = vpack.c.b16 %v1009, %v1009
      %v1060 = vpack.c.b16 %v1010, %v1010
      %v1061 = vpack.c.b16 %v1011, %v1011
      %v1062 = vpack.c.b16 %v1012, %v1012
      %v1063 = vpack.c.b16 %v1013, %v1013
      %v1064 = vpack.c.b16 %v1014, %v1014
      %v1065 = vpack.c.b16 %v1015, %v1015
      %v1066 = vpack.c.b16 %v1016, %v1016
      %v1067 = vpack.c.b16 %v1017, %v1017
      %v1068 = vpack.c.b16 %v1018, %v1018
      %v1069 = vpack.c.b16 %v1019, %v1019
      %v1070 = vpack.c.b16 %v1020, %v1020
      %v1071 = vpack.c.b16 %v1021, %v1021
      %v1072 = vpack.c.b16 %v1022, %v1022
      %v1073 = vpack.c.b16 %v1023, %v1023
      %v1074 = vpack.c.b16 %v1024, %v1024
      %v1075 = vpack.c.b16 %v1025, %v1025
      %v1076 = vpack.c.b16 %v1026, %v1026
      %v1077 = vpack.c.b16 %v1027, %v1027
      %v1078 = vpack.c.b16 %v1028, %v1028
      %v1079 = vpack.c.b16 %v1029, %v1029
      %v1080 = vpack.c.b16 %v1030, %v1030
      %v1081 = vpack.c.b16 %v1031, %v1031
      %v1082 = vpack.c.b16 %v1032, %v1032
      %v1083 = vpack.c.b16 %v1033, %v1033
      %v1084 = vpack.c.b16 %v1034, %v1034
      %v1085 = vpack.c.b16 %v1035, %v1035
      %v1086 = vpack.c.b16 %v1036, %v1036
      %v1087 = vpack.c.b16 %v1037, %v1037
      %v1088 = vpack.c.b16 %v1038, %v1038
      %v1089 = vpack.c.b16 %v1039, %v1039
      %v1090 = vpack.c.b16 %v1040, %v1040
      %v1091 = vpack.c.b16 %v1041, %v1041
      %v1092 = vpack.c.b16 %v1042, %v1042
      %v1093 = vpack.c.b16 %v1043, %v1043
      %v1094 = vpack.c.b16 %v1044, %v1044
      %v1095 = vpack.c.b16 %v1045, %v1045
      %v1096 = vpack.c.b16 %v1046, %v1046
      %1147 = vst [vmem:[%s226] sm:$0xf] %v1047
      %1148 = vst [vmem:[%s226 + $0x4] sm:$0xf] %v1048
      %1149 = vst [vmem:[%s226 + $0x8] sm:$0xf] %v1049
      %1150 = vst [vmem:[%s226 + $0xc] sm:$0xf] %v1050
      %1151 = vst [vmem:[%s226 + $0x10] sm:$0xf] %v1051
      %1152 = vst [vmem:[%s226 + $0x14] sm:$0xf] %v1052
      %1153 = vst [vmem:[%s226 + $0x18] sm:$0xf] %v1053
      %1154 = vst [vmem:[%s226 + $0x1c] sm:$0xf] %v1054
      %1155 = vst [vmem:[%s226 + $0x20] sm:$0xf] %v1055
      %1156 = vst [vmem:[%s226 + $0x24] sm:$0xf] %v1056
      %1157 = vst [vmem:[%s226 + $0x28] sm:$0xf] %v1057
      %1158 = vst [vmem:[%s226 + $0x2c] sm:$0xf] %v1058
      %1159 = vst [vmem:[%s226 + $0x30] sm:$0xf] %v1059
      %1160 = vst [vmem:[%s226 + $0x34] sm:$0xf] %v1060
      %1161 = vst [vmem:[%s226 + $0x38] sm:$0xf] %v1061
      %1162 = vst [vmem:[%s226 + $0x3c] sm:$0xf] %v1062
      %1163 = vst [vmem:[%s226 + $0x40] sm:$0xf] %v1063
      %1164 = vst [vmem:[%s226 + $0x44] sm:$0xf] %v1064
      %1165 = vst [vmem:[%s226 + $0x48] sm:$0xf] %v1065
      %1166 = vst [vmem:[%s226 + $0x4c] sm:$0xf] %v1066
      %1167 = vst [vmem:[%s226 + $0x50] sm:$0xf] %v1067
      %1168 = vst [vmem:[%s226 + $0x54] sm:$0xf] %v1068
      %1169 = vst [vmem:[%s226 + $0x58] sm:$0xf] %v1069
      %1170 = vst [vmem:[%s226 + $0x5c] sm:$0xf] %v1070
      %1171 = vst [vmem:[%s226 + $0x60] sm:$0xf] %v1071
      %1172 = vst [vmem:[%s226 + $0x64] sm:$0xf] %v1072
      %1173 = vst [vmem:[%s226 + $0x68] sm:$0xf] %v1073
      %1174 = vst [vmem:[%s226 + $0x6c] sm:$0xf] %v1074
      %1175 = vst [vmem:[%s226 + $0x70] sm:$0xf] %v1075
      %1176 = vst [vmem:[%s226 + $0x74] sm:$0xf] %v1076
      %1177 = vst [vmem:[%s226 + $0x78] sm:$0xf] %v1077
      %1178 = vst [vmem:[%s226 + $0x7c] sm:$0xf] %v1078
      %1179 = vst [vmem:[%s226 + $0x80] sm:$0xf] %v1079
      %1180 = vst [vmem:[%s226 + $0x84] sm:$0xf] %v1080
      %1181 = vst [vmem:[%s226 + $0x88] sm:$0xf] %v1081
      %1182 = vst [vmem:[%s226 + $0x8c] sm:$0xf] %v1082
      %1183 = vst [vmem:[%s226 + $0x90] sm:$0xf] %v1083
      %1184 = vst [vmem:[%s226 + $0x94] sm:$0xf] %v1084
      %1185 = vst [vmem:[%s226 + $0x98] sm:$0xf] %v1085
      %1186 = vst [vmem:[%s226 + $0x9c] sm:$0xf] %v1086
      %1187 = vst [vmem:[%s226 + $0xa0] sm:$0xf] %v1087
      %1188 = vst [vmem:[%s226 + $0xa4] sm:$0xf] %v1088
      %1189 = vst [vmem:[%s226 + $0xa8] sm:$0xf] %v1089
      %1190 = vst [vmem:[%s226 + $0xac] sm:$0xf] %v1090
      %1191 = vst [vmem:[%s226 + $0xb0] sm:$0xf] %v1091
      %1192 = vst [vmem:[%s226 + $0xb4] sm:$0xf] %v1092
      %1193 = vst [vmem:[%s226 + $0xb8] sm:$0xf] %v1093
      %1194 = vst [vmem:[%s226 + $0xbc] sm:$0xf] %v1094
      %1195 = vst [vmem:[%s226 + $0xc0] sm:$0xf] %v1095
      %1196 = vst [vmem:[%s226 + $0xc4] sm:$0xf] %v1096
      %s1197 = smul.u32 50, %s18
      %p1198 = scmp.lt.s32.totalorder %s1197, 99
      %s1199 = scalar_select %p1198, %s1197, 99
      %p1200 = scmp.lt.s32.totalorder %s19, 0
      %s1201 = scalar_select %p1200, %s19, 0
      %s1202 = sadd.s32 %s1201, %s1199
      %s1203 = smul.addr %s1202, 4
      %s1204 = scalar_lea.vmem %s3, %s1203
      // Predicated region
      $region33: #{_lambda_.5} parent=31 // pred_check
        %p1205 = pneg %p124
      $region34: #{_lambda_.5} parent=31 // pred_check_branch
        %1207 = sbr.rel (%p1205) target = $region36
      $region35: #{_lambda_.5} parent=31 // pred_region
        %s1208 = smul.u32 50, %s18
      $region36: #{_lambda_.5} parent=31 // pred_fallthru
        _
    $region32: #{_lambda_.5} parent=5 // pred_fallthru
      _
    %p1209 = scmp.le.s32.totalorder 2, %s9
    // Predicated region
    $region37: #{_lambda_.5} parent=5 // pred_check
      %p1210 = pneg %p1209
    $region38: #{_lambda_.5} parent=5 // pred_check_branch
      %1212 = sbr.rel (%p1210) target = $region40
    $region39: #{_lambda_.5} parent=5 // pred_region
      %s1213 = ssub.s32 %s9, 2
      // Predicated region
      $region41: #{_lambda_.5} parent=39 // pred_check
        %p1214 = pneg %p130
      $region42: #{_lambda_.5} parent=39 // pred_check_branch
        %1216 = sbr.rel (%p1214) target = $region44
      $region43: #{_lambda_.5} parent=39 // pred_region
        %s1217 = smul.u32 50, %s20
        %p1218 = scmp.lt.s32.totalorder %s1217, 99
        %s1219 = scalar_select %p1218, %s1217, 99
        %p1220 = scmp.lt.s32.totalorder %s21, 0
        %s1221 = scalar_select %p1220, %s21, 0
        %s1222 = sadd.s32 %s1221, %s1219
        %s1223 = smul.addr %s1222, 4
        %s1224 = scalar_lea.vmem %s3, %s1223
      $region44: #{_lambda_.5} parent=39 // pred_fallthru
        _
    $region40: #{_lambda_.5} parent=5 // pred_fallthru
      _
  $region6: #{_lambda_.5} parent=0 // loop_footer
    %s13 = sadd.s32 1, %s9
  $region7: #{_lambda_.5} parent=0 // loop_footer_branch
    %8 = sbr.rel target = $region3
  $region8: #{_lambda_.5} parent=0 // loop_exit
    _

// kernel: _lambda_.6
$region0: #{_lambda_.6}
  #allocation0 [shape = 'u32[]', space=smem, size = 0x4, offset = 0x4, fixed_abs, tag = 'smem constant byte address 0x4 - core index']
  #allocation1 [shape = 'u32[144,128]{1,0:T(1,128)}', space=vmem, size = 0x12000, scoped, tag = 'internal scratch']
  %s0 = inlined_call_operand.vmem [shape: bf16[168,512], index: 0, kind: input, shape index: {}]
  %s1 = inlined_call_operand.vmem [shape: bf16[512,128], index: 1, kind: input, shape index: {}]
  %s2 = inlined_call_operand.vmem [shape: f32[1,128], index: 2, kind: input, shape index: {}]
  %s3 = inlined_call_operand.vmem [shape: bf16[168,128], index: 3, kind: output, shape index: {}]
  %s4 = sld [smem:[#allocation0]]
  $region22: #{_lambda_.6} parent=0
    _
  %s6 = ssub.s32 1, %s4
  %s7 = scalar_select 0, %s6, %s4
  // Predicated region
  $region2: #{_lambda_.6} parent=0 // pred_check
    _
  $region3: #{_lambda_.6} parent=0 // pred_check_branch
    %9 = sbr.rel (0) target = $region5
  $region4: #{_lambda_.6} parent=0 // pred_region
    _
  $region5: #{_lambda_.6} parent=0 // pred_fallthru
    _
  // Predicated region
  $region6: #{_lambda_.6} parent=0 // pred_check
    _
  $region7: #{_lambda_.6} parent=0 // pred_check_branch
    %11 = sbr.rel (0) target = $region9
  $region8: #{_lambda_.6} parent=0 // pred_region
    _
  $region9: #{_lambda_.6} parent=0 // pred_fallthru
    _
  // Predicated region
  $region10: #{_lambda_.6} parent=0 // pred_check
    _
  $region11: #{_lambda_.6} parent=0 // pred_check_branch
    %13 = sbr.rel (0) target = $region13
  $region12: #{_lambda_.6} parent=0 // pred_region
    _
  $region13: #{_lambda_.6} parent=0 // pred_fallthru
    _
  %v15 = vld [vmem:[%s0] sm:$0xff]
  %v16 = vld [vmem:[%s0 + $0x8] sm:$0xff]
  %v17 = vld [vmem:[%s0 + $0x10] sm:$0xff]
  %v18 = vld [vmem:[%s0 + $0x18] sm:$0xff]
  %v19 = vld [vmem:[%s0 + $0x20] sm:$0xff]
  %v20 = vld [vmem:[%s0 + $0x28] sm:$0xff]
  %v21 = vld [vmem:[%s0 + $0x30] sm:$0xff]
  %v22 = vld [vmem:[%s0 + $0x38] sm:$0xff]
  %v23 = vld [vmem:[%s0 + $0x40] sm:$0xff]
  %v24 = vld [vmem:[%s0 + $0x48] sm:$0xff]
  %v25 = vld [vmem:[%s0 + $0x50] sm:$0xff]
  %v26 = vld [vmem:[%s0 + $0x58] sm:$0xff]
  %v27 = vld [vmem:[%s0 + $0x60] sm:$0xff]
  %v28 = vld [vmem:[%s0 + $0x68] sm:$0xff]
  %v29 = vld [vmem:[%s0 + $0x70] sm:$0xff]
  %v30 = vld [vmem:[%s0 + $0x78] sm:$0xff]
  %v31 = vld [vmem:[%s0 + $0x80] sm:$0xff]
  %v32 = vld [vmem:[%s0 + $0x88] sm:$0xff]
  %v33 = vld [vmem:[%s0 + $0x90] sm:$0xff]
  %v34 = vld [vmem:[%s0 + $0x98] sm:$0xff]
  %v35 = vld [vmem:[%s0 + $0xa0] sm:$0xff]
  %v36 = vld [vmem:[%s0 + $0xa8] sm:$0xff]
  %v37 = vld [vmem:[%s0 + $0xb0] sm:$0xff]
  %v38 = vld [vmem:[%s0 + $0xb8] sm:$0xff]
  %v39 = vld [vmem:[%s0 + $0xc0] sm:$0xff]
  %v40 = vld [vmem:[%s0 + $0xc8] sm:$0xff]
  %v41 = vld [vmem:[%s0 + $0xd0] sm:$0xff]
  %v42 = vld [vmem:[%s0 + $0xd8] sm:$0xff]
  %v43 = vld [vmem:[%s0 + $0xe0] sm:$0xff]
  %v44 = vld [vmem:[%s0 + $0xe8] sm:$0xff]
  %v45 = vld [vmem:[%s0 + $0xf0] sm:$0xff]
  %v46 = vld [vmem:[%s0 + $0xf8] sm:$0xff]
  %v47 = vld [vmem:[%s0 + $0x100] sm:$0xff]
  %v48 = vld [vmem:[%s0 + $0x108] sm:$0xff]
  %v49 = vld [vmem:[%s0 + $0x110] sm:$0xff]
  %v50 = vld [vmem:[%s0 + $0x118] sm:$0xff]
  %v51 = vld [vmem:[%s0 + $0x120] sm:$0xff]
  %v52 = vld [vmem:[%s0 + $0x128] sm:$0xff]
  %v53 = vld [vmem:[%s0 + $0x130] sm:$0xff]
  %v54 = vld [vmem:[%s0 + $0x138] sm:$0xff]
  %v55 = vld [vmem:[%s0 + $0x140] sm:$0xff]
  %v56 = vld [vmem:[%s0 + $0x148] sm:$0xff]
  %v57 = vld [vmem:[%s1] sm:$0xf]
  %v58 = vld [vmem:[%s1 + $0x4] sm:$0xf]
  %v59 = vld [vmem:[%s1 + $0x8] sm:$0xf]
  %v60 = vld [vmem:[%s1 + $0xc] sm:$0xf]
  %v61 = vld [vmem:[%s1 + $0x10] sm:$0xf]
  %v62 = vld [vmem:[%s1 + $0x14] sm:$0xf]
  %v63 = vld [vmem:[%s1 + $0x18] sm:$0xf]
  %v64 = vld [vmem:[%s1 + $0x1c] sm:$0xf]
  %v65 = vld [vmem:[%s1 + $0x20] sm:$0xf]
  %v66 = vld [vmem:[%s1 + $0x24] sm:$0xf]
  %v67 = vld [vmem:[%s1 + $0x28] sm:$0xf]
  %v68 = vld [vmem:[%s1 + $0x2c] sm:$0xf]
  %v69 = vld [vmem:[%s1 + $0x30] sm:$0xf]
  %v70 = vld [vmem:[%s1 + $0x34] sm:$0xf]
  %v71 = vld [vmem:[%s1 + $0x38] sm:$0xf]
  %v72 = vld [vmem:[%s1 + $0x3c] sm:$0xf]
  %v73 = vld [vmem:[%s1 + $0x40] sm:$0xf]
  %v74 = vld [vmem:[%s1 + $0x44] sm:$0xf]
  %v75 = vld [vmem:[%s1 + $0x48] sm:$0xf]
  %v76 = vld [vmem:[%s1 + $0x4c] sm:$0xf]
  %v77 = vld [vmem:[%s1 + $0x50] sm:$0xf]
  %v78 = vld [vmem:[%s1 + $0x54] sm:$0xf]
  %v79 = vld [vmem:[%s1 + $0x58] sm:$0xf]
  %v80 = vld [vmem:[%s1 + $0x5c] sm:$0xf]
  %v81 = vld [vmem:[%s1 + $0x60] sm:$0xf]
  %v82 = vld [vmem:[%s1 + $0x64] sm:$0xf]
  %v83 = vld [vmem:[%s1 + $0x68] sm:$0xf]
  %v84 = vld [vmem:[%s1 + $0x6c] sm:$0xf]
  %v85 = vld [vmem:[%s1 + $0x70] sm:$0xf]
  %v86 = vld [vmem:[%s1 + $0x74] sm:$0xf]
  %v87 = vld [vmem:[%s1 + $0x78] sm:$0xf]
  %v88 = vld [vmem:[%s1 + $0x7c] sm:$0xf]
  %v89 = vld [vmem:[%s1 + $0x80] sm:$0xf]
  %v90 = vld [vmem:[%s1 + $0x84] sm:$0xf]
  %v91 = vld [vmem:[%s1 + $0x88] sm:$0xf]
  %v92 = vld [vmem:[%s1 + $0x8c] sm:$0xf]
  %v93 = vld [vmem:[%s1 + $0x90] sm:$0xf]
  %v94 = vld [vmem:[%s1 + $0x94] sm:$0xf]
  %v95 = vld [vmem:[%s1 + $0x98] sm:$0xf]
  %v96 = vld [vmem:[%s1 + $0x9c] sm:$0xf]
  %v97 = vld [vmem:[%s1 + $0xa0] sm:$0xf]
  %v98 = vld [vmem:[%s1 + $0xa4] sm:$0xf]
  %v99 = vld [vmem:[%s1 + $0xa8] sm:$0xf]
  %v100 = vld [vmem:[%s1 + $0xac] sm:$0xf]
  %v101 = vld [vmem:[%s1 + $0xb0] sm:$0xf]
  %v102 = vld [vmem:[%s1 + $0xb4] sm:$0xf]
  %v103 = vld [vmem:[%s1 + $0xb8] sm:$0xf]
  %v104 = vld [vmem:[%s1 + $0xbc] sm:$0xf]
  %v105 = vld [vmem:[%s1 + $0xc0] sm:$0xf]
  %v106 = vld [vmem:[%s1 + $0xc4] sm:$0xf]
  %v107 = vld [vmem:[%s1 + $0xc8] sm:$0xf]
  %v108 = vld [vmem:[%s1 + $0xcc] sm:$0xf]
  %v109 = vld [vmem:[%s1 + $0xd0] sm:$0xf]
  %v110 = vld [vmem:[%s1 + $0xd4] sm:$0xf]
  %v111 = vld [vmem:[%s1 + $0xd8] sm:$0xf]
  %v112 = vld [vmem:[%s1 + $0xdc] sm:$0xf]
  %v113 = vld [vmem:[%s1 + $0xe0] sm:$0xf]
  %v114 = vld [vmem:[%s1 + $0xe4] sm:$0xf]
  %v115 = vld [vmem:[%s1 + $0xe8] sm:$0xf]
  %v116 = vld [vmem:[%s1 + $0xec] sm:$0xf]
  %v117 = vld [vmem:[%s1 + $0xf0] sm:$0xf]
  %v118 = vld [vmem:[%s1 + $0xf4] sm:$0xf]
  %v119 = vld [vmem:[%s1 + $0xf8] sm:$0xf]
  %v120 = vld [vmem:[%s1 + $0xfc] sm:$0xf]
  %v121 = vld [vmem:[%s2] sm:$0x1]
  %v123 = vlaneseq
  %v124 = vshrl.u32 %v123, 7
  %v125 = vsub.s32 0, %v124
  %v126 = vrot.slane %v121, %v125
  %v170 = vunpack.c.l.b16 %v15
  %v171 = vunpack.c.h.b16 %v15
  %v172 = vunpack.c.l.b16 %v16
  %v173 = vunpack.c.h.b16 %v16
  %v174 = vunpack.c.l.b16 %v17
  %v175 = vunpack.c.h.b16 %v17
  %v176 = vunpack.c.l.b16 %v18
  %v177 = vunpack.c.h.b16 %v18
  %v178 = vunpack.c.l.b16 %v19
  %v179 = vunpack.c.h.b16 %v19
  %v180 = vunpack.c.l.b16 %v20
  %v181 = vunpack.c.h.b16 %v20
  %v182 = vunpack.c.l.b16 %v21
  %v183 = vunpack.c.h.b16 %v21
  %v184 = vunpack.c.l.b16 %v22
  %v185 = vunpack.c.h.b16 %v22
  %v186 = vunpack.c.l.b16 %v23
  %v187 = vunpack.c.h.b16 %v23
  %v188 = vunpack.c.l.b16 %v24
  %v189 = vunpack.c.h.b16 %v24
  %v190 = vunpack.c.l.b16 %v25
  %v191 = vunpack.c.h.b16 %v25
  %v192 = vunpack.c.l.b16 %v26
  %v193 = vunpack.c.h.b16 %v26
  %v194 = vunpack.c.l.b16 %v27
  %v195 = vunpack.c.h.b16 %v27
  %v196 = vunpack.c.l.b16 %v28
  %v197 = vunpack.c.h.b16 %v28
  %v198 = vunpack.c.l.b16 %v29
  %v199 = vunpack.c.h.b16 %v29
  %v200 = vunpack.c.l.b16 %v30
  %v201 = vunpack.c.h.b16 %v30
  %v202 = vunpack.c.l.b16 %v31
  %v203 = vunpack.c.h.b16 %v31
  %v204 = vunpack.c.l.b16 %v32
  %v205 = vunpack.c.h.b16 %v32
  %v206 = vunpack.c.l.b16 %v33
  %v207 = vunpack.c.h.b16 %v33
  %v208 = vunpack.c.l.b16 %v34
  %v209 = vunpack.c.h.b16 %v34
  %v210 = vunpack.c.l.b16 %v35
  %v211 = vunpack.c.h.b16 %v35
  %v212 = vunpack.c.l.b16 %v36
  %v213 = vunpack.c.h.b16 %v36
  %v214 = vunpack.c.l.b16 %v37
  %v215 = vunpack.c.h.b16 %v37
  %v216 = vunpack.c.l.b16 %v38
  %v217 = vunpack.c.h.b16 %v38
  %v218 = vunpack.c.l.b16 %v39
  %v219 = vunpack.c.h.b16 %v39
  %v220 = vunpack.c.l.b16 %v40
  %v221 = vunpack.c.h.b16 %v40
  %v222 = vunpack.c.l.b16 %v41
  %v223 = vunpack.c.h.b16 %v41
  %v224 = vunpack.c.l.b16 %v42
  %v225 = vunpack.c.h.b16 %v42
  %v226 = vunpack.c.l.b16 %v43
  %v227 = vunpack.c.h.b16 %v43
  %v228 = vunpack.c.l.b16 %v44
  %v229 = vunpack.c.h.b16 %v44
  %v230 = vunpack.c.l.b16 %v45
  %v231 = vunpack.c.h.b16 %v45
  %v232 = vunpack.c.l.b16 %v46
  %v233 = vunpack.c.h.b16 %v46
  %v234 = vunpack.c.l.b16 %v47
  %v235 = vunpack.c.h.b16 %v47
  %v236 = vunpack.c.l.b16 %v48
  %v237 = vunpack.c.h.b16 %v48
  %v238 = vunpack.c.l.b16 %v49
  %v239 = vunpack.c.h.b16 %v49
  %v240 = vunpack.c.l.b16 %v50
  %v241 = vunpack.c.h.b16 %v50
  %v242 = vunpack.c.l.b16 %v51
  %v243 = vunpack.c.h.b16 %v51
  %v244 = vunpack.c.l.b16 %v52
  %v245 = vunpack.c.h.b16 %v52
  %v246 = vunpack.c.l.b16 %v53
  %v247 = vunpack.c.h.b16 %v53
  %v248 = vunpack.c.l.b16 %v54
  %v249 = vunpack.c.h.b16 %v54
  %v250 = vunpack.c.l.b16 %v55
  %v251 = vunpack.c.h.b16 %v55
  %v252 = vunpack.c.l.b16 %v56
  %v253 = vunpack.c.h.b16 %v56
  %v254 = vpack.c.b16 %v174, %v170
  %v255 = vpack.c.b16 %v175, %v171
  %v256 = vpack.c.b16 %v176, %v172
  %v257 = vpack.c.b16 %v177, %v173
  %v258 = vpack.c.b16 %v182, %v178
  %v259 = vpack.c.b16 %v183, %v179
  %v260 = vpack.c.b16 %v184, %v180
  %v261 = vpack.c.b16 %v185, %v181
  %v262 = vpack.c.b16 %v190, %v186
  %v263 = vpack.c.b16 %v191, %v187
  %v264 = vpack.c.b16 %v192, %v188
  %v265 = vpack.c.b16 %v193, %v189
  %v266 = vpack.c.b16 %v198, %v194
  %v267 = vpack.c.b16 %v199, %v195
  %v268 = vpack.c.b16 %v200, %v196
  %v269 = vpack.c.b16 %v201, %v197
  %v270 = vpack.c.b16 %v206, %v202
  %v271 = vpack.c.b16 %v207, %v203
  %v272 = vpack.c.b16 %v208, %v204
  %v273 = vpack.c.b16 %v209, %v205
  %v274 = vpack.c.b16 %v214, %v210
  %v275 = vpack.c.b16 %v215, %v211
  %v276 = vpack.c.b16 %v216, %v212
  %v277 = vpack.c.b16 %v217, %v213
  %v278 = vpack.c.b16 %v222, %v218
  %v279 = vpack.c.b16 %v223, %v219
  %v280 = vpack.c.b16 %v224, %v220
  %v281 = vpack.c.b16 %v225, %v221
  %v282 = vpack.c.b16 %v230, %v226
  %v283 = vpack.c.b16 %v231, %v227
  %v284 = vpack.c.b16 %v232, %v228
  %v285 = vpack.c.b16 %v233, %v229
  %v286 = vpack.c.b16 %v238, %v234
  %v287 = vpack.c.b16 %v239, %v235
  %v288 = vpack.c.b16 %v240, %v236
  %v289 = vpack.c.b16 %v241, %v237
  %v290 = vpack.c.b16 %v246, %v242
  %v291 = vpack.c.b16 %v247, %v243
  %v292 = vpack.c.b16 %v248, %v244
  %v293 = vpack.c.b16 %v249, %v245
  %v294 = vpack.c.b16 %v250, %v250
  %v295 = vpack.c.b16 %v251, %v251
  %v296 = vpack.c.b16 %v252, %v252
  %v297 = vpack.c.b16 %v253, %v253
  %v406 = vunpack.c.l.b16 %v57
  %v407 = vunpack.c.l.b16 %v58
  %v408 = vunpack.c.l.b16 %v59
  %v409 = vunpack.c.l.b16 %v60
  %v410 = vunpack.c.l.b16 %v61
  %v411 = vunpack.c.l.b16 %v62
  %v412 = vunpack.c.l.b16 %v63
  %v413 = vunpack.c.l.b16 %v64
  %v414 = vunpack.c.l.b16 %v65
  %v415 = vunpack.c.l.b16 %v66
  %v416 = vunpack.c.l.b16 %v67
  %v417 = vunpack.c.l.b16 %v68
  %v418 = vunpack.c.l.b16 %v69
  %v419 = vunpack.c.l.b16 %v70
  %v420 = vunpack.c.l.b16 %v71
  %v421 = vunpack.c.l.b16 %v72
  %v422 = vunpack.c.l.b16 %v73
  %v423 = vunpack.c.l.b16 %v74
  %v424 = vunpack.c.l.b16 %v75
  %v425 = vunpack.c.l.b16 %v76
  %v426 = vunpack.c.l.b16 %v77
  %v427 = vunpack.c.l.b16 %v78
  %v428 = vunpack.c.l.b16 %v79
  %v429 = vunpack.c.l.b16 %v80
  %v430 = vunpack.c.l.b16 %v81
  %v431 = vunpack.c.l.b16 %v82
  %v432 = vunpack.c.l.b16 %v83
  %v433 = vunpack.c.l.b16 %v84
  %v434 = vunpack.c.l.b16 %v85
  %v435 = vunpack.c.l.b16 %v86
  %v436 = vunpack.c.l.b16 %v87
  %v437 = vunpack.c.l.b16 %v88
  %v438 = vunpack.c.l.b16 %v89
  %v439 = vunpack.c.l.b16 %v90
  %v440 = vunpack.c.l.b16 %v91
  %v441 = vunpack.c.l.b16 %v92
  %v442 = vunpack.c.l.b16 %v93
  %v443 = vunpack.c.l.b16 %v94
  %v444 = vunpack.c.l.b16 %v95
  %v445 = vunpack.c.l.b16 %v96
  %v446 = vunpack.c.l.b16 %v97
  %v447 = vunpack.c.l.b16 %v98
  %v448 = vunpack.c.l.b16 %v99
  %v449 = vunpack.c.l.b16 %v100
  %v450 = vunpack.c.l.b16 %v101
  %v451 = vunpack.c.l.b16 %v102
  %v452 = vunpack.c.l.b16 %v103
  %v453 = vunpack.c.l.b16 %v104
  %v454 = vunpack.c.l.b16 %v105
  %v455 = vunpack.c.l.b16 %v106
  %v456 = vunpack.c.l.b16 %v107
  %v457 = vunpack.c.l.b16 %v108
  %v458 = vunpack.c.l.b16 %v109
  %v459 = vunpack.c.l.b16 %v110
  %v460 = vunpack.c.l.b16 %v111
  %v461 = vunpack.c.l.b16 %v112
  %v462 = vunpack.c.l.b16 %v113
  %v463 = vunpack.c.l.b16 %v114
  %v464 = vunpack.c.l.b16 %v115
  %v465 = vunpack.c.l.b16 %v116
  %v466 = vunpack.c.l.b16 %v117
  %v467 = vunpack.c.l.b16 %v118
  %v468 = vunpack.c.l.b16 %v119
  %v469 = vunpack.c.l.b16 %v120
  %v470 = vpack.c.b16 %v407, %v406
  %v471 = vpack.c.b16 %v409, %v408
  %v472 = vpack.c.b16 %v411, %v410
  %v473 = vpack.c.b16 %v413, %v412
  %v474 = vpack.c.b16 %v415, %v414
  %v475 = vpack.c.b16 %v417, %v416
  %v476 = vpack.c.b16 %v419, %v418
  %v477 = vpack.c.b16 %v421, %v420
  %v478 = vpack.c.b16 %v423, %v422
  %v479 = vpack.c.b16 %v425, %v424
  %v480 = vpack.c.b16 %v427, %v426
  %v481 = vpack.c.b16 %v429, %v428
  %v482 = vpack.c.b16 %v431, %v430
  %v483 = vpack.c.b16 %v433, %v432
  %v484 = vpack.c.b16 %v435, %v434
  %v485 = vpack.c.b16 %v437, %v436
  %v486 = vpack.c.b16 %v439, %v438
  %v487 = vpack.c.b16 %v441, %v440
  %v488 = vpack.c.b16 %v443, %v442
  %v489 = vpack.c.b16 %v445, %v444
  %v490 = vpack.c.b16 %v447, %v446
  %v491 = vpack.c.b16 %v449, %v448
  %v492 = vpack.c.b16 %v451, %v450
  %v493 = vpack.c.b16 %v453, %v452
  %v494 = vpack.c.b16 %v455, %v454
  %v495 = vpack.c.b16 %v457, %v456
  %v496 = vpack.c.b16 %v459, %v458
  %v497 = vpack.c.b16 %v461, %v460
  %v498 = vpack.c.b16 %v463, %v462
  %v499 = vpack.c.b16 %v465, %v464
  %v500 = vpack.c.b16 %v467, %v466
  %v501 = vpack.c.b16 %v469, %v468
  %534 = vmatprep.subr.bf16.mxu0 0
  %535 = vmatpush1.bf16.msra.mxu0 %v470
  %536 = vmatprep.subr.bf16.mxu0 0
  %537 = vmatpush1.bf16.msra.mxu0 %v471
  %538 = vmatprep.subr.bf16.mxu0 0
  %539 = vmatpush1.bf16.msra.mxu0 %v472
  %540 = vmatprep.subr.bf16.mxu0 0
  %541 = vmatpush1.bf16.msra.mxu0 %v473
  %542 = vmatprep.subr.bf16.mxu0 0
  %543 = vmatpush1.bf16.msra.mxu0 %v474
  %544 = vmatprep.subr.bf16.mxu0 0
  %545 = vmatpush1.bf16.msra.mxu0 %v475
  %546 = vmatprep.subr.bf16.mxu0 0
  %547 = vmatpush1.bf16.msra.mxu0 %v476
  %548 = vmatprep.subr.bf16.mxu0 0
  %549 = vmatpush1.bf16.msra.mxu0 %v477
  %550 = vmatprep.subr.bf16.mxu0 0
  %551 = vmatpush1.bf16.msra.mxu0 %v478
  %552 = vmatprep.subr.bf16.mxu0 0
  %553 = vmatpush1.bf16.msra.mxu0 %v479
  %554 = vmatprep.subr.bf16.mxu0 0
  %555 = vmatpush1.bf16.msra.mxu0 %v480
  %556 = vmatprep.subr.bf16.mxu0 0
  %557 = vmatpush1.bf16.msra.mxu0 %v481
  %558 = vmatprep.subr.bf16.mxu0 0
  %559 = vmatpush1.bf16.msra.mxu0 %v482
  %560 = vmatprep.subr.bf16.mxu0 0
  %561 = vmatpush1.bf16.msra.mxu0 %v483
  %562 = vmatprep.subr.bf16.mxu0 0
  %563 = vmatpush1.bf16.msra.mxu0 %v484
  %564 = vmatprep.subr.bf16.mxu0 0
  %565 = vmatpush1.bf16.msra.mxu0 %v485
  %566 = vmatprep.mubr.bf16.mxu0 %v255
  %567 = vmatmul.mubr.bf16.gmra.mrb[0].mxu0 %v254
  %v568 = vpop.f32.mrb[0].mxu0
  %v569 = vadd.f32 %v126, %v568
  %v570 = vpop.f32.mrb[0].mxu0
  %v571 = vpop.f32.mrb[0].mxu0
  %v572 = vadd.f32 %v126, %v571
  %v573 = vpop.f32.mrb[0].mxu0
  %574 = vmatprep.mubr.bf16.mxu0 %v259
  %575 = vmatmul.mubr.bf16.gmra.mrb[0].mxu0 %v258
  %v576 = vpop.f32.mrb[0].mxu0
  %v577 = vadd.f32 %v126, %v576
  %v578 = vpop.f32.mrb[0].mxu0
  %v579 = vpop.f32.mrb[0].mxu0
  %v580 = vadd.f32 %v126, %v579
  %v581 = vpop.f32.mrb[0].mxu0
  %582 = vmatprep.mubr.bf16.mxu0 %v263
  %583 = vmatmul.mubr.bf16.gmra.mrb[0].mxu0 %v262
  %v584 = vpop.f32.mrb[0].mxu0
  %v585 = vadd.f32 %v126, %v584
  %v586 = vpop.f32.mrb[0].mxu0
  %v587 = vpop.f32.mrb[0].mxu0
  %v588 = vadd.f32 %v126, %v587
  %v589 = vpop.f32.mrb[0].mxu0
  %590 = vmatprep.mubr.bf16.mxu0 %v267
  %591 = vmatmul.mubr.bf16.gmra.mrb[0].mxu0 %v266
  %v592 = vpop.f32.mrb[0].mxu0
  %v593 = vadd.f32 %v126, %v592
  %v594 = vpop.f32.mrb[0].mxu0
  %v595 = vpop.f32.mrb[0].mxu0
  %v596 = vadd.f32 %v126, %v595
  %v597 = vpop.f32.mrb[0].mxu0
  %598 = vmatprep.mubr.bf16.mxu0 %v271
  %599 = vmatmul.mubr.bf16.gmra.mrb[0].mxu0 %v270
  %v600 = vpop.f32.mrb[0].mxu0
  %v601 = vadd.f32 %v126, %v600
  %v602 = vpop.f32.mrb[0].mxu0
  %v603 = vpop.f32.mrb[0].mxu0
  %v604 = vadd.f32 %v126, %v603
  %v605 = vpop.f32.mrb[0].mxu0
  %606 = vmatprep.mubr.bf16.mxu0 %v275
  %607 = vmatmul.mubr.bf16.gmra.mrb[0].mxu0 %v274
  %v608 = vpop.f32.mrb[0].mxu0
  %v609 = vadd.f32 %v126, %v608
  %v610 = vpop.f32.mrb[0].mxu0
  %v611 = vpop.f32.mrb[0].mxu0
  %v612 = vadd.f32 %v126, %v611
  %v613 = vpop.f32.mrb[0].mxu0
  %614 = vmatprep.mubr.bf16.mxu0 %v279
  %615 = vmatmul.mubr.bf16.gmra.mrb[0].mxu0 %v278
  %v616 = vpop.f32.mrb[0].mxu0
  %v617 = vadd.f32 %v126, %v616
  %v618 = vpop.f32.mrb[0].mxu0
  %v619 = vpop.f32.mrb[0].mxu0
  %v620 = vadd.f32 %v126, %v619
  %v621 = vpop.f32.mrb[0].mxu0
  %622 = vmatprep.mubr.bf16.mxu0 %v283
  %623 = vmatmul.mubr.bf16.gmra.mrb[0].mxu0 %v282
  %v624 = vpop.f32.mrb[0].mxu0
  %v625 = vadd.f32 %v126, %v624
  %v626 = vpop.f32.mrb[0].mxu0
  %v627 = vpop.f32.mrb[0].mxu0
  %v628 = vadd.f32 %v126, %v627
  %v629 = vpop.f32.mrb[0].mxu0
  %630 = vmatprep.mubr.bf16.mxu0 %v287
  %631 = vmatmul.mubr.bf16.gmra.mrb[0].mxu0 %v286
  %v632 = vpop.f32.mrb[0].mxu0
  %v633 = vadd.f32 %v126, %v632
  %v634 = vpop.f32.mrb[0].mxu0
  %v635 = vpop.f32.mrb[0].mxu0
  %v636 = vadd.f32 %v126, %v635
  %v637 = vpop.f32.mrb[0].mxu0
  %638 = vmatprep.mubr.bf16.mxu0 %v291
  %639 = vmatmul.mubr.bf16.gmra.mrb[0].mxu0 %v290
  %v640 = vpop.f32.mrb[0].mxu0
  %v641 = vadd.f32 %v126, %v640
  %v642 = vpop.f32.mrb[0].mxu0
  %v643 = vpop.f32.mrb[0].mxu0
  %v644 = vadd.f32 %v126, %v643
  %v645 = vpop.f32.mrb[0].mxu0
  %646 = vmatprep.mubr.bf16.mxu0 %v295
  %647 = vmatmul.mubr.bf16.gmra.mrb[0].mxu0 %v294
  %v648 = vpop.f32.mrb[0].mxu0
  %v649 = vadd.f32 %v126, %v648
  %v650 = vpop.f32.mrb[0].mxu0
  %v651 = vpop.f32.mrb[0].mxu0
  %v652 = vpop.f32.mrb[0].mxu0
  %653 = vdwg.mxu0
  %654 = vmatprep.subr.bf16.mxu0 0
  %655 = vmatpush1.bf16.msra.mxu0 %v486
  %656 = vmatprep.subr.bf16.mxu0 0
  %657 = vmatpush1.bf16.msra.mxu0 %v487
  %658 = vmatprep.subr.bf16.mxu0 0
  %659 = vmatpush1.bf16.msra.mxu0 %v488
  %660 = vmatprep.subr.bf16.mxu0 0
  %661 = vmatpush1.bf16.msra.mxu0 %v489
  %662 = vmatprep.subr.bf16.mxu0 0
  %663 = vmatpush1.bf16.msra.mxu0 %v490
  %664 = vmatprep.subr.bf16.mxu0 0
  %665 = vmatpush1.bf16.msra.mxu0 %v491
  %666 = vmatprep.subr.bf16.mxu0 0
  %667 = vmatpush1.bf16.msra.mxu0 %v492
  %668 = vmatprep.subr.bf16.mxu0 0
  %669 = vmatpush1.bf16.msra.mxu0 %v493
  %670 = vmatprep.subr.bf16.mxu0 0
  %671 = vmatpush1.bf16.msra.mxu0 %v494
  %672 = vmatprep.subr.bf16.mxu0 0
  %673 = vmatpush1.bf16.msra.mxu0 %v495
  %674 = vmatprep.subr.bf16.mxu0 0
  %675 = vmatpush1.bf16.msra.mxu0 %v496
  %676 = vmatprep.subr.bf16.mxu0 0
  %677 = vmatpush1.bf16.msra.mxu0 %v497
  %678 = vmatprep.subr.bf16.mxu0 0
  %679 = vmatpush1.bf16.msra.mxu0 %v498
  %680 = vmatprep.subr.bf16.mxu0 0
  %681 = vmatpush1.bf16.msra.mxu0 %v499
  %682 = vmatprep.subr.bf16.mxu0 0
  %683 = vmatpush1.bf16.msra.mxu0 %v500
  %684 = vmatprep.subr.bf16.mxu0 0
  %685 = vmatpush1.bf16.msra.mxu0 %v501
  %686 = vmatprep.mubr.bf16.mxu0 %v257
  %687 = vmatmul.mubr.bf16.gmra.mrb[0].mxu0 %v256
  %v688 = vpop.f32.mrb[0].mxu0
  %v689 = vadd.f32 %v569, %v688
  %v690 = vpop.f32.mrb[0].mxu0
  %v691 = vpop.f32.mrb[0].mxu0
  %v692 = vadd.f32 %v572, %v691
  %v693 = vpop.f32.mrb[0].mxu0
  %694 = vmatprep.mubr.bf16.mxu0 %v261
  %695 = vmatmul.mubr.bf16.gmra.mrb[0].mxu0 %v260
  %v696 = vpop.f32.mrb[0].mxu0
  %v697 = vadd.f32 %v577, %v696
  %v698 = vpop.f32.mrb[0].mxu0
  %v699 = vpop.f32.mrb[0].mxu0
  %v700 = vadd.f32 %v580, %v699
  %v701 = vpop.f32.mrb[0].mxu0
  %702 = vmatprep.mubr.bf16.mxu0 %v265
  %703 = vmatmul.mubr.bf16.gmra.mrb[0].mxu0 %v264
  %v704 = vpop.f32.mrb[0].mxu0
  %v705 = vadd.f32 %v585, %v704
  %v706 = vpop.f32.mrb[0].mxu0
  %v707 = vpop.f32.mrb[0].mxu0
  %v708 = vadd.f32 %v588, %v707
  %v709 = vpop.f32.mrb[0].mxu0
  %710 = vmatprep.mubr.bf16.mxu0 %v269
  %711 = vmatmul.mubr.bf16.gmra.mrb[0].mxu0 %v268
  %v712 = vpop.f32.mrb[0].mxu0
  %v713 = vadd.f32 %v593, %v712
  %v714 = vpop.f32.mrb[0].mxu0
  %v715 = vpop.f32.mrb[0].mxu0
  %v716 = vadd.f32 %v596, %v715
  %v717 = vpop.f32.mrb[0].mxu0
  %718 = vmatprep.mubr.bf16.mxu0 %v273
  %719 = vmatmul.mubr.bf16.gmra.mrb[0].mxu0 %v272
  %v720 = vpop.f32.mrb[0].mxu0
  %v721 = vadd.f32 %v601, %v720
  %v722 = vpop.f32.mrb[0].mxu0
  %v723 = vpop.f32.mrb[0].mxu0
  %v724 = vadd.f32 %v604, %v723
  %v725 = vpop.f32.mrb[0].mxu0
  %726 = vmatprep.mubr.bf16.mxu0 %v277
  %727 = vmatmul.mubr.bf16.gmra.mrb[0].mxu0 %v276
  %v728 = vpop.f32.mrb[0].mxu0
  %v729 = vadd.f32 %v609, %v728
  %v730 = vpop.f32.mrb[0].mxu0
  %v731 = vpop.f32.mrb[0].mxu0
  %v732 = vadd.f32 %v612, %v731
  %v733 = vpop.f32.mrb[0].mxu0
  %734 = vmatprep.mubr.bf16.mxu0 %v281
  %735 = vmatmul.mubr.bf16.gmra.mrb[0].mxu0 %v280
  %v736 = vpop.f32.mrb[0].mxu0
  %v737 = vadd.f32 %v617, %v736
  %v738 = vpop.f32.mrb[0].mxu0
  %v739 = vpop.f32.mrb[0].mxu0
  %v740 = vadd.f32 %v620, %v739
  %v741 = vpop.f32.mrb[0].mxu0
  %742 = vmatprep.mubr.bf16.mxu0 %v285
  %743 = vmatmul.mubr.bf16.gmra.mrb[0].mxu0 %v284
  %v744 = vpop.f32.mrb[0].mxu0
  %v745 = vadd.f32 %v625, %v744
  %v746 = vpop.f32.mrb[0].mxu0
  %v747 = vpop.f32.mrb[0].mxu0
  %v748 = vadd.f32 %v628, %v747
  %v749 = vpop.f32.mrb[0].mxu0
  %750 = vmatprep.mubr.bf16.mxu0 %v289
  %751 = vmatmul.mubr.bf16.gmra.mrb[0].mxu0 %v288
  %v752 = vpop.f32.mrb[0].mxu0
  %v753 = vadd.f32 %v633, %v752
  %v754 = vpop.f32.mrb[0].mxu0
  %v755 = vpop.f32.mrb[0].mxu0
  %v756 = vadd.f32 %v636, %v755
  %v757 = vpop.f32.mrb[0].mxu0
  %758 = vmatprep.mubr.bf16.mxu0 %v293
  %759 = vmatmul.mubr.bf16.gmra.mrb[0].mxu0 %v292
  %v760 = vpop.f32.mrb[0].mxu0
  %v761 = vadd.f32 %v641, %v760
  %v762 = vpop.f32.mrb[0].mxu0
  %v763 = vpop.f32.mrb[0].mxu0
  %v764 = vadd.f32 %v644, %v763
  %v765 = vpop.f32.mrb[0].mxu0
  %766 = vmatprep.mubr.bf16.mxu0 %v297
  %767 = vmatmul.mubr.bf16.gmra.mrb[0].mxu0 %v296
  %v768 = vpop.f32.mrb[0].mxu0
  %v769 = vadd.f32 %v649, %v768
  %v770 = vpop.f32.mrb[0].mxu0
  %v771 = vpop.f32.mrb[0].mxu0
  %v772 = vpop.f32.mrb[0].mxu0
  %773 = vdwg.mxu0
  %v774 = vmax.f32 %v689, 0.0
  %v775 = vmax.f32 %v692, 0.0
  %v776 = vmax.f32 %v697, 0.0
  %v777 = vmax.f32 %v700, 0.0
  %v778 = vmax.f32 %v705, 0.0
  %v779 = vmax.f32 %v708, 0.0
  %v780 = vmax.f32 %v713, 0.0
  %v781 = vmax.f32 %v716, 0.0
  %v782 = vmax.f32 %v721, 0.0
  %v783 = vmax.f32 %v724, 0.0
  %v784 = vmax.f32 %v729, 0.0
  %v785 = vmax.f32 %v732, 0.0
  %v786 = vmax.f32 %v737, 0.0
  %v787 = vmax.f32 %v740, 0.0
  %v788 = vmax.f32 %v745, 0.0
  %v789 = vmax.f32 %v748, 0.0
  %v790 = vmax.f32 %v753, 0.0
  %v791 = vmax.f32 %v756, 0.0
  %v792 = vmax.f32 %v761, 0.0
  %v793 = vmax.f32 %v764, 0.0
  %v794 = vmax.f32 %v769, 0.0
  %v795 = vpack.c.bf16 %v775, %v774
  %v796 = vpack.c.bf16 %v777, %v776
  %v797 = vpack.c.bf16 %v779, %v778
  %v798 = vpack.c.bf16 %v781, %v780
  %v799 = vpack.c.bf16 %v783, %v782
  %v800 = vpack.c.bf16 %v785, %v784
  %v801 = vpack.c.bf16 %v787, %v786
  %v802 = vpack.c.bf16 %v789, %v788
  %v803 = vpack.c.bf16 %v791, %v790
  %v804 = vpack.c.bf16 %v793, %v792
  %v805 = vpack.c.bf16 %v794, %v794
  %v817 = vunpack.c.l.b16 %v795
  %v818 = vunpack.c.h.b16 %v795
  %v819 = vunpack.c.l.b16 %v796
  %v820 = vunpack.c.h.b16 %v796
  %v821 = vunpack.c.l.b16 %v797
  %v822 = vunpack.c.h.b16 %v797
  %v823 = vunpack.c.l.b16 %v798
  %v824 = vunpack.c.h.b16 %v798
  %v825 = vunpack.c.l.b16 %v799
  %v826 = vunpack.c.h.b16 %v799
  %v827 = vunpack.c.l.b16 %v800
  %v828 = vunpack.c.h.b16 %v800
  %v829 = vunpack.c.l.b16 %v801
  %v830 = vunpack.c.h.b16 %v801
  %v831 = vunpack.c.l.b16 %v802
  %v832 = vunpack.c.h.b16 %v802
  %v833 = vunpack.c.l.b16 %v803
  %v834 = vunpack.c.h.b16 %v803
  %v835 = vunpack.c.l.b16 %v804
  %v836 = vunpack.c.h.b16 %v804
  %v837 = vunpack.c.l.b16 %v805
  %v838 = vpack.c.b16 %v817, %v817
  %v839 = vpack.c.b16 %v818, %v818
  %v840 = vpack.c.b16 %v819, %v819
  %v841 = vpack.c.b16 %v820, %v820
  %v842 = vpack.c.b16 %v821, %v821
  %v843 = vpack.c.b16 %v822, %v822
  %v844 = vpack.c.b16 %v823, %v823
  %v845 = vpack.c.b16 %v824, %v824
  %v846 = vpack.c.b16 %v825, %v825
  %v847 = vpack.c.b16 %v826, %v826
  %v848 = vpack.c.b16 %v827, %v827
  %v849 = vpack.c.b16 %v828, %v828
  %v850 = vpack.c.b16 %v829, %v829
  %v851 = vpack.c.b16 %v830, %v830
  %v852 = vpack.c.b16 %v831, %v831
  %v853 = vpack.c.b16 %v832, %v832
  %v854 = vpack.c.b16 %v833, %v833
  %v855 = vpack.c.b16 %v834, %v834
  %v856 = vpack.c.b16 %v835, %v835
  %v857 = vpack.c.b16 %v836, %v836
  %v858 = vpack.c.b16 %v837, %v837
  %880 = vst [vmem:[%s3] sm:$0xf] %v838
  %881 = vst [vmem:[%s3 + $0x4] sm:$0xf] %v839
  %882 = vst [vmem:[%s3 + $0x8] sm:$0xf] %v840
  %883 = vst [vmem:[%s3 + $0xc] sm:$0xf] %v841
  %884 = vst [vmem:[%s3 + $0x10] sm:$0xf] %v842
  %885 = vst [vmem:[%s3 + $0x14] sm:$0xf] %v843
  %886 = vst [vmem:[%s3 + $0x18] sm:$0xf] %v844
  %887 = vst [vmem:[%s3 + $0x1c] sm:$0xf] %v845
  %888 = vst [vmem:[%s3 + $0x20] sm:$0xf] %v846
  %889 = vst [vmem:[%s3 + $0x24] sm:$0xf] %v847
  %890 = vst [vmem:[%s3 + $0x28] sm:$0xf] %v848
  %891 = vst [vmem:[%s3 + $0x2c] sm:$0xf] %v849
  %892 = vst [vmem:[%s3 + $0x30] sm:$0xf] %v850
  %893 = vst [vmem:[%s3 + $0x34] sm:$0xf] %v851
  %894 = vst [vmem:[%s3 + $0x38] sm:$0xf] %v852
  %895 = vst [vmem:[%s3 + $0x3c] sm:$0xf] %v853
  %896 = vst [vmem:[%s3 + $0x40] sm:$0xf] %v854
  %897 = vst [vmem:[%s3 + $0x44] sm:$0xf] %v855
  %898 = vst [vmem:[%s3 + $0x48] sm:$0xf] %v856
  %899 = vst [vmem:[%s3 + $0x4c] sm:$0xf] %v857
  %900 = vst [vmem:[%s3 + $0x50] sm:$0xf] %v858
  // Predicated region
  $region14: #{_lambda_.6} parent=0 // pred_check
    _
  $region15: #{_lambda_.6} parent=0 // pred_check_branch
    %902 = sbr.rel (0) target = $region17
  $region16: #{_lambda_.6} parent=0 // pred_region
    _
  $region17: #{_lambda_.6} parent=0 // pred_fallthru
    _
  // Predicated region
  $region18: #{_lambda_.6} parent=0 // pred_check
    _
  $region19: #{_lambda_.6} parent=0 // pred_check_branch
    %904 = sbr.rel (0) target = $region21
  $region20: #{_lambda_.6} parent=0 // pred_region
    _
  $region21: #{_lambda_.6} parent=0 // pred_fallthru
    _

// kernel: _lambda_.7
$region0: #{_lambda_.7}
  #allocation0 [shape = 'u32[]', space=smem, size = 0x4, offset = 0x4, fixed_abs, tag = 'smem constant byte address 0x4 - core index']
  #allocation1 [shape = 'u32[144,128]{1,0:T(1,128)}', space=vmem, size = 0x12000, scoped, tag = 'internal scratch']
  %s0 = inlined_call_operand.vmem [shape: bf16[168,288], index: 0, kind: input, shape index: {}]
  %s1 = inlined_call_operand.vmem [shape: bf16[288,128], index: 1, kind: input, shape index: {}]
  %s2 = inlined_call_operand.vmem [shape: f32[1,128], index: 2, kind: input, shape index: {}]
  %s3 = inlined_call_operand.vmem [shape: bf16[168,128], index: 3, kind: output, shape index: {}]
  %s4 = sld [smem:[#allocation0]]
  $region22: #{_lambda_.7} parent=0
    _
  %s6 = ssub.s32 1, %s4
  %s7 = scalar_select 0, %s6, %s4
  // Predicated region
  $region2: #{_lambda_.7} parent=0 // pred_check
    _
  $region3: #{_lambda_.7} parent=0 // pred_check_branch
    %9 = sbr.rel (0) target = $region5
  $region4: #{_lambda_.7} parent=0 // pred_region
    _
  $region5: #{_lambda_.7} parent=0 // pred_fallthru
    _
  // Predicated region
  $region6: #{_lambda_.7} parent=0 // pred_check
    _
  $region7: #{_lambda_.7} parent=0 // pred_check_branch
    %11 = sbr.rel (0) target = $region9
  $region8: #{_lambda_.7} parent=0 // pred_region
    _
  $region9: #{_lambda_.7} parent=0 // pred_fallthru
    _
  // Predicated region
  $region10: #{_lambda_.7} parent=0 // pred_check
    _
  $region11: #{_lambda_.7} parent=0 // pred_check_branch
    %13 = sbr.rel (0) target = $region13
  $region12: #{_lambda_.7} parent=0 // pred_region
    _
  $region13: #{_lambda_.7} parent=0 // pred_fallthru
    _
  %v15 = vld [vmem:[%s0] sm:$0xff]
  %v16 = vld [vmem:[%s0 + $0x8] sm:$0xf]
  %v17 = vld [vmem:[%s0 + $0xc] sm:$0xff]
  %v18 = vld [vmem:[%s0 + $0x14] sm:$0xf]
  %v19 = vld [vmem:[%s0 + $0x18] sm:$0xff]
  %v20 = vld [vmem:[%s0 + $0x20] sm:$0xf]
  %v21 = vld [vmem:[%s0 + $0x24] sm:$0xff]
  %v22 = vld [vmem:[%s0 + $0x2c] sm:$0xf]
  %v23 = vld [vmem:[%s0 + $0x30] sm:$0xff]
  %v24 = vld [vmem:[%s0 + $0x38] sm:$0xf]
  %v25 = vld [vmem:[%s0 + $0x3c] sm:$0xff]
  %v26 = vld [vmem:[%s0 + $0x44] sm:$0xf]
  %v27 = vld [vmem:[%s0 + $0x48] sm:$0xff]
  %v28 = vld [vmem:[%s0 + $0x50] sm:$0xf]
  %v29 = vld [vmem:[%s0 + $0x54] sm:$0xff]
  %v30 = vld [vmem:[%s0 + $0x5c] sm:$0xf]
  %v31 = vld [vmem:[%s0 + $0x60] sm:$0xff]
  %v32 = vld [vmem:[%s0 + $0x68] sm:$0xf]
  %v33 = vld [vmem:[%s0 + $0x6c] sm:$0xff]
  %v34 = vld [vmem:[%s0 + $0x74] sm:$0xf]
  %v35 = vld [vmem:[%s0 + $0x78] sm:$0xff]
  %v36 = vld [vmem:[%s0 + $0x80] sm:$0xf]
  %v37 = vld [vmem:[%s0 + $0x84] sm:$0xff]
  %v38 = vld [vmem:[%s0 + $0x8c] sm:$0xf]
  %v39 = vld [vmem:[%s0 + $0x90] sm:$0xff]
  %v40 = vld [vmem:[%s0 + $0x98] sm:$0xf]
  %v41 = vld [vmem:[%s0 + $0x9c] sm:$0xff]
  %v42 = vld [vmem:[%s0 + $0xa4] sm:$0xf]
  %v43 = vld [vmem:[%s0 + $0xa8] sm:$0xff]
  %v44 = vld [vmem:[%s0 + $0xb0] sm:$0xf]
  %v45 = vld [vmem:[%s0 + $0xb4] sm:$0xff]
  %v46 = vld [vmem:[%s0 + $0xbc] sm:$0xf]
  %v47 = vld [vmem:[%s0 + $0xc0] sm:$0xff]
  %v48 = vld [vmem:[%s0 + $0xc8] sm:$0xf]
  %v49 = vld [vmem:[%s0 + $0xcc] sm:$0xff]
  %v50 = vld [vmem:[%s0 + $0xd4] sm:$0xf]
  %v51 = vld [vmem:[%s0 + $0xd8] sm:$0xff]
  %v52 = vld [vmem:[%s0 + $0xe0] sm:$0xf]
  %v53 = vld [vmem:[%s0 + $0xe4] sm:$0xff]
  %v54 = vld [vmem:[%s0 + $0xec] sm:$0xf]
  %v55 = vld [vmem:[%s0 + $0xf0] sm:$0xff]
  %v56 = vld [vmem:[%s0 + $0xf8] sm:$0xf]
  %v57 = vld [vmem:[%s1] sm:$0xf]
  %v58 = vld [vmem:[%s1 + $0x4] sm:$0xf]
  %v59 = vld [vmem:[%s1 + $0x8] sm:$0xf]
  %v60 = vld [vmem:[%s1 + $0xc] sm:$0xf]
  %v61 = vld [vmem:[%s1 + $0x10] sm:$0xf]
  %v62 = vld [vmem:[%s1 + $0x14] sm:$0xf]
  %v63 = vld [vmem:[%s1 + $0x18] sm:$0xf]
  %v64 = vld [vmem:[%s1 + $0x1c] sm:$0xf]
  %v65 = vld [vmem:[%s1 + $0x20] sm:$0xf]
  %v66 = vld [vmem:[%s1 + $0x24] sm:$0xf]
  %v67 = vld [vmem:[%s1 + $0x28] sm:$0xf]
  %v68 = vld [vmem:[%s1 + $0x2c] sm:$0xf]
  %v69 = vld [vmem:[%s1 + $0x30] sm:$0xf]
  %v70 = vld [vmem:[%s1 + $0x34] sm:$0xf]
  %v71 = vld [vmem:[%s1 + $0x38] sm:$0xf]
  %v72 = vld [vmem:[%s1 + $0x3c] sm:$0xf]
  %v73 = vld [vmem:[%s1 + $0x40] sm:$0xf]
  %v74 = vld [vmem:[%s1 + $0x44] sm:$0xf]
  %v75 = vld [vmem:[%s1 + $0x48] sm:$0xf]
  %v76 = vld [vmem:[%s1 + $0x4c] sm:$0xf]
  %v77 = vld [vmem:[%s1 + $0x50] sm:$0xf]
  %v78 = vld [vmem:[%s1 + $0x54] sm:$0xf]
  %v79 = vld [vmem:[%s1 + $0x58] sm:$0xf]
  %v80 = vld [vmem:[%s1 + $0x5c] sm:$0xf]
  %v81 = vld [vmem:[%s1 + $0x60] sm:$0xf]
  %v82 = vld [vmem:[%s1 + $0x64] sm:$0xf]
  %v83 = vld [vmem:[%s1 + $0x68] sm:$0xf]
  %v84 = vld [vmem:[%s1 + $0x6c] sm:$0xf]
  %v85 = vld [vmem:[%s1 + $0x70] sm:$0xf]
  %v86 = vld [vmem:[%s1 + $0x74] sm:$0xf]
  %v87 = vld [vmem:[%s1 + $0x78] sm:$0xf]
  %v88 = vld [vmem:[%s1 + $0x7c] sm:$0xf]
  %v89 = vld [vmem:[%s1 + $0x80] sm:$0xf]
  %v90 = vld [vmem:[%s1 + $0x84] sm:$0xf]
  %v91 = vld [vmem:[%s1 + $0x88] sm:$0xf]
  %v92 = vld [vmem:[%s1 + $0x8c] sm:$0xf]
  %v93 = vld [vmem:[%s2] sm:$0x1]
  %v95 = vlaneseq
  %v96 = vshrl.u32 %v95, 7
  %v97 = vsub.s32 0, %v96
  %v98 = vrot.slane %v93, %v97
  %v142 = vunpack.c.l.b16 %v15
  %v143 = vunpack.c.h.b16 %v15
  %v144 = vunpack.c.l.b16 %v16
  %v145 = vunpack.c.l.b16 %v17
  %v146 = vunpack.c.h.b16 %v17
  %v147 = vunpack.c.l.b16 %v18
  %v148 = vunpack.c.l.b16 %v19
  %v149 = vunpack.c.h.b16 %v19
  %v150 = vunpack.c.l.b16 %v20
  %v151 = vunpack.c.l.b16 %v21
  %v152 = vunpack.c.h.b16 %v21
  %v153 = vunpack.c.l.b16 %v22
  %v154 = vunpack.c.l.b16 %v23
  %v155 = vunpack.c.h.b16 %v23
  %v156 = vunpack.c.l.b16 %v24
  %v157 = vunpack.c.l.b16 %v25
  %v158 = vunpack.c.h.b16 %v25
  %v159 = vunpack.c.l.b16 %v26
  %v160 = vunpack.c.l.b16 %v27
  %v161 = vunpack.c.h.b16 %v27
  %v162 = vunpack.c.l.b16 %v28
  %v163 = vunpack.c.l.b16 %v29
  %v164 = vunpack.c.h.b16 %v29
  %v165 = vunpack.c.l.b16 %v30
  %v166 = vunpack.c.l.b16 %v31
  %v167 = vunpack.c.h.b16 %v31
  %v168 = vunpack.c.l.b16 %v32
  %v169 = vunpack.c.l.b16 %v33
  %v170 = vunpack.c.h.b16 %v33
  %v171 = vunpack.c.l.b16 %v34
  %v172 = vunpack.c.l.b16 %v35
  %v173 = vunpack.c.h.b16 %v35
  %v174 = vunpack.c.l.b16 %v36
  %v175 = vunpack.c.l.b16 %v37
  %v176 = vunpack.c.h.b16 %v37
  %v177 = vunpack.c.l.b16 %v38
  %v178 = vunpack.c.l.b16 %v39
  %v179 = vunpack.c.h.b16 %v39
  %v180 = vunpack.c.l.b16 %v40
  %v181 = vunpack.c.l.b16 %v41
  %v182 = vunpack.c.h.b16 %v41
  %v183 = vunpack.c.l.b16 %v42
  %v184 = vunpack.c.l.b16 %v43
  %v185 = vunpack.c.h.b16 %v43
  %v186 = vunpack.c.l.b16 %v44
  %v187 = vunpack.c.l.b16 %v45
  %v188 = vunpack.c.h.b16 %v45
  %v189 = vunpack.c.l.b16 %v46
  %v190 = vunpack.c.l.b16 %v47
  %v191 = vunpack.c.h.b16 %v47
  %v192 = vunpack.c.l.b16 %v48
  %v193 = vunpack.c.l.b16 %v49
  %v194 = vunpack.c.h.b16 %v49
  %v195 = vunpack.c.l.b16 %v50
  %v196 = vunpack.c.l.b16 %v51
  %v197 = vunpack.c.h.b16 %v51
  %v198 = vunpack.c.l.b16 %v52
  %v199 = vunpack.c.l.b16 %v53
  %v200 = vunpack.c.h.b16 %v53
  %v201 = vunpack.c.l.b16 %v54
  %v202 = vunpack.c.l.b16 %v55
  %v203 = vunpack.c.h.b16 %v55
  %v204 = vunpack.c.l.b16 %v56
  %v205 = vpack.c.b16 %v145, %v142
  %v206 = vpack.c.b16 %v146, %v143
  %v207 = vpack.c.b16 %v147, %v144
  %v208 = vpack.c.b16 %v151, %v148
  %v209 = vpack.c.b16 %v152, %v149
  %v210 = vpack.c.b16 %v153, %v150
  %v211 = vpack.c.b16 %v157, %v154
  %v212 = vpack.c.b16 %v158, %v155
  %v213 = vpack.c.b16 %v159, %v156
  %v214 = vpack.c.b16 %v163, %v160
  %v215 = vpack.c.b16 %v164, %v161
  %v216 = vpack.c.b16 %v165, %v162
  %v217 = vpack.c.b16 %v169, %v166
  %v218 = vpack.c.b16 %v170, %v167
  %v219 = vpack.c.b16 %v171, %v168
  %v220 = vpack.c.b16 %v175, %v172
  %v221 = vpack.c.b16 %v176, %v173
  %v222 = vpack.c.b16 %v177, %v174
  %v223 = vpack.c.b16 %v181, %v178
  %v224 = vpack.c.b16 %v182, %v179
  %v225 = vpack.c.b16 %v183, %v180
  %v226 = vpack.c.b16 %v187, %v184
  %v227 = vpack.c.b16 %v188, %v185
  %v228 = vpack.c.b16 %v189, %v186
  %v229 = vpack.c.b16 %v193, %v190
  %v230 = vpack.c.b16 %v194, %v191
  %v231 = vpack.c.b16 %v195, %v192
  %v232 = vpack.c.b16 %v199, %v196
  %v233 = vpack.c.b16 %v200, %v197
  %v234 = vpack.c.b16 %v201, %v198
  %v235 = vpack.c.b16 %v202, %v202
  %v236 = vpack.c.b16 %v203, %v203
  %v237 = vpack.c.b16 %v204, %v204
  %v296 = vunpack.c.l.b16 %v57
  %v297 = vunpack.c.l.b16 %v58
  %v298 = vunpack.c.l.b16 %v59
  %v299 = vunpack.c.l.b16 %v60
  %v300 = vunpack.c.l.b16 %v61
  %v301 = vunpack.c.l.b16 %v62
  %v302 = vunpack.c.l.b16 %v63
  %v303 = vunpack.c.l.b16 %v64
  %v304 = vunpack.c.l.b16 %v65
  %v305 = vunpack.c.l.b16 %v66
  %v306 = vunpack.c.l.b16 %v67
  %v307 = vunpack.c.l.b16 %v68
  %v308 = vunpack.c.l.b16 %v69
  %v309 = vunpack.c.l.b16 %v70
  %v310 = vunpack.c.l.b16 %v71
  %v311 = vunpack.c.l.b16 %v72
  %v312 = vunpack.c.l.b16 %v73
  %v313 = vunpack.c.l.b16 %v74
  %v314 = vunpack.c.l.b16 %v75
  %v315 = vunpack.c.l.b16 %v76
  %v316 = vunpack.c.l.b16 %v77
  %v317 = vunpack.c.l.b16 %v78
  %v318 = vunpack.c.l.b16 %v79
  %v319 = vunpack.c.l.b16 %v80
  %v320 = vunpack.c.l.b16 %v81
  %v321 = vunpack.c.l.b16 %v82
  %v322 = vunpack.c.l.b16 %v83
  %v323 = vunpack.c.l.b16 %v84
  %v324 = vunpack.c.l.b16 %v85
  %v325 = vunpack.c.l.b16 %v86
  %v326 = vunpack.c.l.b16 %v87
  %v327 = vunpack.c.l.b16 %v88
  %v328 = vunpack.c.l.b16 %v89
  %v329 = vunpack.c.l.b16 %v90
  %v330 = vunpack.c.l.b16 %v91
  %v331 = vunpack.c.l.b16 %v92
  %v332 = vpack.c.b16 %v297, %v296
  %v333 = vpack.c.b16 %v299, %v298
  %v334 = vpack.c.b16 %v301, %v300
  %v335 = vpack.c.b16 %v303, %v302
  %v336 = vpack.c.b16 %v305, %v304
  %v337 = vpack.c.b16 %v307, %v306
  %v338 = vpack.c.b16 %v309, %v308
  %v339 = vpack.c.b16 %v311, %v310
  %v340 = vpack.c.b16 %v313, %v312
  %v341 = vpack.c.b16 %v315, %v314
  %v342 = vpack.c.b16 %v317, %v316
  %v343 = vpack.c.b16 %v319, %v318
  %v344 = vpack.c.b16 %v321, %v320
  %v345 = vpack.c.b16 %v323, %v322
  %v346 = vpack.c.b16 %v325, %v324
  %v347 = vpack.c.b16 %v327, %v326
  %v348 = vpack.c.b16 %v329, %v328
  %v349 = vpack.c.b16 %v331, %v330
  %vm368 = vcmask 261120
  %v370 = vsel %vm368, %v207, 0
  %v373 = vsel %vm368, %v210, 0
  %v376 = vsel %vm368, %v213, 0
  %v379 = vsel %vm368, %v216, 0
  %v382 = vsel %vm368, %v219, 0
  %v385 = vsel %vm368, %v222, 0
  %v388 = vsel %vm368, %v225, 0
  %v391 = vsel %vm368, %v228, 0
  %v394 = vsel %vm368, %v231, 0
  %v397 = vsel %vm368, %v234, 0
  %v400 = vsel %vm368, %v237, 0
  %402 = vmatprep.subr.bf16.mxu0 0
  %403 = vmatpush1.bf16.msra.mxu0 %v332
  %404 = vmatprep.subr.bf16.mxu0 0
  %405 = vmatpush1.bf16.msra.mxu0 %v333
  %406 = vmatprep.subr.bf16.mxu0 0
  %407 = vmatpush1.bf16.msra.mxu0 %v334
  %408 = vmatprep.subr.bf16.mxu0 0
  %409 = vmatpush1.bf16.msra.mxu0 %v335
  %410 = vmatprep.subr.bf16.mxu0 0
  %411 = vmatpush1.bf16.msra.mxu0 %v336
  %412 = vmatprep.subr.bf16.mxu0 0
  %413 = vmatpush1.bf16.msra.mxu0 %v337
  %414 = vmatprep.subr.bf16.mxu0 0
  %415 = vmatpush1.bf16.msra.mxu0 %v338
  %416 = vmatprep.subr.bf16.mxu0 0
  %417 = vmatpush1.bf16.msra.mxu0 %v339
  %418 = vmatprep.subr.bf16.mxu0 0
  %419 = vmatpush1.bf16.msra.mxu0 %v340
  %420 = vmatprep.subr.bf16.mxu0 0
  %421 = vmatpush1.bf16.msra.mxu0 %v341
  %422 = vmatprep.subr.bf16.mxu0 0
  %423 = vmatpush1.bf16.msra.mxu0 %v342
  %424 = vmatprep.subr.bf16.mxu0 0
  %425 = vmatpush1.bf16.msra.mxu0 %v343
  %426 = vmatprep.subr.bf16.mxu0 0
  %427 = vmatpush1.bf16.msra.mxu0 %v344
  %428 = vmatprep.subr.bf16.mxu0 0
  %429 = vmatpush1.bf16.msra.mxu0 %v345
  %430 = vmatprep.subr.bf16.mxu0 0
  %431 = vmatpush1.bf16.msra.mxu0 %v346
  %432 = vmatprep.subr.bf16.mxu0 0
  %433 = vmatpush1.bf16.msra.mxu0 %v347
  %434 = vmatprep.mubr.bf16.mxu0 %v206
  %435 = vmatmul.mubr.bf16.gmra.mrb[0].mxu0 %v205
  %v436 = vpop.f32.mrb[0].mxu0
  %v437 = vadd.f32 %v98, %v436
  %v438 = vpop.f32.mrb[0].mxu0
  %v439 = vpop.f32.mrb[0].mxu0
  %v440 = vadd.f32 %v98, %v439
  %v441 = vpop.f32.mrb[0].mxu0
  %442 = vmatprep.mubr.bf16.mxu0 %v209
  %443 = vmatmul.mubr.bf16.gmra.mrb[0].mxu0 %v208
  %v444 = vpop.f32.mrb[0].mxu0
  %v445 = vadd.f32 %v98, %v444
  %v446 = vpop.f32.mrb[0].mxu0
  %v447 = vpop.f32.mrb[0].mxu0
  %v448 = vadd.f32 %v98, %v447
  %v449 = vpop.f32.mrb[0].mxu0
  %450 = vmatprep.mubr.bf16.mxu0 %v212
  %451 = vmatmul.mubr.bf16.gmra.mrb[0].mxu0 %v211
  %v452 = vpop.f32.mrb[0].mxu0
  %v453 = vadd.f32 %v98, %v452
  %v454 = vpop.f32.mrb[0].mxu0
  %v455 = vpop.f32.mrb[0].mxu0
  %v456 = vadd.f32 %v98, %v455
  %v457 = vpop.f32.mrb[0].mxu0
  %458 = vmatprep.mubr.bf16.mxu0 %v215
  %459 = vmatmul.mubr.bf16.gmra.mrb[0].mxu0 %v214
  %v460 = vpop.f32.mrb[0].mxu0
  %v461 = vadd.f32 %v98, %v460
  %v462 = vpop.f32.mrb[0].mxu0
  %v463 = vpop.f32.mrb[0].mxu0
  %v464 = vadd.f32 %v98, %v463
  %v465 = vpop.f32.mrb[0].mxu0
  %466 = vmatprep.mubr.bf16.mxu0 %v218
  %467 = vmatmul.mubr.bf16.gmra.mrb[0].mxu0 %v217
  %v468 = vpop.f32.mrb[0].mxu0
  %v469 = vadd.f32 %v98, %v468
  %v470 = vpop.f32.mrb[0].mxu0
  %v471 = vpop.f32.mrb[0].mxu0
  %v472 = vadd.f32 %v98, %v471
  %v473 = vpop.f32.mrb[0].mxu0
  %474 = vmatprep.mubr.bf16.mxu0 %v221
  %475 = vmatmul.mubr.bf16.gmra.mrb[0].mxu0 %v220
  %v476 = vpop.f32.mrb[0].mxu0
  %v477 = vadd.f32 %v98, %v476
  %v478 = vpop.f32.mrb[0].mxu0
  %v479 = vpop.f32.mrb[0].mxu0
  %v480 = vadd.f32 %v98, %v479
  %v481 = vpop.f32.mrb[0].mxu0
  %482 = vmatprep.mubr.bf16.mxu0 %v224
  %483 = vmatmul.mubr.bf16.gmra.mrb[0].mxu0 %v223
  %v484 = vpop.f32.mrb[0].mxu0
  %v485 = vadd.f32 %v98, %v484
  %v486 = vpop.f32.mrb[0].mxu0
  %v487 = vpop.f32.mrb[0].mxu0
  %v488 = vadd.f32 %v98, %v487
  %v489 = vpop.f32.mrb[0].mxu0
  %490 = vmatprep.mubr.bf16.mxu0 %v227
  %491 = vmatmul.mubr.bf16.gmra.mrb[0].mxu0 %v226
  %v492 = vpop.f32.mrb[0].mxu0
  %v493 = vadd.f32 %v98, %v492
  %v494 = vpop.f32.mrb[0].mxu0
  %v495 = vpop.f32.mrb[0].mxu0
  %v496 = vadd.f32 %v98, %v495
  %v497 = vpop.f32.mrb[0].mxu0
  %498 = vmatprep.mubr.bf16.mxu0 %v230
  %499 = vmatmul.mubr.bf16.gmra.mrb[0].mxu0 %v229
  %v500 = vpop.f32.mrb[0].mxu0
  %v501 = vadd.f32 %v98, %v500
  %v502 = vpop.f32.mrb[0].mxu0
  %v503 = vpop.f32.mrb[0].mxu0
  %v504 = vadd.f32 %v98, %v503
  %v505 = vpop.f32.mrb[0].mxu0
  %506 = vmatprep.mubr.bf16.mxu0 %v233
  %507 = vmatmul.mubr.bf16.gmra.mrb[0].mxu0 %v232
  %v508 = vpop.f32.mrb[0].mxu0
  %v509 = vadd.f32 %v98, %v508
  %v510 = vpop.f32.mrb[0].mxu0
  %v511 = vpop.f32.mrb[0].mxu0
  %v512 = vadd.f32 %v98, %v511
  %v513 = vpop.f32.mrb[0].mxu0
  %514 = vmatprep.mubr.bf16.mxu0 %v236
  %515 = vmatmul.mubr.bf16.gmra.mrb[0].mxu0 %v235
  %v516 = vpop.f32.mrb[0].mxu0
  %v517 = vadd.f32 %v98, %v516
  %v518 = vpop.f32.mrb[0].mxu0
  %v519 = vpop.f32.mrb[0].mxu0
  %v520 = vpop.f32.mrb[0].mxu0
  %521 = vdwg.mxu0
  %522 = vmatprep.subr.bf16.mxu0 0
  %523 = vmatpush1.bf16.msra.mxu0 %v348
  %524 = vmatprep.subr.bf16.mxu0 0
  %525 = vmatpush1.bf16.msra.mxu0 %v349
  %526 = vmatprep.subr.bf16.mxu0 0
  %527 = vmatpush1.bf16.msra.mxu0 0
  %528 = vmatprep.subr.bf16.mxu0 0
  %529 = vmatpush1.bf16.msra.mxu0 0
  %530 = vmatprep.subr.bf16.mxu0 0
  %531 = vmatpush1.bf16.msra.mxu0 0
  %532 = vmatprep.subr.bf16.mxu0 0
  %533 = vmatpush1.bf16.msra.mxu0 0
  %534 = vmatprep.subr.bf16.mxu0 0
  %535 = vmatpush1.bf16.msra.mxu0 0
  %536 = vmatprep.subr.bf16.mxu0 0
  %537 = vmatpush1.bf16.msra.mxu0 0
  %538 = vmatprep.subr.bf16.mxu0 0
  %539 = vmatpush1.bf16.msra.mxu0 0
  %540 = vmatprep.subr.bf16.mxu0 0
  %541 = vmatpush1.bf16.msra.mxu0 0
  %542 = vmatprep.subr.bf16.mxu0 0
  %543 = vmatpush1.bf16.msra.mxu0 0
  %544 = vmatprep.subr.bf16.mxu0 0
  %545 = vmatpush1.bf16.msra.mxu0 0
  %546 = vmatprep.subr.bf16.mxu0 0
  %547 = vmatpush1.bf16.msra.mxu0 0
  %548 = vmatprep.subr.bf16.mxu0 0
  %549 = vmatpush1.bf16.msra.mxu0 0
  %550 = vmatprep.subr.bf16.mxu0 0
  %551 = vmatpush1.bf16.msra.mxu0 0
  %552 = vmatprep.subr.bf16.mxu0 0
  %553 = vmatpush1.bf16.msra.mxu0 0
  %554 = vmatprep.mubr.bf16.mxu0 0
  %555 = vmatmul.mubr.bf16.gmra.mrb[0].mxu0 %v370
  %v556 = vpop.f32.mrb[0].mxu0
  %v557 = vadd.f32 %v437, %v556
  %v558 = vpop.f32.mrb[0].mxu0
  %v559 = vpop.f32.mrb[0].mxu0
  %v560 = vadd.f32 %v440, %v559
  %v561 = vpop.f32.mrb[0].mxu0
  %562 = vmatprep.mubr.bf16.mxu0 0
  %563 = vmatmul.mubr.bf16.gmra.mrb[0].mxu0 %v373
  %v564 = vpop.f32.mrb[0].mxu0
  %v565 = vadd.f32 %v445, %v564
  %v566 = vpop.f32.mrb[0].mxu0
  %v567 = vpop.f32.mrb[0].mxu0
  %v568 = vadd.f32 %v448, %v567
  %v569 = vpop.f32.mrb[0].mxu0
  %570 = vmatprep.mubr.bf16.mxu0 0
  %571 = vmatmul.mubr.bf16.gmra.mrb[0].mxu0 %v376
  %v572 = vpop.f32.mrb[0].mxu0
  %v573 = vadd.f32 %v453, %v572
  %v574 = vpop.f32.mrb[0].mxu0
  %v575 = vpop.f32.mrb[0].mxu0
  %v576 = vadd.f32 %v456, %v575
  %v577 = vpop.f32.mrb[0].mxu0
  %578 = vmatprep.mubr.bf16.mxu0 0
  %579 = vmatmul.mubr.bf16.gmra.mrb[0].mxu0 %v379
  %v580 = vpop.f32.mrb[0].mxu0
  %v581 = vadd.f32 %v461, %v580
  %v582 = vpop.f32.mrb[0].mxu0
  %v583 = vpop.f32.mrb[0].mxu0
  %v584 = vadd.f32 %v464, %v583
  %v585 = vpop.f32.mrb[0].mxu0
  %586 = vmatprep.mubr.bf16.mxu0 0
  %587 = vmatmul.mubr.bf16.gmra.mrb[0].mxu0 %v382
  %v588 = vpop.f32.mrb[0].mxu0
  %v589 = vadd.f32 %v469, %v588
  %v590 = vpop.f32.mrb[0].mxu0
  %v591 = vpop.f32.mrb[0].mxu0
  %v592 = vadd.f32 %v472, %v591
  %v593 = vpop.f32.mrb[0].mxu0
  %594 = vmatprep.mubr.bf16.mxu0 0
  %595 = vmatmul.mubr.bf16.gmra.mrb[0].mxu0 %v385
  %v596 = vpop.f32.mrb[0].mxu0
  %v597 = vadd.f32 %v477, %v596
  %v598 = vpop.f32.mrb[0].mxu0
  %v599 = vpop.f32.mrb[0].mxu0
  %v600 = vadd.f32 %v480, %v599
  %v601 = vpop.f32.mrb[0].mxu0
  %602 = vmatprep.mubr.bf16.mxu0 0
  %603 = vmatmul.mubr.bf16.gmra.mrb[0].mxu0 %v388
  %v604 = vpop.f32.mrb[0].mxu0
  %v605 = vadd.f32 %v485, %v604
  %v606 = vpop.f32.mrb[0].mxu0
  %v607 = vpop.f32.mrb[0].mxu0
  %v608 = vadd.f32 %v488, %v607
  %v609 = vpop.f32.mrb[0].mxu0
  %610 = vmatprep.mubr.bf16.mxu0 0
  %611 = vmatmul.mubr.bf16.gmra.mrb[0].mxu0 %v391
  %v612 = vpop.f32.mrb[0].mxu0
  %v613 = vadd.f32 %v493, %v612
  %v614 = vpop.f32.mrb[0].mxu0
  %v615 = vpop.f32.mrb[0].mxu0
  %v616 = vadd.f32 %v496, %v615
  %v617 = vpop.f32.mrb[0].mxu0
  %618 = vmatprep.mubr.bf16.mxu0 0
  %619 = vmatmul.mubr.bf16.gmra.mrb[0].mxu0 %v394
  %v620 = vpop.f32.mrb[0].mxu0
  %v621 = vadd.f32 %v501, %v620
  %v622 = vpop.f32.mrb[0].mxu0
  %v623 = vpop.f32.mrb[0].mxu0
  %v624 = vadd.f32 %v504, %v623
  %v625 = vpop.f32.mrb[0].mxu0
  %626 = vmatprep.mubr.bf16.mxu0 0
  %627 = vmatmul.mubr.bf16.gmra.mrb[0].mxu0 %v397
  %v628 = vpop.f32.mrb[0].mxu0
  %v629 = vadd.f32 %v509, %v628
  %v630 = vpop.f32.mrb[0].mxu0
  %v631 = vpop.f32.mrb[0].mxu0
  %v632 = vadd.f32 %v512, %v631
  %v633 = vpop.f32.mrb[0].mxu0
  %634 = vmatprep.mubr.bf16.mxu0 0
  %635 = vmatmul.mubr.bf16.gmra.mrb[0].mxu0 %v400
  %v636 = vpop.f32.mrb[0].mxu0
  %v637 = vadd.f32 %v517, %v636
  %v638 = vpop.f32.mrb[0].mxu0
  %v639 = vpop.f32.mrb[0].mxu0
  %v640 = vpop.f32.mrb[0].mxu0
  %641 = vdwg.mxu0
  %v642 = vmax.f32 %v557, 0.0
  %v643 = vmax.f32 %v560, 0.0
  %v644 = vmax.f32 %v565, 0.0
  %v645 = vmax.f32 %v568, 0.0
  %v646 = vmax.f32 %v573, 0.0
  %v647 = vmax.f32 %v576, 0.0
  %v648 = vmax.f32 %v581, 0.0
  %v649 = vmax.f32 %v584, 0.0
  %v650 = vmax.f32 %v589, 0.0
  %v651 = vmax.f32 %v592, 0.0
  %v652 = vmax.f32 %v597, 0.0
  %v653 = vmax.f32 %v600, 0.0
  %v654 = vmax.f32 %v605, 0.0
  %v655 = vmax.f32 %v608, 0.0
  %v656 = vmax.f32 %v613, 0.0
  %v657 = vmax.f32 %v616, 0.0
  %v658 = vmax.f32 %v621, 0.0
  %v659 = vmax.f32 %v624, 0.0
  %v660 = vmax.f32 %v629, 0.0
  %v661 = vmax.f32 %v632, 0.0
  %v662 = vmax.f32 %v637, 0.0
  %v663 = vpack.c.bf16 %v643, %v642
  %v664 = vpack.c.bf16 %v645, %v644
  %v665 = vpack.c.bf16 %v647, %v646
  %v666 = vpack.c.bf16 %v649, %v648
  %v667 = vpack.c.bf16 %v651, %v650
  %v668 = vpack.c.bf16 %v653, %v652
  %v669 = vpack.c.bf16 %v655, %v654
  %v670 = vpack.c.bf16 %v657, %v656
  %v671 = vpack.c.bf16 %v659, %v658
  %v672 = vpack.c.bf16 %v661, %v660
  %v673 = vpack.c.bf16 %v662, %v662
  %v685 = vunpack.c.l.b16 %v663
  %v686 = vunpack.c.h.b16 %v663
  %v687 = vunpack.c.l.b16 %v664
  %v688 = vunpack.c.h.b16 %v664
  %v689 = vunpack.c.l.b16 %v665
  %v690 = vunpack.c.h.b16 %v665
  %v691 = vunpack.c.l.b16 %v666
  %v692 = vunpack.c.h.b16 %v666
  %v693 = vunpack.c.l.b16 %v667
  %v694 = vunpack.c.h.b16 %v667
  %v695 = vunpack.c.l.b16 %v668
  %v696 = vunpack.c.h.b16 %v668
  %v697 = vunpack.c.l.b16 %v669
  %v698 = vunpack.c.h.b16 %v669
  %v699 = vunpack.c.l.b16 %v670
  %v700 = vunpack.c.h.b16 %v670
  %v701 = vunpack.c.l.b16 %v671
  %v702 = vunpack.c.h.b16 %v671
  %v703 = vunpack.c.l.b16 %v672
  %v704 = vunpack.c.h.b16 %v672
  %v705 = vunpack.c.l.b16 %v673
  %v706 = vpack.c.b16 %v685, %v685
  %v707 = vpack.c.b16 %v686, %v686
  %v708 = vpack.c.b16 %v687, %v687
  %v709 = vpack.c.b16 %v688, %v688
  %v710 = vpack.c.b16 %v689, %v689
  %v711 = vpack.c.b16 %v690, %v690
  %v712 = vpack.c.b16 %v691, %v691
  %v713 = vpack.c.b16 %v692, %v692
  %v714 = vpack.c.b16 %v693, %v693
  %v715 = vpack.c.b16 %v694, %v694
  %v716 = vpack.c.b16 %v695, %v695
  %v717 = vpack.c.b16 %v696, %v696
  %v718 = vpack.c.b16 %v697, %v697
  %v719 = vpack.c.b16 %v698, %v698
  %v720 = vpack.c.b16 %v699, %v699
  %v721 = vpack.c.b16 %v700, %v700
  %v722 = vpack.c.b16 %v701, %v701
  %v723 = vpack.c.b16 %v702, %v702
  %v724 = vpack.c.b16 %v703, %v703
  %v725 = vpack.c.b16 %v704, %v704
  %v726 = vpack.c.b16 %v705, %v705
  %748 = vst [vmem:[%s3] sm:$0xf] %v706
  %749 = vst [vmem:[%s3 + $0x4] sm:$0xf] %v707
  %750 = vst [vmem:[%s3 + $0x8] sm:$0xf] %v708
  %751 = vst [vmem:[%s3 + $0xc] sm:$0xf] %v709
  %752 = vst [vmem:[%s3 + $0x10] sm:$0xf] %v710
  %753 = vst [vmem:[%s3 + $0x14] sm:$0xf] %v711
  %754 = vst [vmem:[%s3 + $0x18] sm:$0xf] %v712
  %755 = vst [vmem:[%s3 + $0x1c] sm:$0xf] %v713
  %756 = vst [vmem:[%s3 + $0x20] sm:$0xf] %v714
  %757 = vst [vmem:[%s3 + $0x24] sm:$0xf] %v715
  %758 = vst [vmem:[%s3 + $0x28] sm:$0xf] %v716
  %759 = vst [vmem:[%s3 + $0x2c] sm:$0xf] %v717
  %760 = vst [vmem:[%s3 + $0x30] sm:$0xf] %v718
  %761 = vst [vmem:[%s3 + $0x34] sm:$0xf] %v719
  %762 = vst [vmem:[%s3 + $0x38] sm:$0xf] %v720
  %763 = vst [vmem:[%s3 + $0x3c] sm:$0xf] %v721
  %764 = vst [vmem:[%s3 + $0x40] sm:$0xf] %v722
  %765 = vst [vmem:[%s3 + $0x44] sm:$0xf] %v723
  %766 = vst [vmem:[%s3 + $0x48] sm:$0xf] %v724
  %767 = vst [vmem:[%s3 + $0x4c] sm:$0xf] %v725
  %768 = vst [vmem:[%s3 + $0x50] sm:$0xf] %v726
  // Predicated region
  $region14: #{_lambda_.7} parent=0 // pred_check
    _
  $region15: #{_lambda_.7} parent=0 // pred_check_branch
    %770 = sbr.rel (0) target = $region17
  $region16: #{_lambda_.7} parent=0 // pred_region
    _
  $region17: #{_lambda_.7} parent=0 // pred_fallthru
    _
  // Predicated region
  $region18: #{_lambda_.7} parent=0 // pred_check
    _
  $region19: #{_lambda_.7} parent=0 // pred_check_branch
    %772 = sbr.rel (0) target = $region21
  $region20: #{_lambda_.7} parent=0 // pred_region
    _
  $region21: #{_lambda_.7} parent=0 // pred_fallthru
    _

// kernel: _lambda_.8
$region0: #{_lambda_.8}
  #allocation0 [shape = 'u32[]', space=smem, size = 0x4, offset = 0x4, fixed_abs, tag = 'smem constant byte address 0x4 - core index']
  #allocation1 [shape = 'u32[144,128]{1,0:T(1,128)}', space=vmem, size = 0x12000, scoped, tag = 'internal scratch']
  %s0 = inlined_call_operand.vmem [shape: bf16[168,576], index: 0, kind: input, shape index: {}]
  %s1 = inlined_call_operand.vmem [shape: bf16[576,128], index: 1, kind: input, shape index: {}]
  %s2 = inlined_call_operand.vmem [shape: f32[1,128], index: 2, kind: input, shape index: {}]
  %s3 = inlined_call_operand.vmem [shape: bf16[168,128], index: 3, kind: output, shape index: {}]
  %s4 = sld [smem:[#allocation0]]
  $region22: #{_lambda_.8} parent=0
    _
  %s6 = ssub.s32 1, %s4
  %s7 = scalar_select 0, %s6, %s4
  // Predicated region
  $region2: #{_lambda_.8} parent=0 // pred_check
    _
  $region3: #{_lambda_.8} parent=0 // pred_check_branch
    %9 = sbr.rel (0) target = $region5
  $region4: #{_lambda_.8} parent=0 // pred_region
    _
  $region5: #{_lambda_.8} parent=0 // pred_fallthru
    _
  // Predicated region
  $region6: #{_lambda_.8} parent=0 // pred_check
    _
  $region7: #{_lambda_.8} parent=0 // pred_check_branch
    %11 = sbr.rel (0) target = $region9
  $region8: #{_lambda_.8} parent=0 // pred_region
    _
  $region9: #{_lambda_.8} parent=0 // pred_fallthru
    _
  // Predicated region
  $region10: #{_lambda_.8} parent=0 // pred_check
    _
  $region11: #{_lambda_.8} parent=0 // pred_check_branch
    %13 = sbr.rel (0) target = $region13
  $region12: #{_lambda_.8} parent=0 // pred_region
    _
  $region13: #{_lambda_.8} parent=0 // pred_fallthru
    _
  %v15 = vld [vmem:[%s0] sm:$0xff]
  %v16 = vld [vmem:[%s0 + $0x8] sm:$0xff]
  %v17 = vld [vmem:[%s0 + $0x10] sm:$0xf]
  %v18 = vld [vmem:[%s0 + $0x14] sm:$0xff]
  %v19 = vld [vmem:[%s0 + $0x1c] sm:$0xff]
  %v20 = vld [vmem:[%s0 + $0x24] sm:$0xf]
  %v21 = vld [vmem:[%s0 + $0x28] sm:$0xff]
  %v22 = vld [vmem:[%s0 + $0x30] sm:$0xff]
  %v23 = vld [vmem:[%s0 + $0x38] sm:$0xf]
  %v24 = vld [vmem:[%s0 + $0x3c] sm:$0xff]
  %v25 = vld [vmem:[%s0 + $0x44] sm:$0xff]
  %v26 = vld [vmem:[%s0 + $0x4c] sm:$0xf]
  %v27 = vld [vmem:[%s0 + $0x50] sm:$0xff]
  %v28 = vld [vmem:[%s0 + $0x58] sm:$0xff]
  %v29 = vld [vmem:[%s0 + $0x60] sm:$0xf]
  %v30 = vld [vmem:[%s0 + $0x64] sm:$0xff]
  %v31 = vld [vmem:[%s0 + $0x6c] sm:$0xff]
  %v32 = vld [vmem:[%s0 + $0x74] sm:$0xf]
  %v33 = vld [vmem:[%s0 + $0x78] sm:$0xff]
  %v34 = vld [vmem:[%s0 + $0x80] sm:$0xff]
  %v35 = vld [vmem:[%s0 + $0x88] sm:$0xf]
  %v36 = vld [vmem:[%s0 + $0x8c] sm:$0xff]
  %v37 = vld [vmem:[%s0 + $0x94] sm:$0xff]
  %v38 = vld [vmem:[%s0 + $0x9c] sm:$0xf]
  %v39 = vld [vmem:[%s0 + $0xa0] sm:$0xff]
  %v40 = vld [vmem:[%s0 + $0xa8] sm:$0xff]
  %v41 = vld [vmem:[%s0 + $0xb0] sm:$0xf]
  %v42 = vld [vmem:[%s0 + $0xb4] sm:$0xff]
  %v43 = vld [vmem:[%s0 + $0xbc] sm:$0xff]
  %v44 = vld [vmem:[%s0 + $0xc4] sm:$0xf]
  %v45 = vld [vmem:[%s0 + $0xc8] sm:$0xff]
  %v46 = vld [vmem:[%s0 + $0xd0] sm:$0xff]
  %v47 = vld [vmem:[%s0 + $0xd8] sm:$0xf]
  %v48 = vld [vmem:[%s0 + $0xdc] sm:$0xff]
  %v49 = vld [vmem:[%s0 + $0xe4] sm:$0xff]
  %v50 = vld [vmem:[%s0 + $0xec] sm:$0xf]
  %v51 = vld [vmem:[%s0 + $0xf0] sm:$0xff]
  %v52 = vld [vmem:[%s0 + $0xf8] sm:$0xff]
  %v53 = vld [vmem:[%s0 + $0x100] sm:$0xf]
  %v54 = vld [vmem:[%s0 + $0x104] sm:$0xff]
  %v55 = vld [vmem:[%s0 + $0x10c] sm:$0xff]
  %v56 = vld [vmem:[%s0 + $0x114] sm:$0xf]
  %v57 = vld [vmem:[%s0 + $0x118] sm:$0xff]
  %v58 = vld [vmem:[%s0 + $0x120] sm:$0xff]
  %v59 = vld [vmem:[%s0 + $0x128] sm:$0xf]
  %v60 = vld [vmem:[%s0 + $0x12c] sm:$0xff]
  %v61 = vld [vmem:[%s0 + $0x134] sm:$0xff]
  %v62 = vld [vmem:[%s0 + $0x13c] sm:$0xf]
  %v63 = vld [vmem:[%s0 + $0x140] sm:$0xff]
  %v64 = vld [vmem:[%s0 + $0x148] sm:$0xff]
  %v65 = vld [vmem:[%s0 + $0x150] sm:$0xf]
  %v66 = vld [vmem:[%s0 + $0x154] sm:$0xff]
  %v67 = vld [vmem:[%s0 + $0x15c] sm:$0xff]
  %v68 = vld [vmem:[%s0 + $0x164] sm:$0xf]
  %v69 = vld [vmem:[%s0 + $0x168] sm:$0xff]
  %v70 = vld [vmem:[%s0 + $0x170] sm:$0xff]
  %v71 = vld [vmem:[%s0 + $0x178] sm:$0xf]
  %v72 = vld [vmem:[%s0 + $0x17c] sm:$0xff]
  %v73 = vld [vmem:[%s0 + $0x184] sm:$0xff]
  %v74 = vld [vmem:[%s0 + $0x18c] sm:$0xf]
  %v75 = vld [vmem:[%s0 + $0x190] sm:$0xff]
  %v76 = vld [vmem:[%s0 + $0x198] sm:$0xff]
  %v77 = vld [vmem:[%s0 + $0x1a0] sm:$0xf]
  %v78 = vld [vmem:[%s1] sm:$0xf]
  %v79 = vld [vmem:[%s1 + $0x4] sm:$0xf]
  %v80 = vld [vmem:[%s1 + $0x8] sm:$0xf]
  %v81 = vld [vmem:[%s1 + $0xc] sm:$0xf]
  %v82 = vld [vmem:[%s1 + $0x10] sm:$0xf]
  %v83 = vld [vmem:[%s1 + $0x14] sm:$0xf]
  %v84 = vld [vmem:[%s1 + $0x18] sm:$0xf]
  %v85 = vld [vmem:[%s1 + $0x1c] sm:$0xf]
  %v86 = vld [vmem:[%s1 + $0x20] sm:$0xf]
  %v87 = vld [vmem:[%s1 + $0x24] sm:$0xf]
  %v88 = vld [vmem:[%s1 + $0x28] sm:$0xf]
  %v89 = vld [vmem:[%s1 + $0x2c] sm:$0xf]
  %v90 = vld [vmem:[%s1 + $0x30] sm:$0xf]
  %v91 = vld [vmem:[%s1 + $0x34] sm:$0xf]
  %v92 = vld [vmem:[%s1 + $0x38] sm:$0xf]
  %v93 = vld [vmem:[%s1 + $0x3c] sm:$0xf]
  %v94 = vld [vmem:[%s1 + $0x40] sm:$0xf]
  %v95 = vld [vmem:[%s1 + $0x44] sm:$0xf]
  %v96 = vld [vmem:[%s1 + $0x48] sm:$0xf]
  %v97 = vld [vmem:[%s1 + $0x4c] sm:$0xf]
  %v98 = vld [vmem:[%s1 + $0x50] sm:$0xf]
  %v99 = vld [vmem:[%s1 + $0x54] sm:$0xf]
  %v100 = vld [vmem:[%s1 + $0x58] sm:$0xf]
  %v101 = vld [vmem:[%s1 + $0x5c] sm:$0xf]
  %v102 = vld [vmem:[%s1 + $0x60] sm:$0xf]
  %v103 = vld [vmem:[%s1 + $0x64] sm:$0xf]
  %v104 = vld [vmem:[%s1 + $0x68] sm:$0xf]
  %v105 = vld [vmem:[%s1 + $0x6c] sm:$0xf]
  %v106 = vld [vmem:[%s1 + $0x70] sm:$0xf]
  %v107 = vld [vmem:[%s1 + $0x74] sm:$0xf]
  %v108 = vld [vmem:[%s1 + $0x78] sm:$0xf]
  %v109 = vld [vmem:[%s1 + $0x7c] sm:$0xf]
  %v110 = vld [vmem:[%s1 + $0x80] sm:$0xf]
  %v111 = vld [vmem:[%s1 + $0x84] sm:$0xf]
  %v112 = vld [vmem:[%s1 + $0x88] sm:$0xf]
  %v113 = vld [vmem:[%s1 + $0x8c] sm:$0xf]
  %v114 = vld [vmem:[%s1 + $0x90] sm:$0xf]
  %v115 = vld [vmem:[%s1 + $0x94] sm:$0xf]
  %v116 = vld [vmem:[%s1 + $0x98] sm:$0xf]
  %v117 = vld [vmem:[%s1 + $0x9c] sm:$0xf]
  %v118 = vld [vmem:[%s1 + $0xa0] sm:$0xf]
  %v119 = vld [vmem:[%s1 + $0xa4] sm:$0xf]
  %v120 = vld [vmem:[%s1 + $0xa8] sm:$0xf]
  %v121 = vld [vmem:[%s1 + $0xac] sm:$0xf]
  %v122 = vld [vmem:[%s1 + $0xb0] sm:$0xf]
  %v123 = vld [vmem:[%s1 + $0xb4] sm:$0xf]
  %v124 = vld [vmem:[%s1 + $0xb8] sm:$0xf]
  %v125 = vld [vmem:[%s1 + $0xbc] sm:$0xf]
  %v126 = vld [vmem:[%s1 + $0xc0] sm:$0xf]
  %v127 = vld [vmem:[%s1 + $0xc4] sm:$0xf]
  %v128 = vld [vmem:[%s1 + $0xc8] sm:$0xf]
  %v129 = vld [vmem:[%s1 + $0xcc] sm:$0xf]
  %v130 = vld [vmem:[%s1 + $0xd0] sm:$0xf]
  %v131 = vld [vmem:[%s1 + $0xd4] sm:$0xf]
  %v132 = vld [vmem:[%s1 + $0xd8] sm:$0xf]
  %v133 = vld [vmem:[%s1 + $0xdc] sm:$0xf]
  %v134 = vld [vmem:[%s1 + $0xe0] sm:$0xf]
  %v135 = vld [vmem:[%s1 + $0xe4] sm:$0xf]
  %v136 = vld [vmem:[%s1 + $0xe8] sm:$0xf]
  %v137 = vld [vmem:[%s1 + $0xec] sm:$0xf]
  %v138 = vld [vmem:[%s1 + $0xf0] sm:$0xf]
  %v139 = vld [vmem:[%s1 + $0xf4] sm:$0xf]
  %v140 = vld [vmem:[%s1 + $0xf8] sm:$0xf]
  %v141 = vld [vmem:[%s1 + $0xfc] sm:$0xf]
  %v142 = vld [vmem:[%s1 + $0x100] sm:$0xf]
  %v143 = vld [vmem:[%s1 + $0x104] sm:$0xf]
  %v144 = vld [vmem:[%s1 + $0x108] sm:$0xf]
  %v145 = vld [vmem:[%s1 + $0x10c] sm:$0xf]
  %v146 = vld [vmem:[%s1 + $0x110] sm:$0xf]
  %v147 = vld [vmem:[%s1 + $0x114] sm:$0xf]
  %v148 = vld [vmem:[%s1 + $0x118] sm:$0xf]
  %v149 = vld [vmem:[%s1 + $0x11c] sm:$0xf]
  %v150 = vld [vmem:[%s2] sm:$0x1]
  %v152 = vlaneseq
  %v153 = vshrl.u32 %v152, 7
  %v154 = vsub.s32 0, %v153
  %v155 = vrot.slane %v150, %v154
  %v220 = vunpack.c.l.b16 %v15
  %v221 = vunpack.c.h.b16 %v15
  %v222 = vunpack.c.l.b16 %v16
  %v223 = vunpack.c.h.b16 %v16
  %v224 = vunpack.c.l.b16 %v17
  %v225 = vunpack.c.l.b16 %v18
  %v226 = vunpack.c.h.b16 %v18
  %v227 = vunpack.c.l.b16 %v19
  %v228 = vunpack.c.h.b16 %v19
  %v229 = vunpack.c.l.b16 %v20
  %v230 = vunpack.c.l.b16 %v21
  %v231 = vunpack.c.h.b16 %v21
  %v232 = vunpack.c.l.b16 %v22
  %v233 = vunpack.c.h.b16 %v22
  %v234 = vunpack.c.l.b16 %v23
  %v235 = vunpack.c.l.b16 %v24
  %v236 = vunpack.c.h.b16 %v24
  %v237 = vunpack.c.l.b16 %v25
  %v238 = vunpack.c.h.b16 %v25
  %v239 = vunpack.c.l.b16 %v26
  %v240 = vunpack.c.l.b16 %v27
  %v241 = vunpack.c.h.b16 %v27
  %v242 = vunpack.c.l.b16 %v28
  %v243 = vunpack.c.h.b16 %v28
  %v244 = vunpack.c.l.b16 %v29
  %v245 = vunpack.c.l.b16 %v30
  %v246 = vunpack.c.h.b16 %v30
  %v247 = vunpack.c.l.b16 %v31
  %v248 = vunpack.c.h.b16 %v31
  %v249 = vunpack.c.l.b16 %v32
  %v250 = vunpack.c.l.b16 %v33
  %v251 = vunpack.c.h.b16 %v33
  %v252 = vunpack.c.l.b16 %v34
  %v253 = vunpack.c.h.b16 %v34
  %v254 = vunpack.c.l.b16 %v35
  %v255 = vunpack.c.l.b16 %v36
  %v256 = vunpack.c.h.b16 %v36
  %v257 = vunpack.c.l.b16 %v37
  %v258 = vunpack.c.h.b16 %v37
  %v259 = vunpack.c.l.b16 %v38
  %v260 = vunpack.c.l.b16 %v39
  %v261 = vunpack.c.h.b16 %v39
  %v262 = vunpack.c.l.b16 %v40
  %v263 = vunpack.c.h.b16 %v40
  %v264 = vunpack.c.l.b16 %v41
  %v265 = vunpack.c.l.b16 %v42
  %v266 = vunpack.c.h.b16 %v42
  %v267 = vunpack.c.l.b16 %v43
  %v268 = vunpack.c.h.b16 %v43
  %v269 = vunpack.c.l.b16 %v44
  %v270 = vunpack.c.l.b16 %v45
  %v271 = vunpack.c.h.b16 %v45
  %v272 = vunpack.c.l.b16 %v46
  %v273 = vunpack.c.h.b16 %v46
  %v274 = vunpack.c.l.b16 %v47
  %v275 = vunpack.c.l.b16 %v48
  %v276 = vunpack.c.h.b16 %v48
  %v277 = vunpack.c.l.b16 %v49
  %v278 = vunpack.c.h.b16 %v49
  %v279 = vunpack.c.l.b16 %v50
  %v280 = vunpack.c.l.b16 %v51
  %v281 = vunpack.c.h.b16 %v51
  %v282 = vunpack.c.l.b16 %v52
  %v283 = vunpack.c.h.b16 %v52
  %v284 = vunpack.c.l.b16 %v53
  %v285 = vunpack.c.l.b16 %v54
  %v286 = vunpack.c.h.b16 %v54
  %v287 = vunpack.c.l.b16 %v55
  %v288 = vunpack.c.h.b16 %v55
  %v289 = vunpack.c.l.b16 %v56
  %v290 = vunpack.c.l.b16 %v57
  %v291 = vunpack.c.h.b16 %v57
  %v292 = vunpack.c.l.b16 %v58
  %v293 = vunpack.c.h.b16 %v58
  %v294 = vunpack.c.l.b16 %v59
  %v295 = vunpack.c.l.b16 %v60
  %v296 = vunpack.c.h.b16 %v60
  %v297 = vunpack.c.l.b16 %v61
  %v298 = vunpack.c.h.b16 %v61
  %v299 = vunpack.c.l.b16 %v62
  %v300 = vunpack.c.l.b16 %v63
  %v301 = vunpack.c.h.b16 %v63
  %v302 = vunpack.c.l.b16 %v64
  %v303 = vunpack.c.h.b16 %v64
  %v304 = vunpack.c.l.b16 %v65
  %v305 = vunpack.c.l.b16 %v66
  %v306 = vunpack.c.h.b16 %v66
  %v307 = vunpack.c.l.b16 %v67
  %v308 = vunpack.c.h.b16 %v67
  %v309 = vunpack.c.l.b16 %v68
  %v310 = vunpack.c.l.b16 %v69
  %v311 = vunpack.c.h.b16 %v69
  %v312 = vunpack.c.l.b16 %v70
  %v313 = vunpack.c.h.b16 %v70
  %v314 = vunpack.c.l.b16 %v71
  %v315 = vunpack.c.l.b16 %v72
  %v316 = vunpack.c.h.b16 %v72
  %v317 = vunpack.c.l.b16 %v73
  %v318 = vunpack.c.h.b16 %v73
  %v319 = vunpack.c.l.b16 %v74
  %v320 = vunpack.c.l.b16 %v75
  %v321 = vunpack.c.h.b16 %v75
  %v322 = vunpack.c.l.b16 %v76
  %v323 = vunpack.c.h.b16 %v76
  %v324 = vunpack.c.l.b16 %v77
  %v325 = vpack.c.b16 %v225, %v220
  %v326 = vpack.c.b16 %v226, %v221
  %v327 = vpack.c.b16 %v227, %v222
  %v328 = vpack.c.b16 %v228, %v223
  %v329 = vpack.c.b16 %v229, %v224
  %v330 = vpack.c.b16 %v235, %v230
  %v331 = vpack.c.b16 %v236, %v231
  %v332 = vpack.c.b16 %v237, %v232
  %v333 = vpack.c.b16 %v238, %v233
  %v334 = vpack.c.b16 %v239, %v234
  %v335 = vpack.c.b16 %v245, %v240
  %v336 = vpack.c.b16 %v246, %v241
  %v337 = vpack.c.b16 %v247, %v242
  %v338 = vpack.c.b16 %v248, %v243
  %v339 = vpack.c.b16 %v249, %v244
  %v340 = vpack.c.b16 %v255, %v250
  %v341 = vpack.c.b16 %v256, %v251
  %v342 = vpack.c.b16 %v257, %v252
  %v343 = vpack.c.b16 %v258, %v253
  %v344 = vpack.c.b16 %v259, %v254
  %v345 = vpack.c.b16 %v265, %v260
  %v346 = vpack.c.b16 %v266, %v261
  %v347 = vpack.c.b16 %v267, %v262
  %v348 = vpack.c.b16 %v268, %v263
  %v349 = vpack.c.b16 %v269, %v264
  %v350 = vpack.c.b16 %v275, %v270
  %v351 = vpack.c.b16 %v276, %v271
  %v352 = vpack.c.b16 %v277, %v272
  %v353 = vpack.c.b16 %v278, %v273
  %v354 = vpack.c.b16 %v279, %v274
  %v355 = vpack.c.b16 %v285, %v280
  %v356 = vpack.c.b16 %v286, %v281
  %v357 = vpack.c.b16 %v287, %v282
  %v358 = vpack.c.b16 %v288, %v283
  %v359 = vpack.c.b16 %v289, %v284
  %v360 = vpack.c.b16 %v295, %v290
  %v361 = vpack.c.b16 %v296, %v291
  %v362 = vpack.c.b16 %v297, %v292
  %v363 = vpack.c.b16 %v298, %v293
  %v364 = vpack.c.b16 %v299, %v294
  %v365 = vpack.c.b16 %v305, %v300
  %v366 = vpack.c.b16 %v306, %v301
  %v367 = vpack.c.b16 %v307, %v302
  %v368 = vpack.c.b16 %v308, %v303
  %v369 = vpack.c.b16 %v309, %v304
  %v370 = vpack.c.b16 %v315, %v310
  %v371 = vpack.c.b16 %v316, %v311
  %v372 = vpack.c.b16 %v317, %v312
  %v373 = vpack.c.b16 %v318, %v313
  %v374 = vpack.c.b16 %v319, %v314
  %v375 = vpack.c.b16 %v320, %v320
  %v376 = vpack.c.b16 %v321, %v321
  %v377 = vpack.c.b16 %v322, %v322
  %v378 = vpack.c.b16 %v323, %v323
  %v379 = vpack.c.b16 %v324, %v324
  %v496 = vunpack.c.l.b16 %v78
  %v497 = vunpack.c.l.b16 %v79
  %v498 = vunpack.c.l.b16 %v80
  %v499 = vunpack.c.l.b16 %v81
  %v500 = vunpack.c.l.b16 %v82
  %v501 = vunpack.c.l.b16 %v83
  %v502 = vunpack.c.l.b16 %v84
  %v503 = vunpack.c.l.b16 %v85
  %v504 = vunpack.c.l.b16 %v86
  %v505 = vunpack.c.l.b16 %v87
  %v506 = vunpack.c.l.b16 %v88
  %v507 = vunpack.c.l.b16 %v89
  %v508 = vunpack.c.l.b16 %v90
  %v509 = vunpack.c.l.b16 %v91
  %v510 = vunpack.c.l.b16 %v92
  %v511 = vunpack.c.l.b16 %v93
  %v512 = vunpack.c.l.b16 %v94
  %v513 = vunpack.c.l.b16 %v95
  %v514 = vunpack.c.l.b16 %v96
  %v515 = vunpack.c.l.b16 %v97
  %v516 = vunpack.c.l.b16 %v98
  %v517 = vunpack.c.l.b16 %v99
  %v518 = vunpack.c.l.b16 %v100
  %v519 = vunpack.c.l.b16 %v101
  %v520 = vunpack.c.l.b16 %v102
  %v521 = vunpack.c.l.b16 %v103
  %v522 = vunpack.c.l.b16 %v104
  %v523 = vunpack.c.l.b16 %v105
  %v524 = vunpack.c.l.b16 %v106
  %v525 = vunpack.c.l.b16 %v107
  %v526 = vunpack.c.l.b16 %v108
  %v527 = vunpack.c.l.b16 %v109
  %v528 = vunpack.c.l.b16 %v110
  %v529 = vunpack.c.l.b16 %v111
  %v530 = vunpack.c.l.b16 %v112
  %v531 = vunpack.c.l.b16 %v113
  %v532 = vunpack.c.l.b16 %v114
  %v533 = vunpack.c.l.b16 %v115
  %v534 = vunpack.c.l.b16 %v116
  %v535 = vunpack.c.l.b16 %v117
  %v536 = vunpack.c.l.b16 %v118
  %v537 = vunpack.c.l.b16 %v119
  %v538 = vunpack.c.l.b16 %v120
  %v539 = vunpack.c.l.b16 %v121
  %v540 = vunpack.c.l.b16 %v122
  %v541 = vunpack.c.l.b16 %v123
  %v542 = vunpack.c.l.b16 %v124
  %v543 = vunpack.c.l.b16 %v125
  %v544 = vunpack.c.l.b16 %v126
  %v545 = vunpack.c.l.b16 %v127
  %v546 = vunpack.c.l.b16 %v128
  %v547 = vunpack.c.l.b16 %v129
  %v548 = vunpack.c.l.b16 %v130
  %v549 = vunpack.c.l.b16 %v131
  %v550 = vunpack.c.l.b16 %v132
  %v551 = vunpack.c.l.b16 %v133
  %v552 = vunpack.c.l.b16 %v134
  %v553 = vunpack.c.l.b16 %v135
  %v554 = vunpack.c.l.b16 %v136
  %v555 = vunpack.c.l.b16 %v137
  %v556 = vunpack.c.l.b16 %v138
  %v557 = vunpack.c.l.b16 %v139
  %v558 = vunpack.c.l.b16 %v140
  %v559 = vunpack.c.l.b16 %v141
  %v560 = vunpack.c.l.b16 %v142
  %v561 = vunpack.c.l.b16 %v143
  %v562 = vunpack.c.l.b16 %v144
  %v563 = vunpack.c.l.b16 %v145
  %v564 = vunpack.c.l.b16 %v146
  %v565 = vunpack.c.l.b16 %v147
  %v566 = vunpack.c.l.b16 %v148
  %v567 = vunpack.c.l.b16 %v149
  %v568 = vpack.c.b16 %v497, %v496
  %v569 = vpack.c.b16 %v499, %v498
  %v570 = vpack.c.b16 %v501, %v500
  %v571 = vpack.c.b16 %v503, %v502
  %v572 = vpack.c.b16 %v505, %v504
  %v573 = vpack.c.b16 %v507, %v506
  %v574 = vpack.c.b16 %v509, %v508
  %v575 = vpack.c.b16 %v511, %v510
  %v576 = vpack.c.b16 %v513, %v512
  %v577 = vpack.c.b16 %v515, %v514
  %v578 = vpack.c.b16 %v517, %v516
  %v579 = vpack.c.b16 %v519, %v518
  %v580 = vpack.c.b16 %v521, %v520
  %v581 = vpack.c.b16 %v523, %v522
  %v582 = vpack.c.b16 %v525, %v524
  %v583 = vpack.c.b16 %v527, %v526
  %v584 = vpack.c.b16 %v529, %v528
  %v585 = vpack.c.b16 %v531, %v530
  %v586 = vpack.c.b16 %v533, %v532
  %v587 = vpack.c.b16 %v535, %v534
  %v588 = vpack.c.b16 %v537, %v536
  %v589 = vpack.c.b16 %v539, %v538
  %v590 = vpack.c.b16 %v541, %v540
  %v591 = vpack.c.b16 %v543, %v542
  %v592 = vpack.c.b16 %v545, %v544
  %v593 = vpack.c.b16 %v547, %v546
  %v594 = vpack.c.b16 %v549, %v548
  %v595 = vpack.c.b16 %v551, %v550
  %v596 = vpack.c.b16 %v553, %v552
  %v597 = vpack.c.b16 %v555, %v554
  %v598 = vpack.c.b16 %v557, %v556
  %v599 = vpack.c.b16 %v559, %v558
  %v600 = vpack.c.b16 %v561, %v560
  %v601 = vpack.c.b16 %v563, %v562
  %v602 = vpack.c.b16 %v565, %v564
  %v603 = vpack.c.b16 %v567, %v566
  %vm640 = vcmask 523264
  %v642 = vsel %vm640, %v329, 0
  %v645 = vsel %vm640, %v334, 0
  %v648 = vsel %vm640, %v339, 0
  %v651 = vsel %vm640, %v344, 0
  %v654 = vsel %vm640, %v349, 0
  %v657 = vsel %vm640, %v354, 0
  %v660 = vsel %vm640, %v359, 0
  %v663 = vsel %vm640, %v364, 0
  %v666 = vsel %vm640, %v369, 0
  %v669 = vsel %vm640, %v374, 0
  %v672 = vsel %vm640, %v379, 0
  %674 = vmatprep.subr.bf16.mxu0 0
  %675 = vmatpush1.bf16.msra.mxu0 %v568
  %676 = vmatprep.subr.bf16.mxu0 0
  %677 = vmatpush1.bf16.msra.mxu0 %v569
  %678 = vmatprep.subr.bf16.mxu0 0
  %679 = vmatpush1.bf16.msra.mxu0 %v570
  %680 = vmatprep.subr.bf16.mxu0 0
  %681 = vmatpush1.bf16.msra.mxu0 %v571
  %682 = vmatprep.subr.bf16.mxu0 0
  %683 = vmatpush1.bf16.msra.mxu0 %v572
  %684 = vmatprep.subr.bf16.mxu0 0
  %685 = vmatpush1.bf16.msra.mxu0 %v573
  %686 = vmatprep.subr.bf16.mxu0 0
  %687 = vmatpush1.bf16.msra.mxu0 %v574
  %688 = vmatprep.subr.bf16.mxu0 0
  %689 = vmatpush1.bf16.msra.mxu0 %v575
  %690 = vmatprep.subr.bf16.mxu0 0
  %691 = vmatpush1.bf16.msra.mxu0 %v576
  %692 = vmatprep.subr.bf16.mxu0 0
  %693 = vmatpush1.bf16.msra.mxu0 %v577
  %694 = vmatprep.subr.bf16.mxu0 0
  %695 = vmatpush1.bf16.msra.mxu0 %v578
  %696 = vmatprep.subr.bf16.mxu0 0
  %697 = vmatpush1.bf16.msra.mxu0 %v579
  %698 = vmatprep.subr.bf16.mxu0 0
  %699 = vmatpush1.bf16.msra.mxu0 %v580
  %700 = vmatprep.subr.bf16.mxu0 0
  %701 = vmatpush1.bf16.msra.mxu0 %v581
  %702 = vmatprep.subr.bf16.mxu0 0
  %703 = vmatpush1.bf16.msra.mxu0 %v582
  %704 = vmatprep.subr.bf16.mxu0 0
  %705 = vmatpush1.bf16.msra.mxu0 %v583
  %706 = vmatprep.mubr.bf16.mxu0 %v326
  %707 = vmatmul.mubr.bf16.gmra.mrb[0].mxu0 %v325
  %v708 = vpop.f32.mrb[0].mxu0
  %v709 = vadd.f32 %v155, %v708
  %v710 = vpop.f32.mrb[0].mxu0
  %v711 = vpop.f32.mrb[0].mxu0
  %v712 = vadd.f32 %v155, %v711
  %v713 = vpop.f32.mrb[0].mxu0
  %714 = vmatprep.mubr.bf16.mxu0 %v331
  %715 = vmatmul.mubr.bf16.gmra.mrb[0].mxu0 %v330
  %v716 = vpop.f32.mrb[0].mxu0
  %v717 = vadd.f32 %v155, %v716
  %v718 = vpop.f32.mrb[0].mxu0
  %v719 = vpop.f32.mrb[0].mxu0
  %v720 = vadd.f32 %v155, %v719
  %v721 = vpop.f32.mrb[0].mxu0
  %722 = vmatprep.mubr.bf16.mxu0 %v336
  %723 = vmatmul.mubr.bf16.gmra.mrb[0].mxu0 %v335
  %v724 = vpop.f32.mrb[0].mxu0
  %v725 = vadd.f32 %v155, %v724
  %v726 = vpop.f32.mrb[0].mxu0
  %v727 = vpop.f32.mrb[0].mxu0
  %v728 = vadd.f32 %v155, %v727
  %v729 = vpop.f32.mrb[0].mxu0
  %730 = vmatprep.mubr.bf16.mxu0 %v341
  %731 = vmatmul.mubr.bf16.gmra.mrb[0].mxu0 %v340
  %v732 = vpop.f32.mrb[0].mxu0
  %v733 = vadd.f32 %v155, %v732
  %v734 = vpop.f32.mrb[0].mxu0
  %v735 = vpop.f32.mrb[0].mxu0
  %v736 = vadd.f32 %v155, %v735
  %v737 = vpop.f32.mrb[0].mxu0
  %738 = vmatprep.mubr.bf16.mxu0 %v346
  %739 = vmatmul.mubr.bf16.gmra.mrb[0].mxu0 %v345
  %v740 = vpop.f32.mrb[0].mxu0
  %v741 = vadd.f32 %v155, %v740
  %v742 = vpop.f32.mrb[0].mxu0
  %v743 = vpop.f32.mrb[0].mxu0
  %v744 = vadd.f32 %v155, %v743
  %v745 = vpop.f32.mrb[0].mxu0
  %746 = vmatprep.mubr.bf16.mxu0 %v351
  %747 = vmatmul.mubr.bf16.gmra.mrb[0].mxu0 %v350
  %v748 = vpop.f32.mrb[0].mxu0
  %v749 = vadd.f32 %v155, %v748
  %v750 = vpop.f32.mrb[0].mxu0
  %v751 = vpop.f32.mrb[0].mxu0
  %v752 = vadd.f32 %v155, %v751
  %v753 = vpop.f32.mrb[0].mxu0
  %754 = vmatprep.mubr.bf16.mxu0 %v356
  %755 = vmatmul.mubr.bf16.gmra.mrb[0].mxu0 %v355
  %v756 = vpop.f32.mrb[0].mxu0
  %v757 = vadd.f32 %v155, %v756
  %v758 = vpop.f32.mrb[0].mxu0
  %v759 = vpop.f32.mrb[0].mxu0
  %v760 = vadd.f32 %v155, %v759
  %v761 = vpop.f32.mrb[0].mxu0
  %762 = vmatprep.mubr.bf16.mxu0 %v361
  %763 = vmatmul.mubr.bf16.gmra.mrb[0].mxu0 %v360
  %v764 = vpop.f32.mrb[0].mxu0
  %v765 = vadd.f32 %v155, %v764
  %v766 = vpop.f32.mrb[0].mxu0
  %v767 = vpop.f32.mrb[0].mxu0
  %v768 = vadd.f32 %v155, %v767
  %v769 = vpop.f32.mrb[0].mxu0
  %770 = vmatprep.mubr.bf16.mxu0 %v366
  %771 = vmatmul.mubr.bf16.gmra.mrb[0].mxu0 %v365
  %v772 = vpop.f32.mrb[0].mxu0
  %v773 = vadd.f32 %v155, %v772
  %v774 = vpop.f32.mrb[0].mxu0
  %v775 = vpop.f32.mrb[0].mxu0
  %v776 = vadd.f32 %v155, %v775
  %v777 = vpop.f32.mrb[0].mxu0
  %778 = vmatprep.mubr.bf16.mxu0 %v371
  %779 = vmatmul.mubr.bf16.gmra.mrb[0].mxu0 %v370
  %v780 = vpop.f32.mrb[0].mxu0
  %v781 = vadd.f32 %v155, %v780
  %v782 = vpop.f32.mrb[0].mxu0
  %v783 = vpop.f32.mrb[0].mxu0
  %v784 = vadd.f32 %v155, %v783
  %v785 = vpop.f32.mrb[0].mxu0
  %786 = vmatprep.mubr.bf16.mxu0 %v376
  %787 = vmatmul.mubr.bf16.gmra.mrb[0].mxu0 %v375
  %v788 = vpop.f32.mrb[0].mxu0
  %v789 = vadd.f32 %v155, %v788
  %v790 = vpop.f32.mrb[0].mxu0
  %v791 = vpop.f32.mrb[0].mxu0
  %v792 = vpop.f32.mrb[0].mxu0
  %793 = vdwg.mxu0
  %794 = vmatprep.subr.bf16.mxu0 0
  %795 = vmatpush1.bf16.msra.mxu0 %v584
  %796 = vmatprep.subr.bf16.mxu0 0
  %797 = vmatpush1.bf16.msra.mxu0 %v585
  %798 = vmatprep.subr.bf16.mxu0 0
  %799 = vmatpush1.bf16.msra.mxu0 %v586
  %800 = vmatprep.subr.bf16.mxu0 0
  %801 = vmatpush1.bf16.msra.mxu0 %v587
  %802 = vmatprep.subr.bf16.mxu0 0
  %803 = vmatpush1.bf16.msra.mxu0 %v588
  %804 = vmatprep.subr.bf16.mxu0 0
  %805 = vmatpush1.bf16.msra.mxu0 %v589
  %806 = vmatprep.subr.bf16.mxu0 0
  %807 = vmatpush1.bf16.msra.mxu0 %v590
  %808 = vmatprep.subr.bf16.mxu0 0
  %809 = vmatpush1.bf16.msra.mxu0 %v591
  %810 = vmatprep.subr.bf16.mxu0 0
  %811 = vmatpush1.bf16.msra.mxu0 %v592
  %812 = vmatprep.subr.bf16.mxu0 0
  %813 = vmatpush1.bf16.msra.mxu0 %v593
  %814 = vmatprep.subr.bf16.mxu0 0
  %815 = vmatpush1.bf16.msra.mxu0 %v594
  %816 = vmatprep.subr.bf16.mxu0 0
  %817 = vmatpush1.bf16.msra.mxu0 %v595
  %818 = vmatprep.subr.bf16.mxu0 0
  %819 = vmatpush1.bf16.msra.mxu0 %v596
  %820 = vmatprep.subr.bf16.mxu0 0
  %821 = vmatpush1.bf16.msra.mxu0 %v597
  %822 = vmatprep.subr.bf16.mxu0 0
  %823 = vmatpush1.bf16.msra.mxu0 %v598
  %824 = vmatprep.subr.bf16.mxu0 0
  %825 = vmatpush1.bf16.msra.mxu0 %v599
  %826 = vmatprep.mubr.bf16.mxu0 %v328
  %827 = vmatmul.mubr.bf16.gmra.mrb[0].mxu0 %v327
  %v828 = vpop.f32.mrb[0].mxu0
  %v829 = vadd.f32 %v709, %v828
  %v830 = vpop.f32.mrb[0].mxu0
  %v831 = vpop.f32.mrb[0].mxu0
  %v832 = vadd.f32 %v712, %v831
  %v833 = vpop.f32.mrb[0].mxu0
  %834 = vmatprep.mubr.bf16.mxu0 %v333
  %835 = vmatmul.mubr.bf16.gmra.mrb[0].mxu0 %v332
  %v836 = vpop.f32.mrb[0].mxu0
  %v837 = vadd.f32 %v717, %v836
  %v838 = vpop.f32.mrb[0].mxu0
  %v839 = vpop.f32.mrb[0].mxu0
  %v840 = vadd.f32 %v720, %v839
  %v841 = vpop.f32.mrb[0].mxu0
  %842 = vmatprep.mubr.bf16.mxu0 %v338
  %843 = vmatmul.mubr.bf16.gmra.mrb[0].mxu0 %v337
  %v844 = vpop.f32.mrb[0].mxu0
  %v845 = vadd.f32 %v725, %v844
  %v846 = vpop.f32.mrb[0].mxu0
  %v847 = vpop.f32.mrb[0].mxu0
  %v848 = vadd.f32 %v728, %v847
  %v849 = vpop.f32.mrb[0].mxu0
  %850 = vmatprep.mubr.bf16.mxu0 %v343
  %851 = vmatmul.mubr.bf16.gmra.mrb[0].mxu0 %v342
  %v852 = vpop.f32.mrb[0].mxu0
  %v853 = vadd.f32 %v733, %v852
  %v854 = vpop.f32.mrb[0].mxu0
  %v855 = vpop.f32.mrb[0].mxu0
  %v856 = vadd.f32 %v736, %v855
  %v857 = vpop.f32.mrb[0].mxu0
  %858 = vmatprep.mubr.bf16.mxu0 %v348
  %859 = vmatmul.mubr.bf16.gmra.mrb[0].mxu0 %v347
  %v860 = vpop.f32.mrb[0].mxu0
  %v861 = vadd.f32 %v741, %v860
  %v862 = vpop.f32.mrb[0].mxu0
  %v863 = vpop.f32.mrb[0].mxu0
  %v864 = vadd.f32 %v744, %v863
  %v865 = vpop.f32.mrb[0].mxu0
  %866 = vmatprep.mubr.bf16.mxu0 %v353
  %867 = vmatmul.mubr.bf16.gmra.mrb[0].mxu0 %v352
  %v868 = vpop.f32.mrb[0].mxu0
  %v869 = vadd.f32 %v749, %v868
  %v870 = vpop.f32.mrb[0].mxu0
  %v871 = vpop.f32.mrb[0].mxu0
  %v872 = vadd.f32 %v752, %v871
  %v873 = vpop.f32.mrb[0].mxu0
  %874 = vmatprep.mubr.bf16.mxu0 %v358
  %875 = vmatmul.mubr.bf16.gmra.mrb[0].mxu0 %v357
  %v876 = vpop.f32.mrb[0].mxu0
  %v877 = vadd.f32 %v757, %v876
  %v878 = vpop.f32.mrb[0].mxu0
  %v879 = vpop.f32.mrb[0].mxu0
  %v880 = vadd.f32 %v760, %v879
  %v881 = vpop.f32.mrb[0].mxu0
  %882 = vmatprep.mubr.bf16.mxu0 %v363
  %883 = vmatmul.mubr.bf16.gmra.mrb[0].mxu0 %v362
  %v884 = vpop.f32.mrb[0].mxu0
  %v885 = vadd.f32 %v765, %v884
  %v886 = vpop.f32.mrb[0].mxu0
  %v887 = vpop.f32.mrb[0].mxu0
  %v888 = vadd.f32 %v768, %v887
  %v889 = vpop.f32.mrb[0].mxu0
  %890 = vmatprep.mubr.bf16.mxu0 %v368
  %891 = vmatmul.mubr.bf16.gmra.mrb[0].mxu0 %v367
  %v892 = vpop.f32.mrb[0].mxu0
  %v893 = vadd.f32 %v773, %v892
  %v894 = vpop.f32.mrb[0].mxu0
  %v895 = vpop.f32.mrb[0].mxu0
  %v896 = vadd.f32 %v776, %v895
  %v897 = vpop.f32.mrb[0].mxu0
  %898 = vmatprep.mubr.bf16.mxu0 %v373
  %899 = vmatmul.mubr.bf16.gmra.mrb[0].mxu0 %v372
  %v900 = vpop.f32.mrb[0].mxu0
  %v901 = vadd.f32 %v781, %v900
  %v902 = vpop.f32.mrb[0].mxu0
  %v903 = vpop.f32.mrb[0].mxu0
  %v904 = vadd.f32 %v784, %v903
  %v905 = vpop.f32.mrb[0].mxu0
  %906 = vmatprep.mubr.bf16.mxu0 %v378
  %907 = vmatmul.mubr.bf16.gmra.mrb[0].mxu0 %v377
  %v908 = vpop.f32.mrb[0].mxu0
  %v909 = vadd.f32 %v789, %v908
  %v910 = vpop.f32.mrb[0].mxu0
  %v911 = vpop.f32.mrb[0].mxu0
  %v912 = vpop.f32.mrb[0].mxu0
  %913 = vdwg.mxu0
  %914 = vmatprep.subr.bf16.mxu0 0
  %915 = vmatpush1.bf16.msra.mxu0 %v600
  %916 = vmatprep.subr.bf16.mxu0 0
  %917 = vmatpush1.bf16.msra.mxu0 %v601
  %918 = vmatprep.subr.bf16.mxu0 0
  %919 = vmatpush1.bf16.msra.mxu0 %v602
  %920 = vmatprep.subr.bf16.mxu0 0
  %921 = vmatpush1.bf16.msra.mxu0 %v603
  %922 = vmatprep.subr.bf16.mxu0 0
  %923 = vmatpush1.bf16.msra.mxu0 0
  %924 = vmatprep.subr.bf16.mxu0 0
  %925 = vmatpush1.bf16.msra.mxu0 0
  %926 = vmatprep.subr.bf16.mxu0 0
  %927 = vmatpush1.bf16.msra.mxu0 0
  %928 = vmatprep.subr.bf16.mxu0 0
  %929 = vmatpush1.bf16.msra.mxu0 0
  %930 = vmatprep.subr.bf16.mxu0 0
  %931 = vmatpush1.bf16.msra.mxu0 0
  %932 = vmatprep.subr.bf16.mxu0 0
  %933 = vmatpush1.bf16.msra.mxu0 0
  %934 = vmatprep.subr.bf16.mxu0 0
  %935 = vmatpush1.bf16.msra.mxu0 0
  %936 = vmatprep.subr.bf16.mxu0 0
  %937 = vmatpush1.bf16.msra.mxu0 0
  %938 = vmatprep.subr.bf16.mxu0 0
  %939 = vmatpush1.bf16.msra.mxu0 0
  %940 = vmatprep.subr.bf16.mxu0 0
  %941 = vmatpush1.bf16.msra.mxu0 0
  %942 = vmatprep.subr.bf16.mxu0 0
  %943 = vmatpush1.bf16.msra.mxu0 0
  %944 = vmatprep.subr.bf16.mxu0 0
  %945 = vmatpush1.bf16.msra.mxu0 0
  %946 = vmatprep.mubr.bf16.mxu0 0
  %947 = vmatmul.mubr.bf16.gmra.mrb[0].mxu0 %v642
  %v948 = vpop.f32.mrb[0].mxu0
  %v949 = vadd.f32 %v829, %v948
  %v950 = vpop.f32.mrb[0].mxu0
  %v951 = vpop.f32.mrb[0].mxu0
  %v952 = vadd.f32 %v832, %v951
  %v953 = vpop.f32.mrb[0].mxu0
  %954 = vmatprep.mubr.bf16.mxu0 0
  %955 = vmatmul.mubr.bf16.gmra.mrb[0].mxu0 %v645
  %v956 = vpop.f32.mrb[0].mxu0
  %v957 = vadd.f32 %v837, %v956
  %v958 = vpop.f32.mrb[0].mxu0
  %v959 = vpop.f32.mrb[0].mxu0
  %v960 = vadd.f32 %v840, %v959
  %v961 = vpop.f32.mrb[0].mxu0
  %962 = vmatprep.mubr.bf16.mxu0 0
  %963 = vmatmul.mubr.bf16.gmra.mrb[0].mxu0 %v648
  %v964 = vpop.f32.mrb[0].mxu0
  %v965 = vadd.f32 %v845, %v964
  %v966 = vpop.f32.mrb[0].mxu0
  %v967 = vpop.f32.mrb[0].mxu0
  %v968 = vadd.f32 %v848, %v967
  %v969 = vpop.f32.mrb[0].mxu0
  %970 = vmatprep.mubr.bf16.mxu0 0
  %971 = vmatmul.mubr.bf16.gmra.mrb[0].mxu0 %v651
  %v972 = vpop.f32.mrb[0].mxu0
  %v973 = vadd.f32 %v853, %v972
  %v974 = vpop.f32.mrb[0].mxu0
  %v975 = vpop.f32.mrb[0].mxu0
  %v976 = vadd.f32 %v856, %v975
  %v977 = vpop.f32.mrb[0].mxu0
  %978 = vmatprep.mubr.bf16.mxu0 0
  %979 = vmatmul.mubr.bf16.gmra.mrb[0].mxu0 %v654
  %v980 = vpop.f32.mrb[0].mxu0
  %v981 = vadd.f32 %v861, %v980
  %v982 = vpop.f32.mrb[0].mxu0
  %v983 = vpop.f32.mrb[0].mxu0
  %v984 = vadd.f32 %v864, %v983
  %v985 = vpop.f32.mrb[0].mxu0
  %986 = vmatprep.mubr.bf16.mxu0 0
  %987 = vmatmul.mubr.bf16.gmra.mrb[0].mxu0 %v657
  %v988 = vpop.f32.mrb[0].mxu0
  %v989 = vadd.f32 %v869, %v988
  %v990 = vpop.f32.mrb[0].mxu0
  %v991 = vpop.f32.mrb[0].mxu0
  %v992 = vadd.f32 %v872, %v991
  %v993 = vpop.f32.mrb[0].mxu0
  %994 = vmatprep.mubr.bf16.mxu0 0
  %995 = vmatmul.mubr.bf16.gmra.mrb[0].mxu0 %v660
  %v996 = vpop.f32.mrb[0].mxu0
  %v997 = vadd.f32 %v877, %v996
  %v998 = vpop.f32.mrb[0].mxu0
  %v999 = vpop.f32.mrb[0].mxu0
  %v1000 = vadd.f32 %v880, %v999
  %v1001 = vpop.f32.mrb[0].mxu0
  %1002 = vmatprep.mubr.bf16.mxu0 0
  %1003 = vmatmul.mubr.bf16.gmra.mrb[0].mxu0 %v663
  %v1004 = vpop.f32.mrb[0].mxu0
  %v1005 = vadd.f32 %v885, %v1004
  %v1006 = vpop.f32.mrb[0].mxu0
  %v1007 = vpop.f32.mrb[0].mxu0
  %v1008 = vadd.f32 %v888, %v1007
  %v1009 = vpop.f32.mrb[0].mxu0
  %1010 = vmatprep.mubr.bf16.mxu0 0
  %1011 = vmatmul.mubr.bf16.gmra.mrb[0].mxu0 %v666
  %v1012 = vpop.f32.mrb[0].mxu0
  %v1013 = vadd.f32 %v893, %v1012
  %v1014 = vpop.f32.mrb[0].mxu0
  %v1015 = vpop.f32.mrb[0].mxu0
  %v1016 = vadd.f32 %v896, %v1015
  %v1017 = vpop.f32.mrb[0].mxu0
  %1018 = vmatprep.mubr.bf16.mxu0 0
  %1019 = vmatmul.mubr.bf16.gmra.mrb[0].mxu0 %v669
  %v1020 = vpop.f32.mrb[0].mxu0
  %v1021 = vadd.f32 %v901, %v1020
  %v1022 = vpop.f32.mrb[0].mxu0
  %v1023 = vpop.f32.mrb[0].mxu0
  %v1024 = vadd.f32 %v904, %v1023
  %v1025 = vpop.f32.mrb[0].mxu0
  %1026 = vmatprep.mubr.bf16.mxu0 0
  %1027 = vmatmul.mubr.bf16.gmra.mrb[0].mxu0 %v672
  %v1028 = vpop.f32.mrb[0].mxu0
  %v1029 = vadd.f32 %v909, %v1028
  %v1030 = vpop.f32.mrb[0].mxu0
  %v1031 = vpop.f32.mrb[0].mxu0
  %v1032 = vpop.f32.mrb[0].mxu0
  %1033 = vdwg.mxu0
  %v1034 = vmax.f32 %v949, 0.0
  %v1035 = vmax.f32 %v952, 0.0
  %v1036 = vmax.f32 %v957, 0.0
  %v1037 = vmax.f32 %v960, 0.0
  %v1038 = vmax.f32 %v965, 0.0
  %v1039 = vmax.f32 %v968, 0.0
  %v1040 = vmax.f32 %v973, 0.0
  %v1041 = vmax.f32 %v976, 0.0
  %v1042 = vmax.f32 %v981, 0.0
  %v1043 = vmax.f32 %v984, 0.0
  %v1044 = vmax.f32 %v989, 0.0
  %v1045 = vmax.f32 %v992, 0.0
  %v1046 = vmax.f32 %v997, 0.0
  %v1047 = vmax.f32 %v1000, 0.0
  %v1048 = vmax.f32 %v1005, 0.0
  %v1049 = vmax.f32 %v1008, 0.0
  %v1050 = vmax.f32 %v1013, 0.0
  %v1051 = vmax.f32 %v1016, 0.0
  %v1052 = vmax.f32 %v1021, 0.0
  %v1053 = vmax.f32 %v1024, 0.0
  %v1054 = vmax.f32 %v1029, 0.0
  %v1055 = vpack.c.bf16 %v1035, %v1034
  %v1056 = vpack.c.bf16 %v1037, %v1036
  %v1057 = vpack.c.bf16 %v1039, %v1038
  %v1058 = vpack.c.bf16 %v1041, %v1040
  %v1059 = vpack.c.bf16 %v1043, %v1042
  %v1060 = vpack.c.bf16 %v1045, %v1044
  %v1061 = vpack.c.bf16 %v1047, %v1046
  %v1062 = vpack.c.bf16 %v1049, %v1048
  %v1063 = vpack.c.bf16 %v1051, %v1050
  %v1064 = vpack.c.bf16 %v1053, %v1052
  %v1065 = vpack.c.bf16 %v1054, %v1054
  %v1077 = vunpack.c.l.b16 %v1055
  %v1078 = vunpack.c.h.b16 %v1055
  %v1079 = vunpack.c.l.b16 %v1056
  %v1080 = vunpack.c.h.b16 %v1056
  %v1081 = vunpack.c.l.b16 %v1057
  %v1082 = vunpack.c.h.b16 %v1057
  %v1083 = vunpack.c.l.b16 %v1058
  %v1084 = vunpack.c.h.b16 %v1058
  %v1085 = vunpack.c.l.b16 %v1059
  %v1086 = vunpack.c.h.b16 %v1059
  %v1087 = vunpack.c.l.b16 %v1060
  %v1088 = vunpack.c.h.b16 %v1060
  %v1089 = vunpack.c.l.b16 %v1061
  %v1090 = vunpack.c.h.b16 %v1061
  %v1091 = vunpack.c.l.b16 %v1062
  %v1092 = vunpack.c.h.b16 %v1062
  %v1093 = vunpack.c.l.b16 %v1063
  %v1094 = vunpack.c.h.b16 %v1063
  %v1095 = vunpack.c.l.b16 %v1064
  %v1096 = vunpack.c.h.b16 %v1064
  %v1097 = vunpack.c.l.b16 %v1065
  %v1098 = vpack.c.b16 %v1077, %v1077
  %v1099 = vpack.c.b16 %v1078, %v1078
  %v1100 = vpack.c.b16 %v1079, %v1079
  %v1101 = vpack.c.b16 %v1080, %v1080
  %v1102 = vpack.c.b16 %v1081, %v1081
  %v1103 = vpack.c.b16 %v1082, %v1082
  %v1104 = vpack.c.b16 %v1083, %v1083
  %v1105 = vpack.c.b16 %v1084, %v1084
  %v1106 = vpack.c.b16 %v1085, %v1085
  %v1107 = vpack.c.b16 %v1086, %v1086
  %v1108 = vpack.c.b16 %v1087, %v1087
  %v1109 = vpack.c.b16 %v1088, %v1088
  %v1110 = vpack.c.b16 %v1089, %v1089
  %v1111 = vpack.c.b16 %v1090, %v1090
  %v1112 = vpack.c.b16 %v1091, %v1091
  %v1113 = vpack.c.b16 %v1092, %v1092
  %v1114 = vpack.c.b16 %v1093, %v1093
  %v1115 = vpack.c.b16 %v1094, %v1094
  %v1116 = vpack.c.b16 %v1095, %v1095
  %v1117 = vpack.c.b16 %v1096, %v1096
  %v1118 = vpack.c.b16 %v1097, %v1097
  %1140 = vst [vmem:[%s3] sm:$0xf] %v1098
  %1141 = vst [vmem:[%s3 + $0x4] sm:$0xf] %v1099
  %1142 = vst [vmem:[%s3 + $0x8] sm:$0xf] %v1100
  %1143 = vst [vmem:[%s3 + $0xc] sm:$0xf] %v1101
  %1144 = vst [vmem:[%s3 + $0x10] sm:$0xf] %v1102
  %1145 = vst [vmem:[%s3 + $0x14] sm:$0xf] %v1103
  %1146 = vst [vmem:[%s3 + $0x18] sm:$0xf] %v1104
  %1147 = vst [vmem:[%s3 + $0x1c] sm:$0xf] %v1105
  %1148 = vst [vmem:[%s3 + $0x20] sm:$0xf] %v1106
  %1149 = vst [vmem:[%s3 + $0x24] sm:$0xf] %v1107
  %1150 = vst [vmem:[%s3 + $0x28] sm:$0xf] %v1108
  %1151 = vst [vmem:[%s3 + $0x2c] sm:$0xf] %v1109
  %1152 = vst [vmem:[%s3 + $0x30] sm:$0xf] %v1110
  %1153 = vst [vmem:[%s3 + $0x34] sm:$0xf] %v1111
  %1154 = vst [vmem:[%s3 + $0x38] sm:$0xf] %v1112
  %1155 = vst [vmem:[%s3 + $0x3c] sm:$0xf] %v1113
  %1156 = vst [vmem:[%s3 + $0x40] sm:$0xf] %v1114
  %1157 = vst [vmem:[%s3 + $0x44] sm:$0xf] %v1115
  %1158 = vst [vmem:[%s3 + $0x48] sm:$0xf] %v1116
  %1159 = vst [vmem:[%s3 + $0x4c] sm:$0xf] %v1117
  %1160 = vst [vmem:[%s3 + $0x50] sm:$0xf] %v1118
  // Predicated region
  $region14: #{_lambda_.8} parent=0 // pred_check
    _
  $region15: #{_lambda_.8} parent=0 // pred_check_branch
    %1162 = sbr.rel (0) target = $region17
  $region16: #{_lambda_.8} parent=0 // pred_region
    _
  $region17: #{_lambda_.8} parent=0 // pred_fallthru
    _
  // Predicated region
  $region18: #{_lambda_.8} parent=0 // pred_check
    _
  $region19: #{_lambda_.8} parent=0 // pred_check_branch
    %1164 = sbr.rel (0) target = $region21
  $region20: #{_lambda_.8} parent=0 // pred_region
    _
  $region21: #{_lambda_.8} parent=0 // pred_fallthru
    _

// kernel: _lambda_.9
$region0: #{_lambda_.9}
  #allocation0 [shape = 'u32[]', space=smem, size = 0x4, offset = 0x4, fixed_abs, tag = 'smem constant byte address 0x4 - core index']
  #allocation1 [shape = 'u32[144,128]{1,0:T(1,128)}', space=vmem, size = 0x12000, scoped, tag = 'internal scratch']
  #allocation2 [shape = 'f32[8,512]{1,0:T(8,128)}', space=vmem, size = 0x4000, scoped, tag = 'scratch operand']
  %s0 = inlined_call_operand.vmem [shape: bf16[8,5376], index: 0, kind: input, shape index: {}]
  %s1 = inlined_call_operand.vmem [shape: bf16[5376,512], index: 1, kind: input, shape index: {}]
  %s2 = inlined_call_operand.vmem [shape: f32[1,512], index: 2, kind: input, shape index: {}]
  %s3 = inlined_call_operand.vmem [shape: bf16[512,128], index: 3, kind: input, shape index: {}]
  %s4 = inlined_call_operand.vmem [shape: f32[1,128], index: 4, kind: input, shape index: {}]
  %s5 = inlined_call_operand.vmem [shape: f32[8,128], index: 5, kind: output, shape index: {}]
  %s6 = sld [smem:[#allocation0]]
  $region61: #{_lambda_.9} parent=0
    _
  %s8 = ssub.s32 1, %s6
  %s9 = scalar_select 0, %s8, %s6
  loop: start=0, step=1, limit=4
  $region2: #{_lambda_.9} parent=0 // loop_pre_header
    _
  $region3: #{_lambda_.9} parent=0 // loop_header
    %s11 = sphi 0, %s15
    %p12 = scmp.ge.s32.totalorder %s11, 4
    %s21 = sphi 0, %s23
    %s24 = sphi 0, %s21
    %s25 = sphi 0, %s24
    %s41 = sphi 0, %s25
    %s47 = sphi 0, %s49
    %s50 = sphi 0, %s47
    %s51 = sphi 0, %s50
    %s67 = sphi 0, %s51
    %s71 = sphi 0, %s71
    %s73 = sphi 0, %s71
    %s74 = sphi 0, %s73
    %s88 = sphi 0, %s74
    %s92 = sphi 0, %s92
    %s94 = sphi 0, %s92
    %s95 = sphi 0, %s94
    %s109 = sphi 0, %s95
    %s113 = sphi 0, %s113
    %s115 = sphi 0, %s113
    %s116 = sphi 0, %s115
    %s130 = sphi 0, %s116
    %s134 = sphi 0, %s134
    %s136 = sphi 0, %s134
    %s137 = sphi 0, %s136
    %s151 = sphi 0, %s137
  $region4: #{_lambda_.9} parent=0 // loop_header_branch
    %14 = sbr.rel (%p12) target = $region8
  $region5: #{_lambda_.9} parent=0 // loop_body
    %s16 = ssub.s32 %s11, 1
    %s17 = ssub.s32 %s11, 2
    %s18 = sadd.s32 %s11, 1
    %s19 = ssub.s32 %s11, %s18
    %p20 = scmp.eq.s32.totalorder %s19, 0
    %s22 = sadd.s32 %s21, 1
    %s23 = scalar_select %p20, %s21, %s22
    %p26 = pneg %p20
    %p27 = scmp.eq.s32.totalorder %s11, 1
    %p28 = por %p26, %p27
    %p29 = scmp.ne.s32.totalorder %s21, %s24
    %p30 = scmp.eq.s32.totalorder %s11, 0
    %p31 = por %p29, %p30
    %p32 = scmp.ne.s32.totalorder %s21, %s24
    %p33 = scmp.eq.s32.totalorder %s16, 1
    %p34 = por %p32, %p33
    %p35 = scmp.ne.s32.totalorder %s24, %s25
    %p36 = scmp.eq.s32.totalorder %s16, 0
    %p37 = por %p35, %p36
    %p38 = scmp.ne.s32.totalorder %s24, %s25
    %p39 = scmp.eq.s32.totalorder %s17, 1
    %p40 = por %p38, %p39
    %p42 = scmp.ne.s32.totalorder %s25, %s41
    %p43 = scmp.eq.s32.totalorder %s17, 0
    %p44 = por %p42, %p43
    %s45 = ssub.s32 %s11, %s18
    %p46 = scmp.eq.s32.totalorder %s45, 0
    %s48 = sadd.s32 %s47, 1
    %s49 = scalar_select %p46, %s47, %s48
    %p52 = pneg %p46
    %p53 = scmp.eq.s32.totalorder %s11, 1
    %p54 = por %p52, %p53
    %p55 = scmp.ne.s32.totalorder %s47, %s50
    %p56 = scmp.eq.s32.totalorder %s11, 0
    %p57 = por %p55, %p56
    %p58 = scmp.ne.s32.totalorder %s47, %s50
    %p59 = scmp.eq.s32.totalorder %s16, 1
    %p60 = por %p58, %p59
    %p61 = scmp.ne.s32.totalorder %s50, %s51
    %p62 = scmp.eq.s32.totalorder %s16, 0
    %p63 = por %p61, %p62
    %p64 = scmp.ne.s32.totalorder %s50, %s51
    %p65 = scmp.eq.s32.totalorder %s17, 1
    %p66 = por %p64, %p65
    %p68 = scmp.ne.s32.totalorder %s51, %s67
    %p69 = scmp.eq.s32.totalorder %s17, 0
    %p70 = por %p68, %p69
    %s72 = sadd.s32 %s71, 1
    %p75 = scmp.eq.s32.totalorder %s11, 1
    %p76 = scmp.ne.s32.totalorder %s71, %s73
    %p77 = scmp.eq.s32.totalorder %s11, 0
    %p78 = por %p76, %p77
    %p79 = scmp.ne.s32.totalorder %s71, %s73
    %p80 = scmp.eq.s32.totalorder %s16, 1
    %p81 = por %p79, %p80
    %p82 = scmp.ne.s32.totalorder %s73, %s74
    %p83 = scmp.eq.s32.totalorder %s16, 0
    %p84 = por %p82, %p83
    %p85 = scmp.ne.s32.totalorder %s73, %s74
    %p86 = scmp.eq.s32.totalorder %s17, 1
    %p87 = por %p85, %p86
    %p89 = scmp.ne.s32.totalorder %s74, %s88
    %p90 = scmp.eq.s32.totalorder %s17, 0
    %p91 = por %p89, %p90
    %s93 = sadd.s32 %s92, 1
    %p96 = scmp.eq.s32.totalorder %s11, 1
    %p97 = scmp.ne.s32.totalorder %s92, %s94
    %p98 = scmp.eq.s32.totalorder %s11, 0
    %p99 = por %p97, %p98
    %p100 = scmp.ne.s32.totalorder %s92, %s94
    %p101 = scmp.eq.s32.totalorder %s16, 1
    %p102 = por %p100, %p101
    %p103 = scmp.ne.s32.totalorder %s94, %s95
    %p104 = scmp.eq.s32.totalorder %s16, 0
    %p105 = por %p103, %p104
    %p106 = scmp.ne.s32.totalorder %s94, %s95
    %p107 = scmp.eq.s32.totalorder %s17, 1
    %p108 = por %p106, %p107
    %p110 = scmp.ne.s32.totalorder %s95, %s109
    %p111 = scmp.eq.s32.totalorder %s17, 0
    %p112 = por %p110, %p111
    %s114 = sadd.s32 %s113, 1
    %p117 = scmp.eq.s32.totalorder %s11, 1
    %p118 = scmp.ne.s32.totalorder %s113, %s115
    %p119 = scmp.eq.s32.totalorder %s11, 0
    %p120 = por %p118, %p119
    %p121 = scmp.ne.s32.totalorder %s113, %s115
    %p122 = scmp.eq.s32.totalorder %s16, 1
    %p123 = por %p121, %p122
    %p124 = scmp.ne.s32.totalorder %s115, %s116
    %p125 = scmp.eq.s32.totalorder %s16, 0
    %p126 = por %p124, %p125
    %p127 = scmp.ne.s32.totalorder %s115, %s116
    %p128 = scmp.eq.s32.totalorder %s17, 1
    %p129 = por %p127, %p128
    %p131 = scmp.ne.s32.totalorder %s116, %s130
    %p132 = scmp.eq.s32.totalorder %s17, 0
    %p133 = por %p131, %p132
    %s135 = sadd.s32 %s134, 1
    %p138 = scmp.eq.s32.totalorder %s11, 1
    %p139 = scmp.ne.s32.totalorder %s134, %s136
    %p140 = scmp.eq.s32.totalorder %s11, 0
    %p141 = por %p139, %p140
    %p142 = scmp.ne.s32.totalorder %s134, %s136
    %p143 = scmp.eq.s32.totalorder %s16, 1
    %p144 = por %p142, %p143
    %p145 = scmp.ne.s32.totalorder %s136, %s137
    %p146 = scmp.eq.s32.totalorder %s16, 0
    %p147 = por %p145, %p146
    %p148 = scmp.ne.s32.totalorder %s136, %s137
    %p149 = scmp.eq.s32.totalorder %s17, 1
    %p150 = por %p148, %p149
    %p152 = scmp.ne.s32.totalorder %s137, %s151
    %p153 = scmp.eq.s32.totalorder %s17, 0
    %p154 = por %p152, %p153
    %p155 = scmp.le.s32.totalorder 1, %s11
    %p156 = scmp.lt.s32.totalorder %s11, 3
    %p157 = pnand %p155, %p156
    %p158 = pneg %p157
    // Predicated region
    $region9: #{_lambda_.9} parent=5 // pred_check
      _
    $region10: #{_lambda_.9} parent=5 // pred_check_branch
      %160 = sbr.rel (%p157) target = $region12
    $region11: #{_lambda_.9} parent=5 // pred_region
      %s161 = ssub.s32 %s11, 1
      // Predicated region
      $region13: #{_lambda_.9} parent=11 // pred_check
        %p162 = pneg %p84
      $region14: #{_lambda_.9} parent=11 // pred_check_branch
        %164 = sbr.rel (%p162) target = $region16
      $region15: #{_lambda_.9} parent=11 // pred_region
        _
      $region16: #{_lambda_.9} parent=11 // pred_fallthru
        _
      // Predicated region
      $region17: #{_lambda_.9} parent=11 // pred_check
        %p165 = pneg %p105
      $region18: #{_lambda_.9} parent=11 // pred_check_branch
        %167 = sbr.rel (%p165) target = $region20
      $region19: #{_lambda_.9} parent=11 // pred_region
        _
      $region20: #{_lambda_.9} parent=11 // pred_fallthru
        _
      // Predicated region
      $region21: #{_lambda_.9} parent=11 // pred_check
        %p168 = pneg %p126
      $region22: #{_lambda_.9} parent=11 // pred_check_branch
        %170 = sbr.rel (%p168) target = $region24
      $region23: #{_lambda_.9} parent=11 // pred_region
        _
      $region24: #{_lambda_.9} parent=11 // pred_fallthru
        _
    $region12: #{_lambda_.9} parent=5 // pred_fallthru
      _
    %p171 = scmp.lt.s32.totalorder %s11, 2
    // Predicated region
    $region25: #{_lambda_.9} parent=5 // pred_check
      %p172 = pneg %p171
    $region26: #{_lambda_.9} parent=5 // pred_check_branch
      %174 = sbr.rel (%p172) target = $region28
    $region27: #{_lambda_.9} parent=5 // pred_region
      // Predicated region
      $region29: #{_lambda_.9} parent=27 // pred_check
        %p175 = pneg %p31
      $region30: #{_lambda_.9} parent=27 // pred_check_branch
        %177 = sbr.rel (%p175) target = $region32
      $region31: #{_lambda_.9} parent=27 // pred_region
        %s178 = smul.u32 21, %s11
        %p179 = scmp.lt.s32.totalorder %s178, 41
        %s180 = scalar_select %p179, %s178, 41
        %s181 = smul.addr %s180, 4
        %s182 = scalar_lea.vmem %s0, %s181
        %s183 = smul.u32 21, %s11
      $region32: #{_lambda_.9} parent=27 // pred_fallthru
        _
      // Predicated region
      $region33: #{_lambda_.9} parent=27 // pred_check
        %p184 = pneg %p57
      $region34: #{_lambda_.9} parent=27 // pred_check_branch
        %186 = sbr.rel (%p184) target = $region36
      $region35: #{_lambda_.9} parent=27 // pred_region
        %s187 = smul.u32 336, %s11
        %p188 = scmp.lt.s32.totalorder %s187, 671
        %s189 = scalar_select %p188, %s187, 671
        %s190 = smul.addr %s189, 4
        %s191 = smul.addr %s190, 4
        %s192 = scalar_lea.vmem %s1, %s191
        %s193 = smul.u32 336, %s11
      $region36: #{_lambda_.9} parent=27 // pred_fallthru
        _
    $region28: #{_lambda_.9} parent=5 // pred_fallthru
      _
    %p194 = scmp.le.s32.totalorder 1, %s11
    %p195 = scmp.lt.s32.totalorder %s11, 3
    %p196 = pnand %p194, %p195
    %p197 = pneg %p196
    // Predicated region
    $region37: #{_lambda_.9} parent=5 // pred_check
      _
    $region38: #{_lambda_.9} parent=5 // pred_check_branch
      %199 = sbr.rel (%p196) target = $region40
    $region39: #{_lambda_.9} parent=5 // pred_region
      %s200 = ssub.s32 %s11, 1
      %s201 = smul.u32 21, %s16
      %p202 = scmp.lt.s32.totalorder %s201, 41
      %s203 = scalar_select %p202, %s201, 41
      %s204 = smul.addr %s203, 4
      %s205 = scalar_lea.vmem %s0, %s204
      %p206 = pneg %p37
      %p207 = pneg %p34
      %s208 = smul.u32 336, %s16
      %p209 = scmp.lt.s32.totalorder %s208, 671
      %s210 = scalar_select %p209, %s208, 671
      %s211 = smul.addr %s210, 4
      %s212 = smul.addr %s211, 4
      %s213 = scalar_lea.vmem %s1, %s212
      %p214 = pneg %p63
      %p215 = pneg %p60
      %p216 = pneg %p84
      %p217 = pneg %p81
      %p218 = pneg %p105
      %p219 = pneg %p102
      %p220 = pneg %p126
      %p221 = pneg %p123
      %p222 = pneg %p147
      %p223 = pneg %p144
      %s224 = smul.u32 21, %s16
      %p225 = scmp.lt.s32.totalorder %s224, 41
      %s226 = scalar_select %p225, %s224, 41
      %s227 = smul.addr %s226, 4
      %s228 = scalar_lea.vmem %s0, %s227
      %s229 = smul.u32 21, %s16
      %s230 = smul.u32 336, %s16
      %p231 = scmp.lt.s32.totalorder %s230, 671
      %s232 = scalar_select %p231, %s230, 671
      %s233 = smul.addr %s232, 4
      %s234 = smul.addr %s233, 4
      %s235 = scalar_lea.vmem %s1, %s234
      %s236 = smul.u32 336, %s16
      %p238 = scmp.eq.s32.totalorder %s16, 0
      // Predicated region
      $region41: #{_lambda_.9} parent=39 // pred_check
        %p239 = pneg %p238
      $region42: #{_lambda_.9} parent=39 // pred_check_branch
        %241 = sbr.rel (%p239) target = $region44
      $region43: #{_lambda_.9} parent=39 // pred_region
        %242 = vst [vmem:[#allocation2] sm:$0xff] 0.0
        %243 = vst [vmem:[#allocation2 + $0x8] sm:$0xff] 0.0
        %244 = vst [vmem:[#allocation2 + $0x10] sm:$0xff] 0.0
        %245 = vst [vmem:[#allocation2 + $0x18] sm:$0xff] 0.0
      $region44: #{_lambda_.9} parent=39 // pred_fallthru
        _
      %v246 = vld [vmem:[#allocation2] sm:$0xff]
      %v247 = vld [vmem:[#allocation2 + $0x8] sm:$0xff]
      %v248 = vld [vmem:[#allocation2 + $0x10] sm:$0xff]
      %v249 = vld [vmem:[#allocation2 + $0x18] sm:$0xff]
      %v250 = vld [vmem:[%s228] sm:$0xff]
      %v251 = vld [vmem:[%s228 + $0x8] sm:$0xff]
      %v252 = vld [vmem:[%s228 + $0x10] sm:$0xff]
      %v253 = vld [vmem:[%s228 + $0x18] sm:$0xff]
      %v254 = vld [vmem:[%s228 + $0x20] sm:$0xff]
      %v255 = vld [vmem:[%s228 + $0x28] sm:$0xff]
      %v256 = vld [vmem:[%s228 + $0x30] sm:$0xff]
      %v257 = vld [vmem:[%s228 + $0x38] sm:$0xff]
      %v258 = vld [vmem:[%s228 + $0x40] sm:$0xff]
      %v259 = vld [vmem:[%s228 + $0x48] sm:$0xff]
      %v260 = vld [vmem:[%s228 + $0x50] sm:$0xf]
      %v261 = vld [vmem:[%s235] sm:$0xff]
      %v262 = vld [vmem:[%s235 + $0x8] sm:$0xff]
      %v263 = vld [vmem:[%s235 + $0x10] sm:$0xff]
      %v264 = vld [vmem:[%s235 + $0x18] sm:$0xff]
      %v265 = vld [vmem:[%s235 + $0x20] sm:$0xff]
      %v266 = vld [vmem:[%s235 + $0x28] sm:$0xff]
      %v267 = vld [vmem:[%s235 + $0x30] sm:$0xff]
      %v268 = vld [vmem:[%s235 + $0x38] sm:$0xff]
      %v269 = vld [vmem:[%s235 + $0x40] sm:$0xff]
      %v270 = vld [vmem:[%s235 + $0x48] sm:$0xff]
      %v271 = vld [vmem:[%s235 + $0x50] sm:$0xff]
      %v272 = vld [vmem:[%s235 + $0x58] sm:$0xff]
      %v273 = vld [vmem:[%s235 + $0x60] sm:$0xff]
      %v274 = vld [vmem:[%s235 + $0x68] sm:$0xff]
      %v275 = vld [vmem:[%s235 + $0x70] sm:$0xff]
      %v276 = vld [vmem:[%s235 + $0x78] sm:$0xff]
      %v277 = vld [vmem:[%s235 + $0x80] sm:$0xff]
      %v278 = vld [vmem:[%s235 + $0x88] sm:$0xff]
      %v279 = vld [vmem:[%s235 + $0x90] sm:$0xff]
      %v280 = vld [vmem:[%s235 + $0x98] sm:$0xff]
      %v281 = vld [vmem:[%s235 + $0xa0] sm:$0xff]
      %v282 = vld [vmem:[%s235 + $0xa8] sm:$0xff]
      %v283 = vld [vmem:[%s235 + $0xb0] sm:$0xff]
      %v284 = vld [vmem:[%s235 + $0xb8] sm:$0xff]
      %v285 = vld [vmem:[%s235 + $0xc0] sm:$0xff]
      %v286 = vld [vmem:[%s235 + $0xc8] sm:$0xff]
      %v287 = vld [vmem:[%s235 + $0xd0] sm:$0xff]
      %v288 = vld [vmem:[%s235 + $0xd8] sm:$0xff]
      %v289 = vld [vmem:[%s235 + $0xe0] sm:$0xff]
      %v290 = vld [vmem:[%s235 + $0xe8] sm:$0xff]
      %v291 = vld [vmem:[%s235 + $0xf0] sm:$0xff]
      %v292 = vld [vmem:[%s235 + $0xf8] sm:$0xff]
      %v293 = vld [vmem:[%s235 + $0x100] sm:$0xff]
      %v294 = vld [vmem:[%s235 + $0x108] sm:$0xff]
      %v295 = vld [vmem:[%s235 + $0x110] sm:$0xff]
      %v296 = vld [vmem:[%s235 + $0x118] sm:$0xff]
      %v297 = vld [vmem:[%s235 + $0x120] sm:$0xff]
      %v298 = vld [vmem:[%s235 + $0x128] sm:$0xff]
      %v299 = vld [vmem:[%s235 + $0x130] sm:$0xff]
      %v300 = vld [vmem:[%s235 + $0x138] sm:$0xff]
      %v301 = vld [vmem:[%s235 + $0x140] sm:$0xff]
      %v302 = vld [vmem:[%s235 + $0x148] sm:$0xff]
      %v303 = vld [vmem:[%s235 + $0x150] sm:$0xff]
      %v304 = vld [vmem:[%s235 + $0x158] sm:$0xff]
      %v305 = vld [vmem:[%s235 + $0x160] sm:$0xff]
      %v306 = vld [vmem:[%s235 + $0x168] sm:$0xff]
      %v307 = vld [vmem:[%s235 + $0x170] sm:$0xff]
      %v308 = vld [vmem:[%s235 + $0x178] sm:$0xff]
      %v309 = vld [vmem:[%s235 + $0x180] sm:$0xff]
      %v310 = vld [vmem:[%s235 + $0x188] sm:$0xff]
      %v311 = vld [vmem:[%s235 + $0x190] sm:$0xff]
      %v312 = vld [vmem:[%s235 + $0x198] sm:$0xff]
      %v313 = vld [vmem:[%s235 + $0x1a0] sm:$0xff]
      %v314 = vld [vmem:[%s235 + $0x1a8] sm:$0xff]
      %v315 = vld [vmem:[%s235 + $0x1b0] sm:$0xff]
      %v316 = vld [vmem:[%s235 + $0x1b8] sm:$0xff]
      %v317 = vld [vmem:[%s235 + $0x1c0] sm:$0xff]
      %v318 = vld [vmem:[%s235 + $0x1c8] sm:$0xff]
      %v319 = vld [vmem:[%s235 + $0x1d0] sm:$0xff]
      %v320 = vld [vmem:[%s235 + $0x1d8] sm:$0xff]
      %v321 = vld [vmem:[%s235 + $0x1e0] sm:$0xff]
      %v322 = vld [vmem:[%s235 + $0x1e8] sm:$0xff]
      %v323 = vld [vmem:[%s235 + $0x1f0] sm:$0xff]
      %v324 = vld [vmem:[%s235 + $0x1f8] sm:$0xff]
      %v325 = vld [vmem:[%s235 + $0x200] sm:$0xff]
      %v326 = vld [vmem:[%s235 + $0x208] sm:$0xff]
      %v327 = vld [vmem:[%s235 + $0x210] sm:$0xff]
      %v328 = vld [vmem:[%s235 + $0x218] sm:$0xff]
      %v329 = vld [vmem:[%s235 + $0x220] sm:$0xff]
      %v330 = vld [vmem:[%s235 + $0x228] sm:$0xff]
      %v331 = vld [vmem:[%s235 + $0x230] sm:$0xff]
      %v332 = vld [vmem:[%s235 + $0x238] sm:$0xff]
      %v333 = vld [vmem:[%s235 + $0x240] sm:$0xff]
      %v334 = vld [vmem:[%s235 + $0x248] sm:$0xff]
      %v335 = vld [vmem:[%s235 + $0x250] sm:$0xff]
      %v336 = vld [vmem:[%s235 + $0x258] sm:$0xff]
      %v337 = vld [vmem:[%s235 + $0x260] sm:$0xff]
      %v338 = vld [vmem:[%s235 + $0x268] sm:$0xff]
      %v339 = vld [vmem:[%s235 + $0x270] sm:$0xff]
      %v340 = vld [vmem:[%s235 + $0x278] sm:$0xff]
      %v341 = vld [vmem:[%s235 + $0x280] sm:$0xff]
      %v342 = vld [vmem:[%s235 + $0x288] sm:$0xff]
      %v343 = vld [vmem:[%s235 + $0x290] sm:$0xff]
      %v344 = vld [vmem:[%s235 + $0x298] sm:$0xff]
      %v345 = vld [vmem:[%s235 + $0x2a0] sm:$0xff]
      %v346 = vld [vmem:[%s235 + $0x2a8] sm:$0xff]
      %v347 = vld [vmem:[%s235 + $0x2b0] sm:$0xff]
      %v348 = vld [vmem:[%s235 + $0x2b8] sm:$0xff]
      %v349 = vld [vmem:[%s235 + $0x2c0] sm:$0xff]
      %v350 = vld [vmem:[%s235 + $0x2c8] sm:$0xff]
      %v351 = vld [vmem:[%s235 + $0x2d0] sm:$0xff]
      %v352 = vld [vmem:[%s235 + $0x2d8] sm:$0xff]
      %v353 = vld [vmem:[%s235 + $0x2e0] sm:$0xff]
      %v354 = vld [vmem:[%s235 + $0x2e8] sm:$0xff]
      %v355 = vld [vmem:[%s235 + $0x2f0] sm:$0xff]
      %v356 = vld [vmem:[%s235 + $0x2f8] sm:$0xff]
      %v357 = vld [vmem:[%s235 + $0x300] sm:$0xff]
      %v358 = vld [vmem:[%s235 + $0x308] sm:$0xff]
      %v359 = vld [vmem:[%s235 + $0x310] sm:$0xff]
      %v360 = vld [vmem:[%s235 + $0x318] sm:$0xff]
      %v361 = vld [vmem:[%s235 + $0x320] sm:$0xff]
      %v362 = vld [vmem:[%s235 + $0x328] sm:$0xff]
      %v363 = vld [vmem:[%s235 + $0x330] sm:$0xff]
      %v364 = vld [vmem:[%s235 + $0x338] sm:$0xff]
      %v365 = vld [vmem:[%s235 + $0x340] sm:$0xff]
      %v366 = vld [vmem:[%s235 + $0x348] sm:$0xff]
      %v367 = vld [vmem:[%s235 + $0x350] sm:$0xff]
      %v368 = vld [vmem:[%s235 + $0x358] sm:$0xff]
      %v369 = vld [vmem:[%s235 + $0x360] sm:$0xff]
      %v370 = vld [vmem:[%s235 + $0x368] sm:$0xff]
      %v371 = vld [vmem:[%s235 + $0x370] sm:$0xff]
      %v372 = vld [vmem:[%s235 + $0x378] sm:$0xff]
      %v373 = vld [vmem:[%s235 + $0x380] sm:$0xff]
      %v374 = vld [vmem:[%s235 + $0x388] sm:$0xff]
      %v375 = vld [vmem:[%s235 + $0x390] sm:$0xff]
      %v376 = vld [vmem:[%s235 + $0x398] sm:$0xff]
      %v377 = vld [vmem:[%s235 + $0x3a0] sm:$0xff]
      %v378 = vld [vmem:[%s235 + $0x3a8] sm:$0xff]
      %v379 = vld [vmem:[%s235 + $0x3b0] sm:$0xff]
      %v380 = vld [vmem:[%s235 + $0x3b8] sm:$0xff]
      %v381 = vld [vmem:[%s235 + $0x3c0] sm:$0xff]
      %v382 = vld [vmem:[%s235 + $0x3c8] sm:$0xff]
      %v383 = vld [vmem:[%s235 + $0x3d0] sm:$0xff]
      %v384 = vld [vmem:[%s235 + $0x3d8] sm:$0xff]
      %v385 = vld [vmem:[%s235 + $0x3e0] sm:$0xff]
      %v386 = vld [vmem:[%s235 + $0x3e8] sm:$0xff]
      %v387 = vld [vmem:[%s235 + $0x3f0] sm:$0xff]
      %v388 = vld [vmem:[%s235 + $0x3f8] sm:$0xff]
      %v389 = vld [vmem:[%s235 + $0x400] sm:$0xff]
      %v390 = vld [vmem:[%s235 + $0x408] sm:$0xff]
      %v391 = vld [vmem:[%s235 + $0x410] sm:$0xff]
      %v392 = vld [vmem:[%s235 + $0x418] sm:$0xff]
      %v393 = vld [vmem:[%s235 + $0x420] sm:$0xff]
      %v394 = vld [vmem:[%s235 + $0x428] sm:$0xff]
      %v395 = vld [vmem:[%s235 + $0x430] sm:$0xff]
      %v396 = vld [vmem:[%s235 + $0x438] sm:$0xff]
      %v397 = vld [vmem:[%s235 + $0x440] sm:$0xff]
      %v398 = vld [vmem:[%s235 + $0x448] sm:$0xff]
      %v399 = vld [vmem:[%s235 + $0x450] sm:$0xff]
      %v400 = vld [vmem:[%s235 + $0x458] sm:$0xff]
      %v401 = vld [vmem:[%s235 + $0x460] sm:$0xff]
      %v402 = vld [vmem:[%s235 + $0x468] sm:$0xff]
      %v403 = vld [vmem:[%s235 + $0x470] sm:$0xff]
      %v404 = vld [vmem:[%s235 + $0x478] sm:$0xff]
      %v405 = vld [vmem:[%s235 + $0x480] sm:$0xff]
      %v406 = vld [vmem:[%s235 + $0x488] sm:$0xff]
      %v407 = vld [vmem:[%s235 + $0x490] sm:$0xff]
      %v408 = vld [vmem:[%s235 + $0x498] sm:$0xff]
      %v409 = vld [vmem:[%s235 + $0x4a0] sm:$0xff]
      %v410 = vld [vmem:[%s235 + $0x4a8] sm:$0xff]
      %v411 = vld [vmem:[%s235 + $0x4b0] sm:$0xff]
      %v412 = vld [vmem:[%s235 + $0x4b8] sm:$0xff]
      %v413 = vld [vmem:[%s235 + $0x4c0] sm:$0xff]
      %v414 = vld [vmem:[%s235 + $0x4c8] sm:$0xff]
      %v415 = vld [vmem:[%s235 + $0x4d0] sm:$0xff]
      %v416 = vld [vmem:[%s235 + $0x4d8] sm:$0xff]
      %v417 = vld [vmem:[%s235 + $0x4e0] sm:$0xff]
      %v418 = vld [vmem:[%s235 + $0x4e8] sm:$0xff]
      %v419 = vld [vmem:[%s235 + $0x4f0] sm:$0xff]
      %v420 = vld [vmem:[%s235 + $0x4f8] sm:$0xff]
      %v421 = vld [vmem:[%s235 + $0x500] sm:$0xff]
      %v422 = vld [vmem:[%s235 + $0x508] sm:$0xff]
      %v423 = vld [vmem:[%s235 + $0x510] sm:$0xff]
      %v424 = vld [vmem:[%s235 + $0x518] sm:$0xff]
      %v425 = vld [vmem:[%s235 + $0x520] sm:$0xff]
      %v426 = vld [vmem:[%s235 + $0x528] sm:$0xff]
      %v427 = vld [vmem:[%s235 + $0x530] sm:$0xff]
      %v428 = vld [vmem:[%s235 + $0x538] sm:$0xff]
      %v429 = vld [vmem:[%s235 + $0x540] sm:$0xff]
      %v430 = vld [vmem:[%s235 + $0x548] sm:$0xff]
      %v431 = vld [vmem:[%s235 + $0x550] sm:$0xff]
      %v432 = vld [vmem:[%s235 + $0x558] sm:$0xff]
      %v433 = vld [vmem:[%s235 + $0x560] sm:$0xff]
      %v434 = vld [vmem:[%s235 + $0x568] sm:$0xff]
      %v435 = vld [vmem:[%s235 + $0x570] sm:$0xff]
      %v436 = vld [vmem:[%s235 + $0x578] sm:$0xff]
      %v437 = vld [vmem:[%s235 + $0x580] sm:$0xff]
      %v438 = vld [vmem:[%s235 + $0x588] sm:$0xff]
      %v439 = vld [vmem:[%s235 + $0x590] sm:$0xff]
      %v440 = vld [vmem:[%s235 + $0x598] sm:$0xff]
      %v441 = vld [vmem:[%s235 + $0x5a0] sm:$0xff]
      %v442 = vld [vmem:[%s235 + $0x5a8] sm:$0xff]
      %v443 = vld [vmem:[%s235 + $0x5b0] sm:$0xff]
      %v444 = vld [vmem:[%s235 + $0x5b8] sm:$0xff]
      %v445 = vld [vmem:[%s235 + $0x5c0] sm:$0xff]
      %v446 = vld [vmem:[%s235 + $0x5c8] sm:$0xff]
      %v447 = vld [vmem:[%s235 + $0x5d0] sm:$0xff]
      %v448 = vld [vmem:[%s235 + $0x5d8] sm:$0xff]
      %v449 = vld [vmem:[%s235 + $0x5e0] sm:$0xff]
      %v450 = vld [vmem:[%s235 + $0x5e8] sm:$0xff]
      %v451 = vld [vmem:[%s235 + $0x5f0] sm:$0xff]
      %v452 = vld [vmem:[%s235 + $0x5f8] sm:$0xff]
      %v453 = vld [vmem:[%s235 + $0x600] sm:$0xff]
      %v454 = vld [vmem:[%s235 + $0x608] sm:$0xff]
      %v455 = vld [vmem:[%s235 + $0x610] sm:$0xff]
      %v456 = vld [vmem:[%s235 + $0x618] sm:$0xff]
      %v457 = vld [vmem:[%s235 + $0x620] sm:$0xff]
      %v458 = vld [vmem:[%s235 + $0x628] sm:$0xff]
      %v459 = vld [vmem:[%s235 + $0x630] sm:$0xff]
      %v460 = vld [vmem:[%s235 + $0x638] sm:$0xff]
      %v461 = vld [vmem:[%s235 + $0x640] sm:$0xff]
      %v462 = vld [vmem:[%s235 + $0x648] sm:$0xff]
      %v463 = vld [vmem:[%s235 + $0x650] sm:$0xff]
      %v464 = vld [vmem:[%s235 + $0x658] sm:$0xff]
      %v465 = vld [vmem:[%s235 + $0x660] sm:$0xff]
      %v466 = vld [vmem:[%s235 + $0x668] sm:$0xff]
      %v467 = vld [vmem:[%s235 + $0x670] sm:$0xff]
      %v468 = vld [vmem:[%s235 + $0x678] sm:$0xff]
      %v469 = vld [vmem:[%s235 + $0x680] sm:$0xff]
      %v470 = vld [vmem:[%s235 + $0x688] sm:$0xff]
      %v471 = vld [vmem:[%s235 + $0x690] sm:$0xff]
      %v472 = vld [vmem:[%s235 + $0x698] sm:$0xff]
      %v473 = vld [vmem:[%s235 + $0x6a0] sm:$0xff]
      %v474 = vld [vmem:[%s235 + $0x6a8] sm:$0xff]
      %v475 = vld [vmem:[%s235 + $0x6b0] sm:$0xff]
      %v476 = vld [vmem:[%s235 + $0x6b8] sm:$0xff]
      %v477 = vld [vmem:[%s235 + $0x6c0] sm:$0xff]
      %v478 = vld [vmem:[%s235 + $0x6c8] sm:$0xff]
      %v479 = vld [vmem:[%s235 + $0x6d0] sm:$0xff]
      %v480 = vld [vmem:[%s235 + $0x6d8] sm:$0xff]
      %v481 = vld [vmem:[%s235 + $0x6e0] sm:$0xff]
      %v482 = vld [vmem:[%s235 + $0x6e8] sm:$0xff]
      %v483 = vld [vmem:[%s235 + $0x6f0] sm:$0xff]
      %v484 = vld [vmem:[%s235 + $0x6f8] sm:$0xff]
      %v485 = vld [vmem:[%s235 + $0x700] sm:$0xff]
      %v486 = vld [vmem:[%s235 + $0x708] sm:$0xff]
      %v487 = vld [vmem:[%s235 + $0x710] sm:$0xff]
      %v488 = vld [vmem:[%s235 + $0x718] sm:$0xff]
      %v489 = vld [vmem:[%s235 + $0x720] sm:$0xff]
      %v490 = vld [vmem:[%s235 + $0x728] sm:$0xff]
      %v491 = vld [vmem:[%s235 + $0x730] sm:$0xff]
      %v492 = vld [vmem:[%s235 + $0x738] sm:$0xff]
      %v493 = vld [vmem:[%s235 + $0x740] sm:$0xff]
      %v494 = vld [vmem:[%s235 + $0x748] sm:$0xff]
      %v495 = vld [vmem:[%s235 + $0x750] sm:$0xff]
      %v496 = vld [vmem:[%s235 + $0x758] sm:$0xff]
      %v497 = vld [vmem:[%s235 + $0x760] sm:$0xff]
      %v498 = vld [vmem:[%s235 + $0x768] sm:$0xff]
      %v499 = vld [vmem:[%s235 + $0x770] sm:$0xff]
      %v500 = vld [vmem:[%s235 + $0x778] sm:$0xff]
      %v501 = vld [vmem:[%s235 + $0x780] sm:$0xff]
      %v502 = vld [vmem:[%s235 + $0x788] sm:$0xff]
      %v503 = vld [vmem:[%s235 + $0x790] sm:$0xff]
      %v504 = vld [vmem:[%s235 + $0x798] sm:$0xff]
      %v505 = vld [vmem:[%s235 + $0x7a0] sm:$0xff]
      %v506 = vld [vmem:[%s235 + $0x7a8] sm:$0xff]
      %v507 = vld [vmem:[%s235 + $0x7b0] sm:$0xff]
      %v508 = vld [vmem:[%s235 + $0x7b8] sm:$0xff]
      %v509 = vld [vmem:[%s235 + $0x7c0] sm:$0xff]
      %v510 = vld [vmem:[%s235 + $0x7c8] sm:$0xff]
      %v511 = vld [vmem:[%s235 + $0x7d0] sm:$0xff]
      %v512 = vld [vmem:[%s235 + $0x7d8] sm:$0xff]
      %v513 = vld [vmem:[%s235 + $0x7e0] sm:$0xff]
      %v514 = vld [vmem:[%s235 + $0x7e8] sm:$0xff]
      %v515 = vld [vmem:[%s235 + $0x7f0] sm:$0xff]
      %v516 = vld [vmem:[%s235 + $0x7f8] sm:$0xff]
      %v517 = vld [vmem:[%s235 + $0x800] sm:$0xff]
      %v518 = vld [vmem:[%s235 + $0x808] sm:$0xff]
      %v519 = vld [vmem:[%s235 + $0x810] sm:$0xff]
      %v520 = vld [vmem:[%s235 + $0x818] sm:$0xff]
      %v521 = vld [vmem:[%s235 + $0x820] sm:$0xff]
      %v522 = vld [vmem:[%s235 + $0x828] sm:$0xff]
      %v523 = vld [vmem:[%s235 + $0x830] sm:$0xff]
      %v524 = vld [vmem:[%s235 + $0x838] sm:$0xff]
      %v525 = vld [vmem:[%s235 + $0x840] sm:$0xff]
      %v526 = vld [vmem:[%s235 + $0x848] sm:$0xff]
      %v527 = vld [vmem:[%s235 + $0x850] sm:$0xff]
      %v528 = vld [vmem:[%s235 + $0x858] sm:$0xff]
      %v529 = vld [vmem:[%s235 + $0x860] sm:$0xff]
      %v530 = vld [vmem:[%s235 + $0x868] sm:$0xff]
      %v531 = vld [vmem:[%s235 + $0x870] sm:$0xff]
      %v532 = vld [vmem:[%s235 + $0x878] sm:$0xff]
      %v533 = vld [vmem:[%s235 + $0x880] sm:$0xff]
      %v534 = vld [vmem:[%s235 + $0x888] sm:$0xff]
      %v535 = vld [vmem:[%s235 + $0x890] sm:$0xff]
      %v536 = vld [vmem:[%s235 + $0x898] sm:$0xff]
      %v537 = vld [vmem:[%s235 + $0x8a0] sm:$0xff]
      %v538 = vld [vmem:[%s235 + $0x8a8] sm:$0xff]
      %v539 = vld [vmem:[%s235 + $0x8b0] sm:$0xff]
      %v540 = vld [vmem:[%s235 + $0x8b8] sm:$0xff]
      %v541 = vld [vmem:[%s235 + $0x8c0] sm:$0xff]
      %v542 = vld [vmem:[%s235 + $0x8c8] sm:$0xff]
      %v543 = vld [vmem:[%s235 + $0x8d0] sm:$0xff]
      %v544 = vld [vmem:[%s235 + $0x8d8] sm:$0xff]
      %v545 = vld [vmem:[%s235 + $0x8e0] sm:$0xff]
      %v546 = vld [vmem:[%s235 + $0x8e8] sm:$0xff]
      %v547 = vld [vmem:[%s235 + $0x8f0] sm:$0xff]
      %v548 = vld [vmem:[%s235 + $0x8f8] sm:$0xff]
      %v549 = vld [vmem:[%s235 + $0x900] sm:$0xff]
      %v550 = vld [vmem:[%s235 + $0x908] sm:$0xff]
      %v551 = vld [vmem:[%s235 + $0x910] sm:$0xff]
      %v552 = vld [vmem:[%s235 + $0x918] sm:$0xff]
      %v553 = vld [vmem:[%s235 + $0x920] sm:$0xff]
      %v554 = vld [vmem:[%s235 + $0x928] sm:$0xff]
      %v555 = vld [vmem:[%s235 + $0x930] sm:$0xff]
      %v556 = vld [vmem:[%s235 + $0x938] sm:$0xff]
      %v557 = vld [vmem:[%s235 + $0x940] sm:$0xff]
      %v558 = vld [vmem:[%s235 + $0x948] sm:$0xff]
      %v559 = vld [vmem:[%s235 + $0x950] sm:$0xff]
      %v560 = vld [vmem:[%s235 + $0x958] sm:$0xff]
      %v561 = vld [vmem:[%s235 + $0x960] sm:$0xff]
      %v562 = vld [vmem:[%s235 + $0x968] sm:$0xff]
      %v563 = vld [vmem:[%s235 + $0x970] sm:$0xff]
      %v564 = vld [vmem:[%s235 + $0x978] sm:$0xff]
      %v565 = vld [vmem:[%s235 + $0x980] sm:$0xff]
      %v566 = vld [vmem:[%s235 + $0x988] sm:$0xff]
      %v567 = vld [vmem:[%s235 + $0x990] sm:$0xff]
      %v568 = vld [vmem:[%s235 + $0x998] sm:$0xff]
      %v569 = vld [vmem:[%s235 + $0x9a0] sm:$0xff]
      %v570 = vld [vmem:[%s235 + $0x9a8] sm:$0xff]
      %v571 = vld [vmem:[%s235 + $0x9b0] sm:$0xff]
      %v572 = vld [vmem:[%s235 + $0x9b8] sm:$0xff]
      %v573 = vld [vmem:[%s235 + $0x9c0] sm:$0xff]
      %v574 = vld [vmem:[%s235 + $0x9c8] sm:$0xff]
      %v575 = vld [vmem:[%s235 + $0x9d0] sm:$0xff]
      %v576 = vld [vmem:[%s235 + $0x9d8] sm:$0xff]
      %v577 = vld [vmem:[%s235 + $0x9e0] sm:$0xff]
      %v578 = vld [vmem:[%s235 + $0x9e8] sm:$0xff]
      %v579 = vld [vmem:[%s235 + $0x9f0] sm:$0xff]
      %v580 = vld [vmem:[%s235 + $0x9f8] sm:$0xff]
      %v581 = vld [vmem:[%s235 + $0xa00] sm:$0xff]
      %v582 = vld [vmem:[%s235 + $0xa08] sm:$0xff]
      %v583 = vld [vmem:[%s235 + $0xa10] sm:$0xff]
      %v584 = vld [vmem:[%s235 + $0xa18] sm:$0xff]
      %v585 = vld [vmem:[%s235 + $0xa20] sm:$0xff]
      %v586 = vld [vmem:[%s235 + $0xa28] sm:$0xff]
      %v587 = vld [vmem:[%s235 + $0xa30] sm:$0xff]
      %v588 = vld [vmem:[%s235 + $0xa38] sm:$0xff]
      %v589 = vld [vmem:[%s235 + $0xa40] sm:$0xff]
      %v590 = vld [vmem:[%s235 + $0xa48] sm:$0xff]
      %v591 = vld [vmem:[%s235 + $0xa50] sm:$0xff]
      %v592 = vld [vmem:[%s235 + $0xa58] sm:$0xff]
      %v593 = vld [vmem:[%s235 + $0xa60] sm:$0xff]
      %v594 = vld [vmem:[%s235 + $0xa68] sm:$0xff]
      %v595 = vld [vmem:[%s235 + $0xa70] sm:$0xff]
      %v596 = vld [vmem:[%s235 + $0xa78] sm:$0xff]
      %v597 = vld [vmem:[%s235 + $0xa80] sm:$0xff]
      %v598 = vld [vmem:[%s235 + $0xa88] sm:$0xff]
      %v599 = vld [vmem:[%s235 + $0xa90] sm:$0xff]
      %v600 = vld [vmem:[%s235 + $0xa98] sm:$0xff]
      %v601 = vld [vmem:[%s235 + $0xaa0] sm:$0xff]
      %v602 = vld [vmem:[%s235 + $0xaa8] sm:$0xff]
      %v603 = vld [vmem:[%s235 + $0xab0] sm:$0xff]
      %v604 = vld [vmem:[%s235 + $0xab8] sm:$0xff]
      %v605 = vld [vmem:[%s235 + $0xac0] sm:$0xff]
      %v606 = vld [vmem:[%s235 + $0xac8] sm:$0xff]
      %v607 = vld [vmem:[%s235 + $0xad0] sm:$0xff]
      %v608 = vld [vmem:[%s235 + $0xad8] sm:$0xff]
      %v609 = vld [vmem:[%s235 + $0xae0] sm:$0xff]
      %v610 = vld [vmem:[%s235 + $0xae8] sm:$0xff]
      %v611 = vld [vmem:[%s235 + $0xaf0] sm:$0xff]
      %v612 = vld [vmem:[%s235 + $0xaf8] sm:$0xff]
      %v613 = vld [vmem:[%s235 + $0xb00] sm:$0xff]
      %v614 = vld [vmem:[%s235 + $0xb08] sm:$0xff]
      %v615 = vld [vmem:[%s235 + $0xb10] sm:$0xff]
      %v616 = vld [vmem:[%s235 + $0xb18] sm:$0xff]
      %v617 = vld [vmem:[%s235 + $0xb20] sm:$0xff]
      %v618 = vld [vmem:[%s235 + $0xb28] sm:$0xff]
      %v619 = vld [vmem:[%s235 + $0xb30] sm:$0xff]
      %v620 = vld [vmem:[%s235 + $0xb38] sm:$0xff]
      %v621 = vld [vmem:[%s235 + $0xb40] sm:$0xff]
      %v622 = vld [vmem:[%s235 + $0xb48] sm:$0xff]
      %v623 = vld [vmem:[%s235 + $0xb50] sm:$0xff]
      %v624 = vld [vmem:[%s235 + $0xb58] sm:$0xff]
      %v625 = vld [vmem:[%s235 + $0xb60] sm:$0xff]
      %v626 = vld [vmem:[%s235 + $0xb68] sm:$0xff]
      %v627 = vld [vmem:[%s235 + $0xb70] sm:$0xff]
      %v628 = vld [vmem:[%s235 + $0xb78] sm:$0xff]
      %v629 = vld [vmem:[%s235 + $0xb80] sm:$0xff]
      %v630 = vld [vmem:[%s235 + $0xb88] sm:$0xff]
      %v631 = vld [vmem:[%s235 + $0xb90] sm:$0xff]
      %v632 = vld [vmem:[%s235 + $0xb98] sm:$0xff]
      %v633 = vld [vmem:[%s235 + $0xba0] sm:$0xff]
      %v634 = vld [vmem:[%s235 + $0xba8] sm:$0xff]
      %v635 = vld [vmem:[%s235 + $0xbb0] sm:$0xff]
      %v636 = vld [vmem:[%s235 + $0xbb8] sm:$0xff]
      %v637 = vld [vmem:[%s235 + $0xbc0] sm:$0xff]
      %v638 = vld [vmem:[%s235 + $0xbc8] sm:$0xff]
      %v639 = vld [vmem:[%s235 + $0xbd0] sm:$0xff]
      %v640 = vld [vmem:[%s235 + $0xbd8] sm:$0xff]
      %v641 = vld [vmem:[%s235 + $0xbe0] sm:$0xff]
      %v642 = vld [vmem:[%s235 + $0xbe8] sm:$0xff]
      %v643 = vld [vmem:[%s235 + $0xbf0] sm:$0xff]
      %v644 = vld [vmem:[%s235 + $0xbf8] sm:$0xff]
      %v645 = vld [vmem:[%s235 + $0xc00] sm:$0xff]
      %v646 = vld [vmem:[%s235 + $0xc08] sm:$0xff]
      %v647 = vld [vmem:[%s235 + $0xc10] sm:$0xff]
      %v648 = vld [vmem:[%s235 + $0xc18] sm:$0xff]
      %v649 = vld [vmem:[%s235 + $0xc20] sm:$0xff]
      %v650 = vld [vmem:[%s235 + $0xc28] sm:$0xff]
      %v651 = vld [vmem:[%s235 + $0xc30] sm:$0xff]
      %v652 = vld [vmem:[%s235 + $0xc38] sm:$0xff]
      %v653 = vld [vmem:[%s235 + $0xc40] sm:$0xff]
      %v654 = vld [vmem:[%s235 + $0xc48] sm:$0xff]
      %v655 = vld [vmem:[%s235 + $0xc50] sm:$0xff]
      %v656 = vld [vmem:[%s235 + $0xc58] sm:$0xff]
      %v657 = vld [vmem:[%s235 + $0xc60] sm:$0xff]
      %v658 = vld [vmem:[%s235 + $0xc68] sm:$0xff]
      %v659 = vld [vmem:[%s235 + $0xc70] sm:$0xff]
      %v660 = vld [vmem:[%s235 + $0xc78] sm:$0xff]
      %v661 = vld [vmem:[%s235 + $0xc80] sm:$0xff]
      %v662 = vld [vmem:[%s235 + $0xc88] sm:$0xff]
      %v663 = vld [vmem:[%s235 + $0xc90] sm:$0xff]
      %v664 = vld [vmem:[%s235 + $0xc98] sm:$0xff]
      %v665 = vld [vmem:[%s235 + $0xca0] sm:$0xff]
      %v666 = vld [vmem:[%s235 + $0xca8] sm:$0xff]
      %v667 = vld [vmem:[%s235 + $0xcb0] sm:$0xff]
      %v668 = vld [vmem:[%s235 + $0xcb8] sm:$0xff]
      %v669 = vld [vmem:[%s235 + $0xcc0] sm:$0xff]
      %v670 = vld [vmem:[%s235 + $0xcc8] sm:$0xff]
      %v671 = vld [vmem:[%s235 + $0xcd0] sm:$0xff]
      %v672 = vld [vmem:[%s235 + $0xcd8] sm:$0xff]
      %v673 = vld [vmem:[%s235 + $0xce0] sm:$0xff]
      %v674 = vld [vmem:[%s235 + $0xce8] sm:$0xff]
      %v675 = vld [vmem:[%s235 + $0xcf0] sm:$0xff]
      %v676 = vld [vmem:[%s235 + $0xcf8] sm:$0xff]
      %v677 = vld [vmem:[%s235 + $0xd00] sm:$0xff]
      %v678 = vld [vmem:[%s235 + $0xd08] sm:$0xff]
      %v679 = vld [vmem:[%s235 + $0xd10] sm:$0xff]
      %v680 = vld [vmem:[%s235 + $0xd18] sm:$0xff]
      %v681 = vld [vmem:[%s235 + $0xd20] sm:$0xff]
      %v682 = vld [vmem:[%s235 + $0xd28] sm:$0xff]
      %v683 = vld [vmem:[%s235 + $0xd30] sm:$0xff]
      %v684 = vld [vmem:[%s235 + $0xd38] sm:$0xff]
      %v685 = vld [vmem:[%s235 + $0xd40] sm:$0xff]
      %v686 = vld [vmem:[%s235 + $0xd48] sm:$0xff]
      %v687 = vld [vmem:[%s235 + $0xd50] sm:$0xff]
      %v688 = vld [vmem:[%s235 + $0xd58] sm:$0xff]
      %v689 = vld [vmem:[%s235 + $0xd60] sm:$0xff]
      %v690 = vld [vmem:[%s235 + $0xd68] sm:$0xff]
      %v691 = vld [vmem:[%s235 + $0xd70] sm:$0xff]
      %v692 = vld [vmem:[%s235 + $0xd78] sm:$0xff]
      %v693 = vld [vmem:[%s235 + $0xd80] sm:$0xff]
      %v694 = vld [vmem:[%s235 + $0xd88] sm:$0xff]
      %v695 = vld [vmem:[%s235 + $0xd90] sm:$0xff]
      %v696 = vld [vmem:[%s235 + $0xd98] sm:$0xff]
      %v697 = vld [vmem:[%s235 + $0xda0] sm:$0xff]
      %v698 = vld [vmem:[%s235 + $0xda8] sm:$0xff]
      %v699 = vld [vmem:[%s235 + $0xdb0] sm:$0xff]
      %v700 = vld [vmem:[%s235 + $0xdb8] sm:$0xff]
      %v701 = vld [vmem:[%s235 + $0xdc0] sm:$0xff]
      %v702 = vld [vmem:[%s235 + $0xdc8] sm:$0xff]
      %v703 = vld [vmem:[%s235 + $0xdd0] sm:$0xff]
      %v704 = vld [vmem:[%s235 + $0xdd8] sm:$0xff]
      %v705 = vld [vmem:[%s235 + $0xde0] sm:$0xff]
      %v706 = vld [vmem:[%s235 + $0xde8] sm:$0xff]
      %v707 = vld [vmem:[%s235 + $0xdf0] sm:$0xff]
      %v708 = vld [vmem:[%s235 + $0xdf8] sm:$0xff]
      %v709 = vld [vmem:[%s235 + $0xe00] sm:$0xff]
      %v710 = vld [vmem:[%s235 + $0xe08] sm:$0xff]
      %v711 = vld [vmem:[%s235 + $0xe10] sm:$0xff]
      %v712 = vld [vmem:[%s235 + $0xe18] sm:$0xff]
      %v713 = vld [vmem:[%s235 + $0xe20] sm:$0xff]
      %v714 = vld [vmem:[%s235 + $0xe28] sm:$0xff]
      %v715 = vld [vmem:[%s235 + $0xe30] sm:$0xff]
      %v716 = vld [vmem:[%s235 + $0xe38] sm:$0xff]
      %v717 = vld [vmem:[%s235 + $0xe40] sm:$0xff]
      %v718 = vld [vmem:[%s235 + $0xe48] sm:$0xff]
      %v719 = vld [vmem:[%s235 + $0xe50] sm:$0xff]
      %v720 = vld [vmem:[%s235 + $0xe58] sm:$0xff]
      %v721 = vld [vmem:[%s235 + $0xe60] sm:$0xff]
      %v722 = vld [vmem:[%s235 + $0xe68] sm:$0xff]
      %v723 = vld [vmem:[%s235 + $0xe70] sm:$0xff]
      %v724 = vld [vmem:[%s235 + $0xe78] sm:$0xff]
      %v725 = vld [vmem:[%s235 + $0xe80] sm:$0xff]
      %v726 = vld [vmem:[%s235 + $0xe88] sm:$0xff]
      %v727 = vld [vmem:[%s235 + $0xe90] sm:$0xff]
      %v728 = vld [vmem:[%s235 + $0xe98] sm:$0xff]
      %v729 = vld [vmem:[%s235 + $0xea0] sm:$0xff]
      %v730 = vld [vmem:[%s235 + $0xea8] sm:$0xff]
      %v731 = vld [vmem:[%s235 + $0xeb0] sm:$0xff]
      %v732 = vld [vmem:[%s235 + $0xeb8] sm:$0xff]
      %v733 = vld [vmem:[%s235 + $0xec0] sm:$0xff]
      %v734 = vld [vmem:[%s235 + $0xec8] sm:$0xff]
      %v735 = vld [vmem:[%s235 + $0xed0] sm:$0xff]
      %v736 = vld [vmem:[%s235 + $0xed8] sm:$0xff]
      %v737 = vld [vmem:[%s235 + $0xee0] sm:$0xff]
      %v738 = vld [vmem:[%s235 + $0xee8] sm:$0xff]
      %v739 = vld [vmem:[%s235 + $0xef0] sm:$0xff]
      %v740 = vld [vmem:[%s235 + $0xef8] sm:$0xff]
      %v741 = vld [vmem:[%s235 + $0xf00] sm:$0xff]
      %v742 = vld [vmem:[%s235 + $0xf08] sm:$0xff]
      %v743 = vld [vmem:[%s235 + $0xf10] sm:$0xff]
      %v744 = vld [vmem:[%s235 + $0xf18] sm:$0xff]
      %v745 = vld [vmem:[%s235 + $0xf20] sm:$0xff]
      %v746 = vld [vmem:[%s235 + $0xf28] sm:$0xff]
      %v747 = vld [vmem:[%s235 + $0xf30] sm:$0xff]
      %v748 = vld [vmem:[%s235 + $0xf38] sm:$0xff]
      %v749 = vld [vmem:[%s235 + $0xf40] sm:$0xff]
      %v750 = vld [vmem:[%s235 + $0xf48] sm:$0xff]
      %v751 = vld [vmem:[%s235 + $0xf50] sm:$0xff]
      %v752 = vld [vmem:[%s235 + $0xf58] sm:$0xff]
      %v753 = vld [vmem:[%s235 + $0xf60] sm:$0xff]
      %v754 = vld [vmem:[%s235 + $0xf68] sm:$0xff]
      %v755 = vld [vmem:[%s235 + $0xf70] sm:$0xff]
      %v756 = vld [vmem:[%s235 + $0xf78] sm:$0xff]
      %v757 = vld [vmem:[%s235 + $0xf80] sm:$0xff]
      %v758 = vld [vmem:[%s235 + $0xf88] sm:$0xff]
      %v759 = vld [vmem:[%s235 + $0xf90] sm:$0xff]
      %v760 = vld [vmem:[%s235 + $0xf98] sm:$0xff]
      %v761 = vld [vmem:[%s235 + $0xfa0] sm:$0xff]
      %v762 = vld [vmem:[%s235 + $0xfa8] sm:$0xff]
      %v763 = vld [vmem:[%s235 + $0xfb0] sm:$0xff]
      %v764 = vld [vmem:[%s235 + $0xfb8] sm:$0xff]
      %v765 = vld [vmem:[%s235 + $0xfc0] sm:$0xff]
      %v766 = vld [vmem:[%s235 + $0xfc8] sm:$0xff]
      %v767 = vld [vmem:[%s235 + $0xfd0] sm:$0xff]
      %v768 = vld [vmem:[%s235 + $0xfd8] sm:$0xff]
      %v769 = vld [vmem:[%s235 + $0xfe0] sm:$0xff]
      %v770 = vld [vmem:[%s235 + $0xfe8] sm:$0xff]
      %v771 = vld [vmem:[%s235 + $0xff0] sm:$0xff]
      %v772 = vld [vmem:[%s235 + $0xff8] sm:$0xff]
      %v773 = vld [vmem:[%s235 + $0x1000] sm:$0xff]
      %v774 = vld [vmem:[%s235 + $0x1008] sm:$0xff]
      %v775 = vld [vmem:[%s235 + $0x1010] sm:$0xff]
      %v776 = vld [vmem:[%s235 + $0x1018] sm:$0xff]
      %v777 = vld [vmem:[%s235 + $0x1020] sm:$0xff]
      %v778 = vld [vmem:[%s235 + $0x1028] sm:$0xff]
      %v779 = vld [vmem:[%s235 + $0x1030] sm:$0xff]
      %v780 = vld [vmem:[%s235 + $0x1038] sm:$0xff]
      %v781 = vld [vmem:[%s235 + $0x1040] sm:$0xff]
      %v782 = vld [vmem:[%s235 + $0x1048] sm:$0xff]
      %v783 = vld [vmem:[%s235 + $0x1050] sm:$0xff]
      %v784 = vld [vmem:[%s235 + $0x1058] sm:$0xff]
      %v785 = vld [vmem:[%s235 + $0x1060] sm:$0xff]
      %v786 = vld [vmem:[%s235 + $0x1068] sm:$0xff]
      %v787 = vld [vmem:[%s235 + $0x1070] sm:$0xff]
      %v788 = vld [vmem:[%s235 + $0x1078] sm:$0xff]
      %v789 = vld [vmem:[%s235 + $0x1080] sm:$0xff]
      %v790 = vld [vmem:[%s235 + $0x1088] sm:$0xff]
      %v791 = vld [vmem:[%s235 + $0x1090] sm:$0xff]
      %v792 = vld [vmem:[%s235 + $0x1098] sm:$0xff]
      %v793 = vld [vmem:[%s235 + $0x10a0] sm:$0xff]
      %v794 = vld [vmem:[%s235 + $0x10a8] sm:$0xff]
      %v795 = vld [vmem:[%s235 + $0x10b0] sm:$0xff]
      %v796 = vld [vmem:[%s235 + $0x10b8] sm:$0xff]
      %v797 = vld [vmem:[%s235 + $0x10c0] sm:$0xff]
      %v798 = vld [vmem:[%s235 + $0x10c8] sm:$0xff]
      %v799 = vld [vmem:[%s235 + $0x10d0] sm:$0xff]
      %v800 = vld [vmem:[%s235 + $0x10d8] sm:$0xff]
      %v801 = vld [vmem:[%s235 + $0x10e0] sm:$0xff]
      %v802 = vld [vmem:[%s235 + $0x10e8] sm:$0xff]
      %v803 = vld [vmem:[%s235 + $0x10f0] sm:$0xff]
      %v804 = vld [vmem:[%s235 + $0x10f8] sm:$0xff]
      %v805 = vld [vmem:[%s235 + $0x1100] sm:$0xff]
      %v806 = vld [vmem:[%s235 + $0x1108] sm:$0xff]
      %v807 = vld [vmem:[%s235 + $0x1110] sm:$0xff]
      %v808 = vld [vmem:[%s235 + $0x1118] sm:$0xff]
      %v809 = vld [vmem:[%s235 + $0x1120] sm:$0xff]
      %v810 = vld [vmem:[%s235 + $0x1128] sm:$0xff]
      %v811 = vld [vmem:[%s235 + $0x1130] sm:$0xff]
      %v812 = vld [vmem:[%s235 + $0x1138] sm:$0xff]
      %v813 = vld [vmem:[%s235 + $0x1140] sm:$0xff]
      %v814 = vld [vmem:[%s235 + $0x1148] sm:$0xff]
      %v815 = vld [vmem:[%s235 + $0x1150] sm:$0xff]
      %v816 = vld [vmem:[%s235 + $0x1158] sm:$0xff]
      %v817 = vld [vmem:[%s235 + $0x1160] sm:$0xff]
      %v818 = vld [vmem:[%s235 + $0x1168] sm:$0xff]
      %v819 = vld [vmem:[%s235 + $0x1170] sm:$0xff]
      %v820 = vld [vmem:[%s235 + $0x1178] sm:$0xff]
      %v821 = vld [vmem:[%s235 + $0x1180] sm:$0xff]
      %v822 = vld [vmem:[%s235 + $0x1188] sm:$0xff]
      %v823 = vld [vmem:[%s235 + $0x1190] sm:$0xff]
      %v824 = vld [vmem:[%s235 + $0x1198] sm:$0xff]
      %v825 = vld [vmem:[%s235 + $0x11a0] sm:$0xff]
      %v826 = vld [vmem:[%s235 + $0x11a8] sm:$0xff]
      %v827 = vld [vmem:[%s235 + $0x11b0] sm:$0xff]
      %v828 = vld [vmem:[%s235 + $0x11b8] sm:$0xff]
      %v829 = vld [vmem:[%s235 + $0x11c0] sm:$0xff]
      %v830 = vld [vmem:[%s235 + $0x11c8] sm:$0xff]
      %v831 = vld [vmem:[%s235 + $0x11d0] sm:$0xff]
      %v832 = vld [vmem:[%s235 + $0x11d8] sm:$0xff]
      %v833 = vld [vmem:[%s235 + $0x11e0] sm:$0xff]
      %v834 = vld [vmem:[%s235 + $0x11e8] sm:$0xff]
      %v835 = vld [vmem:[%s235 + $0x11f0] sm:$0xff]
      %v836 = vld [vmem:[%s235 + $0x11f8] sm:$0xff]
      %v837 = vld [vmem:[%s235 + $0x1200] sm:$0xff]
      %v838 = vld [vmem:[%s235 + $0x1208] sm:$0xff]
      %v839 = vld [vmem:[%s235 + $0x1210] sm:$0xff]
      %v840 = vld [vmem:[%s235 + $0x1218] sm:$0xff]
      %v841 = vld [vmem:[%s235 + $0x1220] sm:$0xff]
      %v842 = vld [vmem:[%s235 + $0x1228] sm:$0xff]
      %v843 = vld [vmem:[%s235 + $0x1230] sm:$0xff]
      %v844 = vld [vmem:[%s235 + $0x1238] sm:$0xff]
      %v845 = vld [vmem:[%s235 + $0x1240] sm:$0xff]
      %v846 = vld [vmem:[%s235 + $0x1248] sm:$0xff]
      %v847 = vld [vmem:[%s235 + $0x1250] sm:$0xff]
      %v848 = vld [vmem:[%s235 + $0x1258] sm:$0xff]
      %v849 = vld [vmem:[%s235 + $0x1260] sm:$0xff]
      %v850 = vld [vmem:[%s235 + $0x1268] sm:$0xff]
      %v851 = vld [vmem:[%s235 + $0x1270] sm:$0xff]
      %v852 = vld [vmem:[%s235 + $0x1278] sm:$0xff]
      %v853 = vld [vmem:[%s235 + $0x1280] sm:$0xff]
      %v854 = vld [vmem:[%s235 + $0x1288] sm:$0xff]
      %v855 = vld [vmem:[%s235 + $0x1290] sm:$0xff]
      %v856 = vld [vmem:[%s235 + $0x1298] sm:$0xff]
      %v857 = vld [vmem:[%s235 + $0x12a0] sm:$0xff]
      %v858 = vld [vmem:[%s235 + $0x12a8] sm:$0xff]
      %v859 = vld [vmem:[%s235 + $0x12b0] sm:$0xff]
      %v860 = vld [vmem:[%s235 + $0x12b8] sm:$0xff]
      %v861 = vld [vmem:[%s235 + $0x12c0] sm:$0xff]
      %v862 = vld [vmem:[%s235 + $0x12c8] sm:$0xff]
      %v863 = vld [vmem:[%s235 + $0x12d0] sm:$0xff]
      %v864 = vld [vmem:[%s235 + $0x12d8] sm:$0xff]
      %v865 = vld [vmem:[%s235 + $0x12e0] sm:$0xff]
      %v866 = vld [vmem:[%s235 + $0x12e8] sm:$0xff]
      %v867 = vld [vmem:[%s235 + $0x12f0] sm:$0xff]
      %v868 = vld [vmem:[%s235 + $0x12f8] sm:$0xff]
      %v869 = vld [vmem:[%s235 + $0x1300] sm:$0xff]
      %v870 = vld [vmem:[%s235 + $0x1308] sm:$0xff]
      %v871 = vld [vmem:[%s235 + $0x1310] sm:$0xff]
      %v872 = vld [vmem:[%s235 + $0x1318] sm:$0xff]
      %v873 = vld [vmem:[%s235 + $0x1320] sm:$0xff]
      %v874 = vld [vmem:[%s235 + $0x1328] sm:$0xff]
      %v875 = vld [vmem:[%s235 + $0x1330] sm:$0xff]
      %v876 = vld [vmem:[%s235 + $0x1338] sm:$0xff]
      %v877 = vld [vmem:[%s235 + $0x1340] sm:$0xff]
      %v878 = vld [vmem:[%s235 + $0x1348] sm:$0xff]
      %v879 = vld [vmem:[%s235 + $0x1350] sm:$0xff]
      %v880 = vld [vmem:[%s235 + $0x1358] sm:$0xff]
      %v881 = vld [vmem:[%s235 + $0x1360] sm:$0xff]
      %v882 = vld [vmem:[%s235 + $0x1368] sm:$0xff]
      %v883 = vld [vmem:[%s235 + $0x1370] sm:$0xff]
      %v884 = vld [vmem:[%s235 + $0x1378] sm:$0xff]
      %v885 = vld [vmem:[%s235 + $0x1380] sm:$0xff]
      %v886 = vld [vmem:[%s235 + $0x1388] sm:$0xff]
      %v887 = vld [vmem:[%s235 + $0x1390] sm:$0xff]
      %v888 = vld [vmem:[%s235 + $0x1398] sm:$0xff]
      %v889 = vld [vmem:[%s235 + $0x13a0] sm:$0xff]
      %v890 = vld [vmem:[%s235 + $0x13a8] sm:$0xff]
      %v891 = vld [vmem:[%s235 + $0x13b0] sm:$0xff]
      %v892 = vld [vmem:[%s235 + $0x13b8] sm:$0xff]
      %v893 = vld [vmem:[%s235 + $0x13c0] sm:$0xff]
      %v894 = vld [vmem:[%s235 + $0x13c8] sm:$0xff]
      %v895 = vld [vmem:[%s235 + $0x13d0] sm:$0xff]
      %v896 = vld [vmem:[%s235 + $0x13d8] sm:$0xff]
      %v897 = vld [vmem:[%s235 + $0x13e0] sm:$0xff]
      %v898 = vld [vmem:[%s235 + $0x13e8] sm:$0xff]
      %v899 = vld [vmem:[%s235 + $0x13f0] sm:$0xff]
      %v900 = vld [vmem:[%s235 + $0x13f8] sm:$0xff]
      %v901 = vld [vmem:[%s235 + $0x1400] sm:$0xff]
      %v902 = vld [vmem:[%s235 + $0x1408] sm:$0xff]
      %v903 = vld [vmem:[%s235 + $0x1410] sm:$0xff]
      %v904 = vld [vmem:[%s235 + $0x1418] sm:$0xff]
      %v905 = vld [vmem:[%s235 + $0x1420] sm:$0xff]
      %v906 = vld [vmem:[%s235 + $0x1428] sm:$0xff]
      %v907 = vld [vmem:[%s235 + $0x1430] sm:$0xff]
      %v908 = vld [vmem:[%s235 + $0x1438] sm:$0xff]
      %v909 = vld [vmem:[%s235 + $0x1440] sm:$0xff]
      %v910 = vld [vmem:[%s235 + $0x1448] sm:$0xff]
      %v911 = vld [vmem:[%s235 + $0x1450] sm:$0xff]
      %v912 = vld [vmem:[%s235 + $0x1458] sm:$0xff]
      %v913 = vld [vmem:[%s235 + $0x1460] sm:$0xff]
      %v914 = vld [vmem:[%s235 + $0x1468] sm:$0xff]
      %v915 = vld [vmem:[%s235 + $0x1470] sm:$0xff]
      %v916 = vld [vmem:[%s235 + $0x1478] sm:$0xff]
      %v917 = vld [vmem:[%s235 + $0x1480] sm:$0xff]
      %v918 = vld [vmem:[%s235 + $0x1488] sm:$0xff]
      %v919 = vld [vmem:[%s235 + $0x1490] sm:$0xff]
      %v920 = vld [vmem:[%s235 + $0x1498] sm:$0xff]
      %v921 = vld [vmem:[%s235 + $0x14a0] sm:$0xff]
      %v922 = vld [vmem:[%s235 + $0x14a8] sm:$0xff]
      %v923 = vld [vmem:[%s235 + $0x14b0] sm:$0xff]
      %v924 = vld [vmem:[%s235 + $0x14b8] sm:$0xff]
      %v925 = vld [vmem:[%s235 + $0x14c0] sm:$0xff]
      %v926 = vld [vmem:[%s235 + $0x14c8] sm:$0xff]
      %v927 = vld [vmem:[%s235 + $0x14d0] sm:$0xff]
      %v928 = vld [vmem:[%s235 + $0x14d8] sm:$0xff]
      %v929 = vld [vmem:[%s235 + $0x14e0] sm:$0xff]
      %v930 = vld [vmem:[%s235 + $0x14e8] sm:$0xff]
      %v931 = vld [vmem:[%s235 + $0x14f0] sm:$0xff]
      %v932 = vld [vmem:[%s235 + $0x14f8] sm:$0xff]
      %v944 = vunpack.c.l.b16 %v250
      %v945 = vunpack.c.h.b16 %v250
      %v946 = vunpack.c.l.b16 %v251
      %v947 = vunpack.c.h.b16 %v251
      %v948 = vunpack.c.l.b16 %v252
      %v949 = vunpack.c.h.b16 %v252
      %v950 = vunpack.c.l.b16 %v253
      %v951 = vunpack.c.h.b16 %v253
      %v952 = vunpack.c.l.b16 %v254
      %v953 = vunpack.c.h.b16 %v254
      %v954 = vunpack.c.l.b16 %v255
      %v955 = vunpack.c.h.b16 %v255
      %v956 = vunpack.c.l.b16 %v256
      %v957 = vunpack.c.h.b16 %v256
      %v958 = vunpack.c.l.b16 %v257
      %v959 = vunpack.c.h.b16 %v257
      %v960 = vunpack.c.l.b16 %v258
      %v961 = vunpack.c.h.b16 %v258
      %v962 = vunpack.c.l.b16 %v259
      %v963 = vunpack.c.h.b16 %v259
      %v964 = vunpack.c.l.b16 %v260
      %v965 = vpack.c.b16 %v944, %v944
      %v966 = vpack.c.b16 %v945, %v945
      %v967 = vpack.c.b16 %v946, %v946
      %v968 = vpack.c.b16 %v947, %v947
      %v969 = vpack.c.b16 %v948, %v948
      %v970 = vpack.c.b16 %v949, %v949
      %v971 = vpack.c.b16 %v950, %v950
      %v972 = vpack.c.b16 %v951, %v951
      %v973 = vpack.c.b16 %v952, %v952
      %v974 = vpack.c.b16 %v953, %v953
      %v975 = vpack.c.b16 %v954, %v954
      %v976 = vpack.c.b16 %v955, %v955
      %v977 = vpack.c.b16 %v956, %v956
      %v978 = vpack.c.b16 %v957, %v957
      %v979 = vpack.c.b16 %v958, %v958
      %v980 = vpack.c.b16 %v959, %v959
      %v981 = vpack.c.b16 %v960, %v960
      %v982 = vpack.c.b16 %v961, %v961
      %v983 = vpack.c.b16 %v962, %v962
      %v984 = vpack.c.b16 %v963, %v963
      %v985 = vpack.c.b16 %v964, %v964
      %v1679 = vunpack.c.l.b16 %v261
      %v1680 = vunpack.c.h.b16 %v261
      %v1681 = vunpack.c.l.b16 %v262
      %v1682 = vunpack.c.h.b16 %v262
      %v1683 = vunpack.c.l.b16 %v263
      %v1684 = vunpack.c.h.b16 %v263
      %v1685 = vunpack.c.l.b16 %v264
      %v1686 = vunpack.c.h.b16 %v264
      %v1687 = vunpack.c.l.b16 %v265
      %v1688 = vunpack.c.h.b16 %v265
      %v1689 = vunpack.c.l.b16 %v266
      %v1690 = vunpack.c.h.b16 %v266
      %v1691 = vunpack.c.l.b16 %v267
      %v1692 = vunpack.c.h.b16 %v267
      %v1693 = vunpack.c.l.b16 %v268
      %v1694 = vunpack.c.h.b16 %v268
      %v1695 = vunpack.c.l.b16 %v269
      %v1696 = vunpack.c.h.b16 %v269
      %v1697 = vunpack.c.l.b16 %v270
      %v1698 = vunpack.c.h.b16 %v270
      %v1699 = vunpack.c.l.b16 %v271
      %v1700 = vunpack.c.h.b16 %v271
      %v1701 = vunpack.c.l.b16 %v272
      %v1702 = vunpack.c.h.b16 %v272
      %v1703 = vunpack.c.l.b16 %v273
      %v1704 = vunpack.c.h.b16 %v273
      %v1705 = vunpack.c.l.b16 %v274
      %v1706 = vunpack.c.h.b16 %v274
      %v1707 = vunpack.c.l.b16 %v275
      %v1708 = vunpack.c.h.b16 %v275
      %v1709 = vunpack.c.l.b16 %v276
      %v1710 = vunpack.c.h.b16 %v276
      %v1711 = vunpack.c.l.b16 %v277
      %v1712 = vunpack.c.h.b16 %v277
      %v1713 = vunpack.c.l.b16 %v278
      %v1714 = vunpack.c.h.b16 %v278
      %v1715 = vunpack.c.l.b16 %v279
      %v1716 = vunpack.c.h.b16 %v279
      %v1717 = vunpack.c.l.b16 %v280
      %v1718 = vunpack.c.h.b16 %v280
      %v1719 = vunpack.c.l.b16 %v281
      %v1720 = vunpack.c.h.b16 %v281
      %v1721 = vunpack.c.l.b16 %v282
      %v1722 = vunpack.c.h.b16 %v282
      %v1723 = vunpack.c.l.b16 %v283
      %v1724 = vunpack.c.h.b16 %v283
      %v1725 = vunpack.c.l.b16 %v284
      %v1726 = vunpack.c.h.b16 %v284
      %v1727 = vunpack.c.l.b16 %v285
      %v1728 = vunpack.c.h.b16 %v285
      %v1729 = vunpack.c.l.b16 %v286
      %v1730 = vunpack.c.h.b16 %v286
      %v1731 = vunpack.c.l.b16 %v287
      %v1732 = vunpack.c.h.b16 %v287
      %v1733 = vunpack.c.l.b16 %v288
      %v1734 = vunpack.c.h.b16 %v288
      %v1735 = vunpack.c.l.b16 %v289
      %v1736 = vunpack.c.h.b16 %v289
      %v1737 = vunpack.c.l.b16 %v290
      %v1738 = vunpack.c.h.b16 %v290
      %v1739 = vunpack.c.l.b16 %v291
      %v1740 = vunpack.c.h.b16 %v291
      %v1741 = vunpack.c.l.b16 %v292
      %v1742 = vunpack.c.h.b16 %v292
      %v1743 = vunpack.c.l.b16 %v293
      %v1744 = vunpack.c.h.b16 %v293
      %v1745 = vunpack.c.l.b16 %v294
      %v1746 = vunpack.c.h.b16 %v294
      %v1747 = vunpack.c.l.b16 %v295
      %v1748 = vunpack.c.h.b16 %v295
      %v1749 = vunpack.c.l.b16 %v296
      %v1750 = vunpack.c.h.b16 %v296
      %v1751 = vunpack.c.l.b16 %v297
      %v1752 = vunpack.c.h.b16 %v297
      %v1753 = vunpack.c.l.b16 %v298
      %v1754 = vunpack.c.h.b16 %v298
      %v1755 = vunpack.c.l.b16 %v299
      %v1756 = vunpack.c.h.b16 %v299
      %v1757 = vunpack.c.l.b16 %v300
      %v1758 = vunpack.c.h.b16 %v300
      %v1759 = vunpack.c.l.b16 %v301
      %v1760 = vunpack.c.h.b16 %v301
      %v1761 = vunpack.c.l.b16 %v302
      %v1762 = vunpack.c.h.b16 %v302
      %v1763 = vunpack.c.l.b16 %v303
      %v1764 = vunpack.c.h.b16 %v303
      %v1765 = vunpack.c.l.b16 %v304
      %v1766 = vunpack.c.h.b16 %v304
      %v1767 = vunpack.c.l.b16 %v305
      %v1768 = vunpack.c.h.b16 %v305
      %v1769 = vunpack.c.l.b16 %v306
      %v1770 = vunpack.c.h.b16 %v306
      %v1771 = vunpack.c.l.b16 %v307
      %v1772 = vunpack.c.h.b16 %v307
      %v1773 = vunpack.c.l.b16 %v308
      %v1774 = vunpack.c.h.b16 %v308
      %v1775 = vunpack.c.l.b16 %v309
      %v1776 = vunpack.c.h.b16 %v309
      %v1777 = vunpack.c.l.b16 %v310
      %v1778 = vunpack.c.h.b16 %v310
      %v1779 = vunpack.c.l.b16 %v311
      %v1780 = vunpack.c.h.b16 %v311
      %v1781 = vunpack.c.l.b16 %v312
      %v1782 = vunpack.c.h.b16 %v312
      %v1783 = vunpack.c.l.b16 %v313
      %v1784 = vunpack.c.h.b16 %v313
      %v1785 = vunpack.c.l.b16 %v314
      %v1786 = vunpack.c.h.b16 %v314
      %v1787 = vunpack.c.l.b16 %v315
      %v1788 = vunpack.c.h.b16 %v315
      %v1789 = vunpack.c.l.b16 %v316
      %v1790 = vunpack.c.h.b16 %v316
      %v1791 = vunpack.c.l.b16 %v317
      %v1792 = vunpack.c.h.b16 %v317
      %v1793 = vunpack.c.l.b16 %v318
      %v1794 = vunpack.c.h.b16 %v318
      %v1795 = vunpack.c.l.b16 %v319
      %v1796 = vunpack.c.h.b16 %v319
      %v1797 = vunpack.c.l.b16 %v320
      %v1798 = vunpack.c.h.b16 %v320
      %v1799 = vunpack.c.l.b16 %v321
      %v1800 = vunpack.c.h.b16 %v321
      %v1801 = vunpack.c.l.b16 %v322
      %v1802 = vunpack.c.h.b16 %v322
      %v1803 = vunpack.c.l.b16 %v323
      %v1804 = vunpack.c.h.b16 %v323
      %v1805 = vunpack.c.l.b16 %v324
      %v1806 = vunpack.c.h.b16 %v324
      %v1807 = vunpack.c.l.b16 %v325
      %v1808 = vunpack.c.h.b16 %v325
      %v1809 = vunpack.c.l.b16 %v326
      %v1810 = vunpack.c.h.b16 %v326
      %v1811 = vunpack.c.l.b16 %v327
      %v1812 = vunpack.c.h.b16 %v327
      %v1813 = vunpack.c.l.b16 %v328
      %v1814 = vunpack.c.h.b16 %v328
      %v1815 = vunpack.c.l.b16 %v329
      %v1816 = vunpack.c.h.b16 %v329
      %v1817 = vunpack.c.l.b16 %v330
      %v1818 = vunpack.c.h.b16 %v330
      %v1819 = vunpack.c.l.b16 %v331
      %v1820 = vunpack.c.h.b16 %v331
      %v1821 = vunpack.c.l.b16 %v332
      %v1822 = vunpack.c.h.b16 %v332
      %v1823 = vunpack.c.l.b16 %v333
      %v1824 = vunpack.c.h.b16 %v333
      %v1825 = vunpack.c.l.b16 %v334
      %v1826 = vunpack.c.h.b16 %v334
      %v1827 = vunpack.c.l.b16 %v335
      %v1828 = vunpack.c.h.b16 %v335
      %v1829 = vunpack.c.l.b16 %v336
      %v1830 = vunpack.c.h.b16 %v336
      %v1831 = vunpack.c.l.b16 %v337
      %v1832 = vunpack.c.h.b16 %v337
      %v1833 = vunpack.c.l.b16 %v338
      %v1834 = vunpack.c.h.b16 %v338
      %v1835 = vunpack.c.l.b16 %v339
      %v1836 = vunpack.c.h.b16 %v339
      %v1837 = vunpack.c.l.b16 %v340
      %v1838 = vunpack.c.h.b16 %v340
      %v1839 = vunpack.c.l.b16 %v341
      %v1840 = vunpack.c.h.b16 %v341
      %v1841 = vunpack.c.l.b16 %v342
      %v1842 = vunpack.c.h.b16 %v342
      %v1843 = vunpack.c.l.b16 %v343
      %v1844 = vunpack.c.h.b16 %v343
      %v1845 = vunpack.c.l.b16 %v344
      %v1846 = vunpack.c.h.b16 %v344
      %v1847 = vunpack.c.l.b16 %v345
      %v1848 = vunpack.c.h.b16 %v345
      %v1849 = vunpack.c.l.b16 %v346
      %v1850 = vunpack.c.h.b16 %v346
      %v1851 = vunpack.c.l.b16 %v347
      %v1852 = vunpack.c.h.b16 %v347
      %v1853 = vunpack.c.l.b16 %v348
      %v1854 = vunpack.c.h.b16 %v348
      %v1855 = vunpack.c.l.b16 %v349
      %v1856 = vunpack.c.h.b16 %v349
      %v1857 = vunpack.c.l.b16 %v350
      %v1858 = vunpack.c.h.b16 %v350
      %v1859 = vunpack.c.l.b16 %v351
      %v1860 = vunpack.c.h.b16 %v351
      %v1861 = vunpack.c.l.b16 %v352
      %v1862 = vunpack.c.h.b16 %v352
      %v1863 = vunpack.c.l.b16 %v353
      %v1864 = vunpack.c.h.b16 %v353
      %v1865 = vunpack.c.l.b16 %v354
      %v1866 = vunpack.c.h.b16 %v354
      %v1867 = vunpack.c.l.b16 %v355
      %v1868 = vunpack.c.h.b16 %v355
      %v1869 = vunpack.c.l.b16 %v356
      %v1870 = vunpack.c.h.b16 %v356
      %v1871 = vunpack.c.l.b16 %v357
      %v1872 = vunpack.c.h.b16 %v357
      %v1873 = vunpack.c.l.b16 %v358
      %v1874 = vunpack.c.h.b16 %v358
      %v1875 = vunpack.c.l.b16 %v359
      %v1876 = vunpack.c.h.b16 %v359
      %v1877 = vunpack.c.l.b16 %v360
      %v1878 = vunpack.c.h.b16 %v360
      %v1879 = vunpack.c.l.b16 %v361
      %v1880 = vunpack.c.h.b16 %v361
      %v1881 = vunpack.c.l.b16 %v362
      %v1882 = vunpack.c.h.b16 %v362
      %v1883 = vunpack.c.l.b16 %v363
      %v1884 = vunpack.c.h.b16 %v363
      %v1885 = vunpack.c.l.b16 %v364
      %v1886 = vunpack.c.h.b16 %v364
      %v1887 = vunpack.c.l.b16 %v365
      %v1888 = vunpack.c.h.b16 %v365
      %v1889 = vunpack.c.l.b16 %v366
      %v1890 = vunpack.c.h.b16 %v366
      %v1891 = vunpack.c.l.b16 %v367
      %v1892 = vunpack.c.h.b16 %v367
      %v1893 = vunpack.c.l.b16 %v368
      %v1894 = vunpack.c.h.b16 %v368
      %v1895 = vunpack.c.l.b16 %v369
      %v1896 = vunpack.c.h.b16 %v369
      %v1897 = vunpack.c.l.b16 %v370
      %v1898 = vunpack.c.h.b16 %v370
      %v1899 = vunpack.c.l.b16 %v371
      %v1900 = vunpack.c.h.b16 %v371
      %v1901 = vunpack.c.l.b16 %v372
      %v1902 = vunpack.c.h.b16 %v372
      %v1903 = vunpack.c.l.b16 %v373
      %v1904 = vunpack.c.h.b16 %v373
      %v1905 = vunpack.c.l.b16 %v374
      %v1906 = vunpack.c.h.b16 %v374
      %v1907 = vunpack.c.l.b16 %v375
      %v1908 = vunpack.c.h.b16 %v375
      %v1909 = vunpack.c.l.b16 %v376
      %v1910 = vunpack.c.h.b16 %v376
      %v1911 = vunpack.c.l.b16 %v377
      %v1912 = vunpack.c.h.b16 %v377
      %v1913 = vunpack.c.l.b16 %v378
      %v1914 = vunpack.c.h.b16 %v378
      %v1915 = vunpack.c.l.b16 %v379
      %v1916 = vunpack.c.h.b16 %v379
      %v1917 = vunpack.c.l.b16 %v380
      %v1918 = vunpack.c.h.b16 %v380
      %v1919 = vunpack.c.l.b16 %v381
      %v1920 = vunpack.c.h.b16 %v381
      %v1921 = vunpack.c.l.b16 %v382
      %v1922 = vunpack.c.h.b16 %v382
      %v1923 = vunpack.c.l.b16 %v383
      %v1924 = vunpack.c.h.b16 %v383
      %v1925 = vunpack.c.l.b16 %v384
      %v1926 = vunpack.c.h.b16 %v384
      %v1927 = vunpack.c.l.b16 %v385
      %v1928 = vunpack.c.h.b16 %v385
      %v1929 = vunpack.c.l.b16 %v386
      %v1930 = vunpack.c.h.b16 %v386
      %v1931 = vunpack.c.l.b16 %v387
      %v1932 = vunpack.c.h.b16 %v387
      %v1933 = vunpack.c.l.b16 %v388
      %v1934 = vunpack.c.h.b16 %v388
      %v1935 = vunpack.c.l.b16 %v389
      %v1936 = vunpack.c.h.b16 %v389
      %v1937 = vunpack.c.l.b16 %v390
      %v1938 = vunpack.c.h.b16 %v390
      %v1939 = vunpack.c.l.b16 %v391
      %v1940 = vunpack.c.h.b16 %v391
      %v1941 = vunpack.c.l.b16 %v392
      %v1942 = vunpack.c.h.b16 %v392
      %v1943 = vunpack.c.l.b16 %v393
      %v1944 = vunpack.c.h.b16 %v393
      %v1945 = vunpack.c.l.b16 %v394
      %v1946 = vunpack.c.h.b16 %v394
      %v1947 = vunpack.c.l.b16 %v395
      %v1948 = vunpack.c.h.b16 %v395
      %v1949 = vunpack.c.l.b16 %v396
      %v1950 = vunpack.c.h.b16 %v396
      %v1951 = vunpack.c.l.b16 %v397
      %v1952 = vunpack.c.h.b16 %v397
      %v1953 = vunpack.c.l.b16 %v398
      %v1954 = vunpack.c.h.b16 %v398
      %v1955 = vunpack.c.l.b16 %v399
      %v1956 = vunpack.c.h.b16 %v399
      %v1957 = vunpack.c.l.b16 %v400
      %v1958 = vunpack.c.h.b16 %v400
      %v1959 = vunpack.c.l.b16 %v401
      %v1960 = vunpack.c.h.b16 %v401
      %v1961 = vunpack.c.l.b16 %v402
      %v1962 = vunpack.c.h.b16 %v402
      %v1963 = vunpack.c.l.b16 %v403
      %v1964 = vunpack.c.h.b16 %v403
      %v1965 = vunpack.c.l.b16 %v404
      %v1966 = vunpack.c.h.b16 %v404
      %v1967 = vunpack.c.l.b16 %v405
      %v1968 = vunpack.c.h.b16 %v405
      %v1969 = vunpack.c.l.b16 %v406
      %v1970 = vunpack.c.h.b16 %v406
      %v1971 = vunpack.c.l.b16 %v407
      %v1972 = vunpack.c.h.b16 %v407
      %v1973 = vunpack.c.l.b16 %v408
      %v1974 = vunpack.c.h.b16 %v408
      %v1975 = vunpack.c.l.b16 %v409
      %v1976 = vunpack.c.h.b16 %v409
      %v1977 = vunpack.c.l.b16 %v410
      %v1978 = vunpack.c.h.b16 %v410
      %v1979 = vunpack.c.l.b16 %v411
      %v1980 = vunpack.c.h.b16 %v411
      %v1981 = vunpack.c.l.b16 %v412
      %v1982 = vunpack.c.h.b16 %v412
      %v1983 = vunpack.c.l.b16 %v413
      %v1984 = vunpack.c.h.b16 %v413
      %v1985 = vunpack.c.l.b16 %v414
      %v1986 = vunpack.c.h.b16 %v414
      %v1987 = vunpack.c.l.b16 %v415
      %v1988 = vunpack.c.h.b16 %v415
      %v1989 = vunpack.c.l.b16 %v416
      %v1990 = vunpack.c.h.b16 %v416
      %v1991 = vunpack.c.l.b16 %v417
      %v1992 = vunpack.c.h.b16 %v417
      %v1993 = vunpack.c.l.b16 %v418
      %v1994 = vunpack.c.h.b16 %v418
      %v1995 = vunpack.c.l.b16 %v419
      %v1996 = vunpack.c.h.b16 %v419
      %v1997 = vunpack.c.l.b16 %v420
      %v1998 = vunpack.c.h.b16 %v420
      %v1999 = vunpack.c.l.b16 %v421
      %v2000 = vunpack.c.h.b16 %v421
      %v2001 = vunpack.c.l.b16 %v422
      %v2002 = vunpack.c.h.b16 %v422
      %v2003 = vunpack.c.l.b16 %v423
      %v2004 = vunpack.c.h.b16 %v423
      %v2005 = vunpack.c.l.b16 %v424
      %v2006 = vunpack.c.h.b16 %v424
      %v2007 = vunpack.c.l.b16 %v425
      %v2008 = vunpack.c.h.b16 %v425
      %v2009 = vunpack.c.l.b16 %v426
      %v2010 = vunpack.c.h.b16 %v426
      %v2011 = vunpack.c.l.b16 %v427
      %v2012 = vunpack.c.h.b16 %v427
      %v2013 = vunpack.c.l.b16 %v428
      %v2014 = vunpack.c.h.b16 %v428
      %v2015 = vunpack.c.l.b16 %v429
      %v2016 = vunpack.c.h.b16 %v429
      %v2017 = vunpack.c.l.b16 %v430
      %v2018 = vunpack.c.h.b16 %v430
      %v2019 = vunpack.c.l.b16 %v431
      %v2020 = vunpack.c.h.b16 %v431
      %v2021 = vunpack.c.l.b16 %v432
      %v2022 = vunpack.c.h.b16 %v432
      %v2023 = vunpack.c.l.b16 %v433
      %v2024 = vunpack.c.h.b16 %v433
      %v2025 = vunpack.c.l.b16 %v434
      %v2026 = vunpack.c.h.b16 %v434
      %v2027 = vunpack.c.l.b16 %v435
      %v2028 = vunpack.c.h.b16 %v435
      %v2029 = vunpack.c.l.b16 %v436
      %v2030 = vunpack.c.h.b16 %v436
      %v2031 = vunpack.c.l.b16 %v437
      %v2032 = vunpack.c.h.b16 %v437
      %v2033 = vunpack.c.l.b16 %v438
      %v2034 = vunpack.c.h.b16 %v438
      %v2035 = vunpack.c.l.b16 %v439
      %v2036 = vunpack.c.h.b16 %v439
      %v2037 = vunpack.c.l.b16 %v440
      %v2038 = vunpack.c.h.b16 %v440
      %v2039 = vunpack.c.l.b16 %v441
      %v2040 = vunpack.c.h.b16 %v441
      %v2041 = vunpack.c.l.b16 %v442
      %v2042 = vunpack.c.h.b16 %v442
      %v2043 = vunpack.c.l.b16 %v443
      %v2044 = vunpack.c.h.b16 %v443
      %v2045 = vunpack.c.l.b16 %v444
      %v2046 = vunpack.c.h.b16 %v444
      %v2047 = vunpack.c.l.b16 %v445
      %v2048 = vunpack.c.h.b16 %v445
      %v2049 = vunpack.c.l.b16 %v446
      %v2050 = vunpack.c.h.b16 %v446
      %v2051 = vunpack.c.l.b16 %v447
      %v2052 = vunpack.c.h.b16 %v447
      %v2053 = vunpack.c.l.b16 %v448
      %v2054 = vunpack.c.h.b16 %v448
      %v2055 = vunpack.c.l.b16 %v449
      %v2056 = vunpack.c.h.b16 %v449
      %v2057 = vunpack.c.l.b16 %v450
      %v2058 = vunpack.c.h.b16 %v450
      %v2059 = vunpack.c.l.b16 %v451
      %v2060 = vunpack.c.h.b16 %v451
      %v2061 = vunpack.c.l.b16 %v452
      %v2062 = vunpack.c.h.b16 %v452
      %v2063 = vunpack.c.l.b16 %v453
      %v2064 = vunpack.c.h.b16 %v453
      %v2065 = vunpack.c.l.b16 %v454
      %v2066 = vunpack.c.h.b16 %v454
      %v2067 = vunpack.c.l.b16 %v455
      %v2068 = vunpack.c.h.b16 %v455
      %v2069 = vunpack.c.l.b16 %v456
      %v2070 = vunpack.c.h.b16 %v456
      %v2071 = vunpack.c.l.b16 %v457
      %v2072 = vunpack.c.h.b16 %v457
      %v2073 = vunpack.c.l.b16 %v458
      %v2074 = vunpack.c.h.b16 %v458
      %v2075 = vunpack.c.l.b16 %v459
      %v2076 = vunpack.c.h.b16 %v459
      %v2077 = vunpack.c.l.b16 %v460
      %v2078 = vunpack.c.h.b16 %v460
      %v2079 = vunpack.c.l.b16 %v461
      %v2080 = vunpack.c.h.b16 %v461
      %v2081 = vunpack.c.l.b16 %v462
      %v2082 = vunpack.c.h.b16 %v462
      %v2083 = vunpack.c.l.b16 %v463
      %v2084 = vunpack.c.h.b16 %v463
      %v2085 = vunpack.c.l.b16 %v464
      %v2086 = vunpack.c.h.b16 %v464
      %v2087 = vunpack.c.l.b16 %v465
      %v2088 = vunpack.c.h.b16 %v465
      %v2089 = vunpack.c.l.b16 %v466
      %v2090 = vunpack.c.h.b16 %v466
      %v2091 = vunpack.c.l.b16 %v467
      %v2092 = vunpack.c.h.b16 %v467
      %v2093 = vunpack.c.l.b16 %v468
      %v2094 = vunpack.c.h.b16 %v468
      %v2095 = vunpack.c.l.b16 %v469
      %v2096 = vunpack.c.h.b16 %v469
      %v2097 = vunpack.c.l.b16 %v470
      %v2098 = vunpack.c.h.b16 %v470
      %v2099 = vunpack.c.l.b16 %v471
      %v2100 = vunpack.c.h.b16 %v471
      %v2101 = vunpack.c.l.b16 %v472
      %v2102 = vunpack.c.h.b16 %v472
      %v2103 = vunpack.c.l.b16 %v473
      %v2104 = vunpack.c.h.b16 %v473
      %v2105 = vunpack.c.l.b16 %v474
      %v2106 = vunpack.c.h.b16 %v474
      %v2107 = vunpack.c.l.b16 %v475
      %v2108 = vunpack.c.h.b16 %v475
      %v2109 = vunpack.c.l.b16 %v476
      %v2110 = vunpack.c.h.b16 %v476
      %v2111 = vunpack.c.l.b16 %v477
      %v2112 = vunpack.c.h.b16 %v477
      %v2113 = vunpack.c.l.b16 %v478
      %v2114 = vunpack.c.h.b16 %v478
      %v2115 = vunpack.c.l.b16 %v479
      %v2116 = vunpack.c.h.b16 %v479
      %v2117 = vunpack.c.l.b16 %v480
      %v2118 = vunpack.c.h.b16 %v480
      %v2119 = vunpack.c.l.b16 %v481
      %v2120 = vunpack.c.h.b16 %v481
      %v2121 = vunpack.c.l.b16 %v482
      %v2122 = vunpack.c.h.b16 %v482
      %v2123 = vunpack.c.l.b16 %v483
      %v2124 = vunpack.c.h.b16 %v483
      %v2125 = vunpack.c.l.b16 %v484
      %v2126 = vunpack.c.h.b16 %v484
      %v2127 = vunpack.c.l.b16 %v485
      %v2128 = vunpack.c.h.b16 %v485
      %v2129 = vunpack.c.l.b16 %v486
      %v2130 = vunpack.c.h.b16 %v486
      %v2131 = vunpack.c.l.b16 %v487
      %v2132 = vunpack.c.h.b16 %v487
      %v2133 = vunpack.c.l.b16 %v488
      %v2134 = vunpack.c.h.b16 %v488
      %v2135 = vunpack.c.l.b16 %v489
      %v2136 = vunpack.c.h.b16 %v489
      %v2137 = vunpack.c.l.b16 %v490
      %v2138 = vunpack.c.h.b16 %v490
      %v2139 = vunpack.c.l.b16 %v491
      %v2140 = vunpack.c.h.b16 %v491
      %v2141 = vunpack.c.l.b16 %v492
      %v2142 = vunpack.c.h.b16 %v492
      %v2143 = vunpack.c.l.b16 %v493
      %v2144 = vunpack.c.h.b16 %v493
      %v2145 = vunpack.c.l.b16 %v494
      %v2146 = vunpack.c.h.b16 %v494
      %v2147 = vunpack.c.l.b16 %v495
      %v2148 = vunpack.c.h.b16 %v495
      %v2149 = vunpack.c.l.b16 %v496
      %v2150 = vunpack.c.h.b16 %v496
      %v2151 = vunpack.c.l.b16 %v497
      %v2152 = vunpack.c.h.b16 %v497
      %v2153 = vunpack.c.l.b16 %v498
      %v2154 = vunpack.c.h.b16 %v498
      %v2155 = vunpack.c.l.b16 %v499
      %v2156 = vunpack.c.h.b16 %v499
      %v2157 = vunpack.c.l.b16 %v500
      %v2158 = vunpack.c.h.b16 %v500
      %v2159 = vunpack.c.l.b16 %v501
      %v2160 = vunpack.c.h.b16 %v501
      %v2161 = vunpack.c.l.b16 %v502
      %v2162 = vunpack.c.h.b16 %v502
      %v2163 = vunpack.c.l.b16 %v503
      %v2164 = vunpack.c.h.b16 %v503
      %v2165 = vunpack.c.l.b16 %v504
      %v2166 = vunpack.c.h.b16 %v504
      %v2167 = vunpack.c.l.b16 %v505
      %v2168 = vunpack.c.h.b16 %v505
      %v2169 = vunpack.c.l.b16 %v506
      %v2170 = vunpack.c.h.b16 %v506
      %v2171 = vunpack.c.l.b16 %v507
      %v2172 = vunpack.c.h.b16 %v507
      %v2173 = vunpack.c.l.b16 %v508
      %v2174 = vunpack.c.h.b16 %v508
      %v2175 = vunpack.c.l.b16 %v509
      %v2176 = vunpack.c.h.b16 %v509
      %v2177 = vunpack.c.l.b16 %v510
      %v2178 = vunpack.c.h.b16 %v510
      %v2179 = vunpack.c.l.b16 %v511
      %v2180 = vunpack.c.h.b16 %v511
      %v2181 = vunpack.c.l.b16 %v512
      %v2182 = vunpack.c.h.b16 %v512
      %v2183 = vunpack.c.l.b16 %v513
      %v2184 = vunpack.c.h.b16 %v513
      %v2185 = vunpack.c.l.b16 %v514
      %v2186 = vunpack.c.h.b16 %v514
      %v2187 = vunpack.c.l.b16 %v515
      %v2188 = vunpack.c.h.b16 %v515
      %v2189 = vunpack.c.l.b16 %v516
      %v2190 = vunpack.c.h.b16 %v516
      %v2191 = vunpack.c.l.b16 %v517
      %v2192 = vunpack.c.h.b16 %v517
      %v2193 = vunpack.c.l.b16 %v518
      %v2194 = vunpack.c.h.b16 %v518
      %v2195 = vunpack.c.l.b16 %v519
      %v2196 = vunpack.c.h.b16 %v519
      %v2197 = vunpack.c.l.b16 %v520
      %v2198 = vunpack.c.h.b16 %v520
      %v2199 = vunpack.c.l.b16 %v521
      %v2200 = vunpack.c.h.b16 %v521
      %v2201 = vunpack.c.l.b16 %v522
      %v2202 = vunpack.c.h.b16 %v522
      %v2203 = vunpack.c.l.b16 %v523
      %v2204 = vunpack.c.h.b16 %v523
      %v2205 = vunpack.c.l.b16 %v524
      %v2206 = vunpack.c.h.b16 %v524
      %v2207 = vunpack.c.l.b16 %v525
      %v2208 = vunpack.c.h.b16 %v525
      %v2209 = vunpack.c.l.b16 %v526
      %v2210 = vunpack.c.h.b16 %v526
      %v2211 = vunpack.c.l.b16 %v527
      %v2212 = vunpack.c.h.b16 %v527
      %v2213 = vunpack.c.l.b16 %v528
      %v2214 = vunpack.c.h.b16 %v528
      %v2215 = vunpack.c.l.b16 %v529
      %v2216 = vunpack.c.h.b16 %v529
      %v2217 = vunpack.c.l.b16 %v530
      %v2218 = vunpack.c.h.b16 %v530
      %v2219 = vunpack.c.l.b16 %v531
      %v2220 = vunpack.c.h.b16 %v531
      %v2221 = vunpack.c.l.b16 %v532
      %v2222 = vunpack.c.h.b16 %v532
      %v2223 = vunpack.c.l.b16 %v533
      %v2224 = vunpack.c.h.b16 %v533
      %v2225 = vunpack.c.l.b16 %v534
      %v2226 = vunpack.c.h.b16 %v534
      %v2227 = vunpack.c.l.b16 %v535
      %v2228 = vunpack.c.h.b16 %v535
      %v2229 = vunpack.c.l.b16 %v536
      %v2230 = vunpack.c.h.b16 %v536
      %v2231 = vunpack.c.l.b16 %v537
      %v2232 = vunpack.c.h.b16 %v537
      %v2233 = vunpack.c.l.b16 %v538
      %v2234 = vunpack.c.h.b16 %v538
      %v2235 = vunpack.c.l.b16 %v539
      %v2236 = vunpack.c.h.b16 %v539
      %v2237 = vunpack.c.l.b16 %v540
      %v2238 = vunpack.c.h.b16 %v540
      %v2239 = vunpack.c.l.b16 %v541
      %v2240 = vunpack.c.h.b16 %v541
      %v2241 = vunpack.c.l.b16 %v542
      %v2242 = vunpack.c.h.b16 %v542
      %v2243 = vunpack.c.l.b16 %v543
      %v2244 = vunpack.c.h.b16 %v543
      %v2245 = vunpack.c.l.b16 %v544
      %v2246 = vunpack.c.h.b16 %v544
      %v2247 = vunpack.c.l.b16 %v545
      %v2248 = vunpack.c.h.b16 %v545
      %v2249 = vunpack.c.l.b16 %v546
      %v2250 = vunpack.c.h.b16 %v546
      %v2251 = vunpack.c.l.b16 %v547
      %v2252 = vunpack.c.h.b16 %v547
      %v2253 = vunpack.c.l.b16 %v548
      %v2254 = vunpack.c.h.b16 %v548
      %v2255 = vunpack.c.l.b16 %v549
      %v2256 = vunpack.c.h.b16 %v549
      %v2257 = vunpack.c.l.b16 %v550
      %v2258 = vunpack.c.h.b16 %v550
      %v2259 = vunpack.c.l.b16 %v551
      %v2260 = vunpack.c.h.b16 %v551
      %v2261 = vunpack.c.l.b16 %v552
      %v2262 = vunpack.c.h.b16 %v552
      %v2263 = vunpack.c.l.b16 %v553
      %v2264 = vunpack.c.h.b16 %v553
      %v2265 = vunpack.c.l.b16 %v554
      %v2266 = vunpack.c.h.b16 %v554
      %v2267 = vunpack.c.l.b16 %v555
      %v2268 = vunpack.c.h.b16 %v555
      %v2269 = vunpack.c.l.b16 %v556
      %v2270 = vunpack.c.h.b16 %v556
      %v2271 = vunpack.c.l.b16 %v557
      %v2272 = vunpack.c.h.b16 %v557
      %v2273 = vunpack.c.l.b16 %v558
      %v2274 = vunpack.c.h.b16 %v558
      %v2275 = vunpack.c.l.b16 %v559
      %v2276 = vunpack.c.h.b16 %v559
      %v2277 = vunpack.c.l.b16 %v560
      %v2278 = vunpack.c.h.b16 %v560
      %v2279 = vunpack.c.l.b16 %v561
      %v2280 = vunpack.c.h.b16 %v561
      %v2281 = vunpack.c.l.b16 %v562
      %v2282 = vunpack.c.h.b16 %v562
      %v2283 = vunpack.c.l.b16 %v563
      %v2284 = vunpack.c.h.b16 %v563
      %v2285 = vunpack.c.l.b16 %v564
      %v2286 = vunpack.c.h.b16 %v564
      %v2287 = vunpack.c.l.b16 %v565
      %v2288 = vunpack.c.h.b16 %v565
      %v2289 = vunpack.c.l.b16 %v566
      %v2290 = vunpack.c.h.b16 %v566
      %v2291 = vunpack.c.l.b16 %v567
      %v2292 = vunpack.c.h.b16 %v567
      %v2293 = vunpack.c.l.b16 %v568
      %v2294 = vunpack.c.h.b16 %v568
      %v2295 = vunpack.c.l.b16 %v569
      %v2296 = vunpack.c.h.b16 %v569
      %v2297 = vunpack.c.l.b16 %v570
      %v2298 = vunpack.c.h.b16 %v570
      %v2299 = vunpack.c.l.b16 %v571
      %v2300 = vunpack.c.h.b16 %v571
      %v2301 = vunpack.c.l.b16 %v572
      %v2302 = vunpack.c.h.b16 %v572
      %v2303 = vunpack.c.l.b16 %v573
      %v2304 = vunpack.c.h.b16 %v573
      %v2305 = vunpack.c.l.b16 %v574
      %v2306 = vunpack.c.h.b16 %v574
      %v2307 = vunpack.c.l.b16 %v575
      %v2308 = vunpack.c.h.b16 %v575
      %v2309 = vunpack.c.l.b16 %v576
      %v2310 = vunpack.c.h.b16 %v576
      %v2311 = vunpack.c.l.b16 %v577
      %v2312 = vunpack.c.h.b16 %v577
      %v2313 = vunpack.c.l.b16 %v578
      %v2314 = vunpack.c.h.b16 %v578
      %v2315 = vunpack.c.l.b16 %v579
      %v2316 = vunpack.c.h.b16 %v579
      %v2317 = vunpack.c.l.b16 %v580
      %v2318 = vunpack.c.h.b16 %v580
      %v2319 = vunpack.c.l.b16 %v581
      %v2320 = vunpack.c.h.b16 %v581
      %v2321 = vunpack.c.l.b16 %v582
      %v2322 = vunpack.c.h.b16 %v582
      %v2323 = vunpack.c.l.b16 %v583
      %v2324 = vunpack.c.h.b16 %v583
      %v2325 = vunpack.c.l.b16 %v584
      %v2326 = vunpack.c.h.b16 %v584
      %v2327 = vunpack.c.l.b16 %v585
      %v2328 = vunpack.c.h.b16 %v585
      %v2329 = vunpack.c.l.b16 %v586
      %v2330 = vunpack.c.h.b16 %v586
      %v2331 = vunpack.c.l.b16 %v587
      %v2332 = vunpack.c.h.b16 %v587
      %v2333 = vunpack.c.l.b16 %v588
      %v2334 = vunpack.c.h.b16 %v588
      %v2335 = vunpack.c.l.b16 %v589
      %v2336 = vunpack.c.h.b16 %v589
      %v2337 = vunpack.c.l.b16 %v590
      %v2338 = vunpack.c.h.b16 %v590
      %v2339 = vunpack.c.l.b16 %v591
      %v2340 = vunpack.c.h.b16 %v591
      %v2341 = vunpack.c.l.b16 %v592
      %v2342 = vunpack.c.h.b16 %v592
      %v2343 = vunpack.c.l.b16 %v593
      %v2344 = vunpack.c.h.b16 %v593
      %v2345 = vunpack.c.l.b16 %v594
      %v2346 = vunpack.c.h.b16 %v594
      %v2347 = vunpack.c.l.b16 %v595
      %v2348 = vunpack.c.h.b16 %v595
      %v2349 = vunpack.c.l.b16 %v596
      %v2350 = vunpack.c.h.b16 %v596
      %v2351 = vunpack.c.l.b16 %v597
      %v2352 = vunpack.c.h.b16 %v597
      %v2353 = vunpack.c.l.b16 %v598
      %v2354 = vunpack.c.h.b16 %v598
      %v2355 = vunpack.c.l.b16 %v599
      %v2356 = vunpack.c.h.b16 %v599
      %v2357 = vunpack.c.l.b16 %v600
      %v2358 = vunpack.c.h.b16 %v600
      %v2359 = vunpack.c.l.b16 %v601
      %v2360 = vunpack.c.h.b16 %v601
      %v2361 = vunpack.c.l.b16 %v602
      %v2362 = vunpack.c.h.b16 %v602
      %v2363 = vunpack.c.l.b16 %v603
      %v2364 = vunpack.c.h.b16 %v603
      %v2365 = vunpack.c.l.b16 %v604
      %v2366 = vunpack.c.h.b16 %v604
      %v2367 = vunpack.c.l.b16 %v605
      %v2368 = vunpack.c.h.b16 %v605
      %v2369 = vunpack.c.l.b16 %v606
      %v2370 = vunpack.c.h.b16 %v606
      %v2371 = vunpack.c.l.b16 %v607
      %v2372 = vunpack.c.h.b16 %v607
      %v2373 = vunpack.c.l.b16 %v608
      %v2374 = vunpack.c.h.b16 %v608
      %v2375 = vunpack.c.l.b16 %v609
      %v2376 = vunpack.c.h.b16 %v609
      %v2377 = vunpack.c.l.b16 %v610
      %v2378 = vunpack.c.h.b16 %v610
      %v2379 = vunpack.c.l.b16 %v611
      %v2380 = vunpack.c.h.b16 %v611
      %v2381 = vunpack.c.l.b16 %v612
      %v2382 = vunpack.c.h.b16 %v612
      %v2383 = vunpack.c.l.b16 %v613
      %v2384 = vunpack.c.h.b16 %v613
      %v2385 = vunpack.c.l.b16 %v614
      %v2386 = vunpack.c.h.b16 %v614
      %v2387 = vunpack.c.l.b16 %v615
      %v2388 = vunpack.c.h.b16 %v615
      %v2389 = vunpack.c.l.b16 %v616
      %v2390 = vunpack.c.h.b16 %v616
      %v2391 = vunpack.c.l.b16 %v617
      %v2392 = vunpack.c.h.b16 %v617
      %v2393 = vunpack.c.l.b16 %v618
      %v2394 = vunpack.c.h.b16 %v618
      %v2395 = vunpack.c.l.b16 %v619
      %v2396 = vunpack.c.h.b16 %v619
      %v2397 = vunpack.c.l.b16 %v620
      %v2398 = vunpack.c.h.b16 %v620
      %v2399 = vunpack.c.l.b16 %v621
      %v2400 = vunpack.c.h.b16 %v621
      %v2401 = vunpack.c.l.b16 %v622
      %v2402 = vunpack.c.h.b16 %v622
      %v2403 = vunpack.c.l.b16 %v623
      %v2404 = vunpack.c.h.b16 %v623
      %v2405 = vunpack.c.l.b16 %v624
      %v2406 = vunpack.c.h.b16 %v624
      %v2407 = vunpack.c.l.b16 %v625
      %v2408 = vunpack.c.h.b16 %v625
      %v2409 = vunpack.c.l.b16 %v626
      %v2410 = vunpack.c.h.b16 %v626
      %v2411 = vunpack.c.l.b16 %v627
      %v2412 = vunpack.c.h.b16 %v627
      %v2413 = vunpack.c.l.b16 %v628
      %v2414 = vunpack.c.h.b16 %v628
      %v2415 = vunpack.c.l.b16 %v629
      %v2416 = vunpack.c.h.b16 %v629
      %v2417 = vunpack.c.l.b16 %v630
      %v2418 = vunpack.c.h.b16 %v630
      %v2419 = vunpack.c.l.b16 %v631
      %v2420 = vunpack.c.h.b16 %v631
      %v2421 = vunpack.c.l.b16 %v632
      %v2422 = vunpack.c.h.b16 %v632
      %v2423 = vunpack.c.l.b16 %v633
      %v2424 = vunpack.c.h.b16 %v633
      %v2425 = vunpack.c.l.b16 %v634
      %v2426 = vunpack.c.h.b16 %v634
      %v2427 = vunpack.c.l.b16 %v635
      %v2428 = vunpack.c.h.b16 %v635
      %v2429 = vunpack.c.l.b16 %v636
      %v2430 = vunpack.c.h.b16 %v636
      %v2431 = vunpack.c.l.b16 %v637
      %v2432 = vunpack.c.h.b16 %v637
      %v2433 = vunpack.c.l.b16 %v638
      %v2434 = vunpack.c.h.b16 %v638
      %v2435 = vunpack.c.l.b16 %v639
      %v2436 = vunpack.c.h.b16 %v639
      %v2437 = vunpack.c.l.b16 %v640
      %v2438 = vunpack.c.h.b16 %v640
      %v2439 = vunpack.c.l.b16 %v641
      %v2440 = vunpack.c.h.b16 %v641
      %v2441 = vunpack.c.l.b16 %v642
      %v2442 = vunpack.c.h.b16 %v642
      %v2443 = vunpack.c.l.b16 %v643
      %v2444 = vunpack.c.h.b16 %v643
      %v2445 = vunpack.c.l.b16 %v644
      %v2446 = vunpack.c.h.b16 %v644
      %v2447 = vunpack.c.l.b16 %v645
      %v2448 = vunpack.c.h.b16 %v645
      %v2449 = vunpack.c.l.b16 %v646
      %v2450 = vunpack.c.h.b16 %v646
      %v2451 = vunpack.c.l.b16 %v647
      %v2452 = vunpack.c.h.b16 %v647
      %v2453 = vunpack.c.l.b16 %v648
      %v2454 = vunpack.c.h.b16 %v648
      %v2455 = vunpack.c.l.b16 %v649
      %v2456 = vunpack.c.h.b16 %v649
      %v2457 = vunpack.c.l.b16 %v650
      %v2458 = vunpack.c.h.b16 %v650
      %v2459 = vunpack.c.l.b16 %v651
      %v2460 = vunpack.c.h.b16 %v651
      %v2461 = vunpack.c.l.b16 %v652
      %v2462 = vunpack.c.h.b16 %v652
      %v2463 = vunpack.c.l.b16 %v653
      %v2464 = vunpack.c.h.b16 %v653
      %v2465 = vunpack.c.l.b16 %v654
      %v2466 = vunpack.c.h.b16 %v654
      %v2467 = vunpack.c.l.b16 %v655
      %v2468 = vunpack.c.h.b16 %v655
      %v2469 = vunpack.c.l.b16 %v656
      %v2470 = vunpack.c.h.b16 %v656
      %v2471 = vunpack.c.l.b16 %v657
      %v2472 = vunpack.c.h.b16 %v657
      %v2473 = vunpack.c.l.b16 %v658
      %v2474 = vunpack.c.h.b16 %v658
      %v2475 = vunpack.c.l.b16 %v659
      %v2476 = vunpack.c.h.b16 %v659
      %v2477 = vunpack.c.l.b16 %v660
      %v2478 = vunpack.c.h.b16 %v660
      %v2479 = vunpack.c.l.b16 %v661
      %v2480 = vunpack.c.h.b16 %v661
      %v2481 = vunpack.c.l.b16 %v662
      %v2482 = vunpack.c.h.b16 %v662
      %v2483 = vunpack.c.l.b16 %v663
      %v2484 = vunpack.c.h.b16 %v663
      %v2485 = vunpack.c.l.b16 %v664
      %v2486 = vunpack.c.h.b16 %v664
      %v2487 = vunpack.c.l.b16 %v665
      %v2488 = vunpack.c.h.b16 %v665
      %v2489 = vunpack.c.l.b16 %v666
      %v2490 = vunpack.c.h.b16 %v666
      %v2491 = vunpack.c.l.b16 %v667
      %v2492 = vunpack.c.h.b16 %v667
      %v2493 = vunpack.c.l.b16 %v668
      %v2494 = vunpack.c.h.b16 %v668
      %v2495 = vunpack.c.l.b16 %v669
      %v2496 = vunpack.c.h.b16 %v669
      %v2497 = vunpack.c.l.b16 %v670
      %v2498 = vunpack.c.h.b16 %v670
      %v2499 = vunpack.c.l.b16 %v671
      %v2500 = vunpack.c.h.b16 %v671
      %v2501 = vunpack.c.l.b16 %v672
      %v2502 = vunpack.c.h.b16 %v672
      %v2503 = vunpack.c.l.b16 %v673
      %v2504 = vunpack.c.h.b16 %v673
      %v2505 = vunpack.c.l.b16 %v674
      %v2506 = vunpack.c.h.b16 %v674
      %v2507 = vunpack.c.l.b16 %v675
      %v2508 = vunpack.c.h.b16 %v675
      %v2509 = vunpack.c.l.b16 %v676
      %v2510 = vunpack.c.h.b16 %v676
      %v2511 = vunpack.c.l.b16 %v677
      %v2512 = vunpack.c.h.b16 %v677
      %v2513 = vunpack.c.l.b16 %v678
      %v2514 = vunpack.c.h.b16 %v678
      %v2515 = vunpack.c.l.b16 %v679
      %v2516 = vunpack.c.h.b16 %v679
      %v2517 = vunpack.c.l.b16 %v680
      %v2518 = vunpack.c.h.b16 %v680
      %v2519 = vunpack.c.l.b16 %v681
      %v2520 = vunpack.c.h.b16 %v681
      %v2521 = vunpack.c.l.b16 %v682
      %v2522 = vunpack.c.h.b16 %v682
      %v2523 = vunpack.c.l.b16 %v683
      %v2524 = vunpack.c.h.b16 %v683
      %v2525 = vunpack.c.l.b16 %v684
      %v2526 = vunpack.c.h.b16 %v684
      %v2527 = vunpack.c.l.b16 %v685
      %v2528 = vunpack.c.h.b16 %v685
      %v2529 = vunpack.c.l.b16 %v686
      %v2530 = vunpack.c.h.b16 %v686
      %v2531 = vunpack.c.l.b16 %v687
      %v2532 = vunpack.c.h.b16 %v687
      %v2533 = vunpack.c.l.b16 %v688
      %v2534 = vunpack.c.h.b16 %v688
      %v2535 = vunpack.c.l.b16 %v689
      %v2536 = vunpack.c.h.b16 %v689
      %v2537 = vunpack.c.l.b16 %v690
      %v2538 = vunpack.c.h.b16 %v690
      %v2539 = vunpack.c.l.b16 %v691
      %v2540 = vunpack.c.h.b16 %v691
      %v2541 = vunpack.c.l.b16 %v692
      %v2542 = vunpack.c.h.b16 %v692
      %v2543 = vunpack.c.l.b16 %v693
      %v2544 = vunpack.c.h.b16 %v693
      %v2545 = vunpack.c.l.b16 %v694
      %v2546 = vunpack.c.h.b16 %v694
      %v2547 = vunpack.c.l.b16 %v695
      %v2548 = vunpack.c.h.b16 %v695
      %v2549 = vunpack.c.l.b16 %v696
      %v2550 = vunpack.c.h.b16 %v696
      %v2551 = vunpack.c.l.b16 %v697
      %v2552 = vunpack.c.h.b16 %v697
      %v2553 = vunpack.c.l.b16 %v698
      %v2554 = vunpack.c.h.b16 %v698
      %v2555 = vunpack.c.l.b16 %v699
      %v2556 = vunpack.c.h.b16 %v699
      %v2557 = vunpack.c.l.b16 %v700
      %v2558 = vunpack.c.h.b16 %v700
      %v2559 = vunpack.c.l.b16 %v701
      %v2560 = vunpack.c.h.b16 %v701
      %v2561 = vunpack.c.l.b16 %v702
      %v2562 = vunpack.c.h.b16 %v702
      %v2563 = vunpack.c.l.b16 %v703
      %v2564 = vunpack.c.h.b16 %v703
      %v2565 = vunpack.c.l.b16 %v704
      %v2566 = vunpack.c.h.b16 %v704
      %v2567 = vunpack.c.l.b16 %v705
      %v2568 = vunpack.c.h.b16 %v705
      %v2569 = vunpack.c.l.b16 %v706
      %v2570 = vunpack.c.h.b16 %v706
      %v2571 = vunpack.c.l.b16 %v707
      %v2572 = vunpack.c.h.b16 %v707
      %v2573 = vunpack.c.l.b16 %v708
      %v2574 = vunpack.c.h.b16 %v708
      %v2575 = vunpack.c.l.b16 %v709
      %v2576 = vunpack.c.h.b16 %v709
      %v2577 = vunpack.c.l.b16 %v710
      %v2578 = vunpack.c.h.b16 %v710
      %v2579 = vunpack.c.l.b16 %v711
      %v2580 = vunpack.c.h.b16 %v711
      %v2581 = vunpack.c.l.b16 %v712
      %v2582 = vunpack.c.h.b16 %v712
      %v2583 = vunpack.c.l.b16 %v713
      %v2584 = vunpack.c.h.b16 %v713
      %v2585 = vunpack.c.l.b16 %v714
      %v2586 = vunpack.c.h.b16 %v714
      %v2587 = vunpack.c.l.b16 %v715
      %v2588 = vunpack.c.h.b16 %v715
      %v2589 = vunpack.c.l.b16 %v716
      %v2590 = vunpack.c.h.b16 %v716
      %v2591 = vunpack.c.l.b16 %v717
      %v2592 = vunpack.c.h.b16 %v717
      %v2593 = vunpack.c.l.b16 %v718
      %v2594 = vunpack.c.h.b16 %v718
      %v2595 = vunpack.c.l.b16 %v719
      %v2596 = vunpack.c.h.b16 %v719
      %v2597 = vunpack.c.l.b16 %v720
      %v2598 = vunpack.c.h.b16 %v720
      %v2599 = vunpack.c.l.b16 %v721
      %v2600 = vunpack.c.h.b16 %v721
      %v2601 = vunpack.c.l.b16 %v722
      %v2602 = vunpack.c.h.b16 %v722
      %v2603 = vunpack.c.l.b16 %v723
      %v2604 = vunpack.c.h.b16 %v723
      %v2605 = vunpack.c.l.b16 %v724
      %v2606 = vunpack.c.h.b16 %v724
      %v2607 = vunpack.c.l.b16 %v725
      %v2608 = vunpack.c.h.b16 %v725
      %v2609 = vunpack.c.l.b16 %v726
      %v2610 = vunpack.c.h.b16 %v726
      %v2611 = vunpack.c.l.b16 %v727
      %v2612 = vunpack.c.h.b16 %v727
      %v2613 = vunpack.c.l.b16 %v728
      %v2614 = vunpack.c.h.b16 %v728
      %v2615 = vunpack.c.l.b16 %v729
      %v2616 = vunpack.c.h.b16 %v729
      %v2617 = vunpack.c.l.b16 %v730
      %v2618 = vunpack.c.h.b16 %v730
      %v2619 = vunpack.c.l.b16 %v731
      %v2620 = vunpack.c.h.b16 %v731
      %v2621 = vunpack.c.l.b16 %v732
      %v2622 = vunpack.c.h.b16 %v732
      %v2623 = vunpack.c.l.b16 %v733
      %v2624 = vunpack.c.h.b16 %v733
      %v2625 = vunpack.c.l.b16 %v734
      %v2626 = vunpack.c.h.b16 %v734
      %v2627 = vunpack.c.l.b16 %v735
      %v2628 = vunpack.c.h.b16 %v735
      %v2629 = vunpack.c.l.b16 %v736
      %v2630 = vunpack.c.h.b16 %v736
      %v2631 = vunpack.c.l.b16 %v737
      %v2632 = vunpack.c.h.b16 %v737
      %v2633 = vunpack.c.l.b16 %v738
      %v2634 = vunpack.c.h.b16 %v738
      %v2635 = vunpack.c.l.b16 %v739
      %v2636 = vunpack.c.h.b16 %v739
      %v2637 = vunpack.c.l.b16 %v740
      %v2638 = vunpack.c.h.b16 %v740
      %v2639 = vunpack.c.l.b16 %v741
      %v2640 = vunpack.c.h.b16 %v741
      %v2641 = vunpack.c.l.b16 %v742
      %v2642 = vunpack.c.h.b16 %v742
      %v2643 = vunpack.c.l.b16 %v743
      %v2644 = vunpack.c.h.b16 %v743
      %v2645 = vunpack.c.l.b16 %v744
      %v2646 = vunpack.c.h.b16 %v744
      %v2647 = vunpack.c.l.b16 %v745
      %v2648 = vunpack.c.h.b16 %v745
      %v2649 = vunpack.c.l.b16 %v746
      %v2650 = vunpack.c.h.b16 %v746
      %v2651 = vunpack.c.l.b16 %v747
      %v2652 = vunpack.c.h.b16 %v747
      %v2653 = vunpack.c.l.b16 %v748
      %v2654 = vunpack.c.h.b16 %v748
      %v2655 = vunpack.c.l.b16 %v749
      %v2656 = vunpack.c.h.b16 %v749
      %v2657 = vunpack.c.l.b16 %v750
      %v2658 = vunpack.c.h.b16 %v750
      %v2659 = vunpack.c.l.b16 %v751
      %v2660 = vunpack.c.h.b16 %v751
      %v2661 = vunpack.c.l.b16 %v752
      %v2662 = vunpack.c.h.b16 %v752
      %v2663 = vunpack.c.l.b16 %v753
      %v2664 = vunpack.c.h.b16 %v753
      %v2665 = vunpack.c.l.b16 %v754
      %v2666 = vunpack.c.h.b16 %v754
      %v2667 = vunpack.c.l.b16 %v755
      %v2668 = vunpack.c.h.b16 %v755
      %v2669 = vunpack.c.l.b16 %v756
      %v2670 = vunpack.c.h.b16 %v756
      %v2671 = vunpack.c.l.b16 %v757
      %v2672 = vunpack.c.h.b16 %v757
      %v2673 = vunpack.c.l.b16 %v758
      %v2674 = vunpack.c.h.b16 %v758
      %v2675 = vunpack.c.l.b16 %v759
      %v2676 = vunpack.c.h.b16 %v759
      %v2677 = vunpack.c.l.b16 %v760
      %v2678 = vunpack.c.h.b16 %v760
      %v2679 = vunpack.c.l.b16 %v761
      %v2680 = vunpack.c.h.b16 %v761
      %v2681 = vunpack.c.l.b16 %v762
      %v2682 = vunpack.c.h.b16 %v762
      %v2683 = vunpack.c.l.b16 %v763
      %v2684 = vunpack.c.h.b16 %v763
      %v2685 = vunpack.c.l.b16 %v764
      %v2686 = vunpack.c.h.b16 %v764
      %v2687 = vunpack.c.l.b16 %v765
      %v2688 = vunpack.c.h.b16 %v765
      %v2689 = vunpack.c.l.b16 %v766
      %v2690 = vunpack.c.h.b16 %v766
      %v2691 = vunpack.c.l.b16 %v767
      %v2692 = vunpack.c.h.b16 %v767
      %v2693 = vunpack.c.l.b16 %v768
      %v2694 = vunpack.c.h.b16 %v768
      %v2695 = vunpack.c.l.b16 %v769
      %v2696 = vunpack.c.h.b16 %v769
      %v2697 = vunpack.c.l.b16 %v770
      %v2698 = vunpack.c.h.b16 %v770
      %v2699 = vunpack.c.l.b16 %v771
      %v2700 = vunpack.c.h.b16 %v771
      %v2701 = vunpack.c.l.b16 %v772
      %v2702 = vunpack.c.h.b16 %v772
      %v2703 = vunpack.c.l.b16 %v773
      %v2704 = vunpack.c.h.b16 %v773
      %v2705 = vunpack.c.l.b16 %v774
      %v2706 = vunpack.c.h.b16 %v774
      %v2707 = vunpack.c.l.b16 %v775
      %v2708 = vunpack.c.h.b16 %v775
      %v2709 = vunpack.c.l.b16 %v776
      %v2710 = vunpack.c.h.b16 %v776
      %v2711 = vunpack.c.l.b16 %v777
      %v2712 = vunpack.c.h.b16 %v777
      %v2713 = vunpack.c.l.b16 %v778
      %v2714 = vunpack.c.h.b16 %v778
      %v2715 = vunpack.c.l.b16 %v779
      %v2716 = vunpack.c.h.b16 %v779
      %v2717 = vunpack.c.l.b16 %v780
      %v2718 = vunpack.c.h.b16 %v780
      %v2719 = vunpack.c.l.b16 %v781
      %v2720 = vunpack.c.h.b16 %v781
      %v2721 = vunpack.c.l.b16 %v782
      %v2722 = vunpack.c.h.b16 %v782
      %v2723 = vunpack.c.l.b16 %v783
      %v2724 = vunpack.c.h.b16 %v783
      %v2725 = vunpack.c.l.b16 %v784
      %v2726 = vunpack.c.h.b16 %v784
      %v2727 = vunpack.c.l.b16 %v785
      %v2728 = vunpack.c.h.b16 %v785
      %v2729 = vunpack.c.l.b16 %v786
      %v2730 = vunpack.c.h.b16 %v786
      %v2731 = vunpack.c.l.b16 %v787
      %v2732 = vunpack.c.h.b16 %v787
      %v2733 = vunpack.c.l.b16 %v788
      %v2734 = vunpack.c.h.b16 %v788
      %v2735 = vunpack.c.l.b16 %v789
      %v2736 = vunpack.c.h.b16 %v789
      %v2737 = vunpack.c.l.b16 %v790
      %v2738 = vunpack.c.h.b16 %v790
      %v2739 = vunpack.c.l.b16 %v791
      %v2740 = vunpack.c.h.b16 %v791
      %v2741 = vunpack.c.l.b16 %v792
      %v2742 = vunpack.c.h.b16 %v792
      %v2743 = vunpack.c.l.b16 %v793
      %v2744 = vunpack.c.h.b16 %v793
      %v2745 = vunpack.c.l.b16 %v794
      %v2746 = vunpack.c.h.b16 %v794
      %v2747 = vunpack.c.l.b16 %v795
      %v2748 = vunpack.c.h.b16 %v795
      %v2749 = vunpack.c.l.b16 %v796
      %v2750 = vunpack.c.h.b16 %v796
      %v2751 = vunpack.c.l.b16 %v797
      %v2752 = vunpack.c.h.b16 %v797
      %v2753 = vunpack.c.l.b16 %v798
      %v2754 = vunpack.c.h.b16 %v798
      %v2755 = vunpack.c.l.b16 %v799
      %v2756 = vunpack.c.h.b16 %v799
      %v2757 = vunpack.c.l.b16 %v800
      %v2758 = vunpack.c.h.b16 %v800
      %v2759 = vunpack.c.l.b16 %v801
      %v2760 = vunpack.c.h.b16 %v801
      %v2761 = vunpack.c.l.b16 %v802
      %v2762 = vunpack.c.h.b16 %v802
      %v2763 = vunpack.c.l.b16 %v803
      %v2764 = vunpack.c.h.b16 %v803
      %v2765 = vunpack.c.l.b16 %v804
      %v2766 = vunpack.c.h.b16 %v804
      %v2767 = vunpack.c.l.b16 %v805
      %v2768 = vunpack.c.h.b16 %v805
      %v2769 = vunpack.c.l.b16 %v806
      %v2770 = vunpack.c.h.b16 %v806
      %v2771 = vunpack.c.l.b16 %v807
      %v2772 = vunpack.c.h.b16 %v807
      %v2773 = vunpack.c.l.b16 %v808
      %v2774 = vunpack.c.h.b16 %v808
      %v2775 = vunpack.c.l.b16 %v809
      %v2776 = vunpack.c.h.b16 %v809
      %v2777 = vunpack.c.l.b16 %v810
      %v2778 = vunpack.c.h.b16 %v810
      %v2779 = vunpack.c.l.b16 %v811
      %v2780 = vunpack.c.h.b16 %v811
      %v2781 = vunpack.c.l.b16 %v812
      %v2782 = vunpack.c.h.b16 %v812
      %v2783 = vunpack.c.l.b16 %v813
      %v2784 = vunpack.c.h.b16 %v813
      %v2785 = vunpack.c.l.b16 %v814
      %v2786 = vunpack.c.h.b16 %v814
      %v2787 = vunpack.c.l.b16 %v815
      %v2788 = vunpack.c.h.b16 %v815
      %v2789 = vunpack.c.l.b16 %v816
      %v2790 = vunpack.c.h.b16 %v816
      %v2791 = vunpack.c.l.b16 %v817
      %v2792 = vunpack.c.h.b16 %v817
      %v2793 = vunpack.c.l.b16 %v818
      %v2794 = vunpack.c.h.b16 %v818
      %v2795 = vunpack.c.l.b16 %v819
      %v2796 = vunpack.c.h.b16 %v819
      %v2797 = vunpack.c.l.b16 %v820
      %v2798 = vunpack.c.h.b16 %v820
      %v2799 = vunpack.c.l.b16 %v821
      %v2800 = vunpack.c.h.b16 %v821
      %v2801 = vunpack.c.l.b16 %v822
      %v2802 = vunpack.c.h.b16 %v822
      %v2803 = vunpack.c.l.b16 %v823
      %v2804 = vunpack.c.h.b16 %v823
      %v2805 = vunpack.c.l.b16 %v824
      %v2806 = vunpack.c.h.b16 %v824
      %v2807 = vunpack.c.l.b16 %v825
      %v2808 = vunpack.c.h.b16 %v825
      %v2809 = vunpack.c.l.b16 %v826
      %v2810 = vunpack.c.h.b16 %v826
      %v2811 = vunpack.c.l.b16 %v827
      %v2812 = vunpack.c.h.b16 %v827
      %v2813 = vunpack.c.l.b16 %v828
      %v2814 = vunpack.c.h.b16 %v828
      %v2815 = vunpack.c.l.b16 %v829
      %v2816 = vunpack.c.h.b16 %v829
      %v2817 = vunpack.c.l.b16 %v830
      %v2818 = vunpack.c.h.b16 %v830
      %v2819 = vunpack.c.l.b16 %v831
      %v2820 = vunpack.c.h.b16 %v831
      %v2821 = vunpack.c.l.b16 %v832
      %v2822 = vunpack.c.h.b16 %v832
      %v2823 = vunpack.c.l.b16 %v833
      %v2824 = vunpack.c.h.b16 %v833
      %v2825 = vunpack.c.l.b16 %v834
      %v2826 = vunpack.c.h.b16 %v834
      %v2827 = vunpack.c.l.b16 %v835
      %v2828 = vunpack.c.h.b16 %v835
      %v2829 = vunpack.c.l.b16 %v836
      %v2830 = vunpack.c.h.b16 %v836
      %v2831 = vunpack.c.l.b16 %v837
      %v2832 = vunpack.c.h.b16 %v837
      %v2833 = vunpack.c.l.b16 %v838
      %v2834 = vunpack.c.h.b16 %v838
      %v2835 = vunpack.c.l.b16 %v839
      %v2836 = vunpack.c.h.b16 %v839
      %v2837 = vunpack.c.l.b16 %v840
      %v2838 = vunpack.c.h.b16 %v840
      %v2839 = vunpack.c.l.b16 %v841
      %v2840 = vunpack.c.h.b16 %v841
      %v2841 = vunpack.c.l.b16 %v842
      %v2842 = vunpack.c.h.b16 %v842
      %v2843 = vunpack.c.l.b16 %v843
      %v2844 = vunpack.c.h.b16 %v843
      %v2845 = vunpack.c.l.b16 %v844
      %v2846 = vunpack.c.h.b16 %v844
      %v2847 = vunpack.c.l.b16 %v845
      %v2848 = vunpack.c.h.b16 %v845
      %v2849 = vunpack.c.l.b16 %v846
      %v2850 = vunpack.c.h.b16 %v846
      %v2851 = vunpack.c.l.b16 %v847
      %v2852 = vunpack.c.h.b16 %v847
      %v2853 = vunpack.c.l.b16 %v848
      %v2854 = vunpack.c.h.b16 %v848
      %v2855 = vunpack.c.l.b16 %v849
      %v2856 = vunpack.c.h.b16 %v849
      %v2857 = vunpack.c.l.b16 %v850
      %v2858 = vunpack.c.h.b16 %v850
      %v2859 = vunpack.c.l.b16 %v851
      %v2860 = vunpack.c.h.b16 %v851
      %v2861 = vunpack.c.l.b16 %v852
      %v2862 = vunpack.c.h.b16 %v852
      %v2863 = vunpack.c.l.b16 %v853
      %v2864 = vunpack.c.h.b16 %v853
      %v2865 = vunpack.c.l.b16 %v854
      %v2866 = vunpack.c.h.b16 %v854
      %v2867 = vunpack.c.l.b16 %v855
      %v2868 = vunpack.c.h.b16 %v855
      %v2869 = vunpack.c.l.b16 %v856
      %v2870 = vunpack.c.h.b16 %v856
      %v2871 = vunpack.c.l.b16 %v857
      %v2872 = vunpack.c.h.b16 %v857
      %v2873 = vunpack.c.l.b16 %v858
      %v2874 = vunpack.c.h.b16 %v858
      %v2875 = vunpack.c.l.b16 %v859
      %v2876 = vunpack.c.h.b16 %v859
      %v2877 = vunpack.c.l.b16 %v860
      %v2878 = vunpack.c.h.b16 %v860
      %v2879 = vunpack.c.l.b16 %v861
      %v2880 = vunpack.c.h.b16 %v861
      %v2881 = vunpack.c.l.b16 %v862
      %v2882 = vunpack.c.h.b16 %v862
      %v2883 = vunpack.c.l.b16 %v863
      %v2884 = vunpack.c.h.b16 %v863
      %v2885 = vunpack.c.l.b16 %v864
      %v2886 = vunpack.c.h.b16 %v864
      %v2887 = vunpack.c.l.b16 %v865
      %v2888 = vunpack.c.h.b16 %v865
      %v2889 = vunpack.c.l.b16 %v866
      %v2890 = vunpack.c.h.b16 %v866
      %v2891 = vunpack.c.l.b16 %v867
      %v2892 = vunpack.c.h.b16 %v867
      %v2893 = vunpack.c.l.b16 %v868
      %v2894 = vunpack.c.h.b16 %v868
      %v2895 = vunpack.c.l.b16 %v869
      %v2896 = vunpack.c.h.b16 %v869
      %v2897 = vunpack.c.l.b16 %v870
      %v2898 = vunpack.c.h.b16 %v870
      %v2899 = vunpack.c.l.b16 %v871
      %v2900 = vunpack.c.h.b16 %v871
      %v2901 = vunpack.c.l.b16 %v872
      %v2902 = vunpack.c.h.b16 %v872
      %v2903 = vunpack.c.l.b16 %v873
      %v2904 = vunpack.c.h.b16 %v873
      %v2905 = vunpack.c.l.b16 %v874
      %v2906 = vunpack.c.h.b16 %v874
      %v2907 = vunpack.c.l.b16 %v875
      %v2908 = vunpack.c.h.b16 %v875
      %v2909 = vunpack.c.l.b16 %v876
      %v2910 = vunpack.c.h.b16 %v876
      %v2911 = vunpack.c.l.b16 %v877
      %v2912 = vunpack.c.h.b16 %v877
      %v2913 = vunpack.c.l.b16 %v878
      %v2914 = vunpack.c.h.b16 %v878
      %v2915 = vunpack.c.l.b16 %v879
      %v2916 = vunpack.c.h.b16 %v879
      %v2917 = vunpack.c.l.b16 %v880
      %v2918 = vunpack.c.h.b16 %v880
      %v2919 = vunpack.c.l.b16 %v881
      %v2920 = vunpack.c.h.b16 %v881
      %v2921 = vunpack.c.l.b16 %v882
      %v2922 = vunpack.c.h.b16 %v882
      %v2923 = vunpack.c.l.b16 %v883
      %v2924 = vunpack.c.h.b16 %v883
      %v2925 = vunpack.c.l.b16 %v884
      %v2926 = vunpack.c.h.b16 %v884
      %v2927 = vunpack.c.l.b16 %v885
      %v2928 = vunpack.c.h.b16 %v885
      %v2929 = vunpack.c.l.b16 %v886
      %v2930 = vunpack.c.h.b16 %v886
      %v2931 = vunpack.c.l.b16 %v887
      %v2932 = vunpack.c.h.b16 %v887
      %v2933 = vunpack.c.l.b16 %v888
      %v2934 = vunpack.c.h.b16 %v888
      %v2935 = vunpack.c.l.b16 %v889
      %v2936 = vunpack.c.h.b16 %v889
      %v2937 = vunpack.c.l.b16 %v890
      %v2938 = vunpack.c.h.b16 %v890
      %v2939 = vunpack.c.l.b16 %v891
      %v2940 = vunpack.c.h.b16 %v891
      %v2941 = vunpack.c.l.b16 %v892
      %v2942 = vunpack.c.h.b16 %v892
      %v2943 = vunpack.c.l.b16 %v893
      %v2944 = vunpack.c.h.b16 %v893
      %v2945 = vunpack.c.l.b16 %v894
      %v2946 = vunpack.c.h.b16 %v894
      %v2947 = vunpack.c.l.b16 %v895
      %v2948 = vunpack.c.h.b16 %v895
      %v2949 = vunpack.c.l.b16 %v896
      %v2950 = vunpack.c.h.b16 %v896
      %v2951 = vunpack.c.l.b16 %v897
      %v2952 = vunpack.c.h.b16 %v897
      %v2953 = vunpack.c.l.b16 %v898
      %v2954 = vunpack.c.h.b16 %v898
      %v2955 = vunpack.c.l.b16 %v899
      %v2956 = vunpack.c.h.b16 %v899
      %v2957 = vunpack.c.l.b16 %v900
      %v2958 = vunpack.c.h.b16 %v900
      %v2959 = vunpack.c.l.b16 %v901
      %v2960 = vunpack.c.h.b16 %v901
      %v2961 = vunpack.c.l.b16 %v902
      %v2962 = vunpack.c.h.b16 %v902
      %v2963 = vunpack.c.l.b16 %v903
      %v2964 = vunpack.c.h.b16 %v903
      %v2965 = vunpack.c.l.b16 %v904
      %v2966 = vunpack.c.h.b16 %v904
      %v2967 = vunpack.c.l.b16 %v905
      %v2968 = vunpack.c.h.b16 %v905
      %v2969 = vunpack.c.l.b16 %v906
      %v2970 = vunpack.c.h.b16 %v906
      %v2971 = vunpack.c.l.b16 %v907
      %v2972 = vunpack.c.h.b16 %v907
      %v2973 = vunpack.c.l.b16 %v908
      %v2974 = vunpack.c.h.b16 %v908
      %v2975 = vunpack.c.l.b16 %v909
      %v2976 = vunpack.c.h.b16 %v909
      %v2977 = vunpack.c.l.b16 %v910
      %v2978 = vunpack.c.h.b16 %v910
      %v2979 = vunpack.c.l.b16 %v911
      %v2980 = vunpack.c.h.b16 %v911
      %v2981 = vunpack.c.l.b16 %v912
      %v2982 = vunpack.c.h.b16 %v912
      %v2983 = vunpack.c.l.b16 %v913
      %v2984 = vunpack.c.h.b16 %v913
      %v2985 = vunpack.c.l.b16 %v914
      %v2986 = vunpack.c.h.b16 %v914
      %v2987 = vunpack.c.l.b16 %v915
      %v2988 = vunpack.c.h.b16 %v915
      %v2989 = vunpack.c.l.b16 %v916
      %v2990 = vunpack.c.h.b16 %v916
      %v2991 = vunpack.c.l.b16 %v917
      %v2992 = vunpack.c.h.b16 %v917
      %v2993 = vunpack.c.l.b16 %v918
      %v2994 = vunpack.c.h.b16 %v918
      %v2995 = vunpack.c.l.b16 %v919
      %v2996 = vunpack.c.h.b16 %v919
      %v2997 = vunpack.c.l.b16 %v920
      %v2998 = vunpack.c.h.b16 %v920
      %v2999 = vunpack.c.l.b16 %v921
      %v3000 = vunpack.c.h.b16 %v921
      %v3001 = vunpack.c.l.b16 %v922
      %v3002 = vunpack.c.h.b16 %v922
      %v3003 = vunpack.c.l.b16 %v923
      %v3004 = vunpack.c.h.b16 %v923
      %v3005 = vunpack.c.l.b16 %v924
      %v3006 = vunpack.c.h.b16 %v924
      %v3007 = vunpack.c.l.b16 %v925
      %v3008 = vunpack.c.h.b16 %v925
      %v3009 = vunpack.c.l.b16 %v926
      %v3010 = vunpack.c.h.b16 %v926
      %v3011 = vunpack.c.l.b16 %v927
      %v3012 = vunpack.c.h.b16 %v927
      %v3013 = vunpack.c.l.b16 %v928
      %v3014 = vunpack.c.h.b16 %v928
      %v3015 = vunpack.c.l.b16 %v929
      %v3016 = vunpack.c.h.b16 %v929
      %v3017 = vunpack.c.l.b16 %v930
      %v3018 = vunpack.c.h.b16 %v930
      %v3019 = vunpack.c.l.b16 %v931
      %v3020 = vunpack.c.h.b16 %v931
      %v3021 = vunpack.c.l.b16 %v932
      %v3022 = vunpack.c.h.b16 %v932
      %v3023 = vpack.c.b16 %v1683, %v1679
      %v3024 = vpack.c.b16 %v1684, %v1680
      %v3025 = vpack.c.b16 %v1685, %v1681
      %v3026 = vpack.c.b16 %v1686, %v1682
      %v3027 = vpack.c.b16 %v1691, %v1687
      %v3028 = vpack.c.b16 %v1692, %v1688
      %v3029 = vpack.c.b16 %v1693, %v1689
      %v3030 = vpack.c.b16 %v1694, %v1690
      %v3031 = vpack.c.b16 %v1699, %v1695
      %v3032 = vpack.c.b16 %v1700, %v1696
      %v3033 = vpack.c.b16 %v1701, %v1697
      %v3034 = vpack.c.b16 %v1702, %v1698
      %v3035 = vpack.c.b16 %v1707, %v1703
      %v3036 = vpack.c.b16 %v1708, %v1704
      %v3037 = vpack.c.b16 %v1709, %v1705
      %v3038 = vpack.c.b16 %v1710, %v1706
      %v3039 = vpack.c.b16 %v1715, %v1711
      %v3040 = vpack.c.b16 %v1716, %v1712
      %v3041 = vpack.c.b16 %v1717, %v1713
      %v3042 = vpack.c.b16 %v1718, %v1714
      %v3043 = vpack.c.b16 %v1723, %v1719
      %v3044 = vpack.c.b16 %v1724, %v1720
      %v3045 = vpack.c.b16 %v1725, %v1721
      %v3046 = vpack.c.b16 %v1726, %v1722
      %v3047 = vpack.c.b16 %v1731, %v1727
      %v3048 = vpack.c.b16 %v1732, %v1728
      %v3049 = vpack.c.b16 %v1733, %v1729
      %v3050 = vpack.c.b16 %v1734, %v1730
      %v3051 = vpack.c.b16 %v1739, %v1735
      %v3052 = vpack.c.b16 %v1740, %v1736
      %v3053 = vpack.c.b16 %v1741, %v1737
      %v3054 = vpack.c.b16 %v1742, %v1738
      %v3055 = vpack.c.b16 %v1747, %v1743
      %v3056 = vpack.c.b16 %v1748, %v1744
      %v3057 = vpack.c.b16 %v1749, %v1745
      %v3058 = vpack.c.b16 %v1750, %v1746
      %v3059 = vpack.c.b16 %v1755, %v1751
      %v3060 = vpack.c.b16 %v1756, %v1752
      %v3061 = vpack.c.b16 %v1757, %v1753
      %v3062 = vpack.c.b16 %v1758, %v1754
      %v3063 = vpack.c.b16 %v1763, %v1759
      %v3064 = vpack.c.b16 %v1764, %v1760
      %v3065 = vpack.c.b16 %v1765, %v1761
      %v3066 = vpack.c.b16 %v1766, %v1762
      %v3067 = vpack.c.b16 %v1771, %v1767
      %v3068 = vpack.c.b16 %v1772, %v1768
      %v3069 = vpack.c.b16 %v1773, %v1769
      %v3070 = vpack.c.b16 %v1774, %v1770
      %v3071 = vpack.c.b16 %v1779, %v1775
      %v3072 = vpack.c.b16 %v1780, %v1776
      %v3073 = vpack.c.b16 %v1781, %v1777
      %v3074 = vpack.c.b16 %v1782, %v1778
      %v3075 = vpack.c.b16 %v1787, %v1783
      %v3076 = vpack.c.b16 %v1788, %v1784
      %v3077 = vpack.c.b16 %v1789, %v1785
      %v3078 = vpack.c.b16 %v1790, %v1786
      %v3079 = vpack.c.b16 %v1795, %v1791
      %v3080 = vpack.c.b16 %v1796, %v1792
      %v3081 = vpack.c.b16 %v1797, %v1793
      %v3082 = vpack.c.b16 %v1798, %v1794
      %v3083 = vpack.c.b16 %v1803, %v1799
      %v3084 = vpack.c.b16 %v1804, %v1800
      %v3085 = vpack.c.b16 %v1805, %v1801
      %v3086 = vpack.c.b16 %v1806, %v1802
      %v3087 = vpack.c.b16 %v1811, %v1807
      %v3088 = vpack.c.b16 %v1812, %v1808
      %v3089 = vpack.c.b16 %v1813, %v1809
      %v3090 = vpack.c.b16 %v1814, %v1810
      %v3091 = vpack.c.b16 %v1819, %v1815
      %v3092 = vpack.c.b16 %v1820, %v1816
      %v3093 = vpack.c.b16 %v1821, %v1817
      %v3094 = vpack.c.b16 %v1822, %v1818
      %v3095 = vpack.c.b16 %v1827, %v1823
      %v3096 = vpack.c.b16 %v1828, %v1824
      %v3097 = vpack.c.b16 %v1829, %v1825
      %v3098 = vpack.c.b16 %v1830, %v1826
      %v3099 = vpack.c.b16 %v1835, %v1831
      %v3100 = vpack.c.b16 %v1836, %v1832
      %v3101 = vpack.c.b16 %v1837, %v1833
      %v3102 = vpack.c.b16 %v1838, %v1834
      %v3103 = vpack.c.b16 %v1843, %v1839
      %v3104 = vpack.c.b16 %v1844, %v1840
      %v3105 = vpack.c.b16 %v1845, %v1841
      %v3106 = vpack.c.b16 %v1846, %v1842
      %v3107 = vpack.c.b16 %v1851, %v1847
      %v3108 = vpack.c.b16 %v1852, %v1848
      %v3109 = vpack.c.b16 %v1853, %v1849
      %v3110 = vpack.c.b16 %v1854, %v1850
      %v3111 = vpack.c.b16 %v1859, %v1855
      %v3112 = vpack.c.b16 %v1860, %v1856
      %v3113 = vpack.c.b16 %v1861, %v1857
      %v3114 = vpack.c.b16 %v1862, %v1858
      %v3115 = vpack.c.b16 %v1867, %v1863
      %v3116 = vpack.c.b16 %v1868, %v1864
      %v3117 = vpack.c.b16 %v1869, %v1865
      %v3118 = vpack.c.b16 %v1870, %v1866
      %v3119 = vpack.c.b16 %v1875, %v1871
      %v3120 = vpack.c.b16 %v1876, %v1872
      %v3121 = vpack.c.b16 %v1877, %v1873
      %v3122 = vpack.c.b16 %v1878, %v1874
      %v3123 = vpack.c.b16 %v1883, %v1879
      %v3124 = vpack.c.b16 %v1884, %v1880
      %v3125 = vpack.c.b16 %v1885, %v1881
      %v3126 = vpack.c.b16 %v1886, %v1882
      %v3127 = vpack.c.b16 %v1891, %v1887
      %v3128 = vpack.c.b16 %v1892, %v1888
      %v3129 = vpack.c.b16 %v1893, %v1889
      %v3130 = vpack.c.b16 %v1894, %v1890
      %v3131 = vpack.c.b16 %v1899, %v1895
      %v3132 = vpack.c.b16 %v1900, %v1896
      %v3133 = vpack.c.b16 %v1901, %v1897
      %v3134 = vpack.c.b16 %v1902, %v1898
      %v3135 = vpack.c.b16 %v1907, %v1903
      %v3136 = vpack.c.b16 %v1908, %v1904
      %v3137 = vpack.c.b16 %v1909, %v1905
      %v3138 = vpack.c.b16 %v1910, %v1906
      %v3139 = vpack.c.b16 %v1915, %v1911
      %v3140 = vpack.c.b16 %v1916, %v1912
      %v3141 = vpack.c.b16 %v1917, %v1913
      %v3142 = vpack.c.b16 %v1918, %v1914
      %v3143 = vpack.c.b16 %v1923, %v1919
      %v3144 = vpack.c.b16 %v1924, %v1920
      %v3145 = vpack.c.b16 %v1925, %v1921
      %v3146 = vpack.c.b16 %v1926, %v1922
      %v3147 = vpack.c.b16 %v1931, %v1927
      %v3148 = vpack.c.b16 %v1932, %v1928
      %v3149 = vpack.c.b16 %v1933, %v1929
      %v3150 = vpack.c.b16 %v1934, %v1930
      %v3151 = vpack.c.b16 %v1939, %v1935
      %v3152 = vpack.c.b16 %v1940, %v1936
      %v3153 = vpack.c.b16 %v1941, %v1937
      %v3154 = vpack.c.b16 %v1942, %v1938
      %v3155 = vpack.c.b16 %v1947, %v1943
      %v3156 = vpack.c.b16 %v1948, %v1944
      %v3157 = vpack.c.b16 %v1949, %v1945
      %v3158 = vpack.c.b16 %v1950, %v1946
      %v3159 = vpack.c.b16 %v1955, %v1951
      %v3160 = vpack.c.b16 %v1956, %v1952
      %v3161 = vpack.c.b16 %v1957, %v1953
      %v3162 = vpack.c.b16 %v1958, %v1954
      %v3163 = vpack.c.b16 %v1963, %v1959
      %v3164 = vpack.c.b16 %v1964, %v1960
      %v3165 = vpack.c.b16 %v1965, %v1961
      %v3166 = vpack.c.b16 %v1966, %v1962
      %v3167 = vpack.c.b16 %v1971, %v1967
      %v3168 = vpack.c.b16 %v1972, %v1968
      %v3169 = vpack.c.b16 %v1973, %v1969
      %v3170 = vpack.c.b16 %v1974, %v1970
      %v3171 = vpack.c.b16 %v1979, %v1975
      %v3172 = vpack.c.b16 %v1980, %v1976
      %v3173 = vpack.c.b16 %v1981, %v1977
      %v3174 = vpack.c.b16 %v1982, %v1978
      %v3175 = vpack.c.b16 %v1987, %v1983
      %v3176 = vpack.c.b16 %v1988, %v1984
      %v3177 = vpack.c.b16 %v1989, %v1985
      %v3178 = vpack.c.b16 %v1990, %v1986
      %v3179 = vpack.c.b16 %v1995, %v1991
      %v3180 = vpack.c.b16 %v1996, %v1992
      %v3181 = vpack.c.b16 %v1997, %v1993
      %v3182 = vpack.c.b16 %v1998, %v1994
      %v3183 = vpack.c.b16 %v2003, %v1999
      %v3184 = vpack.c.b16 %v2004, %v2000
      %v3185 = vpack.c.b16 %v2005, %v2001
      %v3186 = vpack.c.b16 %v2006, %v2002
      %v3187 = vpack.c.b16 %v2011, %v2007
      %v3188 = vpack.c.b16 %v2012, %v2008
      %v3189 = vpack.c.b16 %v2013, %v2009
      %v3190 = vpack.c.b16 %v2014, %v2010
      %v3191 = vpack.c.b16 %v2019, %v2015
      %v3192 = vpack.c.b16 %v2020, %v2016
      %v3193 = vpack.c.b16 %v2021, %v2017
      %v3194 = vpack.c.b16 %v2022, %v2018
      %v3195 = vpack.c.b16 %v2027, %v2023
      %v3196 = vpack.c.b16 %v2028, %v2024
      %v3197 = vpack.c.b16 %v2029, %v2025
      %v3198 = vpack.c.b16 %v2030, %v2026
      %v3199 = vpack.c.b16 %v2035, %v2031
      %v3200 = vpack.c.b16 %v2036, %v2032
      %v3201 = vpack.c.b16 %v2037, %v2033
      %v3202 = vpack.c.b16 %v2038, %v2034
      %v3203 = vpack.c.b16 %v2043, %v2039
      %v3204 = vpack.c.b16 %v2044, %v2040
      %v3205 = vpack.c.b16 %v2045, %v2041
      %v3206 = vpack.c.b16 %v2046, %v2042
      %v3207 = vpack.c.b16 %v2051, %v2047
      %v3208 = vpack.c.b16 %v2052, %v2048
      %v3209 = vpack.c.b16 %v2053, %v2049
      %v3210 = vpack.c.b16 %v2054, %v2050
      %v3211 = vpack.c.b16 %v2059, %v2055
      %v3212 = vpack.c.b16 %v2060, %v2056
      %v3213 = vpack.c.b16 %v2061, %v2057
      %v3214 = vpack.c.b16 %v2062, %v2058
      %v3215 = vpack.c.b16 %v2067, %v2063
      %v3216 = vpack.c.b16 %v2068, %v2064
      %v3217 = vpack.c.b16 %v2069, %v2065
      %v3218 = vpack.c.b16 %v2070, %v2066
      %v3219 = vpack.c.b16 %v2075, %v2071
      %v3220 = vpack.c.b16 %v2076, %v2072
      %v3221 = vpack.c.b16 %v2077, %v2073
      %v3222 = vpack.c.b16 %v2078, %v2074
      %v3223 = vpack.c.b16 %v2083, %v2079
      %v3224 = vpack.c.b16 %v2084, %v2080
      %v3225 = vpack.c.b16 %v2085, %v2081
      %v3226 = vpack.c.b16 %v2086, %v2082
      %v3227 = vpack.c.b16 %v2091, %v2087
      %v3228 = vpack.c.b16 %v2092, %v2088
      %v3229 = vpack.c.b16 %v2093, %v2089
      %v3230 = vpack.c.b16 %v2094, %v2090
      %v3231 = vpack.c.b16 %v2099, %v2095
      %v3232 = vpack.c.b16 %v2100, %v2096
      %v3233 = vpack.c.b16 %v2101, %v2097
      %v3234 = vpack.c.b16 %v2102, %v2098
      %v3235 = vpack.c.b16 %v2107, %v2103
      %v3236 = vpack.c.b16 %v2108, %v2104
      %v3237 = vpack.c.b16 %v2109, %v2105
      %v3238 = vpack.c.b16 %v2110, %v2106
      %v3239 = vpack.c.b16 %v2115, %v2111
      %v3240 = vpack.c.b16 %v2116, %v2112
      %v3241 = vpack.c.b16 %v2117, %v2113
      %v3242 = vpack.c.b16 %v2118, %v2114
      %v3243 = vpack.c.b16 %v2123, %v2119
      %v3244 = vpack.c.b16 %v2124, %v2120
      %v3245 = vpack.c.b16 %v2125, %v2121
      %v3246 = vpack.c.b16 %v2126, %v2122
      %v3247 = vpack.c.b16 %v2131, %v2127
      %v3248 = vpack.c.b16 %v2132, %v2128
      %v3249 = vpack.c.b16 %v2133, %v2129
      %v3250 = vpack.c.b16 %v2134, %v2130
      %v3251 = vpack.c.b16 %v2139, %v2135
      %v3252 = vpack.c.b16 %v2140, %v2136
      %v3253 = vpack.c.b16 %v2141, %v2137
      %v3254 = vpack.c.b16 %v2142, %v2138
      %v3255 = vpack.c.b16 %v2147, %v2143
      %v3256 = vpack.c.b16 %v2148, %v2144
      %v3257 = vpack.c.b16 %v2149, %v2145
      %v3258 = vpack.c.b16 %v2150, %v2146
      %v3259 = vpack.c.b16 %v2155, %v2151
      %v3260 = vpack.c.b16 %v2156, %v2152
      %v3261 = vpack.c.b16 %v2157, %v2153
      %v3262 = vpack.c.b16 %v2158, %v2154
      %v3263 = vpack.c.b16 %v2163, %v2159
      %v3264 = vpack.c.b16 %v2164, %v2160
      %v3265 = vpack.c.b16 %v2165, %v2161
      %v3266 = vpack.c.b16 %v2166, %v2162
      %v3267 = vpack.c.b16 %v2171, %v2167
      %v3268 = vpack.c.b16 %v2172, %v2168
      %v3269 = vpack.c.b16 %v2173, %v2169
      %v3270 = vpack.c.b16 %v2174, %v2170
      %v3271 = vpack.c.b16 %v2179, %v2175
      %v3272 = vpack.c.b16 %v2180, %v2176
      %v3273 = vpack.c.b16 %v2181, %v2177
      %v3274 = vpack.c.b16 %v2182, %v2178
      %v3275 = vpack.c.b16 %v2187, %v2183
      %v3276 = vpack.c.b16 %v2188, %v2184
      %v3277 = vpack.c.b16 %v2189, %v2185
      %v3278 = vpack.c.b16 %v2190, %v2186
      %v3279 = vpack.c.b16 %v2195, %v2191
      %v3280 = vpack.c.b16 %v2196, %v2192
      %v3281 = vpack.c.b16 %v2197, %v2193
      %v3282 = vpack.c.b16 %v2198, %v2194
      %v3283 = vpack.c.b16 %v2203, %v2199
      %v3284 = vpack.c.b16 %v2204, %v2200
      %v3285 = vpack.c.b16 %v2205, %v2201
      %v3286 = vpack.c.b16 %v2206, %v2202
      %v3287 = vpack.c.b16 %v2211, %v2207
      %v3288 = vpack.c.b16 %v2212, %v2208
      %v3289 = vpack.c.b16 %v2213, %v2209
      %v3290 = vpack.c.b16 %v2214, %v2210
      %v3291 = vpack.c.b16 %v2219, %v2215
      %v3292 = vpack.c.b16 %v2220, %v2216
      %v3293 = vpack.c.b16 %v2221, %v2217
      %v3294 = vpack.c.b16 %v2222, %v2218
      %v3295 = vpack.c.b16 %v2227, %v2223
      %v3296 = vpack.c.b16 %v2228, %v2224
      %v3297 = vpack.c.b16 %v2229, %v2225
      %v3298 = vpack.c.b16 %v2230, %v2226
      %v3299 = vpack.c.b16 %v2235, %v2231
      %v3300 = vpack.c.b16 %v2236, %v2232
      %v3301 = vpack.c.b16 %v2237, %v2233
      %v3302 = vpack.c.b16 %v2238, %v2234
      %v3303 = vpack.c.b16 %v2243, %v2239
      %v3304 = vpack.c.b16 %v2244, %v2240
      %v3305 = vpack.c.b16 %v2245, %v2241
      %v3306 = vpack.c.b16 %v2246, %v2242
      %v3307 = vpack.c.b16 %v2251, %v2247
      %v3308 = vpack.c.b16 %v2252, %v2248
      %v3309 = vpack.c.b16 %v2253, %v2249
      %v3310 = vpack.c.b16 %v2254, %v2250
      %v3311 = vpack.c.b16 %v2259, %v2255
      %v3312 = vpack.c.b16 %v2260, %v2256
      %v3313 = vpack.c.b16 %v2261, %v2257
      %v3314 = vpack.c.b16 %v2262, %v2258
      %v3315 = vpack.c.b16 %v2267, %v2263
      %v3316 = vpack.c.b16 %v2268, %v2264
      %v3317 = vpack.c.b16 %v2269, %v2265
      %v3318 = vpack.c.b16 %v2270, %v2266
      %v3319 = vpack.c.b16 %v2275, %v2271
      %v3320 = vpack.c.b16 %v2276, %v2272
      %v3321 = vpack.c.b16 %v2277, %v2273
      %v3322 = vpack.c.b16 %v2278, %v2274
      %v3323 = vpack.c.b16 %v2283, %v2279
      %v3324 = vpack.c.b16 %v2284, %v2280
      %v3325 = vpack.c.b16 %v2285, %v2281
      %v3326 = vpack.c.b16 %v2286, %v2282
      %v3327 = vpack.c.b16 %v2291, %v2287
      %v3328 = vpack.c.b16 %v2292, %v2288
      %v3329 = vpack.c.b16 %v2293, %v2289
      %v3330 = vpack.c.b16 %v2294, %v2290
      %v3331 = vpack.c.b16 %v2299, %v2295
      %v3332 = vpack.c.b16 %v2300, %v2296
      %v3333 = vpack.c.b16 %v2301, %v2297
      %v3334 = vpack.c.b16 %v2302, %v2298
      %v3335 = vpack.c.b16 %v2307, %v2303
      %v3336 = vpack.c.b16 %v2308, %v2304
      %v3337 = vpack.c.b16 %v2309, %v2305
      %v3338 = vpack.c.b16 %v2310, %v2306
      %v3339 = vpack.c.b16 %v2315, %v2311
      %v3340 = vpack.c.b16 %v2316, %v2312
      %v3341 = vpack.c.b16 %v2317, %v2313
      %v3342 = vpack.c.b16 %v2318, %v2314
      %v3343 = vpack.c.b16 %v2323, %v2319
      %v3344 = vpack.c.b16 %v2324, %v2320
      %v3345 = vpack.c.b16 %v2325, %v2321
      %v3346 = vpack.c.b16 %v2326, %v2322
      %v3347 = vpack.c.b16 %v2331, %v2327
      %v3348 = vpack.c.b16 %v2332, %v2328
      %v3349 = vpack.c.b16 %v2333, %v2329
      %v3350 = vpack.c.b16 %v2334, %v2330
      %v3351 = vpack.c.b16 %v2339, %v2335
      %v3352 = vpack.c.b16 %v2340, %v2336
      %v3353 = vpack.c.b16 %v2341, %v2337
      %v3354 = vpack.c.b16 %v2342, %v2338
      %v3355 = vpack.c.b16 %v2347, %v2343
      %v3356 = vpack.c.b16 %v2348, %v2344
      %v3357 = vpack.c.b16 %v2349, %v2345
      %v3358 = vpack.c.b16 %v2350, %v2346
      %v3359 = vpack.c.b16 %v2355, %v2351
      %v3360 = vpack.c.b16 %v2356, %v2352
      %v3361 = vpack.c.b16 %v2357, %v2353
      %v3362 = vpack.c.b16 %v2358, %v2354
      %v3363 = vpack.c.b16 %v2363, %v2359
      %v3364 = vpack.c.b16 %v2364, %v2360
      %v3365 = vpack.c.b16 %v2365, %v2361
      %v3366 = vpack.c.b16 %v2366, %v2362
      %v3367 = vpack.c.b16 %v2371, %v2367
      %v3368 = vpack.c.b16 %v2372, %v2368
      %v3369 = vpack.c.b16 %v2373, %v2369
      %v3370 = vpack.c.b16 %v2374, %v2370
      %v3371 = vpack.c.b16 %v2379, %v2375
      %v3372 = vpack.c.b16 %v2380, %v2376
      %v3373 = vpack.c.b16 %v2381, %v2377
      %v3374 = vpack.c.b16 %v2382, %v2378
      %v3375 = vpack.c.b16 %v2387, %v2383
      %v3376 = vpack.c.b16 %v2388, %v2384
      %v3377 = vpack.c.b16 %v2389, %v2385
      %v3378 = vpack.c.b16 %v2390, %v2386
      %v3379 = vpack.c.b16 %v2395, %v2391
      %v3380 = vpack.c.b16 %v2396, %v2392
      %v3381 = vpack.c.b16 %v2397, %v2393
      %v3382 = vpack.c.b16 %v2398, %v2394
      %v3383 = vpack.c.b16 %v2403, %v2399
      %v3384 = vpack.c.b16 %v2404, %v2400
      %v3385 = vpack.c.b16 %v2405, %v2401
      %v3386 = vpack.c.b16 %v2406, %v2402
      %v3387 = vpack.c.b16 %v2411, %v2407
      %v3388 = vpack.c.b16 %v2412, %v2408
      %v3389 = vpack.c.b16 %v2413, %v2409
      %v3390 = vpack.c.b16 %v2414, %v2410
      %v3391 = vpack.c.b16 %v2419, %v2415
      %v3392 = vpack.c.b16 %v2420, %v2416
      %v3393 = vpack.c.b16 %v2421, %v2417
      %v3394 = vpack.c.b16 %v2422, %v2418
      %v3395 = vpack.c.b16 %v2427, %v2423
      %v3396 = vpack.c.b16 %v2428, %v2424
      %v3397 = vpack.c.b16 %v2429, %v2425
      %v3398 = vpack.c.b16 %v2430, %v2426
      %v3399 = vpack.c.b16 %v2435, %v2431
      %v3400 = vpack.c.b16 %v2436, %v2432
      %v3401 = vpack.c.b16 %v2437, %v2433
      %v3402 = vpack.c.b16 %v2438, %v2434
      %v3403 = vpack.c.b16 %v2443, %v2439
      %v3404 = vpack.c.b16 %v2444, %v2440
      %v3405 = vpack.c.b16 %v2445, %v2441
      %v3406 = vpack.c.b16 %v2446, %v2442
      %v3407 = vpack.c.b16 %v2451, %v2447
      %v3408 = vpack.c.b16 %v2452, %v2448
      %v3409 = vpack.c.b16 %v2453, %v2449
      %v3410 = vpack.c.b16 %v2454, %v2450
      %v3411 = vpack.c.b16 %v2459, %v2455
      %v3412 = vpack.c.b16 %v2460, %v2456
      %v3413 = vpack.c.b16 %v2461, %v2457
      %v3414 = vpack.c.b16 %v2462, %v2458
      %v3415 = vpack.c.b16 %v2467, %v2463
      %v3416 = vpack.c.b16 %v2468, %v2464
      %v3417 = vpack.c.b16 %v2469, %v2465
      %v3418 = vpack.c.b16 %v2470, %v2466
      %v3419 = vpack.c.b16 %v2475, %v2471
      %v3420 = vpack.c.b16 %v2476, %v2472
      %v3421 = vpack.c.b16 %v2477, %v2473
      %v3422 = vpack.c.b16 %v2478, %v2474
      %v3423 = vpack.c.b16 %v2483, %v2479
      %v3424 = vpack.c.b16 %v2484, %v2480
      %v3425 = vpack.c.b16 %v2485, %v2481
      %v3426 = vpack.c.b16 %v2486, %v2482
      %v3427 = vpack.c.b16 %v2491, %v2487
      %v3428 = vpack.c.b16 %v2492, %v2488
      %v3429 = vpack.c.b16 %v2493, %v2489
      %v3430 = vpack.c.b16 %v2494, %v2490
      %v3431 = vpack.c.b16 %v2499, %v2495
      %v3432 = vpack.c.b16 %v2500, %v2496
      %v3433 = vpack.c.b16 %v2501, %v2497
      %v3434 = vpack.c.b16 %v2502, %v2498
      %v3435 = vpack.c.b16 %v2507, %v2503
      %v3436 = vpack.c.b16 %v2508, %v2504
      %v3437 = vpack.c.b16 %v2509, %v2505
      %v3438 = vpack.c.b16 %v2510, %v2506
      %v3439 = vpack.c.b16 %v2515, %v2511
      %v3440 = vpack.c.b16 %v2516, %v2512
      %v3441 = vpack.c.b16 %v2517, %v2513
      %v3442 = vpack.c.b16 %v2518, %v2514
      %v3443 = vpack.c.b16 %v2523, %v2519
      %v3444 = vpack.c.b16 %v2524, %v2520
      %v3445 = vpack.c.b16 %v2525, %v2521
      %v3446 = vpack.c.b16 %v2526, %v2522
      %v3447 = vpack.c.b16 %v2531, %v2527
      %v3448 = vpack.c.b16 %v2532, %v2528
      %v3449 = vpack.c.b16 %v2533, %v2529
      %v3450 = vpack.c.b16 %v2534, %v2530
      %v3451 = vpack.c.b16 %v2539, %v2535
      %v3452 = vpack.c.b16 %v2540, %v2536
      %v3453 = vpack.c.b16 %v2541, %v2537
      %v3454 = vpack.c.b16 %v2542, %v2538
      %v3455 = vpack.c.b16 %v2547, %v2543
      %v3456 = vpack.c.b16 %v2548, %v2544
      %v3457 = vpack.c.b16 %v2549, %v2545
      %v3458 = vpack.c.b16 %v2550, %v2546
      %v3459 = vpack.c.b16 %v2555, %v2551
      %v3460 = vpack.c.b16 %v2556, %v2552
      %v3461 = vpack.c.b16 %v2557, %v2553
      %v3462 = vpack.c.b16 %v2558, %v2554
      %v3463 = vpack.c.b16 %v2563, %v2559
      %v3464 = vpack.c.b16 %v2564, %v2560
      %v3465 = vpack.c.b16 %v2565, %v2561
      %v3466 = vpack.c.b16 %v2566, %v2562
      %v3467 = vpack.c.b16 %v2571, %v2567
      %v3468 = vpack.c.b16 %v2572, %v2568
      %v3469 = vpack.c.b16 %v2573, %v2569
      %v3470 = vpack.c.b16 %v2574, %v2570
      %v3471 = vpack.c.b16 %v2579, %v2575
      %v3472 = vpack.c.b16 %v2580, %v2576
      %v3473 = vpack.c.b16 %v2581, %v2577
      %v3474 = vpack.c.b16 %v2582, %v2578
      %v3475 = vpack.c.b16 %v2587, %v2583
      %v3476 = vpack.c.b16 %v2588, %v2584
      %v3477 = vpack.c.b16 %v2589, %v2585
      %v3478 = vpack.c.b16 %v2590, %v2586
      %v3479 = vpack.c.b16 %v2595, %v2591
      %v3480 = vpack.c.b16 %v2596, %v2592
      %v3481 = vpack.c.b16 %v2597, %v2593
      %v3482 = vpack.c.b16 %v2598, %v2594
      %v3483 = vpack.c.b16 %v2603, %v2599
      %v3484 = vpack.c.b16 %v2604, %v2600
      %v3485 = vpack.c.b16 %v2605, %v2601
      %v3486 = vpack.c.b16 %v2606, %v2602
      %v3487 = vpack.c.b16 %v2611, %v2607
      %v3488 = vpack.c.b16 %v2612, %v2608
      %v3489 = vpack.c.b16 %v2613, %v2609
      %v3490 = vpack.c.b16 %v2614, %v2610
      %v3491 = vpack.c.b16 %v2619, %v2615
      %v3492 = vpack.c.b16 %v2620, %v2616
      %v3493 = vpack.c.b16 %v2621, %v2617
      %v3494 = vpack.c.b16 %v2622, %v2618
      %v3495 = vpack.c.b16 %v2627, %v2623
      %v3496 = vpack.c.b16 %v2628, %v2624
      %v3497 = vpack.c.b16 %v2629, %v2625
      %v3498 = vpack.c.b16 %v2630, %v2626
      %v3499 = vpack.c.b16 %v2635, %v2631
      %v3500 = vpack.c.b16 %v2636, %v2632
      %v3501 = vpack.c.b16 %v2637, %v2633
      %v3502 = vpack.c.b16 %v2638, %v2634
      %v3503 = vpack.c.b16 %v2643, %v2639
      %v3504 = vpack.c.b16 %v2644, %v2640
      %v3505 = vpack.c.b16 %v2645, %v2641
      %v3506 = vpack.c.b16 %v2646, %v2642
      %v3507 = vpack.c.b16 %v2651, %v2647
      %v3508 = vpack.c.b16 %v2652, %v2648
      %v3509 = vpack.c.b16 %v2653, %v2649
      %v3510 = vpack.c.b16 %v2654, %v2650
      %v3511 = vpack.c.b16 %v2659, %v2655
      %v3512 = vpack.c.b16 %v2660, %v2656
      %v3513 = vpack.c.b16 %v2661, %v2657
      %v3514 = vpack.c.b16 %v2662, %v2658
      %v3515 = vpack.c.b16 %v2667, %v2663
      %v3516 = vpack.c.b16 %v2668, %v2664
      %v3517 = vpack.c.b16 %v2669, %v2665
      %v3518 = vpack.c.b16 %v2670, %v2666
      %v3519 = vpack.c.b16 %v2675, %v2671
      %v3520 = vpack.c.b16 %v2676, %v2672
      %v3521 = vpack.c.b16 %v2677, %v2673
      %v3522 = vpack.c.b16 %v2678, %v2674
      %v3523 = vpack.c.b16 %v2683, %v2679
      %v3524 = vpack.c.b16 %v2684, %v2680
      %v3525 = vpack.c.b16 %v2685, %v2681
      %v3526 = vpack.c.b16 %v2686, %v2682
      %v3527 = vpack.c.b16 %v2691, %v2687
      %v3528 = vpack.c.b16 %v2692, %v2688
      %v3529 = vpack.c.b16 %v2693, %v2689
      %v3530 = vpack.c.b16 %v2694, %v2690
      %v3531 = vpack.c.b16 %v2699, %v2695
      %v3532 = vpack.c.b16 %v2700, %v2696
      %v3533 = vpack.c.b16 %v2701, %v2697
      %v3534 = vpack.c.b16 %v2702, %v2698
      %v3535 = vpack.c.b16 %v2707, %v2703
      %v3536 = vpack.c.b16 %v2708, %v2704
      %v3537 = vpack.c.b16 %v2709, %v2705
      %v3538 = vpack.c.b16 %v2710, %v2706
      %v3539 = vpack.c.b16 %v2715, %v2711
      %v3540 = vpack.c.b16 %v2716, %v2712
      %v3541 = vpack.c.b16 %v2717, %v2713
      %v3542 = vpack.c.b16 %v2718, %v2714
      %v3543 = vpack.c.b16 %v2723, %v2719
      %v3544 = vpack.c.b16 %v2724, %v2720
      %v3545 = vpack.c.b16 %v2725, %v2721
      %v3546 = vpack.c.b16 %v2726, %v2722
      %v3547 = vpack.c.b16 %v2731, %v2727
      %v3548 = vpack.c.b16 %v2732, %v2728
      %v3549 = vpack.c.b16 %v2733, %v2729
      %v3550 = vpack.c.b16 %v2734, %v2730
      %v3551 = vpack.c.b16 %v2739, %v2735
      %v3552 = vpack.c.b16 %v2740, %v2736
      %v3553 = vpack.c.b16 %v2741, %v2737
      %v3554 = vpack.c.b16 %v2742, %v2738
      %v3555 = vpack.c.b16 %v2747, %v2743
      %v3556 = vpack.c.b16 %v2748, %v2744
      %v3557 = vpack.c.b16 %v2749, %v2745
      %v3558 = vpack.c.b16 %v2750, %v2746
      %v3559 = vpack.c.b16 %v2755, %v2751
      %v3560 = vpack.c.b16 %v2756, %v2752
      %v3561 = vpack.c.b16 %v2757, %v2753
      %v3562 = vpack.c.b16 %v2758, %v2754
      %v3563 = vpack.c.b16 %v2763, %v2759
      %v3564 = vpack.c.b16 %v2764, %v2760
      %v3565 = vpack.c.b16 %v2765, %v2761
      %v3566 = vpack.c.b16 %v2766, %v2762
      %v3567 = vpack.c.b16 %v2771, %v2767
      %v3568 = vpack.c.b16 %v2772, %v2768
      %v3569 = vpack.c.b16 %v2773, %v2769
      %v3570 = vpack.c.b16 %v2774, %v2770
      %v3571 = vpack.c.b16 %v2779, %v2775
      %v3572 = vpack.c.b16 %v2780, %v2776
      %v3573 = vpack.c.b16 %v2781, %v2777
      %v3574 = vpack.c.b16 %v2782, %v2778
      %v3575 = vpack.c.b16 %v2787, %v2783
      %v3576 = vpack.c.b16 %v2788, %v2784
      %v3577 = vpack.c.b16 %v2789, %v2785
      %v3578 = vpack.c.b16 %v2790, %v2786
      %v3579 = vpack.c.b16 %v2795, %v2791
      %v3580 = vpack.c.b16 %v2796, %v2792
      %v3581 = vpack.c.b16 %v2797, %v2793
      %v3582 = vpack.c.b16 %v2798, %v2794
      %v3583 = vpack.c.b16 %v2803, %v2799
      %v3584 = vpack.c.b16 %v2804, %v2800
      %v3585 = vpack.c.b16 %v2805, %v2801
      %v3586 = vpack.c.b16 %v2806, %v2802
      %v3587 = vpack.c.b16 %v2811, %v2807
      %v3588 = vpack.c.b16 %v2812, %v2808
      %v3589 = vpack.c.b16 %v2813, %v2809
      %v3590 = vpack.c.b16 %v2814, %v2810
      %v3591 = vpack.c.b16 %v2819, %v2815
      %v3592 = vpack.c.b16 %v2820, %v2816
      %v3593 = vpack.c.b16 %v2821, %v2817
      %v3594 = vpack.c.b16 %v2822, %v2818
      %v3595 = vpack.c.b16 %v2827, %v2823
      %v3596 = vpack.c.b16 %v2828, %v2824
      %v3597 = vpack.c.b16 %v2829, %v2825
      %v3598 = vpack.c.b16 %v2830, %v2826
      %v3599 = vpack.c.b16 %v2835, %v2831
      %v3600 = vpack.c.b16 %v2836, %v2832
      %v3601 = vpack.c.b16 %v2837, %v2833
      %v3602 = vpack.c.b16 %v2838, %v2834
      %v3603 = vpack.c.b16 %v2843, %v2839
      %v3604 = vpack.c.b16 %v2844, %v2840
      %v3605 = vpack.c.b16 %v2845, %v2841
      %v3606 = vpack.c.b16 %v2846, %v2842
      %v3607 = vpack.c.b16 %v2851, %v2847
      %v3608 = vpack.c.b16 %v2852, %v2848
      %v3609 = vpack.c.b16 %v2853, %v2849
      %v3610 = vpack.c.b16 %v2854, %v2850
      %v3611 = vpack.c.b16 %v2859, %v2855
      %v3612 = vpack.c.b16 %v2860, %v2856
      %v3613 = vpack.c.b16 %v2861, %v2857
      %v3614 = vpack.c.b16 %v2862, %v2858
      %v3615 = vpack.c.b16 %v2867, %v2863
      %v3616 = vpack.c.b16 %v2868, %v2864
      %v3617 = vpack.c.b16 %v2869, %v2865
      %v3618 = vpack.c.b16 %v2870, %v2866
      %v3619 = vpack.c.b16 %v2875, %v2871
      %v3620 = vpack.c.b16 %v2876, %v2872
      %v3621 = vpack.c.b16 %v2877, %v2873
      %v3622 = vpack.c.b16 %v2878, %v2874
      %v3623 = vpack.c.b16 %v2883, %v2879
      %v3624 = vpack.c.b16 %v2884, %v2880
      %v3625 = vpack.c.b16 %v2885, %v2881
      %v3626 = vpack.c.b16 %v2886, %v2882
      %v3627 = vpack.c.b16 %v2891, %v2887
      %v3628 = vpack.c.b16 %v2892, %v2888
      %v3629 = vpack.c.b16 %v2893, %v2889
      %v3630 = vpack.c.b16 %v2894, %v2890
      %v3631 = vpack.c.b16 %v2899, %v2895
      %v3632 = vpack.c.b16 %v2900, %v2896
      %v3633 = vpack.c.b16 %v2901, %v2897
      %v3634 = vpack.c.b16 %v2902, %v2898
      %v3635 = vpack.c.b16 %v2907, %v2903
      %v3636 = vpack.c.b16 %v2908, %v2904
      %v3637 = vpack.c.b16 %v2909, %v2905
      %v3638 = vpack.c.b16 %v2910, %v2906
      %v3639 = vpack.c.b16 %v2915, %v2911
      %v3640 = vpack.c.b16 %v2916, %v2912
      %v3641 = vpack.c.b16 %v2917, %v2913
      %v3642 = vpack.c.b16 %v2918, %v2914
      %v3643 = vpack.c.b16 %v2923, %v2919
      %v3644 = vpack.c.b16 %v2924, %v2920
      %v3645 = vpack.c.b16 %v2925, %v2921
      %v3646 = vpack.c.b16 %v2926, %v2922
      %v3647 = vpack.c.b16 %v2931, %v2927
      %v3648 = vpack.c.b16 %v2932, %v2928
      %v3649 = vpack.c.b16 %v2933, %v2929
      %v3650 = vpack.c.b16 %v2934, %v2930
      %v3651 = vpack.c.b16 %v2939, %v2935
      %v3652 = vpack.c.b16 %v2940, %v2936
      %v3653 = vpack.c.b16 %v2941, %v2937
      %v3654 = vpack.c.b16 %v2942, %v2938
      %v3655 = vpack.c.b16 %v2947, %v2943
      %v3656 = vpack.c.b16 %v2948, %v2944
      %v3657 = vpack.c.b16 %v2949, %v2945
      %v3658 = vpack.c.b16 %v2950, %v2946
      %v3659 = vpack.c.b16 %v2955, %v2951
      %v3660 = vpack.c.b16 %v2956, %v2952
      %v3661 = vpack.c.b16 %v2957, %v2953
      %v3662 = vpack.c.b16 %v2958, %v2954
      %v3663 = vpack.c.b16 %v2963, %v2959
      %v3664 = vpack.c.b16 %v2964, %v2960
      %v3665 = vpack.c.b16 %v2965, %v2961
      %v3666 = vpack.c.b16 %v2966, %v2962
      %v3667 = vpack.c.b16 %v2971, %v2967
      %v3668 = vpack.c.b16 %v2972, %v2968
      %v3669 = vpack.c.b16 %v2973, %v2969
      %v3670 = vpack.c.b16 %v2974, %v2970
      %v3671 = vpack.c.b16 %v2979, %v2975
      %v3672 = vpack.c.b16 %v2980, %v2976
      %v3673 = vpack.c.b16 %v2981, %v2977
      %v3674 = vpack.c.b16 %v2982, %v2978
      %v3675 = vpack.c.b16 %v2987, %v2983
      %v3676 = vpack.c.b16 %v2988, %v2984
      %v3677 = vpack.c.b16 %v2989, %v2985
      %v3678 = vpack.c.b16 %v2990, %v2986
      %v3679 = vpack.c.b16 %v2995, %v2991
      %v3680 = vpack.c.b16 %v2996, %v2992
      %v3681 = vpack.c.b16 %v2997, %v2993
      %v3682 = vpack.c.b16 %v2998, %v2994
      %v3683 = vpack.c.b16 %v3003, %v2999
      %v3684 = vpack.c.b16 %v3004, %v3000
      %v3685 = vpack.c.b16 %v3005, %v3001
      %v3686 = vpack.c.b16 %v3006, %v3002
      %v3687 = vpack.c.b16 %v3011, %v3007
      %v3688 = vpack.c.b16 %v3012, %v3008
      %v3689 = vpack.c.b16 %v3013, %v3009
      %v3690 = vpack.c.b16 %v3014, %v3010
      %v3691 = vpack.c.b16 %v3019, %v3015
      %v3692 = vpack.c.b16 %v3020, %v3016
      %v3693 = vpack.c.b16 %v3021, %v3017
      %v3694 = vpack.c.b16 %v3022, %v3018
      %4367 = vmatprep.subr.bf16.mxu0 %v3024
      %4368 = vmatpush1.bf16.msra.mxu0 %v3023
      %4369 = vmatprep.subr.bf16.mxu0 %v3028
      %4370 = vmatpush1.bf16.msra.mxu0 %v3027
      %4371 = vmatprep.subr.bf16.mxu0 %v3032
      %4372 = vmatpush1.bf16.msra.mxu0 %v3031
      %4373 = vmatprep.subr.bf16.mxu0 %v3036
      %4374 = vmatpush1.bf16.msra.mxu0 %v3035
      %4375 = vmatprep.subr.bf16.mxu0 %v3040
      %4376 = vmatpush1.bf16.msra.mxu0 %v3039
      %4377 = vmatprep.subr.bf16.mxu0 %v3044
      %4378 = vmatpush1.bf16.msra.mxu0 %v3043
      %4379 = vmatprep.subr.bf16.mxu0 %v3048
      %4380 = vmatpush1.bf16.msra.mxu0 %v3047
      %4381 = vmatprep.subr.bf16.mxu0 %v3052
      %4382 = vmatpush1.bf16.msra.mxu0 %v3051
      %4383 = vmatprep.subr.bf16.mxu0 %v3056
      %4384 = vmatpush1.bf16.msra.mxu0 %v3055
      %4385 = vmatprep.subr.bf16.mxu0 %v3060
      %4386 = vmatpush1.bf16.msra.mxu0 %v3059
      %4387 = vmatprep.subr.bf16.mxu0 %v3064
      %4388 = vmatpush1.bf16.msra.mxu0 %v3063
      %4389 = vmatprep.subr.bf16.mxu0 %v3068
      %4390 = vmatpush1.bf16.msra.mxu0 %v3067
      %4391 = vmatprep.subr.bf16.mxu0 %v3072
      %4392 = vmatpush1.bf16.msra.mxu0 %v3071
      %4393 = vmatprep.subr.bf16.mxu0 %v3076
      %4394 = vmatpush1.bf16.msra.mxu0 %v3075
      %4395 = vmatprep.subr.bf16.mxu0 %v3080
      %4396 = vmatpush1.bf16.msra.mxu0 %v3079
      %4397 = vmatprep.subr.bf16.mxu0 %v3084
      %4398 = vmatpush1.bf16.msra.mxu0 %v3083
      %4399 = vmatprep.mubr.bf16.mxu0 %v966
      %4400 = vmatmul.mubr.bf16.gmra.mrb[0].mxu0 %v965
      %v4401 = vpop.f32.mrb[0].mxu0
      %v4402 = vadd.f32 0.0, %v4401
      %v4403 = vpop.f32.mrb[0].mxu0
      %v4404 = vadd.f32 0.0, %v4403
      %v4405 = vpop.f32.mrb[0].mxu0
      %v4406 = vpop.f32.mrb[0].mxu0
      %4407 = vdwg.mxu0
      %4408 = vmatprep.subr.bf16.mxu0 %v3088
      %4409 = vmatpush1.bf16.msra.mxu0 %v3087
      %4410 = vmatprep.subr.bf16.mxu0 %v3092
      %4411 = vmatpush1.bf16.msra.mxu0 %v3091
      %4412 = vmatprep.subr.bf16.mxu0 %v3096
      %4413 = vmatpush1.bf16.msra.mxu0 %v3095
      %4414 = vmatprep.subr.bf16.mxu0 %v3100
      %4415 = vmatpush1.bf16.msra.mxu0 %v3099
      %4416 = vmatprep.subr.bf16.mxu0 %v3104
      %4417 = vmatpush1.bf16.msra.mxu0 %v3103
      %4418 = vmatprep.subr.bf16.mxu0 %v3108
      %4419 = vmatpush1.bf16.msra.mxu0 %v3107
      %4420 = vmatprep.subr.bf16.mxu0 %v3112
      %4421 = vmatpush1.bf16.msra.mxu0 %v3111
      %4422 = vmatprep.subr.bf16.mxu0 %v3116
      %4423 = vmatpush1.bf16.msra.mxu0 %v3115
      %4424 = vmatprep.subr.bf16.mxu0 %v3120
      %4425 = vmatpush1.bf16.msra.mxu0 %v3119
      %4426 = vmatprep.subr.bf16.mxu0 %v3124
      %4427 = vmatpush1.bf16.msra.mxu0 %v3123
      %4428 = vmatprep.subr.bf16.mxu0 %v3128
      %4429 = vmatpush1.bf16.msra.mxu0 %v3127
      %4430 = vmatprep.subr.bf16.mxu0 %v3132
      %4431 = vmatpush1.bf16.msra.mxu0 %v3131
      %4432 = vmatprep.subr.bf16.mxu0 %v3136
      %4433 = vmatpush1.bf16.msra.mxu0 %v3135
      %4434 = vmatprep.subr.bf16.mxu0 %v3140
      %4435 = vmatpush1.bf16.msra.mxu0 %v3139
      %4436 = vmatprep.subr.bf16.mxu0 %v3144
      %4437 = vmatpush1.bf16.msra.mxu0 %v3143
      %4438 = vmatprep.subr.bf16.mxu0 %v3148
      %4439 = vmatpush1.bf16.msra.mxu0 %v3147
      %4440 = vmatprep.mubr.bf16.mxu0 %v968
      %4441 = vmatmul.mubr.bf16.gmra.mrb[0].mxu0 %v967
      %v4442 = vpop.f32.mrb[0].mxu0
      %v4443 = vadd.f32 %v4402, %v4442
      %v4444 = vpop.f32.mrb[0].mxu0
      %v4445 = vadd.f32 %v4404, %v4444
      %v4446 = vpop.f32.mrb[0].mxu0
      %v4447 = vpop.f32.mrb[0].mxu0
      %4448 = vdwg.mxu0
      %4449 = vmatprep.subr.bf16.mxu0 %v3152
      %4450 = vmatpush1.bf16.msra.mxu0 %v3151
      %4451 = vmatprep.subr.bf16.mxu0 %v3156
      %4452 = vmatpush1.bf16.msra.mxu0 %v3155
      %4453 = vmatprep.subr.bf16.mxu0 %v3160
      %4454 = vmatpush1.bf16.msra.mxu0 %v3159
      %4455 = vmatprep.subr.bf16.mxu0 %v3164
      %4456 = vmatpush1.bf16.msra.mxu0 %v3163
      %4457 = vmatprep.subr.bf16.mxu0 %v3168
      %4458 = vmatpush1.bf16.msra.mxu0 %v3167
      %4459 = vmatprep.subr.bf16.mxu0 %v3172
      %4460 = vmatpush1.bf16.msra.mxu0 %v3171
      %4461 = vmatprep.subr.bf16.mxu0 %v3176
      %4462 = vmatpush1.bf16.msra.mxu0 %v3175
      %4463 = vmatprep.subr.bf16.mxu0 %v3180
      %4464 = vmatpush1.bf16.msra.mxu0 %v3179
      %4465 = vmatprep.subr.bf16.mxu0 %v3184
      %4466 = vmatpush1.bf16.msra.mxu0 %v3183
      %4467 = vmatprep.subr.bf16.mxu0 %v3188
      %4468 = vmatpush1.bf16.msra.mxu0 %v3187
      %4469 = vmatprep.subr.bf16.mxu0 %v3192
      %4470 = vmatpush1.bf16.msra.mxu0 %v3191
      %4471 = vmatprep.subr.bf16.mxu0 %v3196
      %4472 = vmatpush1.bf16.msra.mxu0 %v3195
      %4473 = vmatprep.subr.bf16.mxu0 %v3200
      %4474 = vmatpush1.bf16.msra.mxu0 %v3199
      %4475 = vmatprep.subr.bf16.mxu0 %v3204
      %4476 = vmatpush1.bf16.msra.mxu0 %v3203
      %4477 = vmatprep.subr.bf16.mxu0 %v3208
      %4478 = vmatpush1.bf16.msra.mxu0 %v3207
      %4479 = vmatprep.subr.bf16.mxu0 %v3212
      %4480 = vmatpush1.bf16.msra.mxu0 %v3211
      %4481 = vmatprep.mubr.bf16.mxu0 %v970
      %4482 = vmatmul.mubr.bf16.gmra.mrb[0].mxu0 %v969
      %v4483 = vpop.f32.mrb[0].mxu0
      %v4484 = vadd.f32 %v4443, %v4483
      %v4485 = vpop.f32.mrb[0].mxu0
      %v4486 = vadd.f32 %v4445, %v4485
      %v4487 = vpop.f32.mrb[0].mxu0
      %v4488 = vpop.f32.mrb[0].mxu0
      %4489 = vdwg.mxu0
      %4490 = vmatprep.subr.bf16.mxu0 %v3216
      %4491 = vmatpush1.bf16.msra.mxu0 %v3215
      %4492 = vmatprep.subr.bf16.mxu0 %v3220
      %4493 = vmatpush1.bf16.msra.mxu0 %v3219
      %4494 = vmatprep.subr.bf16.mxu0 %v3224
      %4495 = vmatpush1.bf16.msra.mxu0 %v3223
      %4496 = vmatprep.subr.bf16.mxu0 %v3228
      %4497 = vmatpush1.bf16.msra.mxu0 %v3227
      %4498 = vmatprep.subr.bf16.mxu0 %v3232
      %4499 = vmatpush1.bf16.msra.mxu0 %v3231
      %4500 = vmatprep.subr.bf16.mxu0 %v3236
      %4501 = vmatpush1.bf16.msra.mxu0 %v3235
      %4502 = vmatprep.subr.bf16.mxu0 %v3240
      %4503 = vmatpush1.bf16.msra.mxu0 %v3239
      %4504 = vmatprep.subr.bf16.mxu0 %v3244
      %4505 = vmatpush1.bf16.msra.mxu0 %v3243
      %4506 = vmatprep.subr.bf16.mxu0 %v3248
      %4507 = vmatpush1.bf16.msra.mxu0 %v3247
      %4508 = vmatprep.subr.bf16.mxu0 %v3252
      %4509 = vmatpush1.bf16.msra.mxu0 %v3251
      %4510 = vmatprep.subr.bf16.mxu0 %v3256
      %4511 = vmatpush1.bf16.msra.mxu0 %v3255
      %4512 = vmatprep.subr.bf16.mxu0 %v3260
      %4513 = vmatpush1.bf16.msra.mxu0 %v3259
      %4514 = vmatprep.subr.bf16.mxu0 %v3264
      %4515 = vmatpush1.bf16.msra.mxu0 %v3263
      %4516 = vmatprep.subr.bf16.mxu0 %v3268
      %4517 = vmatpush1.bf16.msra.mxu0 %v3267
      %4518 = vmatprep.subr.bf16.mxu0 %v3272
      %4519 = vmatpush1.bf16.msra.mxu0 %v3271
      %4520 = vmatprep.subr.bf16.mxu0 %v3276
      %4521 = vmatpush1.bf16.msra.mxu0 %v3275
      %4522 = vmatprep.mubr.bf16.mxu0 %v972
      %4523 = vmatmul.mubr.bf16.gmra.mrb[0].mxu0 %v971
      %v4524 = vpop.f32.mrb[0].mxu0
      %v4525 = vadd.f32 %v4484, %v4524
      %v4526 = vpop.f32.mrb[0].mxu0
      %v4527 = vadd.f32 %v4486, %v4526
      %v4528 = vpop.f32.mrb[0].mxu0
      %v4529 = vpop.f32.mrb[0].mxu0
      %4530 = vdwg.mxu0
      %4531 = vmatprep.subr.bf16.mxu0 %v3280
      %4532 = vmatpush1.bf16.msra.mxu0 %v3279
      %4533 = vmatprep.subr.bf16.mxu0 %v3284
      %4534 = vmatpush1.bf16.msra.mxu0 %v3283
      %4535 = vmatprep.subr.bf16.mxu0 %v3288
      %4536 = vmatpush1.bf16.msra.mxu0 %v3287
      %4537 = vmatprep.subr.bf16.mxu0 %v3292
      %4538 = vmatpush1.bf16.msra.mxu0 %v3291
      %4539 = vmatprep.subr.bf16.mxu0 %v3296
      %4540 = vmatpush1.bf16.msra.mxu0 %v3295
      %4541 = vmatprep.subr.bf16.mxu0 %v3300
      %4542 = vmatpush1.bf16.msra.mxu0 %v3299
      %4543 = vmatprep.subr.bf16.mxu0 %v3304
      %4544 = vmatpush1.bf16.msra.mxu0 %v3303
      %4545 = vmatprep.subr.bf16.mxu0 %v3308
      %4546 = vmatpush1.bf16.msra.mxu0 %v3307
      %4547 = vmatprep.subr.bf16.mxu0 %v3312
      %4548 = vmatpush1.bf16.msra.mxu0 %v3311
      %4549 = vmatprep.subr.bf16.mxu0 %v3316
      %4550 = vmatpush1.bf16.msra.mxu0 %v3315
      %4551 = vmatprep.subr.bf16.mxu0 %v3320
      %4552 = vmatpush1.bf16.msra.mxu0 %v3319
      %4553 = vmatprep.subr.bf16.mxu0 %v3324
      %4554 = vmatpush1.bf16.msra.mxu0 %v3323
      %4555 = vmatprep.subr.bf16.mxu0 %v3328
      %4556 = vmatpush1.bf16.msra.mxu0 %v3327
      %4557 = vmatprep.subr.bf16.mxu0 %v3332
      %4558 = vmatpush1.bf16.msra.mxu0 %v3331
      %4559 = vmatprep.subr.bf16.mxu0 %v3336
      %4560 = vmatpush1.bf16.msra.mxu0 %v3335
      %4561 = vmatprep.subr.bf16.mxu0 %v3340
      %4562 = vmatpush1.bf16.msra.mxu0 %v3339
      %4563 = vmatprep.mubr.bf16.mxu0 %v974
      %4564 = vmatmul.mubr.bf16.gmra.mrb[0].mxu0 %v973
      %v4565 = vpop.f32.mrb[0].mxu0
      %v4566 = vadd.f32 %v4525, %v4565
      %v4567 = vpop.f32.mrb[0].mxu0
      %v4568 = vadd.f32 %v4527, %v4567
      %v4569 = vpop.f32.mrb[0].mxu0
      %v4570 = vpop.f32.mrb[0].mxu0
      %4571 = vdwg.mxu0
      %4572 = vmatprep.subr.bf16.mxu0 %v3344
      %4573 = vmatpush1.bf16.msra.mxu0 %v3343
      %4574 = vmatprep.subr.bf16.mxu0 %v3348
      %4575 = vmatpush1.bf16.msra.mxu0 %v3347
      %4576 = vmatprep.subr.bf16.mxu0 %v3352
      %4577 = vmatpush1.bf16.msra.mxu0 %v3351
      %4578 = vmatprep.subr.bf16.mxu0 %v3356
      %4579 = vmatpush1.bf16.msra.mxu0 %v3355
      %4580 = vmatprep.subr.bf16.mxu0 %v3360
      %4581 = vmatpush1.bf16.msra.mxu0 %v3359
      %4582 = vmatprep.subr.bf16.mxu0 %v3364
      %4583 = vmatpush1.bf16.msra.mxu0 %v3363
      %4584 = vmatprep.subr.bf16.mxu0 %v3368
      %4585 = vmatpush1.bf16.msra.mxu0 %v3367
      %4586 = vmatprep.subr.bf16.mxu0 %v3372
      %4587 = vmatpush1.bf16.msra.mxu0 %v3371
      %4588 = vmatprep.subr.bf16.mxu0 %v3376
      %4589 = vmatpush1.bf16.msra.mxu0 %v3375
      %4590 = vmatprep.subr.bf16.mxu0 %v3380
      %4591 = vmatpush1.bf16.msra.mxu0 %v3379
      %4592 = vmatprep.subr.bf16.mxu0 %v3384
      %4593 = vmatpush1.bf16.msra.mxu0 %v3383
      %4594 = vmatprep.subr.bf16.mxu0 %v3388
      %4595 = vmatpush1.bf16.msra.mxu0 %v3387
      %4596 = vmatprep.subr.bf16.mxu0 %v3392
      %4597 = vmatpush1.bf16.msra.mxu0 %v3391
      %4598 = vmatprep.subr.bf16.mxu0 %v3396
      %4599 = vmatpush1.bf16.msra.mxu0 %v3395
      %4600 = vmatprep.subr.bf16.mxu0 %v3400
      %4601 = vmatpush1.bf16.msra.mxu0 %v3399
      %4602 = vmatprep.subr.bf16.mxu0 %v3404
      %4603 = vmatpush1.bf16.msra.mxu0 %v3403
      %4604 = vmatprep.mubr.bf16.mxu0 %v976
      %4605 = vmatmul.mubr.bf16.gmra.mrb[0].mxu0 %v975
      %v4606 = vpop.f32.mrb[0].mxu0
      %v4607 = vadd.f32 %v4566, %v4606
      %v4608 = vpop.f32.mrb[0].mxu0
      %v4609 = vadd.f32 %v4568, %v4608
      %v4610 = vpop.f32.mrb[0].mxu0
      %v4611 = vpop.f32.mrb[0].mxu0
      %4612 = vdwg.mxu0
      %4613 = vmatprep.subr.bf16.mxu0 %v3408
      %4614 = vmatpush1.bf16.msra.mxu0 %v3407
      %4615 = vmatprep.subr.bf16.mxu0 %v3412
      %4616 = vmatpush1.bf16.msra.mxu0 %v3411
      %4617 = vmatprep.subr.bf16.mxu0 %v3416
      %4618 = vmatpush1.bf16.msra.mxu0 %v3415
      %4619 = vmatprep.subr.bf16.mxu0 %v3420
      %4620 = vmatpush1.bf16.msra.mxu0 %v3419
      %4621 = vmatprep.subr.bf16.mxu0 %v3424
      %4622 = vmatpush1.bf16.msra.mxu0 %v3423
      %4623 = vmatprep.subr.bf16.mxu0 %v3428
      %4624 = vmatpush1.bf16.msra.mxu0 %v3427
      %4625 = vmatprep.subr.bf16.mxu0 %v3432
      %4626 = vmatpush1.bf16.msra.mxu0 %v3431
      %4627 = vmatprep.subr.bf16.mxu0 %v3436
      %4628 = vmatpush1.bf16.msra.mxu0 %v3435
      %4629 = vmatprep.subr.bf16.mxu0 %v3440
      %4630 = vmatpush1.bf16.msra.mxu0 %v3439
      %4631 = vmatprep.subr.bf16.mxu0 %v3444
      %4632 = vmatpush1.bf16.msra.mxu0 %v3443
      %4633 = vmatprep.subr.bf16.mxu0 %v3448
      %4634 = vmatpush1.bf16.msra.mxu0 %v3447
      %4635 = vmatprep.subr.bf16.mxu0 %v3452
      %4636 = vmatpush1.bf16.msra.mxu0 %v3451
      %4637 = vmatprep.subr.bf16.mxu0 %v3456
      %4638 = vmatpush1.bf16.msra.mxu0 %v3455
      %4639 = vmatprep.subr.bf16.mxu0 %v3460
      %4640 = vmatpush1.bf16.msra.mxu0 %v3459
      %4641 = vmatprep.subr.bf16.mxu0 %v3464
      %4642 = vmatpush1.bf16.msra.mxu0 %v3463
      %4643 = vmatprep.subr.bf16.mxu0 %v3468
      %4644 = vmatpush1.bf16.msra.mxu0 %v3467
      %4645 = vmatprep.mubr.bf16.mxu0 %v978
      %4646 = vmatmul.mubr.bf16.gmra.mrb[0].mxu0 %v977
      %v4647 = vpop.f32.mrb[0].mxu0
      %v4648 = vadd.f32 %v4607, %v4647
      %v4649 = vpop.f32.mrb[0].mxu0
      %v4650 = vadd.f32 %v4609, %v4649
      %v4651 = vpop.f32.mrb[0].mxu0
      %v4652 = vpop.f32.mrb[0].mxu0
      %4653 = vdwg.mxu0
      %4654 = vmatprep.subr.bf16.mxu0 %v3472
      %4655 = vmatpush1.bf16.msra.mxu0 %v3471
      %4656 = vmatprep.subr.bf16.mxu0 %v3476
      %4657 = vmatpush1.bf16.msra.mxu0 %v3475
      %4658 = vmatprep.subr.bf16.mxu0 %v3480
      %4659 = vmatpush1.bf16.msra.mxu0 %v3479
      %4660 = vmatprep.subr.bf16.mxu0 %v3484
      %4661 = vmatpush1.bf16.msra.mxu0 %v3483
      %4662 = vmatprep.subr.bf16.mxu0 %v3488
      %4663 = vmatpush1.bf16.msra.mxu0 %v3487
      %4664 = vmatprep.subr.bf16.mxu0 %v3492
      %4665 = vmatpush1.bf16.msra.mxu0 %v3491
      %4666 = vmatprep.subr.bf16.mxu0 %v3496
      %4667 = vmatpush1.bf16.msra.mxu0 %v3495
      %4668 = vmatprep.subr.bf16.mxu0 %v3500
      %4669 = vmatpush1.bf16.msra.mxu0 %v3499
      %4670 = vmatprep.subr.bf16.mxu0 %v3504
      %4671 = vmatpush1.bf16.msra.mxu0 %v3503
      %4672 = vmatprep.subr.bf16.mxu0 %v3508
      %4673 = vmatpush1.bf16.msra.mxu0 %v3507
      %4674 = vmatprep.subr.bf16.mxu0 %v3512
      %4675 = vmatpush1.bf16.msra.mxu0 %v3511
      %4676 = vmatprep.subr.bf16.mxu0 %v3516
      %4677 = vmatpush1.bf16.msra.mxu0 %v3515
      %4678 = vmatprep.subr.bf16.mxu0 %v3520
      %4679 = vmatpush1.bf16.msra.mxu0 %v3519
      %4680 = vmatprep.subr.bf16.mxu0 %v3524
      %4681 = vmatpush1.bf16.msra.mxu0 %v3523
      %4682 = vmatprep.subr.bf16.mxu0 %v3528
      %4683 = vmatpush1.bf16.msra.mxu0 %v3527
      %4684 = vmatprep.subr.bf16.mxu0 %v3532
      %4685 = vmatpush1.bf16.msra.mxu0 %v3531
      %4686 = vmatprep.mubr.bf16.mxu0 %v980
      %4687 = vmatmul.mubr.bf16.gmra.mrb[0].mxu0 %v979
      %v4688 = vpop.f32.mrb[0].mxu0
      %v4689 = vadd.f32 %v4648, %v4688
      %v4690 = vpop.f32.mrb[0].mxu0
      %v4691 = vadd.f32 %v4650, %v4690
      %v4692 = vpop.f32.mrb[0].mxu0
      %v4693 = vpop.f32.mrb[0].mxu0
      %4694 = vdwg.mxu0
      %4695 = vmatprep.subr.bf16.mxu0 %v3536
      %4696 = vmatpush1.bf16.msra.mxu0 %v3535
      %4697 = vmatprep.subr.bf16.mxu0 %v3540
      %4698 = vmatpush1.bf16.msra.mxu0 %v3539
      %4699 = vmatprep.subr.bf16.mxu0 %v3544
      %4700 = vmatpush1.bf16.msra.mxu0 %v3543
      %4701 = vmatprep.subr.bf16.mxu0 %v3548
      %4702 = vmatpush1.bf16.msra.mxu0 %v3547
      %4703 = vmatprep.subr.bf16.mxu0 %v3552
      %4704 = vmatpush1.bf16.msra.mxu0 %v3551
      %4705 = vmatprep.subr.bf16.mxu0 %v3556
      %4706 = vmatpush1.bf16.msra.mxu0 %v3555
      %4707 = vmatprep.subr.bf16.mxu0 %v3560
      %4708 = vmatpush1.bf16.msra.mxu0 %v3559
      %4709 = vmatprep.subr.bf16.mxu0 %v3564
      %4710 = vmatpush1.bf16.msra.mxu0 %v3563
      %4711 = vmatprep.subr.bf16.mxu0 %v3568
      %4712 = vmatpush1.bf16.msra.mxu0 %v3567
      %4713 = vmatprep.subr.bf16.mxu0 %v3572
      %4714 = vmatpush1.bf16.msra.mxu0 %v3571
      %4715 = vmatprep.subr.bf16.mxu0 %v3576
      %4716 = vmatpush1.bf16.msra.mxu0 %v3575
      %4717 = vmatprep.subr.bf16.mxu0 %v3580
      %4718 = vmatpush1.bf16.msra.mxu0 %v3579
      %4719 = vmatprep.subr.bf16.mxu0 %v3584
      %4720 = vmatpush1.bf16.msra.mxu0 %v3583
      %4721 = vmatprep.subr.bf16.mxu0 %v3588
      %4722 = vmatpush1.bf16.msra.mxu0 %v3587
      %4723 = vmatprep.subr.bf16.mxu0 %v3592
      %4724 = vmatpush1.bf16.msra.mxu0 %v3591
      %4725 = vmatprep.subr.bf16.mxu0 %v3596
      %4726 = vmatpush1.bf16.msra.mxu0 %v3595
      %4727 = vmatprep.mubr.bf16.mxu0 %v982
      %4728 = vmatmul.mubr.bf16.gmra.mrb[0].mxu0 %v981
      %v4729 = vpop.f32.mrb[0].mxu0
      %v4730 = vadd.f32 %v4689, %v4729
      %v4731 = vpop.f32.mrb[0].mxu0
      %v4732 = vadd.f32 %v4691, %v4731
      %v4733 = vpop.f32.mrb[0].mxu0
      %v4734 = vpop.f32.mrb[0].mxu0
      %4735 = vdwg.mxu0
      %4736 = vmatprep.subr.bf16.mxu0 %v3600
      %4737 = vmatpush1.bf16.msra.mxu0 %v3599
      %4738 = vmatprep.subr.bf16.mxu0 %v3604
      %4739 = vmatpush1.bf16.msra.mxu0 %v3603
      %4740 = vmatprep.subr.bf16.mxu0 %v3608
      %4741 = vmatpush1.bf16.msra.mxu0 %v3607
      %4742 = vmatprep.subr.bf16.mxu0 %v3612
      %4743 = vmatpush1.bf16.msra.mxu0 %v3611
      %4744 = vmatprep.subr.bf16.mxu0 %v3616
      %4745 = vmatpush1.bf16.msra.mxu0 %v3615
      %4746 = vmatprep.subr.bf16.mxu0 %v3620
      %4747 = vmatpush1.bf16.msra.mxu0 %v3619
      %4748 = vmatprep.subr.bf16.mxu0 %v3624
      %4749 = vmatpush1.bf16.msra.mxu0 %v3623
      %4750 = vmatprep.subr.bf16.mxu0 %v3628
      %4751 = vmatpush1.bf16.msra.mxu0 %v3627
      %4752 = vmatprep.subr.bf16.mxu0 %v3632
      %4753 = vmatpush1.bf16.msra.mxu0 %v3631
      %4754 = vmatprep.subr.bf16.mxu0 %v3636
      %4755 = vmatpush1.bf16.msra.mxu0 %v3635
      %4756 = vmatprep.subr.bf16.mxu0 %v3640
      %4757 = vmatpush1.bf16.msra.mxu0 %v3639
      %4758 = vmatprep.subr.bf16.mxu0 %v3644
      %4759 = vmatpush1.bf16.msra.mxu0 %v3643
      %4760 = vmatprep.subr.bf16.mxu0 %v3648
      %4761 = vmatpush1.bf16.msra.mxu0 %v3647
      %4762 = vmatprep.subr.bf16.mxu0 %v3652
      %4763 = vmatpush1.bf16.msra.mxu0 %v3651
      %4764 = vmatprep.subr.bf16.mxu0 %v3656
      %4765 = vmatpush1.bf16.msra.mxu0 %v3655
      %4766 = vmatprep.subr.bf16.mxu0 %v3660
      %4767 = vmatpush1.bf16.msra.mxu0 %v3659
      %4768 = vmatprep.mubr.bf16.mxu0 %v984
      %4769 = vmatmul.mubr.bf16.gmra.mrb[0].mxu0 %v983
      %v4770 = vpop.f32.mrb[0].mxu0
      %v4771 = vadd.f32 %v4730, %v4770
      %v4772 = vpop.f32.mrb[0].mxu0
      %v4773 = vadd.f32 %v4732, %v4772
      %v4774 = vpop.f32.mrb[0].mxu0
      %v4775 = vpop.f32.mrb[0].mxu0
      %4776 = vdwg.mxu0
      %4777 = vmatprep.subr.bf16.mxu0 %v3664
      %4778 = vmatpush1.bf16.msra.mxu0 %v3663
      %4779 = vmatprep.subr.bf16.mxu0 %v3668
      %4780 = vmatpush1.bf16.msra.mxu0 %v3667
      %4781 = vmatprep.subr.bf16.mxu0 %v3672
      %4782 = vmatpush1.bf16.msra.mxu0 %v3671
      %4783 = vmatprep.subr.bf16.mxu0 %v3676
      %4784 = vmatpush1.bf16.msra.mxu0 %v3675
      %4785 = vmatprep.subr.bf16.mxu0 %v3680
      %4786 = vmatpush1.bf16.msra.mxu0 %v3679
      %4787 = vmatprep.subr.bf16.mxu0 %v3684
      %4788 = vmatpush1.bf16.msra.mxu0 %v3683
      %4789 = vmatprep.subr.bf16.mxu0 %v3688
      %4790 = vmatpush1.bf16.msra.mxu0 %v3687
      %4791 = vmatprep.subr.bf16.mxu0 %v3692
      %4792 = vmatpush1.bf16.msra.mxu0 %v3691
      %4793 = vmatprep.subr.bf16.mxu0 0
      %4794 = vmatpush1.bf16.msra.mxu0 0
      %4795 = vmatprep.subr.bf16.mxu0 0
      %4796 = vmatpush1.bf16.msra.mxu0 0
      %4797 = vmatprep.subr.bf16.mxu0 0
      %4798 = vmatpush1.bf16.msra.mxu0 0
      %4799 = vmatprep.subr.bf16.mxu0 0
      %4800 = vmatpush1.bf16.msra.mxu0 0
      %4801 = vmatprep.subr.bf16.mxu0 0
      %4802 = vmatpush1.bf16.msra.mxu0 0
      %4803 = vmatprep.subr.bf16.mxu0 0
      %4804 = vmatpush1.bf16.msra.mxu0 0
      %4805 = vmatprep.subr.bf16.mxu0 0
      %4806 = vmatpush1.bf16.msra.mxu0 0
      %4807 = vmatprep.subr.bf16.mxu0 0
      %4808 = vmatpush1.bf16.msra.mxu0 0
      %4809 = vmatprep.mubr.bf16.mxu0 0
      %4810 = vmatmul.mubr.bf16.gmra.mrb[0].mxu0 %v985
      %v4811 = vpop.f32.mrb[0].mxu0
      %v4812 = vadd.f32 %v4771, %v4811
      %v4813 = vpop.f32.mrb[0].mxu0
      %v4814 = vadd.f32 %v4773, %v4813
      %v4815 = vpop.f32.mrb[0].mxu0
      %v4816 = vpop.f32.mrb[0].mxu0
      %4817 = vdwg.mxu0
      %4818 = vmatprep.subr.bf16.mxu0 %v3026
      %4819 = vmatpush1.bf16.msra.mxu0 %v3025
      %4820 = vmatprep.subr.bf16.mxu0 %v3030
      %4821 = vmatpush1.bf16.msra.mxu0 %v3029
      %4822 = vmatprep.subr.bf16.mxu0 %v3034
      %4823 = vmatpush1.bf16.msra.mxu0 %v3033
      %4824 = vmatprep.subr.bf16.mxu0 %v3038
      %4825 = vmatpush1.bf16.msra.mxu0 %v3037
      %4826 = vmatprep.subr.bf16.mxu0 %v3042
      %4827 = vmatpush1.bf16.msra.mxu0 %v3041
      %4828 = vmatprep.subr.bf16.mxu0 %v3046
      %4829 = vmatpush1.bf16.msra.mxu0 %v3045
      %4830 = vmatprep.subr.bf16.mxu0 %v3050
      %4831 = vmatpush1.bf16.msra.mxu0 %v3049
      %4832 = vmatprep.subr.bf16.mxu0 %v3054
      %4833 = vmatpush1.bf16.msra.mxu0 %v3053
      %4834 = vmatprep.subr.bf16.mxu0 %v3058
      %4835 = vmatpush1.bf16.msra.mxu0 %v3057
      %4836 = vmatprep.subr.bf16.mxu0 %v3062
      %4837 = vmatpush1.bf16.msra.mxu0 %v3061
      %4838 = vmatprep.subr.bf16.mxu0 %v3066
      %4839 = vmatpush1.bf16.msra.mxu0 %v3065
      %4840 = vmatprep.subr.bf16.mxu0 %v3070
      %4841 = vmatpush1.bf16.msra.mxu0 %v3069
      %4842 = vmatprep.subr.bf16.mxu0 %v3074
      %4843 = vmatpush1.bf16.msra.mxu0 %v3073
      %4844 = vmatprep.subr.bf16.mxu0 %v3078
      %4845 = vmatpush1.bf16.msra.mxu0 %v3077
      %4846 = vmatprep.subr.bf16.mxu0 %v3082
      %4847 = vmatpush1.bf16.msra.mxu0 %v3081
      %4848 = vmatprep.subr.bf16.mxu0 %v3086
      %4849 = vmatpush1.bf16.msra.mxu0 %v3085
      %4850 = vmatprep.mubr.bf16.mxu0 %v966
      %4851 = vmatmul.mubr.bf16.gmra.mrb[0].mxu0 %v965
      %v4852 = vpop.f32.mrb[0].mxu0
      %v4853 = vadd.f32 0.0, %v4852
      %v4854 = vpop.f32.mrb[0].mxu0
      %v4855 = vadd.f32 0.0, %v4854
      %v4856 = vpop.f32.mrb[0].mxu0
      %v4857 = vpop.f32.mrb[0].mxu0
      %4858 = vdwg.mxu0
      %4859 = vmatprep.subr.bf16.mxu0 %v3090
      %4860 = vmatpush1.bf16.msra.mxu0 %v3089
      %4861 = vmatprep.subr.bf16.mxu0 %v3094
      %4862 = vmatpush1.bf16.msra.mxu0 %v3093
      %4863 = vmatprep.subr.bf16.mxu0 %v3098
      %4864 = vmatpush1.bf16.msra.mxu0 %v3097
      %4865 = vmatprep.subr.bf16.mxu0 %v3102
      %4866 = vmatpush1.bf16.msra.mxu0 %v3101
      %4867 = vmatprep.subr.bf16.mxu0 %v3106
      %4868 = vmatpush1.bf16.msra.mxu0 %v3105
      %4869 = vmatprep.subr.bf16.mxu0 %v3110
      %4870 = vmatpush1.bf16.msra.mxu0 %v3109
      %4871 = vmatprep.subr.bf16.mxu0 %v3114
      %4872 = vmatpush1.bf16.msra.mxu0 %v3113
      %4873 = vmatprep.subr.bf16.mxu0 %v3118
      %4874 = vmatpush1.bf16.msra.mxu0 %v3117
      %4875 = vmatprep.subr.bf16.mxu0 %v3122
      %4876 = vmatpush1.bf16.msra.mxu0 %v3121
      %4877 = vmatprep.subr.bf16.mxu0 %v3126
      %4878 = vmatpush1.bf16.msra.mxu0 %v3125
      %4879 = vmatprep.subr.bf16.mxu0 %v3130
      %4880 = vmatpush1.bf16.msra.mxu0 %v3129
      %4881 = vmatprep.subr.bf16.mxu0 %v3134
      %4882 = vmatpush1.bf16.msra.mxu0 %v3133
      %4883 = vmatprep.subr.bf16.mxu0 %v3138
      %4884 = vmatpush1.bf16.msra.mxu0 %v3137
      %4885 = vmatprep.subr.bf16.mxu0 %v3142
      %4886 = vmatpush1.bf16.msra.mxu0 %v3141
      %4887 = vmatprep.subr.bf16.mxu0 %v3146
      %4888 = vmatpush1.bf16.msra.mxu0 %v3145
      %4889 = vmatprep.subr.bf16.mxu0 %v3150
      %4890 = vmatpush1.bf16.msra.mxu0 %v3149
      %4891 = vmatprep.mubr.bf16.mxu0 %v968
      %4892 = vmatmul.mubr.bf16.gmra.mrb[0].mxu0 %v967
      %v4893 = vpop.f32.mrb[0].mxu0
      %v4894 = vadd.f32 %v4853, %v4893
      %v4895 = vpop.f32.mrb[0].mxu0
      %v4896 = vadd.f32 %v4855, %v4895
      %v4897 = vpop.f32.mrb[0].mxu0
      %v4898 = vpop.f32.mrb[0].mxu0
      %4899 = vdwg.mxu0
      %4900 = vmatprep.subr.bf16.mxu0 %v3154
      %4901 = vmatpush1.bf16.msra.mxu0 %v3153
      %4902 = vmatprep.subr.bf16.mxu0 %v3158
      %4903 = vmatpush1.bf16.msra.mxu0 %v3157
      %4904 = vmatprep.subr.bf16.mxu0 %v3162
      %4905 = vmatpush1.bf16.msra.mxu0 %v3161
      %4906 = vmatprep.subr.bf16.mxu0 %v3166
      %4907 = vmatpush1.bf16.msra.mxu0 %v3165
      %4908 = vmatprep.subr.bf16.mxu0 %v3170
      %4909 = vmatpush1.bf16.msra.mxu0 %v3169
      %4910 = vmatprep.subr.bf16.mxu0 %v3174
      %4911 = vmatpush1.bf16.msra.mxu0 %v3173
      %4912 = vmatprep.subr.bf16.mxu0 %v3178
      %4913 = vmatpush1.bf16.msra.mxu0 %v3177
      %4914 = vmatprep.subr.bf16.mxu0 %v3182
      %4915 = vmatpush1.bf16.msra.mxu0 %v3181
      %4916 = vmatprep.subr.bf16.mxu0 %v3186
      %4917 = vmatpush1.bf16.msra.mxu0 %v3185
      %4918 = vmatprep.subr.bf16.mxu0 %v3190
      %4919 = vmatpush1.bf16.msra.mxu0 %v3189
      %4920 = vmatprep.subr.bf16.mxu0 %v3194
      %4921 = vmatpush1.bf16.msra.mxu0 %v3193
      %4922 = vmatprep.subr.bf16.mxu0 %v3198
      %4923 = vmatpush1.bf16.msra.mxu0 %v3197
      %4924 = vmatprep.subr.bf16.mxu0 %v3202
      %4925 = vmatpush1.bf16.msra.mxu0 %v3201
      %4926 = vmatprep.subr.bf16.mxu0 %v3206
      %4927 = vmatpush1.bf16.msra.mxu0 %v3205
      %4928 = vmatprep.subr.bf16.mxu0 %v3210
      %4929 = vmatpush1.bf16.msra.mxu0 %v3209
      %4930 = vmatprep.subr.bf16.mxu0 %v3214
      %4931 = vmatpush1.bf16.msra.mxu0 %v3213
      %4932 = vmatprep.mubr.bf16.mxu0 %v970
      %4933 = vmatmul.mubr.bf16.gmra.mrb[0].mxu0 %v969
      %v4934 = vpop.f32.mrb[0].mxu0
      %v4935 = vadd.f32 %v4894, %v4934
      %v4936 = vpop.f32.mrb[0].mxu0
      %v4937 = vadd.f32 %v4896, %v4936
      %v4938 = vpop.f32.mrb[0].mxu0
      %v4939 = vpop.f32.mrb[0].mxu0
      %4940 = vdwg.mxu0
      %4941 = vmatprep.subr.bf16.mxu0 %v3218
      %4942 = vmatpush1.bf16.msra.mxu0 %v3217
      %4943 = vmatprep.subr.bf16.mxu0 %v3222
      %4944 = vmatpush1.bf16.msra.mxu0 %v3221
      %4945 = vmatprep.subr.bf16.mxu0 %v3226
      %4946 = vmatpush1.bf16.msra.mxu0 %v3225
      %4947 = vmatprep.subr.bf16.mxu0 %v3230
      %4948 = vmatpush1.bf16.msra.mxu0 %v3229
      %4949 = vmatprep.subr.bf16.mxu0 %v3234
      %4950 = vmatpush1.bf16.msra.mxu0 %v3233
      %4951 = vmatprep.subr.bf16.mxu0 %v3238
      %4952 = vmatpush1.bf16.msra.mxu0 %v3237
      %4953 = vmatprep.subr.bf16.mxu0 %v3242
      %4954 = vmatpush1.bf16.msra.mxu0 %v3241
      %4955 = vmatprep.subr.bf16.mxu0 %v3246
      %4956 = vmatpush1.bf16.msra.mxu0 %v3245
      %4957 = vmatprep.subr.bf16.mxu0 %v3250
      %4958 = vmatpush1.bf16.msra.mxu0 %v3249
      %4959 = vmatprep.subr.bf16.mxu0 %v3254
      %4960 = vmatpush1.bf16.msra.mxu0 %v3253
      %4961 = vmatprep.subr.bf16.mxu0 %v3258
      %4962 = vmatpush1.bf16.msra.mxu0 %v3257
      %4963 = vmatprep.subr.bf16.mxu0 %v3262
      %4964 = vmatpush1.bf16.msra.mxu0 %v3261
      %4965 = vmatprep.subr.bf16.mxu0 %v3266
      %4966 = vmatpush1.bf16.msra.mxu0 %v3265
      %4967 = vmatprep.subr.bf16.mxu0 %v3270
      %4968 = vmatpush1.bf16.msra.mxu0 %v3269
      %4969 = vmatprep.subr.bf16.mxu0 %v3274
      %4970 = vmatpush1.bf16.msra.mxu0 %v3273
      %4971 = vmatprep.subr.bf16.mxu0 %v3278
      %4972 = vmatpush1.bf16.msra.mxu0 %v3277
      %4973 = vmatprep.mubr.bf16.mxu0 %v972
      %4974 = vmatmul.mubr.bf16.gmra.mrb[0].mxu0 %v971
      %v4975 = vpop.f32.mrb[0].mxu0
      %v4976 = vadd.f32 %v4935, %v4975
      %v4977 = vpop.f32.mrb[0].mxu0
      %v4978 = vadd.f32 %v4937, %v4977
      %v4979 = vpop.f32.mrb[0].mxu0
      %v4980 = vpop.f32.mrb[0].mxu0
      %4981 = vdwg.mxu0
      %4982 = vmatprep.subr.bf16.mxu0 %v3282
      %4983 = vmatpush1.bf16.msra.mxu0 %v3281
      %4984 = vmatprep.subr.bf16.mxu0 %v3286
      %4985 = vmatpush1.bf16.msra.mxu0 %v3285
      %4986 = vmatprep.subr.bf16.mxu0 %v3290
      %4987 = vmatpush1.bf16.msra.mxu0 %v3289
      %4988 = vmatprep.subr.bf16.mxu0 %v3294
      %4989 = vmatpush1.bf16.msra.mxu0 %v3293
      %4990 = vmatprep.subr.bf16.mxu0 %v3298
      %4991 = vmatpush1.bf16.msra.mxu0 %v3297
      %4992 = vmatprep.subr.bf16.mxu0 %v3302
      %4993 = vmatpush1.bf16.msra.mxu0 %v3301
      %4994 = vmatprep.subr.bf16.mxu0 %v3306
      %4995 = vmatpush1.bf16.msra.mxu0 %v3305
      %4996 = vmatprep.subr.bf16.mxu0 %v3310
      %4997 = vmatpush1.bf16.msra.mxu0 %v3309
      %4998 = vmatprep.subr.bf16.mxu0 %v3314
      %4999 = vmatpush1.bf16.msra.mxu0 %v3313
      %5000 = vmatprep.subr.bf16.mxu0 %v3318
      %5001 = vmatpush1.bf16.msra.mxu0 %v3317
      %5002 = vmatprep.subr.bf16.mxu0 %v3322
      %5003 = vmatpush1.bf16.msra.mxu0 %v3321
      %5004 = vmatprep.subr.bf16.mxu0 %v3326
      %5005 = vmatpush1.bf16.msra.mxu0 %v3325
      %5006 = vmatprep.subr.bf16.mxu0 %v3330
      %5007 = vmatpush1.bf16.msra.mxu0 %v3329
      %5008 = vmatprep.subr.bf16.mxu0 %v3334
      %5009 = vmatpush1.bf16.msra.mxu0 %v3333
      %5010 = vmatprep.subr.bf16.mxu0 %v3338
      %5011 = vmatpush1.bf16.msra.mxu0 %v3337
      %5012 = vmatprep.subr.bf16.mxu0 %v3342
      %5013 = vmatpush1.bf16.msra.mxu0 %v3341
      %5014 = vmatprep.mubr.bf16.mxu0 %v974
      %5015 = vmatmul.mubr.bf16.gmra.mrb[0].mxu0 %v973
      %v5016 = vpop.f32.mrb[0].mxu0
      %v5017 = vadd.f32 %v4976, %v5016
      %v5018 = vpop.f32.mrb[0].mxu0
      %v5019 = vadd.f32 %v4978, %v5018
      %v5020 = vpop.f32.mrb[0].mxu0
      %v5021 = vpop.f32.mrb[0].mxu0
      %5022 = vdwg.mxu0
      %5023 = vmatprep.subr.bf16.mxu0 %v3346
      %5024 = vmatpush1.bf16.msra.mxu0 %v3345
      %5025 = vmatprep.subr.bf16.mxu0 %v3350
      %5026 = vmatpush1.bf16.msra.mxu0 %v3349
      %5027 = vmatprep.subr.bf16.mxu0 %v3354
      %5028 = vmatpush1.bf16.msra.mxu0 %v3353
      %5029 = vmatprep.subr.bf16.mxu0 %v3358
      %5030 = vmatpush1.bf16.msra.mxu0 %v3357
      %5031 = vmatprep.subr.bf16.mxu0 %v3362
      %5032 = vmatpush1.bf16.msra.mxu0 %v3361
      %5033 = vmatprep.subr.bf16.mxu0 %v3366
      %5034 = vmatpush1.bf16.msra.mxu0 %v3365
      %5035 = vmatprep.subr.bf16.mxu0 %v3370
      %5036 = vmatpush1.bf16.msra.mxu0 %v3369
      %5037 = vmatprep.subr.bf16.mxu0 %v3374
      %5038 = vmatpush1.bf16.msra.mxu0 %v3373
      %5039 = vmatprep.subr.bf16.mxu0 %v3378
      %5040 = vmatpush1.bf16.msra.mxu0 %v3377
      %5041 = vmatprep.subr.bf16.mxu0 %v3382
      %5042 = vmatpush1.bf16.msra.mxu0 %v3381
      %5043 = vmatprep.subr.bf16.mxu0 %v3386
      %5044 = vmatpush1.bf16.msra.mxu0 %v3385
      %5045 = vmatprep.subr.bf16.mxu0 %v3390
      %5046 = vmatpush1.bf16.msra.mxu0 %v3389
      %5047 = vmatprep.subr.bf16.mxu0 %v3394
      %5048 = vmatpush1.bf16.msra.mxu0 %v3393
      %5049 = vmatprep.subr.bf16.mxu0 %v3398
      %5050 = vmatpush1.bf16.msra.mxu0 %v3397
      %5051 = vmatprep.subr.bf16.mxu0 %v3402
      %5052 = vmatpush1.bf16.msra.mxu0 %v3401
      %5053 = vmatprep.subr.bf16.mxu0 %v3406
      %5054 = vmatpush1.bf16.msra.mxu0 %v3405
      %5055 = vmatprep.mubr.bf16.mxu0 %v976
      %5056 = vmatmul.mubr.bf16.gmra.mrb[0].mxu0 %v975
      %v5057 = vpop.f32.mrb[0].mxu0
      %v5058 = vadd.f32 %v5017, %v5057
      %v5059 = vpop.f32.mrb[0].mxu0
      %v5060 = vadd.f32 %v5019, %v5059
      %v5061 = vpop.f32.mrb[0].mxu0
      %v5062 = vpop.f32.mrb[0].mxu0
      %5063 = vdwg.mxu0
      %5064 = vmatprep.subr.bf16.mxu0 %v3410
      %5065 = vmatpush1.bf16.msra.mxu0 %v3409
      %5066 = vmatprep.subr.bf16.mxu0 %v3414
      %5067 = vmatpush1.bf16.msra.mxu0 %v3413
      %5068 = vmatprep.subr.bf16.mxu0 %v3418
      %5069 = vmatpush1.bf16.msra.mxu0 %v3417
      %5070 = vmatprep.subr.bf16.mxu0 %v3422
      %5071 = vmatpush1.bf16.msra.mxu0 %v3421
      %5072 = vmatprep.subr.bf16.mxu0 %v3426
      %5073 = vmatpush1.bf16.msra.mxu0 %v3425
      %5074 = vmatprep.subr.bf16.mxu0 %v3430
      %5075 = vmatpush1.bf16.msra.mxu0 %v3429
      %5076 = vmatprep.subr.bf16.mxu0 %v3434
      %5077 = vmatpush1.bf16.msra.mxu0 %v3433
      %5078 = vmatprep.subr.bf16.mxu0 %v3438
      %5079 = vmatpush1.bf16.msra.mxu0 %v3437
      %5080 = vmatprep.subr.bf16.mxu0 %v3442
      %5081 = vmatpush1.bf16.msra.mxu0 %v3441
      %5082 = vmatprep.subr.bf16.mxu0 %v3446
      %5083 = vmatpush1.bf16.msra.mxu0 %v3445
      %5084 = vmatprep.subr.bf16.mxu0 %v3450
      %5085 = vmatpush1.bf16.msra.mxu0 %v3449
      %5086 = vmatprep.subr.bf16.mxu0 %v3454
      %5087 = vmatpush1.bf16.msra.mxu0 %v3453
      %5088 = vmatprep.subr.bf16.mxu0 %v3458
      %5089 = vmatpush1.bf16.msra.mxu0 %v3457
      %5090 = vmatprep.subr.bf16.mxu0 %v3462
      %5091 = vmatpush1.bf16.msra.mxu0 %v3461
      %5092 = vmatprep.subr.bf16.mxu0 %v3466
      %5093 = vmatpush1.bf16.msra.mxu0 %v3465
      %5094 = vmatprep.subr.bf16.mxu0 %v3470
      %5095 = vmatpush1.bf16.msra.mxu0 %v3469
      %5096 = vmatprep.mubr.bf16.mxu0 %v978
      %5097 = vmatmul.mubr.bf16.gmra.mrb[0].mxu0 %v977
      %v5098 = vpop.f32.mrb[0].mxu0
      %v5099 = vadd.f32 %v5058, %v5098
      %v5100 = vpop.f32.mrb[0].mxu0
      %v5101 = vadd.f32 %v5060, %v5100
      %v5102 = vpop.f32.mrb[0].mxu0
      %v5103 = vpop.f32.mrb[0].mxu0
      %5104 = vdwg.mxu0
      %5105 = vmatprep.subr.bf16.mxu0 %v3474
      %5106 = vmatpush1.bf16.msra.mxu0 %v3473
      %5107 = vmatprep.subr.bf16.mxu0 %v3478
      %5108 = vmatpush1.bf16.msra.mxu0 %v3477
      %5109 = vmatprep.subr.bf16.mxu0 %v3482
      %5110 = vmatpush1.bf16.msra.mxu0 %v3481
      %5111 = vmatprep.subr.bf16.mxu0 %v3486
      %5112 = vmatpush1.bf16.msra.mxu0 %v3485
      %5113 = vmatprep.subr.bf16.mxu0 %v3490
      %5114 = vmatpush1.bf16.msra.mxu0 %v3489
      %5115 = vmatprep.subr.bf16.mxu0 %v3494
      %5116 = vmatpush1.bf16.msra.mxu0 %v3493
      %5117 = vmatprep.subr.bf16.mxu0 %v3498
      %5118 = vmatpush1.bf16.msra.mxu0 %v3497
      %5119 = vmatprep.subr.bf16.mxu0 %v3502
      %5120 = vmatpush1.bf16.msra.mxu0 %v3501
      %5121 = vmatprep.subr.bf16.mxu0 %v3506
      %5122 = vmatpush1.bf16.msra.mxu0 %v3505
      %5123 = vmatprep.subr.bf16.mxu0 %v3510
      %5124 = vmatpush1.bf16.msra.mxu0 %v3509
      %5125 = vmatprep.subr.bf16.mxu0 %v3514
      %5126 = vmatpush1.bf16.msra.mxu0 %v3513
      %5127 = vmatprep.subr.bf16.mxu0 %v3518
      %5128 = vmatpush1.bf16.msra.mxu0 %v3517
      %5129 = vmatprep.subr.bf16.mxu0 %v3522
      %5130 = vmatpush1.bf16.msra.mxu0 %v3521
      %5131 = vmatprep.subr.bf16.mxu0 %v3526
      %5132 = vmatpush1.bf16.msra.mxu0 %v3525
      %5133 = vmatprep.subr.bf16.mxu0 %v3530
      %5134 = vmatpush1.bf16.msra.mxu0 %v3529
      %5135 = vmatprep.subr.bf16.mxu0 %v3534
      %5136 = vmatpush1.bf16.msra.mxu0 %v3533
      %5137 = vmatprep.mubr.bf16.mxu0 %v980
      %5138 = vmatmul.mubr.bf16.gmra.mrb[0].mxu0 %v979
      %v5139 = vpop.f32.mrb[0].mxu0
      %v5140 = vadd.f32 %v5099, %v5139
      %v5141 = vpop.f32.mrb[0].mxu0
      %v5142 = vadd.f32 %v5101, %v5141
      %v5143 = vpop.f32.mrb[0].mxu0
      %v5144 = vpop.f32.mrb[0].mxu0
      %5145 = vdwg.mxu0
      %5146 = vmatprep.subr.bf16.mxu0 %v3538
      %5147 = vmatpush1.bf16.msra.mxu0 %v3537
      %5148 = vmatprep.subr.bf16.mxu0 %v3542
      %5149 = vmatpush1.bf16.msra.mxu0 %v3541
      %5150 = vmatprep.subr.bf16.mxu0 %v3546
      %5151 = vmatpush1.bf16.msra.mxu0 %v3545
      %5152 = vmatprep.subr.bf16.mxu0 %v3550
      %5153 = vmatpush1.bf16.msra.mxu0 %v3549
      %5154 = vmatprep.subr.bf16.mxu0 %v3554
      %5155 = vmatpush1.bf16.msra.mxu0 %v3553
      %5156 = vmatprep.subr.bf16.mxu0 %v3558
      %5157 = vmatpush1.bf16.msra.mxu0 %v3557
      %5158 = vmatprep.subr.bf16.mxu0 %v3562
      %5159 = vmatpush1.bf16.msra.mxu0 %v3561
      %5160 = vmatprep.subr.bf16.mxu0 %v3566
      %5161 = vmatpush1.bf16.msra.mxu0 %v3565
      %5162 = vmatprep.subr.bf16.mxu0 %v3570
      %5163 = vmatpush1.bf16.msra.mxu0 %v3569
      %5164 = vmatprep.subr.bf16.mxu0 %v3574
      %5165 = vmatpush1.bf16.msra.mxu0 %v3573
      %5166 = vmatprep.subr.bf16.mxu0 %v3578
      %5167 = vmatpush1.bf16.msra.mxu0 %v3577
      %5168 = vmatprep.subr.bf16.mxu0 %v3582
      %5169 = vmatpush1.bf16.msra.mxu0 %v3581
      %5170 = vmatprep.subr.bf16.mxu0 %v3586
      %5171 = vmatpush1.bf16.msra.mxu0 %v3585
      %5172 = vmatprep.subr.bf16.mxu0 %v3590
      %5173 = vmatpush1.bf16.msra.mxu0 %v3589
      %5174 = vmatprep.subr.bf16.mxu0 %v3594
      %5175 = vmatpush1.bf16.msra.mxu0 %v3593
      %5176 = vmatprep.subr.bf16.mxu0 %v3598
      %5177 = vmatpush1.bf16.msra.mxu0 %v3597
      %5178 = vmatprep.mubr.bf16.mxu0 %v982
      %5179 = vmatmul.mubr.bf16.gmra.mrb[0].mxu0 %v981
      %v5180 = vpop.f32.mrb[0].mxu0
      %v5181 = vadd.f32 %v5140, %v5180
      %v5182 = vpop.f32.mrb[0].mxu0
      %v5183 = vadd.f32 %v5142, %v5182
      %v5184 = vpop.f32.mrb[0].mxu0
      %v5185 = vpop.f32.mrb[0].mxu0
      %5186 = vdwg.mxu0
      %5187 = vmatprep.subr.bf16.mxu0 %v3602
      %5188 = vmatpush1.bf16.msra.mxu0 %v3601
      %5189 = vmatprep.subr.bf16.mxu0 %v3606
      %5190 = vmatpush1.bf16.msra.mxu0 %v3605
      %5191 = vmatprep.subr.bf16.mxu0 %v3610
      %5192 = vmatpush1.bf16.msra.mxu0 %v3609
      %5193 = vmatprep.subr.bf16.mxu0 %v3614
      %5194 = vmatpush1.bf16.msra.mxu0 %v3613
      %5195 = vmatprep.subr.bf16.mxu0 %v3618
      %5196 = vmatpush1.bf16.msra.mxu0 %v3617
      %5197 = vmatprep.subr.bf16.mxu0 %v3622
      %5198 = vmatpush1.bf16.msra.mxu0 %v3621
      %5199 = vmatprep.subr.bf16.mxu0 %v3626
      %5200 = vmatpush1.bf16.msra.mxu0 %v3625
      %5201 = vmatprep.subr.bf16.mxu0 %v3630
      %5202 = vmatpush1.bf16.msra.mxu0 %v3629
      %5203 = vmatprep.subr.bf16.mxu0 %v3634
      %5204 = vmatpush1.bf16.msra.mxu0 %v3633
      %5205 = vmatprep.subr.bf16.mxu0 %v3638
      %5206 = vmatpush1.bf16.msra.mxu0 %v3637
      %5207 = vmatprep.subr.bf16.mxu0 %v3642
      %5208 = vmatpush1.bf16.msra.mxu0 %v3641
      %5209 = vmatprep.subr.bf16.mxu0 %v3646
      %5210 = vmatpush1.bf16.msra.mxu0 %v3645
      %5211 = vmatprep.subr.bf16.mxu0 %v3650
      %5212 = vmatpush1.bf16.msra.mxu0 %v3649
      %5213 = vmatprep.subr.bf16.mxu0 %v3654
      %5214 = vmatpush1.bf16.msra.mxu0 %v3653
      %5215 = vmatprep.subr.bf16.mxu0 %v3658
      %5216 = vmatpush1.bf16.msra.mxu0 %v3657
      %5217 = vmatprep.subr.bf16.mxu0 %v3662
      %5218 = vmatpush1.bf16.msra.mxu0 %v3661
      %5219 = vmatprep.mubr.bf16.mxu0 %v984
      %5220 = vmatmul.mubr.bf16.gmra.mrb[0].mxu0 %v983
      %v5221 = vpop.f32.mrb[0].mxu0
      %v5222 = vadd.f32 %v5181, %v5221
      %v5223 = vpop.f32.mrb[0].mxu0
      %v5224 = vadd.f32 %v5183, %v5223
      %v5225 = vpop.f32.mrb[0].mxu0
      %v5226 = vpop.f32.mrb[0].mxu0
      %5227 = vdwg.mxu0
      %5228 = vmatprep.subr.bf16.mxu0 %v3666
      %5229 = vmatpush1.bf16.msra.mxu0 %v3665
      %5230 = vmatprep.subr.bf16.mxu0 %v3670
      %5231 = vmatpush1.bf16.msra.mxu0 %v3669
      %5232 = vmatprep.subr.bf16.mxu0 %v3674
      %5233 = vmatpush1.bf16.msra.mxu0 %v3673
      %5234 = vmatprep.subr.bf16.mxu0 %v3678
      %5235 = vmatpush1.bf16.msra.mxu0 %v3677
      %5236 = vmatprep.subr.bf16.mxu0 %v3682
      %5237 = vmatpush1.bf16.msra.mxu0 %v3681
      %5238 = vmatprep.subr.bf16.mxu0 %v3686
      %5239 = vmatpush1.bf16.msra.mxu0 %v3685
      %5240 = vmatprep.subr.bf16.mxu0 %v3690
      %5241 = vmatpush1.bf16.msra.mxu0 %v3689
      %5242 = vmatprep.subr.bf16.mxu0 %v3694
      %5243 = vmatpush1.bf16.msra.mxu0 %v3693
      %5244 = vmatprep.subr.bf16.mxu0 0
      %5245 = vmatpush1.bf16.msra.mxu0 0
      %5246 = vmatprep.subr.bf16.mxu0 0
      %5247 = vmatpush1.bf16.msra.mxu0 0
      %5248 = vmatprep.subr.bf16.mxu0 0
      %5249 = vmatpush1.bf16.msra.mxu0 0
      %5250 = vmatprep.subr.bf16.mxu0 0
      %5251 = vmatpush1.bf16.msra.mxu0 0
      %5252 = vmatprep.subr.bf16.mxu0 0
      %5253 = vmatpush1.bf16.msra.mxu0 0
      %5254 = vmatprep.subr.bf16.mxu0 0
      %5255 = vmatpush1.bf16.msra.mxu0 0
      %5256 = vmatprep.subr.bf16.mxu0 0
      %5257 = vmatpush1.bf16.msra.mxu0 0
      %5258 = vmatprep.subr.bf16.mxu0 0
      %5259 = vmatpush1.bf16.msra.mxu0 0
      %5260 = vmatprep.mubr.bf16.mxu0 0
      %5261 = vmatmul.mubr.bf16.gmra.mrb[0].mxu0 %v985
      %v5262 = vpop.f32.mrb[0].mxu0
      %v5263 = vadd.f32 %v5222, %v5262
      %v5264 = vpop.f32.mrb[0].mxu0
      %v5265 = vadd.f32 %v5224, %v5264
      %v5266 = vpop.f32.mrb[0].mxu0
      %v5267 = vpop.f32.mrb[0].mxu0
      %5268 = vdwg.mxu0
      %v5269 = vadd.f32 %v246, %v4812
      %v5270 = vadd.f32 %v247, %v4814
      %v5271 = vadd.f32 %v248, %v5263
      %v5272 = vadd.f32 %v249, %v5265
      %5273 = vst [vmem:[#allocation2] sm:$0xff] %v5269
      %5274 = vst [vmem:[#allocation2 + $0x8] sm:$0xff] %v5270
      %5275 = vst [vmem:[#allocation2 + $0x10] sm:$0xff] %v5271
      %5276 = vst [vmem:[#allocation2 + $0x18] sm:$0xff] %v5272
      %p5277 = scmp.eq.s32.totalorder %s16, 1
      // Predicated region
      $region45: #{_lambda_.9} parent=39 // pred_check
        %p5278 = pneg %p5277
      $region46: #{_lambda_.9} parent=39 // pred_check_branch
        %5280 = sbr.rel (%p5278) target = $region48
      $region47: #{_lambda_.9} parent=39 // pred_region
        %v5281 = vld [vmem:[#allocation2] sm:$0xff]
        %v5282 = vld [vmem:[#allocation2 + $0x8] sm:$0xff]
        %v5283 = vld [vmem:[#allocation2 + $0x10] sm:$0xff]
        %v5284 = vld [vmem:[#allocation2 + $0x18] sm:$0xff]
        %v5285 = vld [vmem:[%s2] sm:$0xf]
        %v5287 = vlaneseq
        %v5288 = vshrl.u32 %v5287, 7
        %v5289 = vsub.s32 0, %v5288
        %v5290 = vrot.slane %v5285, %v5289
        %v5291 = vlaneseq
        %v5292 = vshrl.u32 %v5291, 7
        %v5293 = vsub.s32 1, %v5292
        %v5294 = vrot.slane %v5285, %v5293
        %v5295 = vlaneseq
        %v5296 = vshrl.u32 %v5295, 7
        %v5297 = vsub.s32 2, %v5296
        %v5298 = vrot.slane %v5285, %v5297
        %v5299 = vlaneseq
        %v5300 = vshrl.u32 %v5299, 7
        %v5301 = vsub.s32 3, %v5300
        %v5302 = vrot.slane %v5285, %v5301
        %v5307 = vadd.f32 %v5281, %v5290
        %v5308 = vadd.f32 %v5282, %v5294
        %v5309 = vadd.f32 %v5283, %v5298
        %v5310 = vadd.f32 %v5284, %v5302
        %v5311 = vmax.f32 %v5307, 0.0
        %v5312 = vmax.f32 %v5308, 0.0
        %v5313 = vmax.f32 %v5309, 0.0
        %v5314 = vmax.f32 %v5310, 0.0
        %v5315 = vpack.c.bf16 %v5311, %v5311
        %v5316 = vpack.c.bf16 %v5312, %v5312
        %v5317 = vpack.c.bf16 %v5313, %v5313
        %v5318 = vpack.c.bf16 %v5314, %v5314
        %v5319 = vld [vmem:[%s3] sm:$0xf]
        %v5320 = vld [vmem:[%s3 + $0x4] sm:$0xf]
        %v5321 = vld [vmem:[%s3 + $0x8] sm:$0xf]
        %v5322 = vld [vmem:[%s3 + $0xc] sm:$0xf]
        %v5323 = vld [vmem:[%s3 + $0x10] sm:$0xf]
        %v5324 = vld [vmem:[%s3 + $0x14] sm:$0xf]
        %v5325 = vld [vmem:[%s3 + $0x18] sm:$0xf]
        %v5326 = vld [vmem:[%s3 + $0x1c] sm:$0xf]
        %v5327 = vld [vmem:[%s3 + $0x20] sm:$0xf]
        %v5328 = vld [vmem:[%s3 + $0x24] sm:$0xf]
        %v5329 = vld [vmem:[%s3 + $0x28] sm:$0xf]
        %v5330 = vld [vmem:[%s3 + $0x2c] sm:$0xf]
        %v5331 = vld [vmem:[%s3 + $0x30] sm:$0xf]
        %v5332 = vld [vmem:[%s3 + $0x34] sm:$0xf]
        %v5333 = vld [vmem:[%s3 + $0x38] sm:$0xf]
        %v5334 = vld [vmem:[%s3 + $0x3c] sm:$0xf]
        %v5335 = vld [vmem:[%s3 + $0x40] sm:$0xf]
        %v5336 = vld [vmem:[%s3 + $0x44] sm:$0xf]
        %v5337 = vld [vmem:[%s3 + $0x48] sm:$0xf]
        %v5338 = vld [vmem:[%s3 + $0x4c] sm:$0xf]
        %v5339 = vld [vmem:[%s3 + $0x50] sm:$0xf]
        %v5340 = vld [vmem:[%s3 + $0x54] sm:$0xf]
        %v5341 = vld [vmem:[%s3 + $0x58] sm:$0xf]
        %v5342 = vld [vmem:[%s3 + $0x5c] sm:$0xf]
        %v5343 = vld [vmem:[%s3 + $0x60] sm:$0xf]
        %v5344 = vld [vmem:[%s3 + $0x64] sm:$0xf]
        %v5345 = vld [vmem:[%s3 + $0x68] sm:$0xf]
        %v5346 = vld [vmem:[%s3 + $0x6c] sm:$0xf]
        %v5347 = vld [vmem:[%s3 + $0x70] sm:$0xf]
        %v5348 = vld [vmem:[%s3 + $0x74] sm:$0xf]
        %v5349 = vld [vmem:[%s3 + $0x78] sm:$0xf]
        %v5350 = vld [vmem:[%s3 + $0x7c] sm:$0xf]
        %v5351 = vld [vmem:[%s3 + $0x80] sm:$0xf]
        %v5352 = vld [vmem:[%s3 + $0x84] sm:$0xf]
        %v5353 = vld [vmem:[%s3 + $0x88] sm:$0xf]
        %v5354 = vld [vmem:[%s3 + $0x8c] sm:$0xf]
        %v5355 = vld [vmem:[%s3 + $0x90] sm:$0xf]
        %v5356 = vld [vmem:[%s3 + $0x94] sm:$0xf]
        %v5357 = vld [vmem:[%s3 + $0x98] sm:$0xf]
        %v5358 = vld [vmem:[%s3 + $0x9c] sm:$0xf]
        %v5359 = vld [vmem:[%s3 + $0xa0] sm:$0xf]
        %v5360 = vld [vmem:[%s3 + $0xa4] sm:$0xf]
        %v5361 = vld [vmem:[%s3 + $0xa8] sm:$0xf]
        %v5362 = vld [vmem:[%s3 + $0xac] sm:$0xf]
        %v5363 = vld [vmem:[%s3 + $0xb0] sm:$0xf]
        %v5364 = vld [vmem:[%s3 + $0xb4] sm:$0xf]
        %v5365 = vld [vmem:[%s3 + $0xb8] sm:$0xf]
        %v5366 = vld [vmem:[%s3 + $0xbc] sm:$0xf]
        %v5367 = vld [vmem:[%s3 + $0xc0] sm:$0xf]
        %v5368 = vld [vmem:[%s3 + $0xc4] sm:$0xf]
        %v5369 = vld [vmem:[%s3 + $0xc8] sm:$0xf]
        %v5370 = vld [vmem:[%s3 + $0xcc] sm:$0xf]
        %v5371 = vld [vmem:[%s3 + $0xd0] sm:$0xf]
        %v5372 = vld [vmem:[%s3 + $0xd4] sm:$0xf]
        %v5373 = vld [vmem:[%s3 + $0xd8] sm:$0xf]
        %v5374 = vld [vmem:[%s3 + $0xdc] sm:$0xf]
        %v5375 = vld [vmem:[%s3 + $0xe0] sm:$0xf]
        %v5376 = vld [vmem:[%s3 + $0xe4] sm:$0xf]
        %v5377 = vld [vmem:[%s3 + $0xe8] sm:$0xf]
        %v5378 = vld [vmem:[%s3 + $0xec] sm:$0xf]
        %v5379 = vld [vmem:[%s3 + $0xf0] sm:$0xf]
        %v5380 = vld [vmem:[%s3 + $0xf4] sm:$0xf]
        %v5381 = vld [vmem:[%s3 + $0xf8] sm:$0xf]
        %v5382 = vld [vmem:[%s3 + $0xfc] sm:$0xf]
        %v5383 = vld [vmem:[%s4] sm:$0x1]
        %v5385 = vlaneseq
        %v5386 = vshrl.u32 %v5385, 7
        %v5387 = vsub.s32 0, %v5386
        %v5388 = vrot.slane %v5383, %v5387
        %v5454 = vunpack.c.l.b16 %v5319
        %v5455 = vunpack.c.l.b16 %v5320
        %v5456 = vunpack.c.l.b16 %v5321
        %v5457 = vunpack.c.l.b16 %v5322
        %v5458 = vunpack.c.l.b16 %v5323
        %v5459 = vunpack.c.l.b16 %v5324
        %v5460 = vunpack.c.l.b16 %v5325
        %v5461 = vunpack.c.l.b16 %v5326
        %v5462 = vunpack.c.l.b16 %v5327
        %v5463 = vunpack.c.l.b16 %v5328
        %v5464 = vunpack.c.l.b16 %v5329
        %v5465 = vunpack.c.l.b16 %v5330
        %v5466 = vunpack.c.l.b16 %v5331
        %v5467 = vunpack.c.l.b16 %v5332
        %v5468 = vunpack.c.l.b16 %v5333
        %v5469 = vunpack.c.l.b16 %v5334
        %v5470 = vunpack.c.l.b16 %v5335
        %v5471 = vunpack.c.l.b16 %v5336
        %v5472 = vunpack.c.l.b16 %v5337
        %v5473 = vunpack.c.l.b16 %v5338
        %v5474 = vunpack.c.l.b16 %v5339
        %v5475 = vunpack.c.l.b16 %v5340
        %v5476 = vunpack.c.l.b16 %v5341
        %v5477 = vunpack.c.l.b16 %v5342
        %v5478 = vunpack.c.l.b16 %v5343
        %v5479 = vunpack.c.l.b16 %v5344
        %v5480 = vunpack.c.l.b16 %v5345
        %v5481 = vunpack.c.l.b16 %v5346
        %v5482 = vunpack.c.l.b16 %v5347
        %v5483 = vunpack.c.l.b16 %v5348
        %v5484 = vunpack.c.l.b16 %v5349
        %v5485 = vunpack.c.l.b16 %v5350
        %v5486 = vunpack.c.l.b16 %v5351
        %v5487 = vunpack.c.l.b16 %v5352
        %v5488 = vunpack.c.l.b16 %v5353
        %v5489 = vunpack.c.l.b16 %v5354
        %v5490 = vunpack.c.l.b16 %v5355
        %v5491 = vunpack.c.l.b16 %v5356
        %v5492 = vunpack.c.l.b16 %v5357
        %v5493 = vunpack.c.l.b16 %v5358
        %v5494 = vunpack.c.l.b16 %v5359
        %v5495 = vunpack.c.l.b16 %v5360
        %v5496 = vunpack.c.l.b16 %v5361
        %v5497 = vunpack.c.l.b16 %v5362
        %v5498 = vunpack.c.l.b16 %v5363
        %v5499 = vunpack.c.l.b16 %v5364
        %v5500 = vunpack.c.l.b16 %v5365
        %v5501 = vunpack.c.l.b16 %v5366
        %v5502 = vunpack.c.l.b16 %v5367
        %v5503 = vunpack.c.l.b16 %v5368
        %v5504 = vunpack.c.l.b16 %v5369
        %v5505 = vunpack.c.l.b16 %v5370
        %v5506 = vunpack.c.l.b16 %v5371
        %v5507 = vunpack.c.l.b16 %v5372
        %v5508 = vunpack.c.l.b16 %v5373
        %v5509 = vunpack.c.l.b16 %v5374
        %v5510 = vunpack.c.l.b16 %v5375
        %v5511 = vunpack.c.l.b16 %v5376
        %v5512 = vunpack.c.l.b16 %v5377
        %v5513 = vunpack.c.l.b16 %v5378
        %v5514 = vunpack.c.l.b16 %v5379
        %v5515 = vunpack.c.l.b16 %v5380
        %v5516 = vunpack.c.l.b16 %v5381
        %v5517 = vunpack.c.l.b16 %v5382
        %v5518 = vpack.c.b16 %v5455, %v5454
        %v5519 = vpack.c.b16 %v5457, %v5456
        %v5520 = vpack.c.b16 %v5459, %v5458
        %v5521 = vpack.c.b16 %v5461, %v5460
        %v5522 = vpack.c.b16 %v5463, %v5462
        %v5523 = vpack.c.b16 %v5465, %v5464
        %v5524 = vpack.c.b16 %v5467, %v5466
        %v5525 = vpack.c.b16 %v5469, %v5468
        %v5526 = vpack.c.b16 %v5471, %v5470
        %v5527 = vpack.c.b16 %v5473, %v5472
        %v5528 = vpack.c.b16 %v5475, %v5474
        %v5529 = vpack.c.b16 %v5477, %v5476
        %v5530 = vpack.c.b16 %v5479, %v5478
        %v5531 = vpack.c.b16 %v5481, %v5480
        %v5532 = vpack.c.b16 %v5483, %v5482
        %v5533 = vpack.c.b16 %v5485, %v5484
        %v5534 = vpack.c.b16 %v5487, %v5486
        %v5535 = vpack.c.b16 %v5489, %v5488
        %v5536 = vpack.c.b16 %v5491, %v5490
        %v5537 = vpack.c.b16 %v5493, %v5492
        %v5538 = vpack.c.b16 %v5495, %v5494
        %v5539 = vpack.c.b16 %v5497, %v5496
        %v5540 = vpack.c.b16 %v5499, %v5498
        %v5541 = vpack.c.b16 %v5501, %v5500
        %v5542 = vpack.c.b16 %v5503, %v5502
        %v5543 = vpack.c.b16 %v5505, %v5504
        %v5544 = vpack.c.b16 %v5507, %v5506
        %v5545 = vpack.c.b16 %v5509, %v5508
        %v5546 = vpack.c.b16 %v5511, %v5510
        %v5547 = vpack.c.b16 %v5513, %v5512
        %v5548 = vpack.c.b16 %v5515, %v5514
        %v5549 = vpack.c.b16 %v5517, %v5516
        %5582 = vmatprep.subr.bf16.mxu0 0
        %5583 = vmatpush1.bf16.msra.mxu0 %v5518
        %5584 = vmatprep.subr.bf16.mxu0 0
        %5585 = vmatpush1.bf16.msra.mxu0 %v5519
        %5586 = vmatprep.subr.bf16.mxu0 0
        %5587 = vmatpush1.bf16.msra.mxu0 %v5520
        %5588 = vmatprep.subr.bf16.mxu0 0
        %5589 = vmatpush1.bf16.msra.mxu0 %v5521
        %5590 = vmatprep.subr.bf16.mxu0 0
        %5591 = vmatpush1.bf16.msra.mxu0 %v5522
        %5592 = vmatprep.subr.bf16.mxu0 0
        %5593 = vmatpush1.bf16.msra.mxu0 %v5523
        %5594 = vmatprep.subr.bf16.mxu0 0
        %5595 = vmatpush1.bf16.msra.mxu0 %v5524
        %5596 = vmatprep.subr.bf16.mxu0 0
        %5597 = vmatpush1.bf16.msra.mxu0 %v5525
        %5598 = vmatprep.subr.bf16.mxu0 0
        %5599 = vmatpush1.bf16.msra.mxu0 %v5526
        %5600 = vmatprep.subr.bf16.mxu0 0
        %5601 = vmatpush1.bf16.msra.mxu0 %v5527
        %5602 = vmatprep.subr.bf16.mxu0 0
        %5603 = vmatpush1.bf16.msra.mxu0 %v5528
        %5604 = vmatprep.subr.bf16.mxu0 0
        %5605 = vmatpush1.bf16.msra.mxu0 %v5529
        %5606 = vmatprep.subr.bf16.mxu0 0
        %5607 = vmatpush1.bf16.msra.mxu0 %v5530
        %5608 = vmatprep.subr.bf16.mxu0 0
        %5609 = vmatpush1.bf16.msra.mxu0 %v5531
        %5610 = vmatprep.subr.bf16.mxu0 0
        %5611 = vmatpush1.bf16.msra.mxu0 %v5532
        %5612 = vmatprep.subr.bf16.mxu0 0
        %5613 = vmatpush1.bf16.msra.mxu0 %v5533
        %5614 = vmatprep.mubr.bf16.mxu0 %v5316
        %5615 = vmatmul.mubr.bf16.gmra.mrb[0].mxu0 %v5315
        %v5616 = vpop.f32.mrb[0].mxu0
        %v5617 = vadd.f32 %v5388, %v5616
        %v5618 = vpop.f32.mrb[0].mxu0
        %v5619 = vpop.f32.mrb[0].mxu0
        %v5620 = vpop.f32.mrb[0].mxu0
        %5621 = vdwg.mxu0
        %5622 = vmatprep.subr.bf16.mxu0 0
        %5623 = vmatpush1.bf16.msra.mxu0 %v5534
        %5624 = vmatprep.subr.bf16.mxu0 0
        %5625 = vmatpush1.bf16.msra.mxu0 %v5535
        %5626 = vmatprep.subr.bf16.mxu0 0
        %5627 = vmatpush1.bf16.msra.mxu0 %v5536
        %5628 = vmatprep.subr.bf16.mxu0 0
        %5629 = vmatpush1.bf16.msra.mxu0 %v5537
        %5630 = vmatprep.subr.bf16.mxu0 0
        %5631 = vmatpush1.bf16.msra.mxu0 %v5538
        %5632 = vmatprep.subr.bf16.mxu0 0
        %5633 = vmatpush1.bf16.msra.mxu0 %v5539
        %5634 = vmatprep.subr.bf16.mxu0 0
        %5635 = vmatpush1.bf16.msra.mxu0 %v5540
        %5636 = vmatprep.subr.bf16.mxu0 0
        %5637 = vmatpush1.bf16.msra.mxu0 %v5541
        %5638 = vmatprep.subr.bf16.mxu0 0
        %5639 = vmatpush1.bf16.msra.mxu0 %v5542
        %5640 = vmatprep.subr.bf16.mxu0 0
        %5641 = vmatpush1.bf16.msra.mxu0 %v5543
        %5642 = vmatprep.subr.bf16.mxu0 0
        %5643 = vmatpush1.bf16.msra.mxu0 %v5544
        %5644 = vmatprep.subr.bf16.mxu0 0
        %5645 = vmatpush1.bf16.msra.mxu0 %v5545
        %5646 = vmatprep.subr.bf16.mxu0 0
        %5647 = vmatpush1.bf16.msra.mxu0 %v5546
        %5648 = vmatprep.subr.bf16.mxu0 0
        %5649 = vmatpush1.bf16.msra.mxu0 %v5547
        %5650 = vmatprep.subr.bf16.mxu0 0
        %5651 = vmatpush1.bf16.msra.mxu0 %v5548
        %5652 = vmatprep.subr.bf16.mxu0 0
        %5653 = vmatpush1.bf16.msra.mxu0 %v5549
        %5654 = vmatprep.mubr.bf16.mxu0 %v5318
        %5655 = vmatmul.mubr.bf16.gmra.mrb[0].mxu0 %v5317
        %v5656 = vpop.f32.mrb[0].mxu0
        %v5657 = vadd.f32 %v5617, %v5656
        %v5658 = vpop.f32.mrb[0].mxu0
        %v5659 = vpop.f32.mrb[0].mxu0
        %v5660 = vpop.f32.mrb[0].mxu0
        %5661 = vdwg.mxu0
        %5662 = vst [vmem:[%s5] sm:$0xff] %v5657
      $region48: #{_lambda_.9} parent=39 // pred_fallthru
        _
      // Predicated region
      $region49: #{_lambda_.9} parent=39 // pred_check
        %p5663 = pneg %p144
      $region50: #{_lambda_.9} parent=39 // pred_check_branch
        %5665 = sbr.rel (%p5663) target = $region52
      $region51: #{_lambda_.9} parent=39 // pred_region
        _
      $region52: #{_lambda_.9} parent=39 // pred_fallthru
        _
      // Predicated region
      $region53: #{_lambda_.9} parent=39 // pred_check
        %p5666 = pneg %p144
      $region54: #{_lambda_.9} parent=39 // pred_check_branch
        %5668 = sbr.rel (%p5666) target = $region56
      $region55: #{_lambda_.9} parent=39 // pred_region
        _
      $region56: #{_lambda_.9} parent=39 // pred_fallthru
        _
    $region40: #{_lambda_.9} parent=5 // pred_fallthru
      _
    %p5669 = scmp.le.s32.totalorder 2, %s11
    // Predicated region
    $region57: #{_lambda_.9} parent=5 // pred_check
      %p5670 = pneg %p5669
    $region58: #{_lambda_.9} parent=5 // pred_check_branch
      %5672 = sbr.rel (%p5670) target = $region60
    $region59: #{_lambda_.9} parent=5 // pred_region
      %s5673 = ssub.s32 %s11, 2
    $region60: #{_lambda_.9} parent=5 // pred_fallthru
      _
  $region6: #{_lambda_.9} parent=0 // loop_footer
    %s15 = sadd.s32 1, %s11
  $region7: #{_lambda_.9} parent=0 // loop_footer_branch
    %10 = sbr.rel target = $region3
  $region8: #{_lambda_.9} parent=0 // loop_exit
    _

</llo_original>
